<compile_context>
chip_gen: v7x
topology: tpu7x:2x2x1
jax: 0.10.0
libtpu: 0.0.40
codegen_flags: <defaults>
</compile_context>

<pallas_src>
import functools

import numpy as np
import jax
import jax.numpy as jnp
from jax import lax
from jax.experimental import pallas as pl
from jax.experimental.pallas import tpu as pltpu

_C1 = 1e-4          # k1
_C2 = 9e-4          # k2
_WIN = 11
_SIGMA = 1.5
_HALO = _WIN - 1    # 10 extra input rows/cols needed per tile
_HALO_PAD = 16      # halo rounded up to a sublane-aligned 16-row block
_CENTER = _WIN // 2 # 5


def _gaussian_1d(window_size: int, sigma: float) -> np.ndarray:
    xs = np.arange(window_size, dtype=np.float64) - (window_size - 1) / 2.0
    g = np.exp(-(xs ** 2) / (2.0 * sigma ** 2))
    return (g / g.sum()).astype(np.float32)


# 11 Gaussian taps baked into the kernel as constants (symmetric: tap[k] == tap[10-k]).
_TAPS = tuple(float(v) for v in _gaussian_1d(_WIN, _SIGMA))


def _round_up(x: int, m: int) -> int:
    return ((x + m - 1) // m) * m


def _metrics_kernel(pred_b_ref, pred_h_ref, true_b_ref, true_h_ref,
                    out_ref, pbuf, tbuf, ppbuf, ttbuf, ptbuf,
                    *, th, ho, wo, sw, n_strips, n_tiles):
    i = pl.program_id(0)
    swp = sw + 128   # strip width + lane-aligned room for the 10-col halo

    # ---- assemble haloed (th+16, W_pad) tiles and the 3 product images -------
    #   rows [0, th)        <- body block i   (global rows [i*th, (i+1)*th))
    #   rows [th, th + 16)  <- halo block     (global rows [(i+1)*th, (i+1)*th+16))
    xpb = pred_b_ref[...]
    xtb = true_b_ref[...]
    ttb = xtb * xtb
    pbuf[0:th, :] = xpb
    tbuf[0:th, :] = xtb
    ppbuf[0:th, :] = xpb * xpb
    ttbuf[0:th, :] = ttb
    ptbuf[0:th, :] = xpb * xtb

    xph = pred_h_ref[...]
    xth = true_h_ref[...]
    tth = xth * xth
    pbuf[th:th + _HALO_PAD, :] = xph
    tbuf[th:th + _HALO_PAD, :] = xth
    ppbuf[th:th + _HALO_PAD, :] = xph * xph
    ttbuf[th:th + _HALO_PAD, :] = tth
    ptbuf[th:th + _HALO_PAD, :] = xph * xth

    # ---- SNR / RSE partial sums (zero-padded rows/cols contribute nothing) ---
    bd = xtb - xpb
    tsq = jnp.sum(ttb)
    dsq = jnp.sum(bd * bd)

    # ---- SSIM: fused separable blur + pointwise math, per column strip -------
    rows_left = ho - i * th          # valid output rows in this tile (dynamic)
    ssim_sum = jnp.float32(0.0)
    for s in range(n_strips):
        c0 = s * sw                  # static, multiple of 128
        blurred = []
        for src in (pbuf, tbuf, ppbuf, ttbuf, ptbuf):
            # vertical pass: ref-sliced loads (vld) + Gaussian tap symmetry.
            acc = _TAPS[_CENTER] * src[_CENTER:_CENTER + th, c0:c0 + swp]
            for k in range(_CENTER):
                acc = acc + _TAPS[k] * (src[k:k + th, c0:c0 + swp]
                                        + src[_HALO - k:_HALO - k + th, c0:c0 + swp])
            # horizontal pass: width-multiple-of-128 slices + tap symmetry.
            res = _TAPS[_CENTER] * acc[:, _CENTER:_CENTER + sw]
            for k in range(_CENTER):
                res = res + _TAPS[k] * (acc[:, k:k + sw]
                                        + acc[:, _HALO - k:_HALO - k + sw])
            blurred.append(res)
        mu1, mu2, s11, s22, s12 = blurred

        mu1_sq = mu1 * mu1
        mu2_sq = mu2 * mu2
        mu12 = mu1 * mu2
        sig1 = s11 - mu1_sq
        sig2 = s22 - mu2_sq
        sig12 = s12 - mu12
        num = (2.0 * mu12 + _C1) * (2.0 * sig12 + _C2)
        den = (mu1_sq + mu2_sq + _C1) * (sig1 + sig2 + _C2)
        ssim_map = num * pl.reciprocal(den, approx=True)   # EUP, no VALU refinement

        # Fold the valid-region (rows < ho, cols < wo) mask into the sum.
        row_ids = lax.broadcasted_iota(jnp.int32, (th, sw), 0)
        col_ids = lax.broadcasted_iota(jnp.int32, (th, sw), 1)
        valid = (row_ids < rows_left) & (col_ids < (wo - c0))
        ssim_sum = ssim_sum + jnp.sum(jnp.where(valid, ssim_map, 0.0))

    # Lane-dense (1, 8, 128) partial-sum slab:
    #   lane 0 = ssim_sum, lane 1 = sum(true^2), lane 2 = sum(diff^2)
    lane = lax.broadcasted_iota(jnp.int32, (1, 8, 128), 2)
    out_ref[...] = (jnp.where(lane == 0, ssim_sum, 0.0)
                    + jnp.where(lane == 1, tsq, 0.0)
                    + jnp.where(lane == 2, dsq, 0.0))

    # Rows [n*th, n*th+16) appear only in the last tile's halo view: add their
    # SNR/RSE contribution exactly once there (padding rows are zero).
    @pl.when(i == n_tiles - 1)
    def _():
        hd = xth - xph
        tsq_h = jnp.sum(tth)
        dsq_h = jnp.sum(hd * hd)
        out_ref[...] = out_ref[...] + (jnp.where(lane == 1, tsq_h, 0.0)
                                       + jnp.where(lane == 2, dsq_h, 0.0))


def _pick_tile_rows(ho: int, w_pad: int, vmem_budget: int = 20 * 1024 * 1024) -> int:
    """Largest row tile (multiple of 16, <=256) whose explicit VMEM fits the budget."""
    th = 256
    while th > 16:
        # 2 inputs x 2 double buffers (body + halo) + 5 haloed scratch buffers, f32.
        explicit = (4 * th + 4 * _HALO_PAD + 5 * (th + _HALO_PAD)) * w_pad * 4
        if explicit <= vmem_budget:
            break
        th //= 2
    return max(16, min(th, _round_up(ho, 16)))


def compute_metrics_pallas(model_pred: jax.Array, model_true: jax.Array, *,
                           tile_rows: int | None = None):
    """Returns dict with 'SSIM', 'SNR', 'RSE' scalars, matching the PyTorch module.

    (The PyTorch module calls .item(); here JAX scalars are returned instead.)
    """
    assert model_pred.shape == model_true.shape and model_pred.ndim == 2
    h, w = model_pred.shape
    assert h >= _WIN and w >= _WIN, "image must be at least window size (11)"
    ho, wo = h - _HALO, w - _HALO

    # Column strips: lane-dense (multiple-of-128) output width per strip.
    sw = min(512, _round_up(wo, 128))
    n_strips = -(-wo // sw)
    w_pad = n_strips * sw + 128            # room for the last strip's 10-col halo

    # Row tiles (multiple of 16, VMEM-budgeted).
    if tile_rows is None:
        th = _pick_tile_rows(ho, w_pad)
    else:
        assert tile_rows % 16 == 0
        th = min(tile_rows, _round_up(ho, 16))
    n = -(-ho // th)                       # number of row tiles
    h_pad = n * th + _HALO_PAD             # room for the last tile's halo view

    pred = jnp.pad(model_pred.astype(jnp.float32),
                   ((0, h_pad - h), (0, w_pad - w)))
    true = jnp.pad(model_true.astype(jnp.float32),
                   ((0, h_pad - h), (0, w_pad - w)))

    kernel = functools.partial(_metrics_kernel, th=th, ho=ho, wo=wo,
                               sw=sw, n_strips=n_strips, n_tiles=n)
    halo_blk = th // 16                    # halo block stride in 16-row blocks

    parts = pl.pallas_call(
        kernel,
        out_shape=jax.ShapeDtypeStruct((n, 8, 128), jnp.float32),
        grid=(n,),
        in_specs=[
            pl.BlockSpec((th, w_pad), lambda i: (i, 0)),                          # pred body
            pl.BlockSpec((_HALO_PAD, w_pad), lambda i: ((i + 1) * halo_blk, 0)),  # pred halo
            pl.BlockSpec((th, w_pad), lambda i: (i, 0)),                          # true body
            pl.BlockSpec((_HALO_PAD, w_pad), lambda i: ((i + 1) * halo_blk, 0)),  # true halo
        ],
        out_specs=pl.BlockSpec((1, 8, 128), lambda i: (i, 0, 0)),
        scratch_shapes=[pltpu.VMEM((th + _HALO_PAD, w_pad), jnp.float32)
                        for _ in range(5)],          # pred, true, p*p, t*t, p*t (haloed)
        compiler_params=pltpu.CompilerParams(
            dimension_semantics=("parallel",),       # independent tiles -> 2 TCs on v7x
            vmem_limit_bytes=40 * 1024 * 1024,
        ),
    )(pred, pred, true, true)

    ssim_sum = jnp.sum(parts[:, 0, 0])
    sum_true_sq = jnp.sum(parts[:, 0, 1])
    sum_diff_sq = jnp.sum(parts[:, 0, 2])

    ssim = ssim_sum / float(ho * wo)
    snr = 10.0 * jnp.log10(sum_true_sq / sum_diff_sq)
    rse = jnp.sqrt(sum_diff_sq / sum_true_sq)
    return {'SSIM': ssim, 'SNR': snr, 'RSE': rse}


# ----------------------------- reference (test only) -----------------------------
def _conv_matrix(n: int, taps: np.ndarray) -> np.ndarray:
    ws = len(taps)
    m = np.zeros((n - ws + 1, n), dtype=np.float32)
    for i in range(n - ws + 1):
        m[i, i:i + ws] = taps
    return m


def _ssim_ref(pred, true):
    h, w = pred.shape
    g = _gaussian_1d(_WIN, _SIGMA)
    a = jnp.asarray(_conv_matrix(h, g))
    b = jnp.asarray(_conv_matrix(w, g).T)
    blur = lambda x: a @ x @ b
    mu1, mu2 = blur(pred), blur(true)
    s11, s22, s12 = blur(pred * pred), blur(true * true), blur(pred * true)
    mu1_sq, mu2_sq, mu12 = mu1 * mu1, mu2 * mu2, mu1 * mu2
    sig1, sig2, sig12 = s11 - mu1_sq, s22 - mu2_sq, s12 - mu12
    m = ((2 * mu12 + _C1) * (2 * sig12 + _C2)) / (
        (mu1_sq + mu2_sq + _C1) * (sig1 + sig2 + _C2))
    return jnp.mean(m)


def _check(model_pred, model_true, met):
    diff = model_true - model_pred
    st = jnp.sum(model_true ** 2)
    sd = jnp.sum(diff ** 2)
    snr_ref = 10.0 * jnp.log10(st / sd)
    rse_ref = jnp.sqrt(sd / st)
    ssim_ref = _ssim_ref(model_pred, model_true)
    assert jnp.allclose(met['SNR'], snr_ref, rtol=1e-4, atol=1e-4), (met['SNR'], snr_ref)
    assert jnp.allclose(met['RSE'], rse_ref, rtol=1e-4, atol=1e-4), (met['RSE'], rse_ref)
    # tolerance absorbs the approx-EUP reciprocal used for the SSIM divide
    assert jnp.allclose(met['SSIM'], ssim_ref, rtol=5e-3, atol=5e-3), (met['SSIM'], ssim_ref)
    assert all(bool(jnp.isfinite(v)) for v in met.values())


if __name__ == "__main__":
    key = jax.random.PRNGKey(0)

    # Case 1: small image, single row tile, single column strip.
    k1, k2 = jax.random.split(key)
    h, w = 80, 72
    t1 = jax.random.normal(k1, (h, w), dtype=jnp.float32)
    p1 = t1 + 0.1 * jax.random.normal(k2, (h, w), dtype=jnp.float32)
    met1 = compute_metrics_pallas(p1, t1)
    met1 = {k: jax.block_until_ready(v) for k, v in met1.items()}
    _check(p1, t1, met1)

    # Case 2: multiple row tiles (forced tile_rows=48), two column strips,
    # row/col masking, and real rows that live only in the last tile's halo.
    k3, k4 = jax.random.split(k2)
    h2, w2 = 154, 650
    t2 = jax.random.normal(k3, (h2, w2), dtype=jnp.float32)
    p2 = t2 + 0.1 * jax.random.normal(k4, (h2, w2), dtype=jnp.float32)
    met2 = compute_metrics_pallas(p2, t2, tile_rows=48)
    met2 = {k: jax.block_until_ready(v) for k, v in met2.items()}
    _check(p2, t2, met2)

    print("KERNEL_OK")
</pallas_src>

<mosaic_0001>
module attributes {stable_mosaic.version = 11 : i64} {
  func.func @_metrics_kernel(%arg0: i32, %arg1: memref<80x256xf32, #tpu.memory_space<vmem>>, %arg2: memref<16x256xf32, #tpu.memory_space<vmem>>, %arg3: memref<80x256xf32, #tpu.memory_space<vmem>>, %arg4: memref<16x256xf32, #tpu.memory_space<vmem>>, %arg5: memref<1x8x128xf32, #tpu.memory_space<vmem>>, %arg6: memref<96x256xf32, #tpu.memory_space<vmem>>, %arg7: memref<96x256xf32, #tpu.memory_space<vmem>>, %arg8: memref<96x256xf32, #tpu.memory_space<vmem>>, %arg9: memref<96x256xf32, #tpu.memory_space<vmem>>, %arg10: memref<96x256xf32, #tpu.memory_space<vmem>>) attributes {dimension_semantics = [#tpu.dimension_semantics<parallel>], iteration_bounds = array<i64: 1>, scalar_prefetch = 0 : i64, scratch_operands = 5 : i64, tpu.core_type = #tpu.core_type<tc>, window_params = [{transform_indices = @transform_0, window_bounds = array<i64: 80, 256>}, {transform_indices = @transform_1, window_bounds = array<i64: 16, 256>}, {transform_indices = @transform_2, window_bounds = array<i64: 80, 256>}, {transform_indices = @transform_3, window_bounds = array<i64: 16, 256>}, {transform_indices = @transform_4, window_bounds = array<i64: 1, 8, 128>}]} {
    %c0 = arith.constant 0 : index
    %c0_0 = arith.constant 0 : index
    %0 = vector.load %arg1[%c0, %c0_0] : memref<80x256xf32, #tpu.memory_space<vmem>>, vector<80x256xf32>
    %c0_1 = arith.constant 0 : index
    %c0_2 = arith.constant 0 : index
    %1 = vector.load %arg3[%c0_1, %c0_2] : memref<80x256xf32, #tpu.memory_space<vmem>>, vector<80x256xf32>
    %2 = arith.mulf %1, %1 : vector<80x256xf32>
    %c0_3 = arith.constant 0 : index
    %c0_4 = arith.constant 0 : index
    %3 = vector.load %arg6[%c0_3, %c0_4] : memref<96x256xf32, #tpu.memory_space<vmem>>, vector<80x256xf32>
    tpu.vector_store %arg6[%c0_3, %c0_4], %0 {strides = array<i32>} : memref<96x256xf32, #tpu.memory_space<vmem>>, vector<80x256xf32>,
    %c0_5 = arith.constant 0 : index
    %c0_6 = arith.constant 0 : index
    %4 = vector.load %arg7[%c0_5, %c0_6] : memref<96x256xf32, #tpu.memory_space<vmem>>, vector<80x256xf32>
    tpu.vector_store %arg7[%c0_5, %c0_6], %1 {strides = array<i32>} : memref<96x256xf32, #tpu.memory_space<vmem>>, vector<80x256xf32>,
    %5 = arith.mulf %0, %0 : vector<80x256xf32>
    %c0_7 = arith.constant 0 : index
    %c0_8 = arith.constant 0 : index
    %6 = vector.load %arg8[%c0_7, %c0_8] : memref<96x256xf32, #tpu.memory_space<vmem>>, vector<80x256xf32>
    tpu.vector_store %arg8[%c0_7, %c0_8], %5 {strides = array<i32>} : memref<96x256xf32, #tpu.memory_space<vmem>>, vector<80x256xf32>,
    %c0_9 = arith.constant 0 : index
    %c0_10 = arith.constant 0 : index
    %7 = vector.load %arg9[%c0_9, %c0_10] : memref<96x256xf32, #tpu.memory_space<vmem>>, vector<80x256xf32>
    tpu.vector_store %arg9[%c0_9, %c0_10], %2 {strides = array<i32>} : memref<96x256xf32, #tpu.memory_space<vmem>>, vector<80x256xf32>,
    %8 = arith.mulf %0, %1 : vector<80x256xf32>
    %c0_11 = arith.constant 0 : index
    %c0_12 = arith.constant 0 : index
    %9 = vector.load %arg10[%c0_11, %c0_12] : memref<96x256xf32, #tpu.memory_space<vmem>>, vector<80x256xf32>
    tpu.vector_store %arg10[%c0_11, %c0_12], %8 {strides = array<i32>} : memref<96x256xf32, #tpu.memory_space<vmem>>, vector<80x256xf32>,
    %c0_13 = arith.constant 0 : index
    %c0_14 = arith.constant 0 : index
    %10 = vector.load %arg2[%c0_13, %c0_14] : memref<16x256xf32, #tpu.memory_space<vmem>>, vector<16x256xf32>
    %c0_15 = arith.constant 0 : index
    %c0_16 = arith.constant 0 : index
    %11 = vector.load %arg4[%c0_15, %c0_16] : memref<16x256xf32, #tpu.memory_space<vmem>>, vector<16x256xf32>
    %12 = arith.mulf %11, %11 : vector<16x256xf32>
    %c80 = arith.constant 80 : index
    %c0_17 = arith.constant 0 : index
    %13 = vector.load %arg6[%c80, %c0_17] : memref<96x256xf32, #tpu.memory_space<vmem>>, vector<16x256xf32>
    tpu.vector_store %arg6[%c80, %c0_17], %10 {strides = array<i32>} : memref<96x256xf32, #tpu.memory_space<vmem>>, vector<16x256xf32>,
    %c80_18 = arith.constant 80 : index
    %c0_19 = arith.constant 0 : index
    %14 = vector.load %arg7[%c80_18, %c0_19] : memref<96x256xf32, #tpu.memory_space<vmem>>, vector<16x256xf32>
    tpu.vector_store %arg7[%c80_18, %c0_19], %11 {strides = array<i32>} : memref<96x256xf32, #tpu.memory_space<vmem>>, vector<16x256xf32>,
    %15 = arith.mulf %10, %10 : vector<16x256xf32>
    %c80_20 = arith.constant 80 : index
    %c0_21 = arith.constant 0 : index
    %16 = vector.load %arg8[%c80_20, %c0_21] : memref<96x256xf32, #tpu.memory_space<vmem>>, vector<16x256xf32>
    tpu.vector_store %arg8[%c80_20, %c0_21], %15 {strides = array<i32>} : memref<96x256xf32, #tpu.memory_space<vmem>>, vector<16x256xf32>,
    %c80_22 = arith.constant 80 : index
    %c0_23 = arith.constant 0 : index
    %17 = vector.load %arg9[%c80_22, %c0_23] : memref<96x256xf32, #tpu.memory_space<vmem>>, vector<16x256xf32>
    tpu.vector_store %arg9[%c80_22, %c0_23], %12 {strides = array<i32>} : memref<96x256xf32, #tpu.memory_space<vmem>>, vector<16x256xf32>,
    %18 = arith.mulf %10, %11 : vector<16x256xf32>
    %c80_24 = arith.constant 80 : index
    %c0_25 = arith.constant 0 : index
    %19 = vector.load %arg10[%c80_24, %c0_25] : memref<96x256xf32, #tpu.memory_space<vmem>>, vector<16x256xf32>
    tpu.vector_store %arg10[%c80_24, %c0_25], %18 {strides = array<i32>} : memref<96x256xf32, #tpu.memory_space<vmem>>, vector<16x256xf32>,
    %20 = arith.subf %1, %0 : vector<80x256xf32>
    %21 = vector.shape_cast %2 : vector<80x256xf32> to vector<1x80x256xf32>
    %cst = arith.constant dense<0.000000e+00> : vector<1xf32>
    %22 = vector.multi_reduction <add>, %21, %cst [1, 2] : vector<1x80x256xf32> to vector<1xf32>
    %23 = vector.shape_cast %22 : vector<1xf32> to vector<1x1x1xf32>
    %24 = vector.extract %23[0, 0, 0] : f32 from vector<1x1x1xf32>
    %25 = arith.mulf %20, %20 : vector<80x256xf32>
    %26 = vector.shape_cast %25 : vector<80x256xf32> to vector<1x80x256xf32>
    %cst_26 = arith.constant dense<0.000000e+00> : vector<1xf32>
    %27 = vector.multi_reduction <add>, %26, %cst_26 [1, 2] : vector<1x80x256xf32> to vector<1xf32>
    %28 = vector.shape_cast %27 : vector<1xf32> to vector<1x1x1xf32>
    %29 = vector.extract %28[0, 0, 0] : f32 from vector<1x1x1xf32>
    %c80_i32 = arith.constant 80 : i32
    %30 = arith.muli %arg0, %c80_i32 : i32
    %c70_i32 = arith.constant 70 : i32
    %31 = arith.subi %c70_i32, %30 : i32
    %c5 = arith.constant 5 : index
    %c0_27 = arith.constant 0 : index
    %32 = vector.load %arg6[%c5, %c0_27] : memref<96x256xf32, #tpu.memory_space<vmem>>, vector<80x256xf32>
    %cst_28 = arith.constant 0.266011715 : f32
    %33 = vector.broadcast %cst_28 : f32 to vector<80x256xf32>
    %34 = arith.mulf %33, %32 : vector<80x256xf32>
    %c0_29 = arith.constant 0 : index
    %c0_30 = arith.constant 0 : index
    %35 = vector.load %arg6[%c0_29, %c0_30] : memref<96x256xf32, #tpu.memory_space<vmem>>, vector<80x256xf32>
    %c10 = arith.constant 10 : index
    %c0_31 = arith.constant 0 : index
    %36 = vector.load %arg6[%c10, %c0_31] : memref<96x256xf32, #tpu.memory_space<vmem>>, vector<80x256xf32>
    %37 = arith.addf %35, %36 : vector<80x256xf32>
    %cst_32 = arith.constant 0.00102838012 : f32
    %38 = vector.broadcast %cst_32 : f32 to vector<80x256xf32>
    %39 = arith.mulf %38, %37 : vector<80x256xf32>
    %40 = arith.addf %34, %39 : vector<80x256xf32>
    %c1 = arith.constant 1 : index
    %c0_33 = arith.constant 0 : index
    %41 = vector.load %arg6[%c1, %c0_33] : memref<96x256xf32, #tpu.memory_space<vmem>>, vector<80x256xf32>
    %c9 = arith.constant 9 : index
    %c0_34 = arith.constant 0 : index
    %42 = vector.load %arg6[%c9, %c0_34] : memref<96x256xf32, #tpu.memory_space<vmem>>, vector<80x256xf32>
    %43 = arith.addf %41, %42 : vector<80x256xf32>
    %cst_35 = arith.constant 0.00759875821 : f32
    %44 = vector.broadcast %cst_35 : f32 to vector<80x256xf32>
    %45 = arith.mulf %44, %43 : vector<80x256xf32>
    %46 = arith.addf %40, %45 : vector<80x256xf32>
    %c2 = arith.constant 2 : index
    %c0_36 = arith.constant 0 : index
    %47 = vector.load %arg6[%c2, %c0_36] : memref<96x256xf32, #tpu.memory_space<vmem>>, vector<80x256xf32>
    %c8 = arith.constant 8 : index
    %c0_37 = arith.constant 0 : index
    %48 = vector.load %arg6[%c8, %c0_37] : memref<96x256xf32, #tpu.memory_space<vmem>>, vector<80x256xf32>
    %49 = arith.addf %47, %48 : vector<80x256xf32>
    %cst_38 = arith.constant 0.0360007733 : f32
    %50 = vector.broadcast %cst_38 : f32 to vector<80x256xf32>
    %51 = arith.mulf %50, %49 : vector<80x256xf32>
    %52 = arith.addf %46, %51 : vector<80x256xf32>
    %c3 = arith.constant 3 : index
    %c0_39 = arith.constant 0 : index
    %53 = vector.load %arg6[%c3, %c0_39] : memref<96x256xf32, #tpu.memory_space<vmem>>, vector<80x256xf32>
    %c7 = arith.constant 7 : index
    %c0_40 = arith.constant 0 : index
    %54 = vector.load %arg6[%c7, %c0_40] : memref<96x256xf32, #tpu.memory_space<vmem>>, vector<80x256xf32>
    %55 = arith.addf %53, %54 : vector<80x256xf32>
    %cst_41 = arith.constant 0.109360687 : f32
    %56 = vector.broadcast %cst_41 : f32 to vector<80x256xf32>
    %57 = arith.mulf %56, %55 : vector<80x256xf32>
    %58 = arith.addf %52, %57 : vector<80x256xf32>
    %c4 = arith.constant 4 : index
    %c0_42 = arith.constant 0 : index
    %59 = vector.load %arg6[%c4, %c0_42] : memref<96x256xf32, #tpu.memory_space<vmem>>, vector<80x256xf32>
    %c6 = arith.constant 6 : index
    %c0_43 = arith.constant 0 : index
    %60 = vector.load %arg6[%c6, %c0_43] : memref<96x256xf32, #tpu.memory_space<vmem>>, vector<80x256xf32>
    %61 = arith.addf %59, %60 : vector<80x256xf32>
    %cst_44 = arith.constant 0.213005543 : f32
    %62 = vector.broadcast %cst_44 : f32 to vector<80x256xf32>
    %63 = arith.mulf %62, %61 : vector<80x256xf32>
    %64 = arith.addf %58, %63 : vector<80x256xf32>
    %65 = vector.extract_strided_slice %64 {offsets = [0, 5], sizes = [80, 128], strides = [1, 1]} : vector<80x256xf32> to vector<80x128xf32>
    %cst_45 = arith.constant 0.266011715 : f32
    %66 = vector.broadcast %cst_45 : f32 to vector<80x128xf32>
    %67 = arith.mulf %66, %65 : vector<80x128xf32>
    %68 = vector.extract_strided_slice %64 {offsets = [0, 0], sizes = [80, 128], strides = [1, 1]} : vector<80x256xf32> to vector<80x128xf32>
    %69 = vector.extract_strided_slice %64 {offsets = [0, 10], sizes = [80, 128], strides = [1, 1]} : vector<80x256xf32> to vector<80x128xf32>
    %70 = arith.addf %68, %69 : vector<80x128xf32>
    %cst_46 = arith.constant 0.00102838012 : f32
    %71 = vector.broadcast %cst_46 : f32 to vector<80x128xf32>
    %72 = arith.mulf %71, %70 : vector<80x128xf32>
    %73 = arith.addf %67, %72 : vector<80x128xf32>
    %74 = vector.extract_strided_slice %64 {offsets = [0, 1], sizes = [80, 128], strides = [1, 1]} : vector<80x256xf32> to vector<80x128xf32>
    %75 = vector.extract_strided_slice %64 {offsets = [0, 9], sizes = [80, 128], strides = [1, 1]} : vector<80x256xf32> to vector<80x128xf32>
    %76 = arith.addf %74, %75 : vector<80x128xf32>
    %cst_47 = arith.constant 0.00759875821 : f32
    %77 = vector.broadcast %cst_47 : f32 to vector<80x128xf32>
    %78 = arith.mulf %77, %76 : vector<80x128xf32>
    %79 = arith.addf %73, %78 : vector<80x128xf32>
    %80 = vector.extract_strided_slice %64 {offsets = [0, 2], sizes = [80, 128], strides = [1, 1]} : vector<80x256xf32> to vector<80x128xf32>
    %81 = vector.extract_strided_slice %64 {offsets = [0, 8], sizes = [80, 128], strides = [1, 1]} : vector<80x256xf32> to vector<80x128xf32>
    %82 = arith.addf %80, %81 : vector<80x128xf32>
    %cst_48 = arith.constant 0.0360007733 : f32
    %83 = vector.broadcast %cst_48 : f32 to vector<80x128xf32>
    %84 = arith.mulf %83, %82 : vector<80x128xf32>
    %85 = arith.addf %79, %84 : vector<80x128xf32>
    %86 = vector.extract_strided_slice %64 {offsets = [0, 3], sizes = [80, 128], strides = [1, 1]} : vector<80x256xf32> to vector<80x128xf32>
    %87 = vector.extract_strided_slice %64 {offsets = [0, 7], sizes = [80, 128], strides = [1, 1]} : vector<80x256xf32> to vector<80x128xf32>
    %88 = arith.addf %86, %87 : vector<80x128xf32>
    %cst_49 = arith.constant 0.109360687 : f32
    %89 = vector.broadcast %cst_49 : f32 to vector<80x128xf32>
    %90 = arith.mulf %89, %88 : vector<80x128xf32>
    %91 = arith.addf %85, %90 : vector<80x128xf32>
    %92 = vector.extract_strided_slice %64 {offsets = [0, 4], sizes = [80, 128], strides = [1, 1]} : vector<80x256xf32> to vector<80x128xf32>
    %93 = vector.extract_strided_slice %64 {offsets = [0, 6], sizes = [80, 128], strides = [1, 1]} : vector<80x256xf32> to vector<80x128xf32>
    %94 = arith.addf %92, %93 : vector<80x128xf32>
    %cst_50 = arith.constant 0.213005543 : f32
    %95 = vector.broadcast %cst_50 : f32 to vector<80x128xf32>
    %96 = arith.mulf %95, %94 : vector<80x128xf32>
    %97 = arith.addf %91, %96 : vector<80x128xf32>
    %c5_51 = arith.constant 5 : index
    %c0_52 = arith.constant 0 : index
    %98 = vector.load %arg7[%c5_51, %c0_52] : memref<96x256xf32, #tpu.memory_space<vmem>>, vector<80x256xf32>
    %cst_53 = arith.constant 0.266011715 : f32
    %99 = vector.broadcast %cst_53 : f32 to vector<80x256xf32>
    %100 = arith.mulf %99, %98 : vector<80x256xf32>
    %c0_54 = arith.constant 0 : index
    %c0_55 = arith.constant 0 : index
    %101 = vector.load %arg7[%c0_54, %c0_55] : memref<96x256xf32, #tpu.memory_space<vmem>>, vector<80x256xf32>
    %c10_56 = arith.constant 10 : index
    %c0_57 = arith.constant 0 : index
    %102 = vector.load %arg7[%c10_56, %c0_57] : memref<96x256xf32, #tpu.memory_space<vmem>>, vector<80x256xf32>
    %103 = arith.addf %101, %102 : vector<80x256xf32>
    %cst_58 = arith.constant 0.00102838012 : f32
    %104 = vector.broadcast %cst_58 : f32 to vector<80x256xf32>
    %105 = arith.mulf %104, %103 : vector<80x256xf32>
    %106 = arith.addf %100, %105 : vector<80x256xf32>
    %c1_59 = arith.constant 1 : index
    %c0_60 = arith.constant 0 : index
    %107 = vector.load %arg7[%c1_59, %c0_60] : memref<96x256xf32, #tpu.memory_space<vmem>>, vector<80x256xf32>
    %c9_61 = arith.constant 9 : index
    %c0_62 = arith.constant 0 : index
    %108 = vector.load %arg7[%c9_61, %c0_62] : memref<96x256xf32, #tpu.memory_space<vmem>>, vector<80x256xf32>
    %109 = arith.addf %107, %108 : vector<80x256xf32>
    %cst_63 = arith.constant 0.00759875821 : f32
    %110 = vector.broadcast %cst_63 : f32 to vector<80x256xf32>
    %111 = arith.mulf %110, %109 : vector<80x256xf32>
    %112 = arith.addf %106, %111 : vector<80x256xf32>
    %c2_64 = arith.constant 2 : index
    %c0_65 = arith.constant 0 : index
    %113 = vector.load %arg7[%c2_64, %c0_65] : memref<96x256xf32, #tpu.memory_space<vmem>>, vector<80x256xf32>
    %c8_66 = arith.constant 8 : index
    %c0_67 = arith.constant 0 : index
    %114 = vector.load %arg7[%c8_66, %c0_67] : memref<96x256xf32, #tpu.memory_space<vmem>>, vector<80x256xf32>
    %115 = arith.addf %113, %114 : vector<80x256xf32>
    %cst_68 = arith.constant 0.0360007733 : f32
    %116 = vector.broadcast %cst_68 : f32 to vector<80x256xf32>
    %117 = arith.mulf %116, %115 : vector<80x256xf32>
    %118 = arith.addf %112, %117 : vector<80x256xf32>
    %c3_69 = arith.constant 3 : index
    %c0_70 = arith.constant 0 : index
    %119 = vector.load %arg7[%c3_69, %c0_70] : memref<96x256xf32, #tpu.memory_space<vmem>>, vector<80x256xf32>
    %c7_71 = arith.constant 7 : index
    %c0_72 = arith.constant 0 : index
    %120 = vector.load %arg7[%c7_71, %c0_72] : memref<96x256xf32, #tpu.memory_space<vmem>>, vector<80x256xf32>
    %121 = arith.addf %119, %120 : vector<80x256xf32>
    %cst_73 = arith.constant 0.109360687 : f32
    %122 = vector.broadcast %cst_73 : f32 to vector<80x256xf32>
    %123 = arith.mulf %122, %121 : vector<80x256xf32>
    %124 = arith.addf %118, %123 : vector<80x256xf32>
    %c4_74 = arith.constant 4 : index
    %c0_75 = arith.constant 0 : index
    %125 = vector.load %arg7[%c4_74, %c0_75] : memref<96x256xf32, #tpu.memory_space<vmem>>, vector<80x256xf32>
    %c6_76 = arith.constant 6 : index
    %c0_77 = arith.constant 0 : index
    %126 = vector.load %arg7[%c6_76, %c0_77] : memref<96x256xf32, #tpu.memory_space<vmem>>, vector<80x256xf32>
    %127 = arith.addf %125, %126 : vector<80x256xf32>
    %cst_78 = arith.constant 0.213005543 : f32
    %128 = vector.broadcast %cst_78 : f32 to vector<80x256xf32>
    %129 = arith.mulf %128, %127 : vector<80x256xf32>
    %130 = arith.addf %124, %129 : vector<80x256xf32>
    %131 = vector.extract_strided_slice %130 {offsets = [0, 5], sizes = [80, 128], strides = [1, 1]} : vector<80x256xf32> to vector<80x128xf32>
    %cst_79 = arith.constant 0.266011715 : f32
    %132 = vector.broadcast %cst_79 : f32 to vector<80x128xf32>
    %133 = arith.mulf %132, %131 : vector<80x128xf32>
    %134 = vector.extract_strided_slice %130 {offsets = [0, 0], sizes = [80, 128], strides = [1, 1]} : vector<80x256xf32> to vector<80x128xf32>
    %135 = vector.extract_strided_slice %130 {offsets = [0, 10], sizes = [80, 128], strides = [1, 1]} : vector<80x256xf32> to vector<80x128xf32>
    %136 = arith.addf %134, %135 : vector<80x128xf32>
    %cst_80 = arith.constant 0.00102838012 : f32
    %137 = vector.broadcast %cst_80 : f32 to vector<80x128xf32>
    %138 = arith.mulf %137, %136 : vector<80x128xf32>
    %139 = arith.addf %133, %138 : vector<80x128xf32>
    %140 = vector.extract_strided_slice %130 {offsets = [0, 1], sizes = [80, 128], strides = [1, 1]} : vector<80x256xf32> to vector<80x128xf32>
    %141 = vector.extract_strided_slice %130 {offsets = [0, 9], sizes = [80, 128], strides = [1, 1]} : vector<80x256xf32> to vector<80x128xf32>
    %142 = arith.addf %140, %141 : vector<80x128xf32>
    %cst_81 = arith.constant 0.00759875821 : f32
    %143 = vector.broadcast %cst_81 : f32 to vector<80x128xf32>
    %144 = arith.mulf %143, %142 : vector<80x128xf32>
    %145 = arith.addf %139, %144 : vector<80x128xf32>
    %146 = vector.extract_strided_slice %130 {offsets = [0, 2], sizes = [80, 128], strides = [1, 1]} : vector<80x256xf32> to vector<80x128xf32>
    %147 = vector.extract_strided_slice %130 {offsets = [0, 8], sizes = [80, 128], strides = [1, 1]} : vector<80x256xf32> to vector<80x128xf32>
    %148 = arith.addf %146, %147 : vector<80x128xf32>
    %cst_82 = arith.constant 0.0360007733 : f32
    %149 = vector.broadcast %cst_82 : f32 to vector<80x128xf32>
    %150 = arith.mulf %149, %148 : vector<80x128xf32>
    %151 = arith.addf %145, %150 : vector<80x128xf32>
    %152 = vector.extract_strided_slice %130 {offsets = [0, 3], sizes = [80, 128], strides = [1, 1]} : vector<80x256xf32> to vector<80x128xf32>
    %153 = vector.extract_strided_slice %130 {offsets = [0, 7], sizes = [80, 128], strides = [1, 1]} : vector<80x256xf32> to vector<80x128xf32>
    %154 = arith.addf %152, %153 : vector<80x128xf32>
    %cst_83 = arith.constant 0.109360687 : f32
    %155 = vector.broadcast %cst_83 : f32 to vector<80x128xf32>
    %156 = arith.mulf %155, %154 : vector<80x128xf32>
    %157 = arith.addf %151, %156 : vector<80x128xf32>
    %158 = vector.extract_strided_slice %130 {offsets = [0, 4], sizes = [80, 128], strides = [1, 1]} : vector<80x256xf32> to vector<80x128xf32>
    %159 = vector.extract_strided_slice %130 {offsets = [0, 6], sizes = [80, 128], strides = [1, 1]} : vector<80x256xf32> to vector<80x128xf32>
    %160 = arith.addf %158, %159 : vector<80x128xf32>
    %cst_84 = arith.constant 0.213005543 : f32
    %161 = vector.broadcast %cst_84 : f32 to vector<80x128xf32>
    %162 = arith.mulf %161, %160 : vector<80x128xf32>
    %163 = arith.addf %157, %162 : vector<80x128xf32>
    %c5_85 = arith.constant 5 : index
    %c0_86 = arith.constant 0 : index
    %164 = vector.load %arg8[%c5_85, %c0_86] : memref<96x256xf32, #tpu.memory_space<vmem>>, vector<80x256xf32>
    %cst_87 = arith.constant 0.266011715 : f32
    %165 = vector.broadcast %cst_87 : f32 to vector<80x256xf32>
    %166 = arith.mulf %165, %164 : vector<80x256xf32>
    %c0_88 = arith.constant 0 : index
    %c0_89 = arith.constant 0 : index
    %167 = vector.load %arg8[%c0_88, %c0_89] : memref<96x256xf32, #tpu.memory_space<vmem>>, vector<80x256xf32>
    %c10_90 = arith.constant 10 : index
    %c0_91 = arith.constant 0 : index
    %168 = vector.load %arg8[%c10_90, %c0_91] : memref<96x256xf32, #tpu.memory_space<vmem>>, vector<80x256xf32>
    %169 = arith.addf %167, %168 : vector<80x256xf32>
    %cst_92 = arith.constant 0.00102838012 : f32
    %170 = vector.broadcast %cst_92 : f32 to vector<80x256xf32>
    %171 = arith.mulf %170, %169 : vector<80x256xf32>
    %172 = arith.addf %166, %171 : vector<80x256xf32>
    %c1_93 = arith.constant 1 : index
    %c0_94 = arith.constant 0 : index
    %173 = vector.load %arg8[%c1_93, %c0_94] : memref<96x256xf32, #tpu.memory_space<vmem>>, vector<80x256xf32>
    %c9_95 = arith.constant 9 : index
    %c0_96 = arith.constant 0 : index
    %174 = vector.load %arg8[%c9_95, %c0_96] : memref<96x256xf32, #tpu.memory_space<vmem>>, vector<80x256xf32>
    %175 = arith.addf %173, %174 : vector<80x256xf32>
    %cst_97 = arith.constant 0.00759875821 : f32
    %176 = vector.broadcast %cst_97 : f32 to vector<80x256xf32>
    %177 = arith.mulf %176, %175 : vector<80x256xf32>
    %178 = arith.addf %172, %177 : vector<80x256xf32>
    %c2_98 = arith.constant 2 : index
    %c0_99 = arith.constant 0 : index
    %179 = vector.load %arg8[%c2_98, %c0_99] : memref<96x256xf32, #tpu.memory_space<vmem>>, vector<80x256xf32>
    %c8_100 = arith.constant 8 : index
    %c0_101 = arith.constant 0 : index
    %180 = vector.load %arg8[%c8_100, %c0_101] : memref<96x256xf32, #tpu.memory_space<vmem>>, vector<80x256xf32>
    %181 = arith.addf %179, %180 : vector<80x256xf32>
    %cst_102 = arith.constant 0.0360007733 : f32
    %182 = vector.broadcast %cst_102 : f32 to vector<80x256xf32>
    %183 = arith.mulf %182, %181 : vector<80x256xf32>
    %184 = arith.addf %178, %183 : vector<80x256xf32>
    %c3_103 = arith.constant 3 : index
    %c0_104 = arith.constant 0 : index
    %185 = vector.load %arg8[%c3_103, %c0_104] : memref<96x256xf32, #tpu.memory_space<vmem>>, vector<80x256xf32>
    %c7_105 = arith.constant 7 : index
    %c0_106 = arith.constant 0 : index
    %186 = vector.load %arg8[%c7_105, %c0_106] : memref<96x256xf32, #tpu.memory_space<vmem>>, vector<80x256xf32>
    %187 = arith.addf %185, %186 : vector<80x256xf32>
    %cst_107 = arith.constant 0.109360687 : f32
    %188 = vector.broadcast %cst_107 : f32 to vector<80x256xf32>
    %189 = arith.mulf %188, %187 : vector<80x256xf32>
    %190 = arith.addf %184, %189 : vector<80x256xf32>
    %c4_108 = arith.constant 4 : index
    %c0_109 = arith.constant 0 : index
    %191 = vector.load %arg8[%c4_108, %c0_109] : memref<96x256xf32, #tpu.memory_space<vmem>>, vector<80x256xf32>
    %c6_110 = arith.constant 6 : index
    %c0_111 = arith.constant 0 : index
    %192 = vector.load %arg8[%c6_110, %c0_111] : memref<96x256xf32, #tpu.memory_space<vmem>>, vector<80x256xf32>
    %193 = arith.addf %191, %192 : vector<80x256xf32>
    %cst_112 = arith.constant 0.213005543 : f32
    %194 = vector.broadcast %cst_112 : f32 to vector<80x256xf32>
    %195 = arith.mulf %194, %193 : vector<80x256xf32>
    %196 = arith.addf %190, %195 : vector<80x256xf32>
    %197 = vector.extract_strided_slice %196 {offsets = [0, 5], sizes = [80, 128], strides = [1, 1]} : vector<80x256xf32> to vector<80x128xf32>
    %cst_113 = arith.constant 0.266011715 : f32
    %198 = vector.broadcast %cst_113 : f32 to vector<80x128xf32>
    %199 = arith.mulf %198, %197 : vector<80x128xf32>
    %200 = vector.extract_strided_slice %196 {offsets = [0, 0], sizes = [80, 128], strides = [1, 1]} : vector<80x256xf32> to vector<80x128xf32>
    %201 = vector.extract_strided_slice %196 {offsets = [0, 10], sizes = [80, 128], strides = [1, 1]} : vector<80x256xf32> to vector<80x128xf32>
    %202 = arith.addf %200, %201 : vector<80x128xf32>
    %cst_114 = arith.constant 0.00102838012 : f32
    %203 = vector.broadcast %cst_114 : f32 to vector<80x128xf32>
    %204 = arith.mulf %203, %202 : vector<80x128xf32>
    %205 = arith.addf %199, %204 : vector<80x128xf32>
    %206 = vector.extract_strided_slice %196 {offsets = [0, 1], sizes = [80, 128], strides = [1, 1]} : vector<80x256xf32> to vector<80x128xf32>
    %207 = vector.extract_strided_slice %196 {offsets = [0, 9], sizes = [80, 128], strides = [1, 1]} : vector<80x256xf32> to vector<80x128xf32>
    %208 = arith.addf %206, %207 : vector<80x128xf32>
    %cst_115 = arith.constant 0.00759875821 : f32
    %209 = vector.broadcast %cst_115 : f32 to vector<80x128xf32>
    %210 = arith.mulf %209, %208 : vector<80x128xf32>
    %211 = arith.addf %205, %210 : vector<80x128xf32>
    %212 = vector.extract_strided_slice %196 {offsets = [0, 2], sizes = [80, 128], strides = [1, 1]} : vector<80x256xf32> to vector<80x128xf32>
    %213 = vector.extract_strided_slice %196 {offsets = [0, 8], sizes = [80, 128], strides = [1, 1]} : vector<80x256xf32> to vector<80x128xf32>
    %214 = arith.addf %212, %213 : vector<80x128xf32>
    %cst_116 = arith.constant 0.0360007733 : f32
    %215 = vector.broadcast %cst_116 : f32 to vector<80x128xf32>
    %216 = arith.mulf %215, %214 : vector<80x128xf32>
    %217 = arith.addf %211, %216 : vector<80x128xf32>
    %218 = vector.extract_strided_slice %196 {offsets = [0, 3], sizes = [80, 128], strides = [1, 1]} : vector<80x256xf32> to vector<80x128xf32>
    %219 = vector.extract_strided_slice %196 {offsets = [0, 7], sizes = [80, 128], strides = [1, 1]} : vector<80x256xf32> to vector<80x128xf32>
    %220 = arith.addf %218, %219 : vector<80x128xf32>
    %cst_117 = arith.constant 0.109360687 : f32
    %221 = vector.broadcast %cst_117 : f32 to vector<80x128xf32>
    %222 = arith.mulf %221, %220 : vector<80x128xf32>
    %223 = arith.addf %217, %222 : vector<80x128xf32>
    %224 = vector.extract_strided_slice %196 {offsets = [0, 4], sizes = [80, 128], strides = [1, 1]} : vector<80x256xf32> to vector<80x128xf32>
    %225 = vector.extract_strided_slice %196 {offsets = [0, 6], sizes = [80, 128], strides = [1, 1]} : vector<80x256xf32> to vector<80x128xf32>
    %226 = arith.addf %224, %225 : vector<80x128xf32>
    %cst_118 = arith.constant 0.213005543 : f32
    %227 = vector.broadcast %cst_118 : f32 to vector<80x128xf32>
    %228 = arith.mulf %227, %226 : vector<80x128xf32>
    %229 = arith.addf %223, %228 : vector<80x128xf32>
    %c5_119 = arith.constant 5 : index
    %c0_120 = arith.constant 0 : index
    %230 = vector.load %arg9[%c5_119, %c0_120] : memref<96x256xf32, #tpu.memory_space<vmem>>, vector<80x256xf32>
    %cst_121 = arith.constant 0.266011715 : f32
    %231 = vector.broadcast %cst_121 : f32 to vector<80x256xf32>
    %232 = arith.mulf %231, %230 : vector<80x256xf32>
    %c0_122 = arith.constant 0 : index
    %c0_123 = arith.constant 0 : index
    %233 = vector.load %arg9[%c0_122, %c0_123] : memref<96x256xf32, #tpu.memory_space<vmem>>, vector<80x256xf32>
    %c10_124 = arith.constant 10 : index
    %c0_125 = arith.constant 0 : index
    %234 = vector.load %arg9[%c10_124, %c0_125] : memref<96x256xf32, #tpu.memory_space<vmem>>, vector<80x256xf32>
    %235 = arith.addf %233, %234 : vector<80x256xf32>
    %cst_126 = arith.constant 0.00102838012 : f32
    %236 = vector.broadcast %cst_126 : f32 to vector<80x256xf32>
    %237 = arith.mulf %236, %235 : vector<80x256xf32>
    %238 = arith.addf %232, %237 : vector<80x256xf32>
    %c1_127 = arith.constant 1 : index
    %c0_128 = arith.constant 0 : index
    %239 = vector.load %arg9[%c1_127, %c0_128] : memref<96x256xf32, #tpu.memory_space<vmem>>, vector<80x256xf32>
    %c9_129 = arith.constant 9 : index
    %c0_130 = arith.constant 0 : index
    %240 = vector.load %arg9[%c9_129, %c0_130] : memref<96x256xf32, #tpu.memory_space<vmem>>, vector<80x256xf32>
    %241 = arith.addf %239, %240 : vector<80x256xf32>
    %cst_131 = arith.constant 0.00759875821 : f32
    %242 = vector.broadcast %cst_131 : f32 to vector<80x256xf32>
    %243 = arith.mulf %242, %241 : vector<80x256xf32>
    %244 = arith.addf %238, %243 : vector<80x256xf32>
    %c2_132 = arith.constant 2 : index
    %c0_133 = arith.constant 0 : index
    %245 = vector.load %arg9[%c2_132, %c0_133] : memref<96x256xf32, #tpu.memory_space<vmem>>, vector<80x256xf32>
    %c8_134 = arith.constant 8 : index
    %c0_135 = arith.constant 0 : index
    %246 = vector.load %arg9[%c8_134, %c0_135] : memref<96x256xf32, #tpu.memory_space<vmem>>, vector<80x256xf32>
    %247 = arith.addf %245, %246 : vector<80x256xf32>
    %cst_136 = arith.constant 0.0360007733 : f32
    %248 = vector.broadcast %cst_136 : f32 to vector<80x256xf32>
    %249 = arith.mulf %248, %247 : vector<80x256xf32>
    %250 = arith.addf %244, %249 : vector<80x256xf32>
    %c3_137 = arith.constant 3 : index
    %c0_138 = arith.constant 0 : index
    %251 = vector.load %arg9[%c3_137, %c0_138] : memref<96x256xf32, #tpu.memory_space<vmem>>, vector<80x256xf32>
    %c7_139 = arith.constant 7 : index
    %c0_140 = arith.constant 0 : index
    %252 = vector.load %arg9[%c7_139, %c0_140] : memref<96x256xf32, #tpu.memory_space<vmem>>, vector<80x256xf32>
    %253 = arith.addf %251, %252 : vector<80x256xf32>
    %cst_141 = arith.constant 0.109360687 : f32
    %254 = vector.broadcast %cst_141 : f32 to vector<80x256xf32>
    %255 = arith.mulf %254, %253 : vector<80x256xf32>
    %256 = arith.addf %250, %255 : vector<80x256xf32>
    %c4_142 = arith.constant 4 : index
    %c0_143 = arith.constant 0 : index
    %257 = vector.load %arg9[%c4_142, %c0_143] : memref<96x256xf32, #tpu.memory_space<vmem>>, vector<80x256xf32>
    %c6_144 = arith.constant 6 : index
    %c0_145 = arith.constant 0 : index
    %258 = vector.load %arg9[%c6_144, %c0_145] : memref<96x256xf32, #tpu.memory_space<vmem>>, vector<80x256xf32>
    %259 = arith.addf %257, %258 : vector<80x256xf32>
    %cst_146 = arith.constant 0.213005543 : f32
    %260 = vector.broadcast %cst_146 : f32 to vector<80x256xf32>
    %261 = arith.mulf %260, %259 : vector<80x256xf32>
    %262 = arith.addf %256, %261 : vector<80x256xf32>
    %263 = vector.extract_strided_slice %262 {offsets = [0, 5], sizes = [80, 128], strides = [1, 1]} : vector<80x256xf32> to vector<80x128xf32>
    %cst_147 = arith.constant 0.266011715 : f32
    %264 = vector.broadcast %cst_147 : f32 to vector<80x128xf32>
    %265 = arith.mulf %264, %263 : vector<80x128xf32>
    %266 = vector.extract_strided_slice %262 {offsets = [0, 0], sizes = [80, 128], strides = [1, 1]} : vector<80x256xf32> to vector<80x128xf32>
    %267 = vector.extract_strided_slice %262 {offsets = [0, 10], sizes = [80, 128], strides = [1, 1]} : vector<80x256xf32> to vector<80x128xf32>
    %268 = arith.addf %266, %267 : vector<80x128xf32>
    %cst_148 = arith.constant 0.00102838012 : f32
    %269 = vector.broadcast %cst_148 : f32 to vector<80x128xf32>
    %270 = arith.mulf %269, %268 : vector<80x128xf32>
    %271 = arith.addf %265, %270 : vector<80x128xf32>
    %272 = vector.extract_strided_slice %262 {offsets = [0, 1], sizes = [80, 128], strides = [1, 1]} : vector<80x256xf32> to vector<80x128xf32>
    %273 = vector.extract_strided_slice %262 {offsets = [0, 9], sizes = [80, 128], strides = [1, 1]} : vector<80x256xf32> to vector<80x128xf32>
    %274 = arith.addf %272, %273 : vector<80x128xf32>
    %cst_149 = arith.constant 0.00759875821 : f32
    %275 = vector.broadcast %cst_149 : f32 to vector<80x128xf32>
    %276 = arith.mulf %275, %274 : vector<80x128xf32>
    %277 = arith.addf %271, %276 : vector<80x128xf32>
    %278 = vector.extract_strided_slice %262 {offsets = [0, 2], sizes = [80, 128], strides = [1, 1]} : vector<80x256xf32> to vector<80x128xf32>
    %279 = vector.extract_strided_slice %262 {offsets = [0, 8], sizes = [80, 128], strides = [1, 1]} : vector<80x256xf32> to vector<80x128xf32>
    %280 = arith.addf %278, %279 : vector<80x128xf32>
    %cst_150 = arith.constant 0.0360007733 : f32
    %281 = vector.broadcast %cst_150 : f32 to vector<80x128xf32>
    %282 = arith.mulf %281, %280 : vector<80x128xf32>
    %283 = arith.addf %277, %282 : vector<80x128xf32>
    %284 = vector.extract_strided_slice %262 {offsets = [0, 3], sizes = [80, 128], strides = [1, 1]} : vector<80x256xf32> to vector<80x128xf32>
    %285 = vector.extract_strided_slice %262 {offsets = [0, 7], sizes = [80, 128], strides = [1, 1]} : vector<80x256xf32> to vector<80x128xf32>
    %286 = arith.addf %284, %285 : vector<80x128xf32>
    %cst_151 = arith.constant 0.109360687 : f32
    %287 = vector.broadcast %cst_151 : f32 to vector<80x128xf32>
    %288 = arith.mulf %287, %286 : vector<80x128xf32>
    %289 = arith.addf %283, %288 : vector<80x128xf32>
    %290 = vector.extract_strided_slice %262 {offsets = [0, 4], sizes = [80, 128], strides = [1, 1]} : vector<80x256xf32> to vector<80x128xf32>
    %291 = vector.extract_strided_slice %262 {offsets = [0, 6], sizes = [80, 128], strides = [1, 1]} : vector<80x256xf32> to vector<80x128xf32>
    %292 = arith.addf %290, %291 : vector<80x128xf32>
    %cst_152 = arith.constant 0.213005543 : f32
    %293 = vector.broadcast %cst_152 : f32 to vector<80x128xf32>
    %294 = arith.mulf %293, %292 : vector<80x128xf32>
    %295 = arith.addf %289, %294 : vector<80x128xf32>
    %c5_153 = arith.constant 5 : index
    %c0_154 = arith.constant 0 : index
    %296 = vector.load %arg10[%c5_153, %c0_154] : memref<96x256xf32, #tpu.memory_space<vmem>>, vector<80x256xf32>
    %cst_155 = arith.constant 0.266011715 : f32
    %297 = vector.broadcast %cst_155 : f32 to vector<80x256xf32>
    %298 = arith.mulf %297, %296 : vector<80x256xf32>
    %c0_156 = arith.constant 0 : index
    %c0_157 = arith.constant 0 : index
    %299 = vector.load %arg10[%c0_156, %c0_157] : memref<96x256xf32, #tpu.memory_space<vmem>>, vector<80x256xf32>
    %c10_158 = arith.constant 10 : index
    %c0_159 = arith.constant 0 : index
    %300 = vector.load %arg10[%c10_158, %c0_159] : memref<96x256xf32, #tpu.memory_space<vmem>>, vector<80x256xf32>
    %301 = arith.addf %299, %300 : vector<80x256xf32>
    %cst_160 = arith.constant 0.00102838012 : f32
    %302 = vector.broadcast %cst_160 : f32 to vector<80x256xf32>
    %303 = arith.mulf %302, %301 : vector<80x256xf32>
    %304 = arith.addf %298, %303 : vector<80x256xf32>
    %c1_161 = arith.constant 1 : index
    %c0_162 = arith.constant 0 : index
    %305 = vector.load %arg10[%c1_161, %c0_162] : memref<96x256xf32, #tpu.memory_space<vmem>>, vector<80x256xf32>
    %c9_163 = arith.constant 9 : index
    %c0_164 = arith.constant 0 : index
    %306 = vector.load %arg10[%c9_163, %c0_164] : memref<96x256xf32, #tpu.memory_space<vmem>>, vector<80x256xf32>
    %307 = arith.addf %305, %306 : vector<80x256xf32>
    %cst_165 = arith.constant 0.00759875821 : f32
    %308 = vector.broadcast %cst_165 : f32 to vector<80x256xf32>
    %309 = arith.mulf %308, %307 : vector<80x256xf32>
    %310 = arith.addf %304, %309 : vector<80x256xf32>
    %c2_166 = arith.constant 2 : index
    %c0_167 = arith.constant 0 : index
    %311 = vector.load %arg10[%c2_166, %c0_167] : memref<96x256xf32, #tpu.memory_space<vmem>>, vector<80x256xf32>
    %c8_168 = arith.constant 8 : index
    %c0_169 = arith.constant 0 : index
    %312 = vector.load %arg10[%c8_168, %c0_169] : memref<96x256xf32, #tpu.memory_space<vmem>>, vector<80x256xf32>
    %313 = arith.addf %311, %312 : vector<80x256xf32>
    %cst_170 = arith.constant 0.0360007733 : f32
    %314 = vector.broadcast %cst_170 : f32 to vector<80x256xf32>
    %315 = arith.mulf %314, %313 : vector<80x256xf32>
    %316 = arith.addf %310, %315 : vector<80x256xf32>
    %c3_171 = arith.constant 3 : index
    %c0_172 = arith.constant 0 : index
    %317 = vector.load %arg10[%c3_171, %c0_172] : memref<96x256xf32, #tpu.memory_space<vmem>>, vector<80x256xf32>
    %c7_173 = arith.constant 7 : index
    %c0_174 = arith.constant 0 : index
    %318 = vector.load %arg10[%c7_173, %c0_174] : memref<96x256xf32, #tpu.memory_space<vmem>>, vector<80x256xf32>
    %319 = arith.addf %317, %318 : vector<80x256xf32>
    %cst_175 = arith.constant 0.109360687 : f32
    %320 = vector.broadcast %cst_175 : f32 to vector<80x256xf32>
    %321 = arith.mulf %320, %319 : vector<80x256xf32>
    %322 = arith.addf %316, %321 : vector<80x256xf32>
    %c4_176 = arith.constant 4 : index
    %c0_177 = arith.constant 0 : index
    %323 = vector.load %arg10[%c4_176, %c0_177] : memref<96x256xf32, #tpu.memory_space<vmem>>, vector<80x256xf32>
    %c6_178 = arith.constant 6 : index
    %c0_179 = arith.constant 0 : index
    %324 = vector.load %arg10[%c6_178, %c0_179] : memref<96x256xf32, #tpu.memory_space<vmem>>, vector<80x256xf32>
    %325 = arith.addf %323, %324 : vector<80x256xf32>
    %cst_180 = arith.constant 0.213005543 : f32
    %326 = vector.broadcast %cst_180 : f32 to vector<80x256xf32>
    %327 = arith.mulf %326, %325 : vector<80x256xf32>
    %328 = arith.addf %322, %327 : vector<80x256xf32>
    %329 = vector.extract_strided_slice %328 {offsets = [0, 5], sizes = [80, 128], strides = [1, 1]} : vector<80x256xf32> to vector<80x128xf32>
    %cst_181 = arith.constant 0.266011715 : f32
    %330 = vector.broadcast %cst_181 : f32 to vector<80x128xf32>
    %331 = arith.mulf %330, %329 : vector<80x128xf32>
    %332 = vector.extract_strided_slice %328 {offsets = [0, 0], sizes = [80, 128], strides = [1, 1]} : vector<80x256xf32> to vector<80x128xf32>
    %333 = vector.extract_strided_slice %328 {offsets = [0, 10], sizes = [80, 128], strides = [1, 1]} : vector<80x256xf32> to vector<80x128xf32>
    %334 = arith.addf %332, %333 : vector<80x128xf32>
    %cst_182 = arith.constant 0.00102838012 : f32
    %335 = vector.broadcast %cst_182 : f32 to vector<80x128xf32>
    %336 = arith.mulf %335, %334 : vector<80x128xf32>
    %337 = arith.addf %331, %336 : vector<80x128xf32>
    %338 = vector.extract_strided_slice %328 {offsets = [0, 1], sizes = [80, 128], strides = [1, 1]} : vector<80x256xf32> to vector<80x128xf32>
    %339 = vector.extract_strided_slice %328 {offsets = [0, 9], sizes = [80, 128], strides = [1, 1]} : vector<80x256xf32> to vector<80x128xf32>
    %340 = arith.addf %338, %339 : vector<80x128xf32>
    %cst_183 = arith.constant 0.00759875821 : f32
    %341 = vector.broadcast %cst_183 : f32 to vector<80x128xf32>
    %342 = arith.mulf %341, %340 : vector<80x128xf32>
    %343 = arith.addf %337, %342 : vector<80x128xf32>
    %344 = vector.extract_strided_slice %328 {offsets = [0, 2], sizes = [80, 128], strides = [1, 1]} : vector<80x256xf32> to vector<80x128xf32>
    %345 = vector.extract_strided_slice %328 {offsets = [0, 8], sizes = [80, 128], strides = [1, 1]} : vector<80x256xf32> to vector<80x128xf32>
    %346 = arith.addf %344, %345 : vector<80x128xf32>
    %cst_184 = arith.constant 0.0360007733 : f32
    %347 = vector.broadcast %cst_184 : f32 to vector<80x128xf32>
    %348 = arith.mulf %347, %346 : vector<80x128xf32>
    %349 = arith.addf %343, %348 : vector<80x128xf32>
    %350 = vector.extract_strided_slice %328 {offsets = [0, 3], sizes = [80, 128], strides = [1, 1]} : vector<80x256xf32> to vector<80x128xf32>
    %351 = vector.extract_strided_slice %328 {offsets = [0, 7], sizes = [80, 128], strides = [1, 1]} : vector<80x256xf32> to vector<80x128xf32>
    %352 = arith.addf %350, %351 : vector<80x128xf32>
    %cst_185 = arith.constant 0.109360687 : f32
    %353 = vector.broadcast %cst_185 : f32 to vector<80x128xf32>
    %354 = arith.mulf %353, %352 : vector<80x128xf32>
    %355 = arith.addf %349, %354 : vector<80x128xf32>
    %356 = vector.extract_strided_slice %328 {offsets = [0, 4], sizes = [80, 128], strides = [1, 1]} : vector<80x256xf32> to vector<80x128xf32>
    %357 = vector.extract_strided_slice %328 {offsets = [0, 6], sizes = [80, 128], strides = [1, 1]} : vector<80x256xf32> to vector<80x128xf32>
    %358 = arith.addf %356, %357 : vector<80x128xf32>
    %cst_186 = arith.constant 0.213005543 : f32
    %359 = vector.broadcast %cst_186 : f32 to vector<80x128xf32>
    %360 = arith.mulf %359, %358 : vector<80x128xf32>
    %361 = arith.addf %355, %360 : vector<80x128xf32>
    %362 = arith.mulf %97, %97 : vector<80x128xf32>
    %363 = arith.mulf %163, %163 : vector<80x128xf32>
    %364 = arith.mulf %97, %163 : vector<80x128xf32>
    %365 = arith.subf %229, %362 : vector<80x128xf32>
    %366 = arith.subf %295, %363 : vector<80x128xf32>
    %367 = arith.subf %361, %364 : vector<80x128xf32>
    %cst_187 = arith.constant 2.000000e+00 : f32
    %368 = vector.broadcast %cst_187 : f32 to vector<80x128xf32>
    %369 = arith.mulf %368, %364 : vector<80x128xf32>
    %cst_188 = arith.constant 9.99999974E-5 : f32
    %370 = vector.broadcast %cst_188 : f32 to vector<80x128xf32>
    %371 = arith.addf %369, %370 : vector<80x128xf32>
    %cst_189 = arith.constant 2.000000e+00 : f32
    %372 = vector.broadcast %cst_189 : f32 to vector<80x128xf32>
    %373 = arith.mulf %372, %367 : vector<80x128xf32>
    %cst_190 = arith.constant 8.99999984E-4 : f32
    %374 = vector.broadcast %cst_190 : f32 to vector<80x128xf32>
    %375 = arith.addf %373, %374 : vector<80x128xf32>
    %376 = arith.mulf %371, %375 : vector<80x128xf32>
    %377 = arith.addf %362, %363 : vector<80x128xf32>
    %cst_191 = arith.constant 9.99999974E-5 : f32
    %378 = vector.broadcast %cst_191 : f32 to vector<80x128xf32>
    %379 = arith.addf %377, %378 : vector<80x128xf32>
    %380 = arith.addf %365, %366 : vector<80x128xf32>
    %cst_192 = arith.constant 8.99999984E-4 : f32
    %381 = vector.broadcast %cst_192 : f32 to vector<80x128xf32>
    %382 = arith.addf %380, %381 : vector<80x128xf32>
    %383 = arith.mulf %379, %382 : vector<80x128xf32>
    %384 = tpu.reciprocal %383 {approx = true} : vector<80x128xf32> -> vector<80x128xf32>
    %385 = arith.mulf %376, %384 : vector<80x128xf32>
    %386 = tpu.iota {dimensions = array<i32: 0>} : vector<80x128xi32>
    %387 = tpu.iota {dimensions = array<i32: 1>} : vector<80x128xi32>
    %388 = vector.broadcast %31 : i32 to vector<80x128xi32>
    %389 = arith.cmpi slt, %386, %388 : vector<80x128xi32>
    %c62_i32 = arith.constant 62 : i32
    %390 = vector.broadcast %c62_i32 : i32 to vector<80x128xi32>
    %391 = arith.cmpi slt, %387, %390 : vector<80x128xi32>
    %392 = arith.andi %389, %391 : vector<80x128xi1>
    %cst_193 = arith.constant 0.000000e+00 : f32
    %393 = vector.broadcast %cst_193 : f32 to vector<80x128xf32>
    %394 = arith.select %392, %385, %393 : vector<80x128xi1>, vector<80x128xf32>
    %395 = vector.shape_cast %394 : vector<80x128xf32> to vector<1x80x128xf32>
    %cst_194 = arith.constant dense<0.000000e+00> : vector<1xf32>
    %396 = vector.multi_reduction <add>, %395, %cst_194 [1, 2] : vector<1x80x128xf32> to vector<1xf32>
    %397 = vector.shape_cast %396 : vector<1xf32> to vector<1x1x1xf32>
    %398 = vector.extract %397[0, 0, 0] : f32 from vector<1x1x1xf32>
    %cst_195 = arith.constant 0.000000e+00 : f32
    %399 = arith.addf %cst_195, %398 : f32
    %400 = tpu.iota {dimensions = array<i32: 2>} : vector<1x8x128xi32>
    %c0_i32 = arith.constant 0 : i32
    %401 = vector.broadcast %c0_i32 : i32 to vector<1x8x128xi32>
    %402 = arith.cmpi eq, %400, %401 : vector<1x8x128xi32>
    %cst_196 = arith.constant 0.000000e+00 : f32
    %403 = vector.broadcast %399 : f32 to vector<1x8x128xf32>
    %404 = vector.broadcast %cst_196 : f32 to vector<1x8x128xf32>
    %405 = arith.select %402, %403, %404 : vector<1x8x128xi1>, vector<1x8x128xf32>
    %c1_i32 = arith.constant 1 : i32
    %406 = vector.broadcast %c1_i32 : i32 to vector<1x8x128xi32>
    %407 = arith.cmpi eq, %400, %406 : vector<1x8x128xi32>
    %cst_197 = arith.constant 0.000000e+00 : f32
    %408 = vector.broadcast %24 : f32 to vector<1x8x128xf32>
    %409 = vector.broadcast %cst_197 : f32 to vector<1x8x128xf32>
    %410 = arith.select %407, %408, %409 : vector<1x8x128xi1>, vector<1x8x128xf32>
    %411 = arith.addf %405, %410 : vector<1x8x128xf32>
    %c2_i32 = arith.constant 2 : i32
    %412 = vector.broadcast %c2_i32 : i32 to vector<1x8x128xi32>
    %413 = arith.cmpi eq, %400, %412 : vector<1x8x128xi32>
    %cst_198 = arith.constant 0.000000e+00 : f32
    %414 = vector.broadcast %29 : f32 to vector<1x8x128xf32>
    %415 = vector.broadcast %cst_198 : f32 to vector<1x8x128xf32>
    %416 = arith.select %413, %414, %415 : vector<1x8x128xi1>, vector<1x8x128xf32>
    %417 = arith.addf %411, %416 : vector<1x8x128xf32>
    %c0_199 = arith.constant 0 : index
    %c0_200 = arith.constant 0 : index
    %c0_201 = arith.constant 0 : index
    %418 = vector.load %arg5[%c0_199, %c0_200, %c0_201] : memref<1x8x128xf32, #tpu.memory_space<vmem>>, vector<1x8x128xf32>
    tpu.vector_store %arg5[%c0_199, %c0_200, %c0_201], %417 {strides = array<i32>} : memref<1x8x128xf32, #tpu.memory_space<vmem>>, vector<1x8x128xf32>,
    %c0_i32_202 = arith.constant 0 : i32
    %419 = arith.cmpi eq, %arg0, %c0_i32_202 : i32
    %420 = arith.extui %419 : i1 to i32
    %c0_i32_203 = arith.constant 0 : i32
    %421 = arith.cmpi ne, %420, %c0_i32_203 : i32
    scf.if %421 {
      %422 = arith.subf %11, %10 : vector<16x256xf32>
      %423 = vector.shape_cast %12 : vector<16x256xf32> to vector<1x16x256xf32>
      %cst_204 = arith.constant dense<0.000000e+00> : vector<1xf32>
      %424 = vector.multi_reduction <add>, %423, %cst_204 [1, 2] : vector<1x16x256xf32> to vector<1xf32>
      %425 = vector.shape_cast %424 : vector<1xf32> to vector<1x1x1xf32>
      %426 = vector.extract %425[0, 0, 0] : f32 from vector<1x1x1xf32>
      %427 = arith.mulf %422, %422 : vector<16x256xf32>
      %428 = vector.shape_cast %427 : vector<16x256xf32> to vector<1x16x256xf32>
      %cst_205 = arith.constant dense<0.000000e+00> : vector<1xf32>
      %429 = vector.multi_reduction <add>, %428, %cst_205 [1, 2] : vector<1x16x256xf32> to vector<1xf32>
      %430 = vector.shape_cast %429 : vector<1xf32> to vector<1x1x1xf32>
      %431 = vector.extract %430[0, 0, 0] : f32 from vector<1x1x1xf32>
      %c0_206 = arith.constant 0 : index
      %c0_207 = arith.constant 0 : index
      %c0_208 = arith.constant 0 : index
      %432 = vector.load %arg5[%c0_206, %c0_207, %c0_208] : memref<1x8x128xf32, #tpu.memory_space<vmem>>, vector<1x8x128xf32>
      %c1_i32_209 = arith.constant 1 : i32
      %433 = vector.broadcast %c1_i32_209 : i32 to vector<1x8x128xi32>
      %434 = arith.cmpi eq, %400, %433 : vector<1x8x128xi32>
      %cst_210 = arith.constant 0.000000e+00 : f32
      %435 = vector.broadcast %426 : f32 to vector<1x8x128xf32>
      %436 = vector.broadcast %cst_210 : f32 to vector<1x8x128xf32>
      %437 = arith.select %434, %435, %436 : vector<1x8x128xi1>, vector<1x8x128xf32>
      %c2_i32_211 = arith.constant 2 : i32
      %438 = vector.broadcast %c2_i32_211 : i32 to vector<1x8x128xi32>
      %439 = arith.cmpi eq, %400, %438 : vector<1x8x128xi32>
      %cst_212 = arith.constant 0.000000e+00 : f32
      %440 = vector.broadcast %431 : f32 to vector<1x8x128xf32>
      %441 = vector.broadcast %cst_212 : f32 to vector<1x8x128xf32>
      %442 = arith.select %439, %440, %441 : vector<1x8x128xi1>, vector<1x8x128xf32>
      %443 = arith.addf %437, %442 : vector<1x8x128xf32>
      %444 = arith.addf %432, %443 : vector<1x8x128xf32>
      %c0_213 = arith.constant 0 : index
      %c0_214 = arith.constant 0 : index
      %c0_215 = arith.constant 0 : index
      %445 = vector.load %arg5[%c0_213, %c0_214, %c0_215] : memref<1x8x128xf32, #tpu.memory_space<vmem>>, vector<1x8x128xf32>
      tpu.vector_store %arg5[%c0_213, %c0_214, %c0_215], %444 {strides = array<i32>} : memref<1x8x128xf32, #tpu.memory_space<vmem>>, vector<1x8x128xf32>,
    } else {
    }
    return
  }
  func.func @transform_0(%arg0: i32) -> (i32, i32) {
    %c0_i32 = arith.constant 0 : i32
    %c0_i32_0 = arith.constant 0 : i32
    return %arg0, %c0_i32 : i32, i32
  }
  func.func @transform_1(%arg0: i32) -> (i32, i32) {
    %c1_i32 = arith.constant 1 : i32
    %0 = arith.addi %arg0, %c1_i32 : i32
    %c5_i32 = arith.constant 5 : i32
    %1 = arith.muli %0, %c5_i32 : i32
    %c0_i32 = arith.constant 0 : i32
    %c0_i32_0 = arith.constant 0 : i32
    return %1, %c0_i32 : i32, i32
  }
  func.func @transform_2(%arg0: i32) -> (i32, i32) {
    %c0_i32 = arith.constant 0 : i32
    %c0_i32_0 = arith.constant 0 : i32
    return %arg0, %c0_i32 : i32, i32
  }
  func.func @transform_3(%arg0: i32) -> (i32, i32) {
    %c1_i32 = arith.constant 1 : i32
    %0 = arith.addi %arg0, %c1_i32 : i32
    %c5_i32 = arith.constant 5 : i32
    %1 = arith.muli %0, %c5_i32 : i32
    %c0_i32 = arith.constant 0 : i32
    %c0_i32_0 = arith.constant 0 : i32
    return %1, %c0_i32 : i32, i32
  }
  func.func @transform_4(%arg0: i32) -> (i32, i32, i32) {
    %c0_i32 = arith.constant 0 : i32
    %c0_i32_0 = arith.constant 0 : i32
    %c0_i32_1 = arith.constant 0 : i32
    return %arg0, %c0_i32, %c0_i32_0 : i32, i32, i32
  }
}

</mosaic_0001>

<llo_original>
// kernel: tpu_custom_call.1
$region0: #{tpu_custom_call.1}
  #allocation0 [shape = 'u32[]', space=smem, size = 0x4, offset = 0x4, fixed_abs, tag = 'smem constant byte address 0x4 - core index']
  #allocation1 [shape = 'u32[144,128]{1,0:T(1,128)}', space=vmem, size = 0x12000, scoped, tag = 'internal scratch']
  #allocation2 [shape = 'f32[96,256]{1,0:T(8,128)}', space=vmem, size = 0x18000, scoped, tag = 'scratch operand']
  #allocation3 [shape = 'f32[96,256]{1,0:T(8,128)}', space=vmem, size = 0x18000, scoped, tag = 'scratch operand']
  #allocation4 [shape = 'f32[96,256]{1,0:T(8,128)}', space=vmem, size = 0x18000, scoped, tag = 'scratch operand']
  #allocation5 [shape = 'f32[96,256]{1,0:T(8,128)}', space=vmem, size = 0x18000, scoped, tag = 'scratch operand']
  #allocation6 [shape = 'f32[96,256]{1,0:T(8,128)}', space=vmem, size = 0x18000, scoped, tag = 'scratch operand']
  %s0 = inlined_call_operand.hbm [shape: f32[96,256], index: 0, kind: input, shape index: {}]
  %s1 = inlined_call_operand.hbm [shape: f32[96,256], index: 1, kind: input, shape index: {}]
  %s2 = inlined_call_operand.hbm [shape: f32[96,256], index: 2, kind: input, shape index: {}]
  %s3 = inlined_call_operand.hbm [shape: f32[96,256], index: 3, kind: input, shape index: {}]
  %s4 = inlined_call_operand.hbm [shape: f32[1,8,128], index: 4, kind: output, shape index: {}]
  %s5 = sld [smem:[#allocation0]]
  $region46: #{tpu_custom_call.1} parent=0
    _
  %s7 = ssub.s32 1, %s5
  %s8 = scalar_select 0, %s7, %s5
  $region1: #{tpu_custom_call.1} parent=0
    #allocation7 [shape = 'u8[81920]{0}', space=vmem, size = 0x14000, scoped, tag = 'input window, operand 0, single buffered']
    #allocation8 [shape = 's32[1]{0}', space=sflag, size = 0x4, scoped, tag = 'scoped memory for tpu_custom_call.1']
    #allocation9 [shape = 's32[1]{0}', space=sflag, size = 0x4, scoped, tag = 'scoped memory for tpu_custom_call.1']
    #allocation10 [shape = 'u8[16384]{0}', space=vmem, size = 0x4000, scoped, tag = 'input window, operand 1, single buffered']
    #allocation11 [shape = 's32[1]{0}', space=sflag, size = 0x4, scoped, tag = 'scoped memory for tpu_custom_call.1']
    #allocation12 [shape = 'u8[81920]{0}', space=vmem, size = 0x14000, scoped, tag = 'input window, operand 2, single buffered']
    #allocation13 [shape = 'u8[16384]{0}', space=vmem, size = 0x4000, scoped, tag = 'input window, operand 3, single buffered']
    #allocation14 [shape = 's32[1]{0}', space=sflag, size = 0x4, scoped, tag = 'scoped memory for tpu_custom_call.1']
    #allocation15 [shape = 'u8[4096]{0}', space=vmem, size = 0x1000, scoped, tag = 'output window, operand 0, single buffered']
    %9 = vsyncpa [#allocation8], 0
    %10 = vsyncpa [#allocation11], 0
    %11 = vsyncpa [#allocation14], 0
    %12 = vsyncpa [#allocation9], 0
    // Predicated region
    $region2: #{tpu_custom_call.1} parent=1 // pred_check
      _
    $region3: #{tpu_custom_call.1} parent=1 // pred_check_branch
      %14 = sbr.rel (0) target = $region5
    $region4: #{tpu_custom_call.1} parent=1 // pred_region
      %s16 = ssub.s32 2560, 2560
      %17 = vsyncadd [#allocation8], %s16
      %s18 = sshll.u32 [#allocation7], 4
      %s19 = int_to_ptr.vmem [resolvable:$true] %s18
      %24 = dma.hbm_to_vmem [thread:$0]  %s0, 2560, %s19, [#allocation8], 256, 256, 16
    $region5: #{tpu_custom_call.1} parent=1 // pred_fallthru
      _
    // Predicated region
    $region6: #{tpu_custom_call.1} parent=1 // pred_check
      _
    $region7: #{tpu_custom_call.1} parent=1 // pred_check_branch
      %26 = sbr.rel (0) target = $region9
    $region8: #{tpu_custom_call.1} parent=1 // pred_region
      %s27 = sadd.s32 0, 1
      %s28 = smul.u32 %s27, 5
      %s29 = smul.u32 2, %s28
      %s31 = ssub.s32 512, 512
      %32 = vsyncadd [#allocation11], %s31
      %s33 = smul.addr %s29, 2
      %s34 = smul.addr %s33, 128
      %s35 = scalar_lea.hbm %s1, %s34
      %s36 = sshll.u32 [#allocation10], 4
      %s37 = int_to_ptr.vmem [resolvable:$true] %s36
      %42 = dma.hbm_to_vmem [thread:$0]  %s35, 512, %s37, [#allocation11], 256, 256, 16
    $region9: #{tpu_custom_call.1} parent=1 // pred_fallthru
      _
    // Predicated region
    $region10: #{tpu_custom_call.1} parent=1 // pred_check
      _
    $region11: #{tpu_custom_call.1} parent=1 // pred_check_branch
      %44 = sbr.rel (0) target = $region13
    $region12: #{tpu_custom_call.1} parent=1 // pred_region
      %s46 = ssub.s32 2560, 2560
      %47 = vsyncadd [#allocation11], %s46
      %s48 = sshll.u32 [#allocation12], 4
      %s49 = int_to_ptr.vmem [resolvable:$true] %s48
      %54 = dma.hbm_to_vmem [thread:$0]  %s2, 2560, %s49, [#allocation11], 256, 256, 16
    $region13: #{tpu_custom_call.1} parent=1 // pred_fallthru
      _
    // Predicated region
    $region14: #{tpu_custom_call.1} parent=1 // pred_check
      _
    $region15: #{tpu_custom_call.1} parent=1 // pred_check_branch
      %56 = sbr.rel (0) target = $region17
    $region16: #{tpu_custom_call.1} parent=1 // pred_region
      %s57 = sadd.s32 0, 1
      %s58 = smul.u32 %s57, 5
      %s59 = smul.u32 2, %s58
      %s61 = ssub.s32 512, 512
      %62 = vsyncadd [#allocation14], %s61
      %s63 = smul.addr %s59, 2
      %s64 = smul.addr %s63, 128
      %s65 = scalar_lea.hbm %s3, %s64
      %s66 = sshll.u32 [#allocation13], 4
      %s67 = int_to_ptr.vmem [resolvable:$true] %s66
      %72 = dma.hbm_to_vmem [thread:$0]  %s65, 512, %s67, [#allocation14], 256, 256, 16
    $region17: #{tpu_custom_call.1} parent=1 // pred_fallthru
      _
    // Predicated region
    $region18: #{tpu_custom_call.1} parent=1 // pred_check
      _
    $region19: #{tpu_custom_call.1} parent=1 // pred_check_branch
      %74 = sbr.rel (0) target = $region21
    $region20: #{tpu_custom_call.1} parent=1 // pred_region
      %75 = dma.done [#allocation8], 2560
    $region21: #{tpu_custom_call.1} parent=1 // pred_fallthru
      _
    // Predicated region
    $region22: #{tpu_custom_call.1} parent=1 // pred_check
      _
    $region23: #{tpu_custom_call.1} parent=1 // pred_check_branch
      %77 = sbr.rel (0) target = $region25
    $region24: #{tpu_custom_call.1} parent=1 // pred_region
      %78 = dma.done [#allocation11], 512
    $region25: #{tpu_custom_call.1} parent=1 // pred_fallthru
      _
    // Predicated region
    $region26: #{tpu_custom_call.1} parent=1 // pred_check
      _
    $region27: #{tpu_custom_call.1} parent=1 // pred_check_branch
      %80 = sbr.rel (0) target = $region29
    $region28: #{tpu_custom_call.1} parent=1 // pred_region
      %81 = dma.done [#allocation11], 2560
    $region29: #{tpu_custom_call.1} parent=1 // pred_fallthru
      _
    // Predicated region
    $region30: #{tpu_custom_call.1} parent=1 // pred_check
      _
    $region31: #{tpu_custom_call.1} parent=1 // pred_check_branch
      %83 = sbr.rel (0) target = $region33
    $region32: #{tpu_custom_call.1} parent=1 // pred_region
      %84 = dma.done [#allocation14], 512
    $region33: #{tpu_custom_call.1} parent=1 // pred_fallthru
      _
    %s85 = sadd.s32 0, 1
    %s86 = smul.u32 %s85, 5
    %s87 = smul.u32 2, %s86
    %s88 = sadd.s32 0, 1
    %s89 = smul.u32 %s88, 5
    %s90 = smul.u32 2, %s89
    %v91 = vld [vmem:[#allocation7] sm:$0xff]
    %v92 = vld [vmem:[#allocation7 + $0x8] sm:$0xff]
    %v93 = vld [vmem:[#allocation7 + $0x10] sm:$0xff]
    %v94 = vld [vmem:[#allocation7 + $0x18] sm:$0xff]
    %v95 = vld [vmem:[#allocation7 + $0x20] sm:$0xff]
    %v96 = vld [vmem:[#allocation7 + $0x28] sm:$0xff]
    %v97 = vld [vmem:[#allocation7 + $0x30] sm:$0xff]
    %v98 = vld [vmem:[#allocation7 + $0x38] sm:$0xff]
    %v99 = vld [vmem:[#allocation7 + $0x40] sm:$0xff]
    %v100 = vld [vmem:[#allocation7 + $0x48] sm:$0xff]
    %v101 = vld [vmem:[#allocation7 + $0x50] sm:$0xff]
    %v102 = vld [vmem:[#allocation7 + $0x58] sm:$0xff]
    %v103 = vld [vmem:[#allocation7 + $0x60] sm:$0xff]
    %v104 = vld [vmem:[#allocation7 + $0x68] sm:$0xff]
    %v105 = vld [vmem:[#allocation7 + $0x70] sm:$0xff]
    %v106 = vld [vmem:[#allocation7 + $0x78] sm:$0xff]
    %v107 = vld [vmem:[#allocation7 + $0x80] sm:$0xff]
    %v108 = vld [vmem:[#allocation7 + $0x88] sm:$0xff]
    %v109 = vld [vmem:[#allocation7 + $0x90] sm:$0xff]
    %v110 = vld [vmem:[#allocation7 + $0x98] sm:$0xff]
    %v111 = vld [vmem:[#allocation12] sm:$0xff]
    %v112 = vld [vmem:[#allocation12 + $0x8] sm:$0xff]
    %v113 = vld [vmem:[#allocation12 + $0x10] sm:$0xff]
    %v114 = vld [vmem:[#allocation12 + $0x18] sm:$0xff]
    %v115 = vld [vmem:[#allocation12 + $0x20] sm:$0xff]
    %v116 = vld [vmem:[#allocation12 + $0x28] sm:$0xff]
    %v117 = vld [vmem:[#allocation12 + $0x30] sm:$0xff]
    %v118 = vld [vmem:[#allocation12 + $0x38] sm:$0xff]
    %v119 = vld [vmem:[#allocation12 + $0x40] sm:$0xff]
    %v120 = vld [vmem:[#allocation12 + $0x48] sm:$0xff]
    %v121 = vld [vmem:[#allocation12 + $0x50] sm:$0xff]
    %v122 = vld [vmem:[#allocation12 + $0x58] sm:$0xff]
    %v123 = vld [vmem:[#allocation12 + $0x60] sm:$0xff]
    %v124 = vld [vmem:[#allocation12 + $0x68] sm:$0xff]
    %v125 = vld [vmem:[#allocation12 + $0x70] sm:$0xff]
    %v126 = vld [vmem:[#allocation12 + $0x78] sm:$0xff]
    %v127 = vld [vmem:[#allocation12 + $0x80] sm:$0xff]
    %v128 = vld [vmem:[#allocation12 + $0x88] sm:$0xff]
    %v129 = vld [vmem:[#allocation12 + $0x90] sm:$0xff]
    %v130 = vld [vmem:[#allocation12 + $0x98] sm:$0xff]
    %v131 = vmul.f32 %v111, %v111
    %v132 = vmul.f32 %v112, %v112
    %v133 = vmul.f32 %v113, %v113
    %v134 = vmul.f32 %v114, %v114
    %v135 = vmul.f32 %v115, %v115
    %v136 = vmul.f32 %v116, %v116
    %v137 = vmul.f32 %v117, %v117
    %v138 = vmul.f32 %v118, %v118
    %v139 = vmul.f32 %v119, %v119
    %v140 = vmul.f32 %v120, %v120
    %v141 = vmul.f32 %v121, %v121
    %v142 = vmul.f32 %v122, %v122
    %v143 = vmul.f32 %v123, %v123
    %v144 = vmul.f32 %v124, %v124
    %v145 = vmul.f32 %v125, %v125
    %v146 = vmul.f32 %v126, %v126
    %v147 = vmul.f32 %v127, %v127
    %v148 = vmul.f32 %v128, %v128
    %v149 = vmul.f32 %v129, %v129
    %v150 = vmul.f32 %v130, %v130
    %151 = vst [vmem:[#allocation2] sm:$0xff] %v91
    %152 = vst [vmem:[#allocation2 + $0x8] sm:$0xff] %v92
    %153 = vst [vmem:[#allocation2 + $0x10] sm:$0xff] %v93
    %154 = vst [vmem:[#allocation2 + $0x18] sm:$0xff] %v94
    %155 = vst [vmem:[#allocation2 + $0x20] sm:$0xff] %v95
    %156 = vst [vmem:[#allocation2 + $0x28] sm:$0xff] %v96
    %157 = vst [vmem:[#allocation2 + $0x30] sm:$0xff] %v97
    %158 = vst [vmem:[#allocation2 + $0x38] sm:$0xff] %v98
    %159 = vst [vmem:[#allocation2 + $0x40] sm:$0xff] %v99
    %160 = vst [vmem:[#allocation2 + $0x48] sm:$0xff] %v100
    %161 = vst [vmem:[#allocation2 + $0x50] sm:$0xff] %v101
    %162 = vst [vmem:[#allocation2 + $0x58] sm:$0xff] %v102
    %163 = vst [vmem:[#allocation2 + $0x60] sm:$0xff] %v103
    %164 = vst [vmem:[#allocation2 + $0x68] sm:$0xff] %v104
    %165 = vst [vmem:[#allocation2 + $0x70] sm:$0xff] %v105
    %166 = vst [vmem:[#allocation2 + $0x78] sm:$0xff] %v106
    %167 = vst [vmem:[#allocation2 + $0x80] sm:$0xff] %v107
    %168 = vst [vmem:[#allocation2 + $0x88] sm:$0xff] %v108
    %169 = vst [vmem:[#allocation2 + $0x90] sm:$0xff] %v109
    %170 = vst [vmem:[#allocation2 + $0x98] sm:$0xff] %v110
    %171 = vst [vmem:[#allocation3] sm:$0xff] %v111
    %172 = vst [vmem:[#allocation3 + $0x8] sm:$0xff] %v112
    %173 = vst [vmem:[#allocation3 + $0x10] sm:$0xff] %v113
    %174 = vst [vmem:[#allocation3 + $0x18] sm:$0xff] %v114
    %175 = vst [vmem:[#allocation3 + $0x20] sm:$0xff] %v115
    %176 = vst [vmem:[#allocation3 + $0x28] sm:$0xff] %v116
    %177 = vst [vmem:[#allocation3 + $0x30] sm:$0xff] %v117
    %178 = vst [vmem:[#allocation3 + $0x38] sm:$0xff] %v118
    %179 = vst [vmem:[#allocation3 + $0x40] sm:$0xff] %v119
    %180 = vst [vmem:[#allocation3 + $0x48] sm:$0xff] %v120
    %181 = vst [vmem:[#allocation3 + $0x50] sm:$0xff] %v121
    %182 = vst [vmem:[#allocation3 + $0x58] sm:$0xff] %v122
    %183 = vst [vmem:[#allocation3 + $0x60] sm:$0xff] %v123
    %184 = vst [vmem:[#allocation3 + $0x68] sm:$0xff] %v124
    %185 = vst [vmem:[#allocation3 + $0x70] sm:$0xff] %v125
    %186 = vst [vmem:[#allocation3 + $0x78] sm:$0xff] %v126
    %187 = vst [vmem:[#allocation3 + $0x80] sm:$0xff] %v127
    %188 = vst [vmem:[#allocation3 + $0x88] sm:$0xff] %v128
    %189 = vst [vmem:[#allocation3 + $0x90] sm:$0xff] %v129
    %190 = vst [vmem:[#allocation3 + $0x98] sm:$0xff] %v130
    %v191 = vmul.f32 %v91, %v91
    %v192 = vmul.f32 %v92, %v92
    %v193 = vmul.f32 %v93, %v93
    %v194 = vmul.f32 %v94, %v94
    %v195 = vmul.f32 %v95, %v95
    %v196 = vmul.f32 %v96, %v96
    %v197 = vmul.f32 %v97, %v97
    %v198 = vmul.f32 %v98, %v98
    %v199 = vmul.f32 %v99, %v99
    %v200 = vmul.f32 %v100, %v100
    %v201 = vmul.f32 %v101, %v101
    %v202 = vmul.f32 %v102, %v102
    %v203 = vmul.f32 %v103, %v103
    %v204 = vmul.f32 %v104, %v104
    %v205 = vmul.f32 %v105, %v105
    %v206 = vmul.f32 %v106, %v106
    %v207 = vmul.f32 %v107, %v107
    %v208 = vmul.f32 %v108, %v108
    %v209 = vmul.f32 %v109, %v109
    %v210 = vmul.f32 %v110, %v110
    %211 = vst [vmem:[#allocation4] sm:$0xff] %v191
    %212 = vst [vmem:[#allocation4 + $0x8] sm:$0xff] %v192
    %213 = vst [vmem:[#allocation4 + $0x10] sm:$0xff] %v193
    %214 = vst [vmem:[#allocation4 + $0x18] sm:$0xff] %v194
    %215 = vst [vmem:[#allocation4 + $0x20] sm:$0xff] %v195
    %216 = vst [vmem:[#allocation4 + $0x28] sm:$0xff] %v196
    %217 = vst [vmem:[#allocation4 + $0x30] sm:$0xff] %v197
    %218 = vst [vmem:[#allocation4 + $0x38] sm:$0xff] %v198
    %219 = vst [vmem:[#allocation4 + $0x40] sm:$0xff] %v199
    %220 = vst [vmem:[#allocation4 + $0x48] sm:$0xff] %v200
    %221 = vst [vmem:[#allocation4 + $0x50] sm:$0xff] %v201
    %222 = vst [vmem:[#allocation4 + $0x58] sm:$0xff] %v202
    %223 = vst [vmem:[#allocation4 + $0x60] sm:$0xff] %v203
    %224 = vst [vmem:[#allocation4 + $0x68] sm:$0xff] %v204
    %225 = vst [vmem:[#allocation4 + $0x70] sm:$0xff] %v205
    %226 = vst [vmem:[#allocation4 + $0x78] sm:$0xff] %v206
    %227 = vst [vmem:[#allocation4 + $0x80] sm:$0xff] %v207
    %228 = vst [vmem:[#allocation4 + $0x88] sm:$0xff] %v208
    %229 = vst [vmem:[#allocation4 + $0x90] sm:$0xff] %v209
    %230 = vst [vmem:[#allocation4 + $0x98] sm:$0xff] %v210
    %231 = vst [vmem:[#allocation5] sm:$0xff] %v131
    %232 = vst [vmem:[#allocation5 + $0x8] sm:$0xff] %v132
    %233 = vst [vmem:[#allocation5 + $0x10] sm:$0xff] %v133
    %234 = vst [vmem:[#allocation5 + $0x18] sm:$0xff] %v134
    %235 = vst [vmem:[#allocation5 + $0x20] sm:$0xff] %v135
    %236 = vst [vmem:[#allocation5 + $0x28] sm:$0xff] %v136
    %237 = vst [vmem:[#allocation5 + $0x30] sm:$0xff] %v137
    %238 = vst [vmem:[#allocation5 + $0x38] sm:$0xff] %v138
    %239 = vst [vmem:[#allocation5 + $0x40] sm:$0xff] %v139
    %240 = vst [vmem:[#allocation5 + $0x48] sm:$0xff] %v140
    %241 = vst [vmem:[#allocation5 + $0x50] sm:$0xff] %v141
    %242 = vst [vmem:[#allocation5 + $0x58] sm:$0xff] %v142
    %243 = vst [vmem:[#allocation5 + $0x60] sm:$0xff] %v143
    %244 = vst [vmem:[#allocation5 + $0x68] sm:$0xff] %v144
    %245 = vst [vmem:[#allocation5 + $0x70] sm:$0xff] %v145
    %246 = vst [vmem:[#allocation5 + $0x78] sm:$0xff] %v146
    %247 = vst [vmem:[#allocation5 + $0x80] sm:$0xff] %v147
    %248 = vst [vmem:[#allocation5 + $0x88] sm:$0xff] %v148
    %249 = vst [vmem:[#allocation5 + $0x90] sm:$0xff] %v149
    %250 = vst [vmem:[#allocation5 + $0x98] sm:$0xff] %v150
    %v251 = vmul.f32 %v91, %v111
    %v252 = vmul.f32 %v92, %v112
    %v253 = vmul.f32 %v93, %v113
    %v254 = vmul.f32 %v94, %v114
    %v255 = vmul.f32 %v95, %v115
    %v256 = vmul.f32 %v96, %v116
    %v257 = vmul.f32 %v97, %v117
    %v258 = vmul.f32 %v98, %v118
    %v259 = vmul.f32 %v99, %v119
    %v260 = vmul.f32 %v100, %v120
    %v261 = vmul.f32 %v101, %v121
    %v262 = vmul.f32 %v102, %v122
    %v263 = vmul.f32 %v103, %v123
    %v264 = vmul.f32 %v104, %v124
    %v265 = vmul.f32 %v105, %v125
    %v266 = vmul.f32 %v106, %v126
    %v267 = vmul.f32 %v107, %v127
    %v268 = vmul.f32 %v108, %v128
    %v269 = vmul.f32 %v109, %v129
    %v270 = vmul.f32 %v110, %v130
    %271 = vst [vmem:[#allocation6] sm:$0xff] %v251
    %272 = vst [vmem:[#allocation6 + $0x8] sm:$0xff] %v252
    %273 = vst [vmem:[#allocation6 + $0x10] sm:$0xff] %v253
    %274 = vst [vmem:[#allocation6 + $0x18] sm:$0xff] %v254
    %275 = vst [vmem:[#allocation6 + $0x20] sm:$0xff] %v255
    %276 = vst [vmem:[#allocation6 + $0x28] sm:$0xff] %v256
    %277 = vst [vmem:[#allocation6 + $0x30] sm:$0xff] %v257
    %278 = vst [vmem:[#allocation6 + $0x38] sm:$0xff] %v258
    %279 = vst [vmem:[#allocation6 + $0x40] sm:$0xff] %v259
    %280 = vst [vmem:[#allocation6 + $0x48] sm:$0xff] %v260
    %281 = vst [vmem:[#allocation6 + $0x50] sm:$0xff] %v261
    %282 = vst [vmem:[#allocation6 + $0x58] sm:$0xff] %v262
    %283 = vst [vmem:[#allocation6 + $0x60] sm:$0xff] %v263
    %284 = vst [vmem:[#allocation6 + $0x68] sm:$0xff] %v264
    %285 = vst [vmem:[#allocation6 + $0x70] sm:$0xff] %v265
    %286 = vst [vmem:[#allocation6 + $0x78] sm:$0xff] %v266
    %287 = vst [vmem:[#allocation6 + $0x80] sm:$0xff] %v267
    %288 = vst [vmem:[#allocation6 + $0x88] sm:$0xff] %v268
    %289 = vst [vmem:[#allocation6 + $0x90] sm:$0xff] %v269
    %290 = vst [vmem:[#allocation6 + $0x98] sm:$0xff] %v270
    %v291 = vld [vmem:[#allocation10] sm:$0xff]
    %v292 = vld [vmem:[#allocation10 + $0x8] sm:$0xff]
    %v293 = vld [vmem:[#allocation10 + $0x10] sm:$0xff]
    %v294 = vld [vmem:[#allocation10 + $0x18] sm:$0xff]
    %v295 = vld [vmem:[#allocation13] sm:$0xff]
    %v296 = vld [vmem:[#allocation13 + $0x8] sm:$0xff]
    %v297 = vld [vmem:[#allocation13 + $0x10] sm:$0xff]
    %v298 = vld [vmem:[#allocation13 + $0x18] sm:$0xff]
    %v299 = vmul.f32 %v295, %v295
    %v300 = vmul.f32 %v296, %v296
    %v301 = vmul.f32 %v297, %v297
    %v302 = vmul.f32 %v298, %v298
    %303 = vst [vmem:[#allocation2 + $0xa0] sm:$0xff] %v291
    %304 = vst [vmem:[#allocation2 + $0xa8] sm:$0xff] %v292
    %305 = vst [vmem:[#allocation2 + $0xb0] sm:$0xff] %v293
    %306 = vst [vmem:[#allocation2 + $0xb8] sm:$0xff] %v294
    %307 = vst [vmem:[#allocation3 + $0xa0] sm:$0xff] %v295
    %308 = vst [vmem:[#allocation3 + $0xa8] sm:$0xff] %v296
    %309 = vst [vmem:[#allocation3 + $0xb0] sm:$0xff] %v297
    %310 = vst [vmem:[#allocation3 + $0xb8] sm:$0xff] %v298
    %v311 = vmul.f32 %v291, %v291
    %v312 = vmul.f32 %v292, %v292
    %v313 = vmul.f32 %v293, %v293
    %v314 = vmul.f32 %v294, %v294
    %315 = vst [vmem:[#allocation4 + $0xa0] sm:$0xff] %v311
    %316 = vst [vmem:[#allocation4 + $0xa8] sm:$0xff] %v312
    %317 = vst [vmem:[#allocation4 + $0xb0] sm:$0xff] %v313
    %318 = vst [vmem:[#allocation4 + $0xb8] sm:$0xff] %v314
    %319 = vst [vmem:[#allocation5 + $0xa0] sm:$0xff] %v299
    %320 = vst [vmem:[#allocation5 + $0xa8] sm:$0xff] %v300
    %321 = vst [vmem:[#allocation5 + $0xb0] sm:$0xff] %v301
    %322 = vst [vmem:[#allocation5 + $0xb8] sm:$0xff] %v302
    %v323 = vmul.f32 %v291, %v295
    %v324 = vmul.f32 %v292, %v296
    %v325 = vmul.f32 %v293, %v297
    %v326 = vmul.f32 %v294, %v298
    %327 = vst [vmem:[#allocation6 + $0xa0] sm:$0xff] %v323
    %328 = vst [vmem:[#allocation6 + $0xa8] sm:$0xff] %v324
    %329 = vst [vmem:[#allocation6 + $0xb0] sm:$0xff] %v325
    %330 = vst [vmem:[#allocation6 + $0xb8] sm:$0xff] %v326
    %v331 = vsub.f32 %v111, %v91
    %v332 = vsub.f32 %v112, %v92
    %v333 = vsub.f32 %v113, %v93
    %v334 = vsub.f32 %v114, %v94
    %v335 = vsub.f32 %v115, %v95
    %v336 = vsub.f32 %v116, %v96
    %v337 = vsub.f32 %v117, %v97
    %v338 = vsub.f32 %v118, %v98
    %v339 = vsub.f32 %v119, %v99
    %v340 = vsub.f32 %v120, %v100
    %v341 = vsub.f32 %v121, %v101
    %v342 = vsub.f32 %v122, %v102
    %v343 = vsub.f32 %v123, %v103
    %v344 = vsub.f32 %v124, %v104
    %v345 = vsub.f32 %v125, %v105
    %v346 = vsub.f32 %v126, %v106
    %v347 = vsub.f32 %v127, %v107
    %v348 = vsub.f32 %v128, %v108
    %v349 = vsub.f32 %v129, %v109
    %v350 = vsub.f32 %v130, %v110
    %v351 = vadd.f32 %v131, %v132
    %v352 = vadd.f32 %v351, %v133
    %v353 = vadd.f32 %v352, %v134
    %v354 = vadd.f32 %v353, %v135
    %v355 = vadd.f32 %v354, %v136
    %v356 = vadd.f32 %v355, %v137
    %v357 = vadd.f32 %v356, %v138
    %v358 = vadd.f32 %v357, %v139
    %v359 = vadd.f32 %v358, %v140
    %v360 = vadd.f32 %v359, %v141
    %v361 = vadd.f32 %v360, %v142
    %v362 = vadd.f32 %v361, %v143
    %v363 = vadd.f32 %v362, %v144
    %v364 = vadd.f32 %v363, %v145
    %v365 = vadd.f32 %v364, %v146
    %v366 = vadd.f32 %v365, %v147
    %v367 = vadd.f32 %v366, %v148
    %v368 = vadd.f32 %v367, %v149
    %v369 = vadd.f32 %v368, %v150
    %370 = vadd.xlane.f32.xlu0 %v369
    %v371 = vpop.xlane.xlu0 %370
    %v372 = vrot.slane %v371, 4
    %v373 = vadd.f32 %v371, %v372
    %v374 = vrot.slane %v373, 2
    %v375 = vadd.f32 %v373, %v374
    %v376 = vrot.slane %v375, 1
    %v377 = vadd.f32 %v375, %v376
    %s378 = vtos %v377
    %v379 = vmul.f32 %v331, %v331
    %v380 = vmul.f32 %v332, %v332
    %v381 = vmul.f32 %v333, %v333
    %v382 = vmul.f32 %v334, %v334
    %v383 = vmul.f32 %v335, %v335
    %v384 = vmul.f32 %v336, %v336
    %v385 = vmul.f32 %v337, %v337
    %v386 = vmul.f32 %v338, %v338
    %v387 = vmul.f32 %v339, %v339
    %v388 = vmul.f32 %v340, %v340
    %v389 = vmul.f32 %v341, %v341
    %v390 = vmul.f32 %v342, %v342
    %v391 = vmul.f32 %v343, %v343
    %v392 = vmul.f32 %v344, %v344
    %v393 = vmul.f32 %v345, %v345
    %v394 = vmul.f32 %v346, %v346
    %v395 = vmul.f32 %v347, %v347
    %v396 = vmul.f32 %v348, %v348
    %v397 = vmul.f32 %v349, %v349
    %v398 = vmul.f32 %v350, %v350
    %v399 = vadd.f32 %v379, %v380
    %v400 = vadd.f32 %v399, %v381
    %v401 = vadd.f32 %v400, %v382
    %v402 = vadd.f32 %v401, %v383
    %v403 = vadd.f32 %v402, %v384
    %v404 = vadd.f32 %v403, %v385
    %v405 = vadd.f32 %v404, %v386
    %v406 = vadd.f32 %v405, %v387
    %v407 = vadd.f32 %v406, %v388
    %v408 = vadd.f32 %v407, %v389
    %v409 = vadd.f32 %v408, %v390
    %v410 = vadd.f32 %v409, %v391
    %v411 = vadd.f32 %v410, %v392
    %v412 = vadd.f32 %v411, %v393
    %v413 = vadd.f32 %v412, %v394
    %v414 = vadd.f32 %v413, %v395
    %v415 = vadd.f32 %v414, %v396
    %v416 = vadd.f32 %v415, %v397
    %v417 = vadd.f32 %v416, %v398
    %418 = vadd.xlane.f32.xlu0 %v417
    %v419 = vpop.xlane.xlu0 %418
    %v420 = vrot.slane %v419, 4
    %v421 = vadd.f32 %v419, %v420
    %v422 = vrot.slane %v421, 2
    %v423 = vadd.f32 %v421, %v422
    %v424 = vrot.slane %v423, 1
    %v425 = vadd.f32 %v423, %v424
    %s426 = vtos %v425
    %s427 = smul.u32 0, 80
    %s428 = ssub.s32 70, %s427
    %v429 = vld [vmem:[#allocation2] sm:$0xe0]
    %v430 = vld [vmem:[#allocation2 + $0x8] sm:$0xe0]
    %v431 = vld [vmem:[#allocation2 + $0x10] sm:$0xff]
    %v432 = vld [vmem:[#allocation2 + $0x18] sm:$0xff]
    %v433 = vld [vmem:[#allocation2 + $0x20] sm:$0xff]
    %v434 = vld [vmem:[#allocation2 + $0x28] sm:$0xff]
    %v435 = vld [vmem:[#allocation2 + $0x30] sm:$0xff]
    %v436 = vld [vmem:[#allocation2 + $0x38] sm:$0xff]
    %v437 = vld [vmem:[#allocation2 + $0x40] sm:$0xff]
    %v438 = vld [vmem:[#allocation2 + $0x48] sm:$0xff]
    %v439 = vld [vmem:[#allocation2 + $0x50] sm:$0xff]
    %v440 = vld [vmem:[#allocation2 + $0x58] sm:$0xff]
    %v441 = vld [vmem:[#allocation2 + $0x60] sm:$0xff]
    %v442 = vld [vmem:[#allocation2 + $0x68] sm:$0xff]
    %v443 = vld [vmem:[#allocation2 + $0x70] sm:$0xff]
    %v444 = vld [vmem:[#allocation2 + $0x78] sm:$0xff]
    %v445 = vld [vmem:[#allocation2 + $0x80] sm:$0xff]
    %v446 = vld [vmem:[#allocation2 + $0x88] sm:$0xff]
    %v447 = vld [vmem:[#allocation2 + $0x90] sm:$0xff]
    %v448 = vld [vmem:[#allocation2 + $0x98] sm:$0xff]
    %v449 = vld [vmem:[#allocation2 + $0xa0] sm:$0x1f]
    %v450 = vld [vmem:[#allocation2 + $0xa8] sm:$0x1f]
    %v451 = vmul.f32 %v429, 0.26601171
    %v452 = vmul.f32 %v430, 0.26601171
    %v453 = vmul.f32 %v431, 0.26601171
    %v454 = vmul.f32 %v432, 0.26601171
    %v455 = vmul.f32 %v433, 0.26601171
    %v456 = vmul.f32 %v434, 0.26601171
    %v457 = vmul.f32 %v435, 0.26601171
    %v458 = vmul.f32 %v436, 0.26601171
    %v459 = vmul.f32 %v437, 0.26601171
    %v460 = vmul.f32 %v438, 0.26601171
    %v461 = vmul.f32 %v439, 0.26601171
    %v462 = vmul.f32 %v440, 0.26601171
    %v463 = vmul.f32 %v441, 0.26601171
    %v464 = vmul.f32 %v442, 0.26601171
    %v465 = vmul.f32 %v443, 0.26601171
    %v466 = vmul.f32 %v444, 0.26601171
    %v467 = vmul.f32 %v445, 0.26601171
    %v468 = vmul.f32 %v446, 0.26601171
    %v469 = vmul.f32 %v447, 0.26601171
    %v470 = vmul.f32 %v448, 0.26601171
    %v471 = vmul.f32 %v449, 0.26601171
    %v472 = vmul.f32 %v450, 0.26601171
    %v473 = vld [vmem:[#allocation2] sm:$0xff]
    %v474 = vld [vmem:[#allocation2 + $0x8] sm:$0xff]
    %v475 = vld [vmem:[#allocation2 + $0x10] sm:$0xfc]
    %v476 = vld [vmem:[#allocation2 + $0x18] sm:$0xfc]
    %v477 = vld [vmem:[#allocation2 + $0x20] sm:$0xff]
    %v478 = vld [vmem:[#allocation2 + $0x28] sm:$0xff]
    %v479 = vld [vmem:[#allocation2 + $0x30] sm:$0xff]
    %v480 = vld [vmem:[#allocation2 + $0x38] sm:$0xff]
    %v481 = vld [vmem:[#allocation2 + $0x40] sm:$0xff]
    %v482 = vld [vmem:[#allocation2 + $0x48] sm:$0xff]
    %v483 = vld [vmem:[#allocation2 + $0x50] sm:$0xff]
    %v484 = vld [vmem:[#allocation2 + $0x58] sm:$0xff]
    %v485 = vld [vmem:[#allocation2 + $0x60] sm:$0xff]
    %v486 = vld [vmem:[#allocation2 + $0x68] sm:$0xff]
    %v487 = vld [vmem:[#allocation2 + $0x70] sm:$0xff]
    %v488 = vld [vmem:[#allocation2 + $0x78] sm:$0xff]
    %v489 = vld [vmem:[#allocation2 + $0x80] sm:$0xff]
    %v490 = vld [vmem:[#allocation2 + $0x88] sm:$0xff]
    %v491 = vld [vmem:[#allocation2 + $0x90] sm:$0xff]
    %v492 = vld [vmem:[#allocation2 + $0x98] sm:$0xff]
    %v493 = vld [vmem:[#allocation2 + $0xa0] sm:$0xff]
    %v494 = vld [vmem:[#allocation2 + $0xa8] sm:$0xff]
    %v495 = vld [vmem:[#allocation2 + $0xb0] sm:$0x3]
    %v496 = vld [vmem:[#allocation2 + $0xb8] sm:$0x3]
    %vm519 = vcmask 1045504
    %v520 = vrot.slane %v475, 2
    %v521 = vrot.slane %v477, 2
    %v522 = vsel %vm519, %v520, %v521
    %v523 = vrot.slane %v476, 2
    %v524 = vrot.slane %v478, 2
    %v525 = vsel %vm519, %v523, %v524
    %v526 = vrot.slane %v479, 2
    %v527 = vsel %vm519, %v521, %v526
    %v528 = vrot.slane %v480, 2
    %v529 = vsel %vm519, %v524, %v528
    %v530 = vrot.slane %v481, 2
    %v531 = vsel %vm519, %v526, %v530
    %v532 = vrot.slane %v482, 2
    %v533 = vsel %vm519, %v528, %v532
    %v534 = vrot.slane %v483, 2
    %v535 = vsel %vm519, %v530, %v534
    %v536 = vrot.slane %v484, 2
    %v537 = vsel %vm519, %v532, %v536
    %v538 = vrot.slane %v485, 2
    %v539 = vsel %vm519, %v534, %v538
    %v540 = vrot.slane %v486, 2
    %v541 = vsel %vm519, %v536, %v540
    %v542 = vrot.slane %v487, 2
    %v543 = vsel %vm519, %v538, %v542
    %v544 = vrot.slane %v488, 2
    %v545 = vsel %vm519, %v540, %v544
    %v546 = vrot.slane %v489, 2
    %v547 = vsel %vm519, %v542, %v546
    %v548 = vrot.slane %v490, 2
    %v549 = vsel %vm519, %v544, %v548
    %v550 = vrot.slane %v491, 2
    %v551 = vsel %vm519, %v546, %v550
    %v552 = vrot.slane %v492, 2
    %v553 = vsel %vm519, %v548, %v552
    %v554 = vrot.slane %v493, 2
    %v555 = vsel %vm519, %v550, %v554
    %v556 = vrot.slane %v494, 2
    %v557 = vsel %vm519, %v552, %v556
    %v558 = vrot.slane %v495, 2
    %v559 = vsel %vm519, %v554, %v558
    %v560 = vrot.slane %v496, 2
    %v561 = vsel %vm519, %v556, %v560
    %v582 = vadd.f32 %v473, %v522
    %v583 = vadd.f32 %v474, %v525
    %v584 = vadd.f32 %v431, %v527
    %v585 = vadd.f32 %v432, %v529
    %v586 = vadd.f32 %v433, %v531
    %v587 = vadd.f32 %v434, %v533
    %v588 = vadd.f32 %v435, %v535
    %v589 = vadd.f32 %v436, %v537
    %v590 = vadd.f32 %v437, %v539
    %v591 = vadd.f32 %v438, %v541
    %v592 = vadd.f32 %v439, %v543
    %v593 = vadd.f32 %v440, %v545
    %v594 = vadd.f32 %v441, %v547
    %v595 = vadd.f32 %v442, %v549
    %v596 = vadd.f32 %v443, %v551
    %v597 = vadd.f32 %v444, %v553
    %v598 = vadd.f32 %v445, %v555
    %v599 = vadd.f32 %v446, %v557
    %v600 = vadd.f32 %v447, %v559
    %v601 = vadd.f32 %v448, %v561
    %v602 = vmul.f32 %v582, 0.0010283801
    %v603 = vmul.f32 %v583, 0.0010283801
    %v604 = vmul.f32 %v584, 0.0010283801
    %v605 = vmul.f32 %v585, 0.0010283801
    %v606 = vmul.f32 %v586, 0.0010283801
    %v607 = vmul.f32 %v587, 0.0010283801
    %v608 = vmul.f32 %v588, 0.0010283801
    %v609 = vmul.f32 %v589, 0.0010283801
    %v610 = vmul.f32 %v590, 0.0010283801
    %v611 = vmul.f32 %v591, 0.0010283801
    %v612 = vmul.f32 %v592, 0.0010283801
    %v613 = vmul.f32 %v593, 0.0010283801
    %v614 = vmul.f32 %v594, 0.0010283801
    %v615 = vmul.f32 %v595, 0.0010283801
    %v616 = vmul.f32 %v596, 0.0010283801
    %v617 = vmul.f32 %v597, 0.0010283801
    %v618 = vmul.f32 %v598, 0.0010283801
    %v619 = vmul.f32 %v599, 0.0010283801
    %v620 = vmul.f32 %v600, 0.0010283801
    %v621 = vmul.f32 %v601, 0.0010283801
    %vm642 = vcmask 1044480
    %v643 = vrot.slane %v602, 3
    %v644 = vrot.slane %v603, 3
    %v645 = vrot.slane %v604, 3
    %v646 = vsel %vm642, %v643, %v645
    %v647 = vrot.slane %v605, 3
    %v648 = vsel %vm642, %v644, %v647
    %v649 = vrot.slane %v606, 3
    %v650 = vsel %vm642, %v645, %v649
    %v651 = vrot.slane %v607, 3
    %v652 = vsel %vm642, %v647, %v651
    %v653 = vrot.slane %v608, 3
    %v654 = vsel %vm642, %v649, %v653
    %v655 = vrot.slane %v609, 3
    %v656 = vsel %vm642, %v651, %v655
    %v657 = vrot.slane %v610, 3
    %v658 = vsel %vm642, %v653, %v657
    %v659 = vrot.slane %v611, 3
    %v660 = vsel %vm642, %v655, %v659
    %v661 = vrot.slane %v612, 3
    %v662 = vsel %vm642, %v657, %v661
    %v663 = vrot.slane %v613, 3
    %v664 = vsel %vm642, %v659, %v663
    %v665 = vrot.slane %v614, 3
    %v666 = vsel %vm642, %v661, %v665
    %v667 = vrot.slane %v615, 3
    %v668 = vsel %vm642, %v663, %v667
    %v669 = vrot.slane %v616, 3
    %v670 = vsel %vm642, %v665, %v669
    %v671 = vrot.slane %v617, 3
    %v672 = vsel %vm642, %v667, %v671
    %v673 = vrot.slane %v618, 3
    %v674 = vsel %vm642, %v669, %v673
    %v675 = vrot.slane %v619, 3
    %v676 = vsel %vm642, %v671, %v675
    %v677 = vrot.slane %v620, 3
    %v678 = vsel %vm642, %v673, %v677
    %v679 = vrot.slane %v621, 3
    %v680 = vsel %vm642, %v675, %v679
    %v703 = vadd.f32 %v451, %v643
    %v704 = vadd.f32 %v452, %v644
    %v705 = vadd.f32 %v453, %v646
    %v706 = vadd.f32 %v454, %v648
    %v707 = vadd.f32 %v455, %v650
    %v708 = vadd.f32 %v456, %v652
    %v709 = vadd.f32 %v457, %v654
    %v710 = vadd.f32 %v458, %v656
    %v711 = vadd.f32 %v459, %v658
    %v712 = vadd.f32 %v460, %v660
    %v713 = vadd.f32 %v461, %v662
    %v714 = vadd.f32 %v462, %v664
    %v715 = vadd.f32 %v463, %v666
    %v716 = vadd.f32 %v464, %v668
    %v717 = vadd.f32 %v465, %v670
    %v718 = vadd.f32 %v466, %v672
    %v719 = vadd.f32 %v467, %v674
    %v720 = vadd.f32 %v468, %v676
    %v721 = vadd.f32 %v469, %v678
    %v722 = vadd.f32 %v470, %v680
    %v723 = vadd.f32 %v471, %v677
    %v724 = vadd.f32 %v472, %v679
    %v725 = vld [vmem:[#allocation2] sm:$0xfe]
    %v726 = vld [vmem:[#allocation2 + $0x8] sm:$0xfe]
    %v727 = vld [vmem:[#allocation2 + $0xa0] sm:$0x1]
    %v728 = vld [vmem:[#allocation2 + $0xa8] sm:$0x1]
    %v729 = vld [vmem:[#allocation2 + $0x10] sm:$0xfe]
    %v730 = vld [vmem:[#allocation2 + $0x18] sm:$0xfe]
    %v731 = vld [vmem:[#allocation2 + $0xb0] sm:$0x1]
    %v732 = vld [vmem:[#allocation2 + $0xb8] sm:$0x1]
    %v733 = vadd.f32 %v725, %v729
    %v734 = vadd.f32 %v726, %v730
    %v735 = vadd.f32 %v431, %v477
    %v736 = vadd.f32 %v432, %v478
    %v737 = vadd.f32 %v433, %v479
    %v738 = vadd.f32 %v434, %v480
    %v739 = vadd.f32 %v435, %v481
    %v740 = vadd.f32 %v436, %v482
    %v741 = vadd.f32 %v437, %v483
    %v742 = vadd.f32 %v438, %v484
    %v743 = vadd.f32 %v439, %v485
    %v744 = vadd.f32 %v440, %v486
    %v745 = vadd.f32 %v441, %v487
    %v746 = vadd.f32 %v442, %v488
    %v747 = vadd.f32 %v443, %v489
    %v748 = vadd.f32 %v444, %v490
    %v749 = vadd.f32 %v445, %v491
    %v750 = vadd.f32 %v446, %v492
    %v751 = vadd.f32 %v447, %v493
    %v752 = vadd.f32 %v448, %v494
    %v753 = vadd.f32 %v727, %v731
    %v754 = vadd.f32 %v728, %v732
    %v755 = vmul.f32 %v733, 0.007598758
    %v756 = vmul.f32 %v734, 0.007598758
    %v757 = vmul.f32 %v735, 0.007598758
    %v758 = vmul.f32 %v736, 0.007598758
    %v759 = vmul.f32 %v737, 0.007598758
    %v760 = vmul.f32 %v738, 0.007598758
    %v761 = vmul.f32 %v739, 0.007598758
    %v762 = vmul.f32 %v740, 0.007598758
    %v763 = vmul.f32 %v741, 0.007598758
    %v764 = vmul.f32 %v742, 0.007598758
    %v765 = vmul.f32 %v743, 0.007598758
    %v766 = vmul.f32 %v744, 0.007598758
    %v767 = vmul.f32 %v745, 0.007598758
    %v768 = vmul.f32 %v746, 0.007598758
    %v769 = vmul.f32 %v747, 0.007598758
    %v770 = vmul.f32 %v748, 0.007598758
    %v771 = vmul.f32 %v749, 0.007598758
    %v772 = vmul.f32 %v750, 0.007598758
    %v773 = vmul.f32 %v751, 0.007598758
    %v774 = vmul.f32 %v752, 0.007598758
    %v775 = vmul.f32 %v753, 0.007598758
    %v776 = vmul.f32 %v754, 0.007598758
    %vm799 = vcmask 1043456
    %v800 = vrot.slane %v755, 4
    %v801 = vrot.slane %v756, 4
    %v802 = vrot.slane %v757, 4
    %v803 = vsel %vm799, %v800, %v802
    %v804 = vrot.slane %v758, 4
    %v805 = vsel %vm799, %v801, %v804
    %v806 = vrot.slane %v759, 4
    %v807 = vsel %vm799, %v802, %v806
    %v808 = vrot.slane %v760, 4
    %v809 = vsel %vm799, %v804, %v808
    %v810 = vrot.slane %v761, 4
    %v811 = vsel %vm799, %v806, %v810
    %v812 = vrot.slane %v762, 4
    %v813 = vsel %vm799, %v808, %v812
    %v814 = vrot.slane %v763, 4
    %v815 = vsel %vm799, %v810, %v814
    %v816 = vrot.slane %v764, 4
    %v817 = vsel %vm799, %v812, %v816
    %v818 = vrot.slane %v765, 4
    %v819 = vsel %vm799, %v814, %v818
    %v820 = vrot.slane %v766, 4
    %v821 = vsel %vm799, %v816, %v820
    %v822 = vrot.slane %v767, 4
    %v823 = vsel %vm799, %v818, %v822
    %v824 = vrot.slane %v768, 4
    %v825 = vsel %vm799, %v820, %v824
    %v826 = vrot.slane %v769, 4
    %v827 = vsel %vm799, %v822, %v826
    %v828 = vrot.slane %v770, 4
    %v829 = vsel %vm799, %v824, %v828
    %v830 = vrot.slane %v771, 4
    %v831 = vsel %vm799, %v826, %v830
    %v832 = vrot.slane %v772, 4
    %v833 = vsel %vm799, %v828, %v832
    %v834 = vrot.slane %v773, 4
    %v835 = vsel %vm799, %v830, %v834
    %v836 = vrot.slane %v774, 4
    %v837 = vsel %vm799, %v832, %v836
    %v838 = vrot.slane %v775, 4
    %v839 = vsel %vm799, %v834, %v838
    %v840 = vrot.slane %v776, 4
    %v841 = vsel %vm799, %v836, %v840
    %v864 = vadd.f32 %v703, %v800
    %v865 = vadd.f32 %v704, %v801
    %v866 = vadd.f32 %v705, %v803
    %v867 = vadd.f32 %v706, %v805
    %v868 = vadd.f32 %v707, %v807
    %v869 = vadd.f32 %v708, %v809
    %v870 = vadd.f32 %v709, %v811
    %v871 = vadd.f32 %v710, %v813
    %v872 = vadd.f32 %v711, %v815
    %v873 = vadd.f32 %v712, %v817
    %v874 = vadd.f32 %v713, %v819
    %v875 = vadd.f32 %v714, %v821
    %v876 = vadd.f32 %v715, %v823
    %v877 = vadd.f32 %v716, %v825
    %v878 = vadd.f32 %v717, %v827
    %v879 = vadd.f32 %v718, %v829
    %v880 = vadd.f32 %v719, %v831
    %v881 = vadd.f32 %v720, %v833
    %v882 = vadd.f32 %v721, %v835
    %v883 = vadd.f32 %v722, %v837
    %v884 = vadd.f32 %v723, %v839
    %v885 = vadd.f32 %v724, %v841
    %v886 = vld [vmem:[#allocation2] sm:$0xfc]
    %v887 = vld [vmem:[#allocation2 + $0x8] sm:$0xfc]
    %v888 = vld [vmem:[#allocation2 + $0xa0] sm:$0x3]
    %v889 = vld [vmem:[#allocation2 + $0xa8] sm:$0x3]
    %v890 = vld [vmem:[#allocation2 + $0xa0] sm:$0xff]
    %v891 = vld [vmem:[#allocation2 + $0xa8] sm:$0xff]
    %vm912 = vcmask 1041408
    %v913 = vrot.slane %v431, 6
    %v914 = vrot.slane %v432, 6
    %v915 = vrot.slane %v433, 6
    %v916 = vsel %vm912, %v913, %v915
    %v917 = vrot.slane %v434, 6
    %v918 = vsel %vm912, %v914, %v917
    %v919 = vrot.slane %v435, 6
    %v920 = vsel %vm912, %v915, %v919
    %v921 = vrot.slane %v436, 6
    %v922 = vsel %vm912, %v917, %v921
    %v923 = vrot.slane %v437, 6
    %v924 = vsel %vm912, %v919, %v923
    %v925 = vrot.slane %v438, 6
    %v926 = vsel %vm912, %v921, %v925
    %v927 = vrot.slane %v439, 6
    %v928 = vsel %vm912, %v923, %v927
    %v929 = vrot.slane %v440, 6
    %v930 = vsel %vm912, %v925, %v929
    %v931 = vrot.slane %v441, 6
    %v932 = vsel %vm912, %v927, %v931
    %v933 = vrot.slane %v442, 6
    %v934 = vsel %vm912, %v929, %v933
    %v935 = vrot.slane %v443, 6
    %v936 = vsel %vm912, %v931, %v935
    %v937 = vrot.slane %v444, 6
    %v938 = vsel %vm912, %v933, %v937
    %v939 = vrot.slane %v445, 6
    %v940 = vsel %vm912, %v935, %v939
    %v941 = vrot.slane %v446, 6
    %v942 = vsel %vm912, %v937, %v941
    %v943 = vrot.slane %v447, 6
    %v944 = vsel %vm912, %v939, %v943
    %v945 = vrot.slane %v448, 6
    %v946 = vsel %vm912, %v941, %v945
    %v947 = vrot.slane %v890, 6
    %v948 = vsel %vm912, %v943, %v947
    %v949 = vrot.slane %v891, 6
    %v950 = vsel %vm912, %v945, %v949
    %v973 = vadd.f32 %v886, %v913
    %v974 = vadd.f32 %v887, %v914
    %v975 = vadd.f32 %v431, %v916
    %v976 = vadd.f32 %v432, %v918
    %v977 = vadd.f32 %v433, %v920
    %v978 = vadd.f32 %v434, %v922
    %v979 = vadd.f32 %v435, %v924
    %v980 = vadd.f32 %v436, %v926
    %v981 = vadd.f32 %v437, %v928
    %v982 = vadd.f32 %v438, %v930
    %v983 = vadd.f32 %v439, %v932
    %v984 = vadd.f32 %v440, %v934
    %v985 = vadd.f32 %v441, %v936
    %v986 = vadd.f32 %v442, %v938
    %v987 = vadd.f32 %v443, %v940
    %v988 = vadd.f32 %v444, %v942
    %v989 = vadd.f32 %v445, %v944
    %v990 = vadd.f32 %v446, %v946
    %v991 = vadd.f32 %v447, %v948
    %v992 = vadd.f32 %v448, %v950
    %v993 = vadd.f32 %v888, %v947
    %v994 = vadd.f32 %v889, %v949
    %v995 = vmul.f32 %v973, 0.036000773
    %v996 = vmul.f32 %v974, 0.036000773
    %v997 = vmul.f32 %v975, 0.036000773
    %v998 = vmul.f32 %v976, 0.036000773
    %v999 = vmul.f32 %v977, 0.036000773
    %v1000 = vmul.f32 %v978, 0.036000773
    %v1001 = vmul.f32 %v979, 0.036000773
    %v1002 = vmul.f32 %v980, 0.036000773
    %v1003 = vmul.f32 %v981, 0.036000773
    %v1004 = vmul.f32 %v982, 0.036000773
    %v1005 = vmul.f32 %v983, 0.036000773
    %v1006 = vmul.f32 %v984, 0.036000773
    %v1007 = vmul.f32 %v985, 0.036000773
    %v1008 = vmul.f32 %v986, 0.036000773
    %v1009 = vmul.f32 %v987, 0.036000773
    %v1010 = vmul.f32 %v988, 0.036000773
    %v1011 = vmul.f32 %v989, 0.036000773
    %v1012 = vmul.f32 %v990, 0.036000773
    %v1013 = vmul.f32 %v991, 0.036000773
    %v1014 = vmul.f32 %v992, 0.036000773
    %v1015 = vmul.f32 %v993, 0.036000773
    %v1016 = vmul.f32 %v994, 0.036000773
    %vm1039 = vcmask 1042432
    %v1040 = vrot.slane %v995, 5
    %v1041 = vrot.slane %v996, 5
    %v1042 = vrot.slane %v997, 5
    %v1043 = vsel %vm1039, %v1040, %v1042
    %v1044 = vrot.slane %v998, 5
    %v1045 = vsel %vm1039, %v1041, %v1044
    %v1046 = vrot.slane %v999, 5
    %v1047 = vsel %vm1039, %v1042, %v1046
    %v1048 = vrot.slane %v1000, 5
    %v1049 = vsel %vm1039, %v1044, %v1048
    %v1050 = vrot.slane %v1001, 5
    %v1051 = vsel %vm1039, %v1046, %v1050
    %v1052 = vrot.slane %v1002, 5
    %v1053 = vsel %vm1039, %v1048, %v1052
    %v1054 = vrot.slane %v1003, 5
    %v1055 = vsel %vm1039, %v1050, %v1054
    %v1056 = vrot.slane %v1004, 5
    %v1057 = vsel %vm1039, %v1052, %v1056
    %v1058 = vrot.slane %v1005, 5
    %v1059 = vsel %vm1039, %v1054, %v1058
    %v1060 = vrot.slane %v1006, 5
    %v1061 = vsel %vm1039, %v1056, %v1060
    %v1062 = vrot.slane %v1007, 5
    %v1063 = vsel %vm1039, %v1058, %v1062
    %v1064 = vrot.slane %v1008, 5
    %v1065 = vsel %vm1039, %v1060, %v1064
    %v1066 = vrot.slane %v1009, 5
    %v1067 = vsel %vm1039, %v1062, %v1066
    %v1068 = vrot.slane %v1010, 5
    %v1069 = vsel %vm1039, %v1064, %v1068
    %v1070 = vrot.slane %v1011, 5
    %v1071 = vsel %vm1039, %v1066, %v1070
    %v1072 = vrot.slane %v1012, 5
    %v1073 = vsel %vm1039, %v1068, %v1072
    %v1074 = vrot.slane %v1013, 5
    %v1075 = vsel %vm1039, %v1070, %v1074
    %v1076 = vrot.slane %v1014, 5
    %v1077 = vsel %vm1039, %v1072, %v1076
    %v1078 = vrot.slane %v1015, 5
    %v1079 = vsel %vm1039, %v1074, %v1078
    %v1080 = vrot.slane %v1016, 5
    %v1081 = vsel %vm1039, %v1076, %v1080
    %v1104 = vadd.f32 %v864, %v1040
    %v1105 = vadd.f32 %v865, %v1041
    %v1106 = vadd.f32 %v866, %v1043
    %v1107 = vadd.f32 %v867, %v1045
    %v1108 = vadd.f32 %v868, %v1047
    %v1109 = vadd.f32 %v869, %v1049
    %v1110 = vadd.f32 %v870, %v1051
    %v1111 = vadd.f32 %v871, %v1053
    %v1112 = vadd.f32 %v872, %v1055
    %v1113 = vadd.f32 %v873, %v1057
    %v1114 = vadd.f32 %v874, %v1059
    %v1115 = vadd.f32 %v875, %v1061
    %v1116 = vadd.f32 %v876, %v1063
    %v1117 = vadd.f32 %v877, %v1065
    %v1118 = vadd.f32 %v878, %v1067
    %v1119 = vadd.f32 %v879, %v1069
    %v1120 = vadd.f32 %v880, %v1071
    %v1121 = vadd.f32 %v881, %v1073
    %v1122 = vadd.f32 %v882, %v1075
    %v1123 = vadd.f32 %v883, %v1077
    %v1124 = vadd.f32 %v884, %v1079
    %v1125 = vadd.f32 %v885, %v1081
    %v1126 = vld [vmem:[#allocation2] sm:$0xf8]
    %v1127 = vld [vmem:[#allocation2 + $0x8] sm:$0xf8]
    %v1128 = vld [vmem:[#allocation2 + $0xa0] sm:$0x7]
    %v1129 = vld [vmem:[#allocation2 + $0xa8] sm:$0x7]
    %v1130 = vld [vmem:[#allocation2] sm:$0x80]
    %v1131 = vld [vmem:[#allocation2 + $0x8] sm:$0x80]
    %v1132 = vld [vmem:[#allocation2 + $0xa0] sm:$0x7f]
    %v1133 = vld [vmem:[#allocation2 + $0xa8] sm:$0x7f]
    %v1138 = vrot.slane %v1130, 4
    %v1139 = vrot.slane %v431, 4
    %v1140 = vsel %vm799, %v1138, %v1139
    %v1141 = vrot.slane %v1131, 4
    %v1142 = vrot.slane %v432, 4
    %v1143 = vsel %vm799, %v1141, %v1142
    %v1144 = vrot.slane %v433, 4
    %v1145 = vsel %vm799, %v1139, %v1144
    %v1146 = vrot.slane %v434, 4
    %v1147 = vsel %vm799, %v1142, %v1146
    %v1148 = vrot.slane %v435, 4
    %v1149 = vsel %vm799, %v1144, %v1148
    %v1150 = vrot.slane %v436, 4
    %v1151 = vsel %vm799, %v1146, %v1150
    %v1152 = vrot.slane %v437, 4
    %v1153 = vsel %vm799, %v1148, %v1152
    %v1154 = vrot.slane %v438, 4
    %v1155 = vsel %vm799, %v1150, %v1154
    %v1156 = vrot.slane %v439, 4
    %v1157 = vsel %vm799, %v1152, %v1156
    %v1158 = vrot.slane %v440, 4
    %v1159 = vsel %vm799, %v1154, %v1158
    %v1160 = vrot.slane %v441, 4
    %v1161 = vsel %vm799, %v1156, %v1160
    %v1162 = vrot.slane %v442, 4
    %v1163 = vsel %vm799, %v1158, %v1162
    %v1164 = vrot.slane %v443, 4
    %v1165 = vsel %vm799, %v1160, %v1164
    %v1166 = vrot.slane %v444, 4
    %v1167 = vsel %vm799, %v1162, %v1166
    %v1168 = vrot.slane %v445, 4
    %v1169 = vsel %vm799, %v1164, %v1168
    %v1170 = vrot.slane %v446, 4
    %v1171 = vsel %vm799, %v1166, %v1170
    %v1172 = vrot.slane %v447, 4
    %v1173 = vsel %vm799, %v1168, %v1172
    %v1174 = vrot.slane %v448, 4
    %v1175 = vsel %vm799, %v1170, %v1174
    %v1176 = vrot.slane %v1132, 4
    %v1177 = vsel %vm799, %v1172, %v1176
    %v1178 = vrot.slane %v1133, 4
    %v1179 = vsel %vm799, %v1174, %v1178
    %v1202 = vadd.f32 %v1126, %v1140
    %v1203 = vadd.f32 %v1127, %v1143
    %v1204 = vadd.f32 %v431, %v1145
    %v1205 = vadd.f32 %v432, %v1147
    %v1206 = vadd.f32 %v433, %v1149
    %v1207 = vadd.f32 %v434, %v1151
    %v1208 = vadd.f32 %v435, %v1153
    %v1209 = vadd.f32 %v436, %v1155
    %v1210 = vadd.f32 %v437, %v1157
    %v1211 = vadd.f32 %v438, %v1159
    %v1212 = vadd.f32 %v439, %v1161
    %v1213 = vadd.f32 %v440, %v1163
    %v1214 = vadd.f32 %v441, %v1165
    %v1215 = vadd.f32 %v442, %v1167
    %v1216 = vadd.f32 %v443, %v1169
    %v1217 = vadd.f32 %v444, %v1171
    %v1218 = vadd.f32 %v445, %v1173
    %v1219 = vadd.f32 %v446, %v1175
    %v1220 = vadd.f32 %v447, %v1177
    %v1221 = vadd.f32 %v448, %v1179
    %v1222 = vadd.f32 %v1128, %v1176
    %v1223 = vadd.f32 %v1129, %v1178
    %v1224 = vmul.f32 %v1202, 0.10936069
    %v1225 = vmul.f32 %v1203, 0.10936069
    %v1226 = vmul.f32 %v1204, 0.10936069
    %v1227 = vmul.f32 %v1205, 0.10936069
    %v1228 = vmul.f32 %v1206, 0.10936069
    %v1229 = vmul.f32 %v1207, 0.10936069
    %v1230 = vmul.f32 %v1208, 0.10936069
    %v1231 = vmul.f32 %v1209, 0.10936069
    %v1232 = vmul.f32 %v1210, 0.10936069
    %v1233 = vmul.f32 %v1211, 0.10936069
    %v1234 = vmul.f32 %v1212, 0.10936069
    %v1235 = vmul.f32 %v1213, 0.10936069
    %v1236 = vmul.f32 %v1214, 0.10936069
    %v1237 = vmul.f32 %v1215, 0.10936069
    %v1238 = vmul.f32 %v1216, 0.10936069
    %v1239 = vmul.f32 %v1217, 0.10936069
    %v1240 = vmul.f32 %v1218, 0.10936069
    %v1241 = vmul.f32 %v1219, 0.10936069
    %v1242 = vmul.f32 %v1220, 0.10936069
    %v1243 = vmul.f32 %v1221, 0.10936069
    %v1244 = vmul.f32 %v1222, 0.10936069
    %v1245 = vmul.f32 %v1223, 0.10936069
    %v1268 = vrot.slane %v1224, 6
    %v1269 = vrot.slane %v1225, 6
    %v1270 = vrot.slane %v1226, 6
    %v1271 = vsel %vm912, %v1268, %v1270
    %v1272 = vrot.slane %v1227, 6
    %v1273 = vsel %vm912, %v1269, %v1272
    %v1274 = vrot.slane %v1228, 6
    %v1275 = vsel %vm912, %v1270, %v1274
    %v1276 = vrot.slane %v1229, 6
    %v1277 = vsel %vm912, %v1272, %v1276
    %v1278 = vrot.slane %v1230, 6
    %v1279 = vsel %vm912, %v1274, %v1278
    %v1280 = vrot.slane %v1231, 6
    %v1281 = vsel %vm912, %v1276, %v1280
    %v1282 = vrot.slane %v1232, 6
    %v1283 = vsel %vm912, %v1278, %v1282
    %v1284 = vrot.slane %v1233, 6
    %v1285 = vsel %vm912, %v1280, %v1284
    %v1286 = vrot.slane %v1234, 6
    %v1287 = vsel %vm912, %v1282, %v1286
    %v1288 = vrot.slane %v1235, 6
    %v1289 = vsel %vm912, %v1284, %v1288
    %v1290 = vrot.slane %v1236, 6
    %v1291 = vsel %vm912, %v1286, %v1290
    %v1292 = vrot.slane %v1237, 6
    %v1293 = vsel %vm912, %v1288, %v1292
    %v1294 = vrot.slane %v1238, 6
    %v1295 = vsel %vm912, %v1290, %v1294
    %v1296 = vrot.slane %v1239, 6
    %v1297 = vsel %vm912, %v1292, %v1296
    %v1298 = vrot.slane %v1240, 6
    %v1299 = vsel %vm912, %v1294, %v1298
    %v1300 = vrot.slane %v1241, 6
    %v1301 = vsel %vm912, %v1296, %v1300
    %v1302 = vrot.slane %v1242, 6
    %v1303 = vsel %vm912, %v1298, %v1302
    %v1304 = vrot.slane %v1243, 6
    %v1305 = vsel %vm912, %v1300, %v1304
    %v1306 = vrot.slane %v1244, 6
    %v1307 = vsel %vm912, %v1302, %v1306
    %v1308 = vrot.slane %v1245, 6
    %v1309 = vsel %vm912, %v1304, %v1308
    %v1332 = vadd.f32 %v1104, %v1268
    %v1333 = vadd.f32 %v1105, %v1269
    %v1334 = vadd.f32 %v1106, %v1271
    %v1335 = vadd.f32 %v1107, %v1273
    %v1336 = vadd.f32 %v1108, %v1275
    %v1337 = vadd.f32 %v1109, %v1277
    %v1338 = vadd.f32 %v1110, %v1279
    %v1339 = vadd.f32 %v1111, %v1281
    %v1340 = vadd.f32 %v1112, %v1283
    %v1341 = vadd.f32 %v1113, %v1285
    %v1342 = vadd.f32 %v1114, %v1287
    %v1343 = vadd.f32 %v1115, %v1289
    %v1344 = vadd.f32 %v1116, %v1291
    %v1345 = vadd.f32 %v1117, %v1293
    %v1346 = vadd.f32 %v1118, %v1295
    %v1347 = vadd.f32 %v1119, %v1297
    %v1348 = vadd.f32 %v1120, %v1299
    %v1349 = vadd.f32 %v1121, %v1301
    %v1350 = vadd.f32 %v1122, %v1303
    %v1351 = vadd.f32 %v1123, %v1305
    %v1352 = vadd.f32 %v1124, %v1307
    %v1353 = vadd.f32 %v1125, %v1309
    %v1354 = vld [vmem:[#allocation2] sm:$0xf0]
    %v1355 = vld [vmem:[#allocation2 + $0x8] sm:$0xf0]
    %v1356 = vld [vmem:[#allocation2 + $0xa0] sm:$0xf]
    %v1357 = vld [vmem:[#allocation2 + $0xa8] sm:$0xf]
    %v1358 = vld [vmem:[#allocation2] sm:$0xc0]
    %v1359 = vld [vmem:[#allocation2 + $0x8] sm:$0xc0]
    %v1360 = vld [vmem:[#allocation2 + $0xa0] sm:$0x3f]
    %v1361 = vld [vmem:[#allocation2 + $0xa8] sm:$0x3f]
    %v1366 = vrot.slane %v1358, 2
    %v1367 = vrot.slane %v431, 2
    %v1368 = vsel %vm519, %v1366, %v1367
    %v1369 = vrot.slane %v1359, 2
    %v1370 = vrot.slane %v432, 2
    %v1371 = vsel %vm519, %v1369, %v1370
    %v1372 = vrot.slane %v433, 2
    %v1373 = vsel %vm519, %v1367, %v1372
    %v1374 = vrot.slane %v434, 2
    %v1375 = vsel %vm519, %v1370, %v1374
    %v1376 = vrot.slane %v435, 2
    %v1377 = vsel %vm519, %v1372, %v1376
    %v1378 = vrot.slane %v436, 2
    %v1379 = vsel %vm519, %v1374, %v1378
    %v1380 = vrot.slane %v437, 2
    %v1381 = vsel %vm519, %v1376, %v1380
    %v1382 = vrot.slane %v438, 2
    %v1383 = vsel %vm519, %v1378, %v1382
    %v1384 = vrot.slane %v439, 2
    %v1385 = vsel %vm519, %v1380, %v1384
    %v1386 = vrot.slane %v440, 2
    %v1387 = vsel %vm519, %v1382, %v1386
    %v1388 = vrot.slane %v441, 2
    %v1389 = vsel %vm519, %v1384, %v1388
    %v1390 = vrot.slane %v442, 2
    %v1391 = vsel %vm519, %v1386, %v1390
    %v1392 = vrot.slane %v443, 2
    %v1393 = vsel %vm519, %v1388, %v1392
    %v1394 = vrot.slane %v444, 2
    %v1395 = vsel %vm519, %v1390, %v1394
    %v1396 = vrot.slane %v445, 2
    %v1397 = vsel %vm519, %v1392, %v1396
    %v1398 = vrot.slane %v446, 2
    %v1399 = vsel %vm519, %v1394, %v1398
    %v1400 = vrot.slane %v447, 2
    %v1401 = vsel %vm519, %v1396, %v1400
    %v1402 = vrot.slane %v448, 2
    %v1403 = vsel %vm519, %v1398, %v1402
    %v1404 = vrot.slane %v1360, 2
    %v1405 = vsel %vm519, %v1400, %v1404
    %v1406 = vrot.slane %v1361, 2
    %v1407 = vsel %vm519, %v1402, %v1406
    %v1430 = vadd.f32 %v1354, %v1368
    %v1431 = vadd.f32 %v1355, %v1371
    %v1432 = vadd.f32 %v431, %v1373
    %v1433 = vadd.f32 %v432, %v1375
    %v1434 = vadd.f32 %v433, %v1377
    %v1435 = vadd.f32 %v434, %v1379
    %v1436 = vadd.f32 %v435, %v1381
    %v1437 = vadd.f32 %v436, %v1383
    %v1438 = vadd.f32 %v437, %v1385
    %v1439 = vadd.f32 %v438, %v1387
    %v1440 = vadd.f32 %v439, %v1389
    %v1441 = vadd.f32 %v440, %v1391
    %v1442 = vadd.f32 %v441, %v1393
    %v1443 = vadd.f32 %v442, %v1395
    %v1444 = vadd.f32 %v443, %v1397
    %v1445 = vadd.f32 %v444, %v1399
    %v1446 = vadd.f32 %v445, %v1401
    %v1447 = vadd.f32 %v446, %v1403
    %v1448 = vadd.f32 %v447, %v1405
    %v1449 = vadd.f32 %v448, %v1407
    %v1450 = vadd.f32 %v1356, %v1404
    %v1451 = vadd.f32 %v1357, %v1406
    %v1452 = vmul.f32 %v1430, 0.21300554
    %v1453 = vmul.f32 %v1431, 0.21300554
    %v1454 = vmul.f32 %v1432, 0.21300554
    %v1455 = vmul.f32 %v1433, 0.21300554
    %v1456 = vmul.f32 %v1434, 0.21300554
    %v1457 = vmul.f32 %v1435, 0.21300554
    %v1458 = vmul.f32 %v1436, 0.21300554
    %v1459 = vmul.f32 %v1437, 0.21300554
    %v1460 = vmul.f32 %v1438, 0.21300554
    %v1461 = vmul.f32 %v1439, 0.21300554
    %v1462 = vmul.f32 %v1440, 0.21300554
    %v1463 = vmul.f32 %v1441, 0.21300554
    %v1464 = vmul.f32 %v1442, 0.21300554
    %v1465 = vmul.f32 %v1443, 0.21300554
    %v1466 = vmul.f32 %v1444, 0.21300554
    %v1467 = vmul.f32 %v1445, 0.21300554
    %v1468 = vmul.f32 %v1446, 0.21300554
    %v1469 = vmul.f32 %v1447, 0.21300554
    %v1470 = vmul.f32 %v1448, 0.21300554
    %v1471 = vmul.f32 %v1449, 0.21300554
    %v1472 = vmul.f32 %v1450, 0.21300554
    %v1473 = vmul.f32 %v1451, 0.21300554
    %vm1496 = vcmask 1040384
    %v1497 = vrot.slane %v1452, 7
    %v1498 = vrot.slane %v1453, 7
    %v1499 = vrot.slane %v1454, 7
    %v1500 = vsel %vm1496, %v1497, %v1499
    %v1501 = vrot.slane %v1455, 7
    %v1502 = vsel %vm1496, %v1498, %v1501
    %v1503 = vrot.slane %v1456, 7
    %v1504 = vsel %vm1496, %v1499, %v1503
    %v1505 = vrot.slane %v1457, 7
    %v1506 = vsel %vm1496, %v1501, %v1505
    %v1507 = vrot.slane %v1458, 7
    %v1508 = vsel %vm1496, %v1503, %v1507
    %v1509 = vrot.slane %v1459, 7
    %v1510 = vsel %vm1496, %v1505, %v1509
    %v1511 = vrot.slane %v1460, 7
    %v1512 = vsel %vm1496, %v1507, %v1511
    %v1513 = vrot.slane %v1461, 7
    %v1514 = vsel %vm1496, %v1509, %v1513
    %v1515 = vrot.slane %v1462, 7
    %v1516 = vsel %vm1496, %v1511, %v1515
    %v1517 = vrot.slane %v1463, 7
    %v1518 = vsel %vm1496, %v1513, %v1517
    %v1519 = vrot.slane %v1464, 7
    %v1520 = vsel %vm1496, %v1515, %v1519
    %v1521 = vrot.slane %v1465, 7
    %v1522 = vsel %vm1496, %v1517, %v1521
    %v1523 = vrot.slane %v1466, 7
    %v1524 = vsel %vm1496, %v1519, %v1523
    %v1525 = vrot.slane %v1467, 7
    %v1526 = vsel %vm1496, %v1521, %v1525
    %v1527 = vrot.slane %v1468, 7
    %v1528 = vsel %vm1496, %v1523, %v1527
    %v1529 = vrot.slane %v1469, 7
    %v1530 = vsel %vm1496, %v1525, %v1529
    %v1531 = vrot.slane %v1470, 7
    %v1532 = vsel %vm1496, %v1527, %v1531
    %v1533 = vrot.slane %v1471, 7
    %v1534 = vsel %vm1496, %v1529, %v1533
    %v1535 = vrot.slane %v1472, 7
    %v1536 = vsel %vm1496, %v1531, %v1535
    %v1537 = vrot.slane %v1473, 7
    %v1538 = vsel %vm1496, %v1533, %v1537
    %v1561 = vadd.f32 %v1332, %v1497
    %v1562 = vadd.f32 %v1333, %v1498
    %v1563 = vadd.f32 %v1334, %v1500
    %v1564 = vadd.f32 %v1335, %v1502
    %v1565 = vadd.f32 %v1336, %v1504
    %v1566 = vadd.f32 %v1337, %v1506
    %v1567 = vadd.f32 %v1338, %v1508
    %v1568 = vadd.f32 %v1339, %v1510
    %v1569 = vadd.f32 %v1340, %v1512
    %v1570 = vadd.f32 %v1341, %v1514
    %v1571 = vadd.f32 %v1342, %v1516
    %v1572 = vadd.f32 %v1343, %v1518
    %v1573 = vadd.f32 %v1344, %v1520
    %v1574 = vadd.f32 %v1345, %v1522
    %v1575 = vadd.f32 %v1346, %v1524
    %v1576 = vadd.f32 %v1347, %v1526
    %v1577 = vadd.f32 %v1348, %v1528
    %v1578 = vadd.f32 %v1349, %v1530
    %v1579 = vadd.f32 %v1350, %v1532
    %v1580 = vadd.f32 %v1351, %v1534
    %v1581 = vadd.f32 %v1352, %v1536
    %v1582 = vadd.f32 %v1353, %v1538
    %v1583 = vmul.f32 %v1561, 0.26601171
    %v1584 = vmul.f32 %v1562, 0.26601171
    %v1585 = vmul.f32 %v1563, 0.26601171
    %v1586 = vmul.f32 %v1564, 0.26601171
    %v1587 = vmul.f32 %v1565, 0.26601171
    %v1588 = vmul.f32 %v1566, 0.26601171
    %v1589 = vmul.f32 %v1567, 0.26601171
    %v1590 = vmul.f32 %v1568, 0.26601171
    %v1591 = vmul.f32 %v1569, 0.26601171
    %v1592 = vmul.f32 %v1570, 0.26601171
    %v1593 = vmul.f32 %v1571, 0.26601171
    %v1594 = vmul.f32 %v1572, 0.26601171
    %v1595 = vmul.f32 %v1573, 0.26601171
    %v1596 = vmul.f32 %v1574, 0.26601171
    %v1597 = vmul.f32 %v1575, 0.26601171
    %v1598 = vmul.f32 %v1576, 0.26601171
    %v1599 = vmul.f32 %v1577, 0.26601171
    %v1600 = vmul.f32 %v1578, 0.26601171
    %v1601 = vmul.f32 %v1579, 0.26601171
    %v1602 = vmul.f32 %v1580, 0.26601171
    %v1603 = vmul.f32 %v1581, 0.26601171
    %v1604 = vmul.f32 %v1582, 0.26601171
    %1627 = vrot.lane.b32.xlu0 %v1561, 118
    %v1628 = vpop.permute.xlu0 %1627
    %1629 = vrot.lane.b32.xlu0 %v1562, 118
    %v1630 = vpop.permute.xlu0 %1629
    %1631 = vrot.lane.b32.xlu0 %v1563, 118
    %v1632 = vpop.permute.xlu0 %1631
    %1633 = vrot.lane.b32.xlu0 %v1564, 118
    %v1634 = vpop.permute.xlu0 %1633
    %1635 = vrot.lane.b32.xlu0 %v1565, 118
    %v1636 = vpop.permute.xlu0 %1635
    %1637 = vrot.lane.b32.xlu0 %v1566, 118
    %v1638 = vpop.permute.xlu0 %1637
    %1639 = vrot.lane.b32.xlu0 %v1567, 118
    %v1640 = vpop.permute.xlu0 %1639
    %1641 = vrot.lane.b32.xlu0 %v1568, 118
    %v1642 = vpop.permute.xlu0 %1641
    %1643 = vrot.lane.b32.xlu0 %v1569, 118
    %v1644 = vpop.permute.xlu0 %1643
    %1645 = vrot.lane.b32.xlu0 %v1570, 118
    %v1646 = vpop.permute.xlu0 %1645
    %1647 = vrot.lane.b32.xlu0 %v1571, 118
    %v1648 = vpop.permute.xlu0 %1647
    %1649 = vrot.lane.b32.xlu0 %v1572, 118
    %v1650 = vpop.permute.xlu0 %1649
    %1651 = vrot.lane.b32.xlu0 %v1573, 118
    %v1652 = vpop.permute.xlu0 %1651
    %1653 = vrot.lane.b32.xlu0 %v1574, 118
    %v1654 = vpop.permute.xlu0 %1653
    %1655 = vrot.lane.b32.xlu0 %v1575, 118
    %v1656 = vpop.permute.xlu0 %1655
    %1657 = vrot.lane.b32.xlu0 %v1576, 118
    %v1658 = vpop.permute.xlu0 %1657
    %1659 = vrot.lane.b32.xlu0 %v1577, 118
    %v1660 = vpop.permute.xlu0 %1659
    %1661 = vrot.lane.b32.xlu0 %v1578, 118
    %v1662 = vpop.permute.xlu0 %1661
    %1663 = vrot.lane.b32.xlu0 %v1579, 118
    %v1664 = vpop.permute.xlu0 %1663
    %1665 = vrot.lane.b32.xlu0 %v1580, 118
    %v1666 = vpop.permute.xlu0 %1665
    %1667 = vrot.lane.b32.xlu0 %v1581, 118
    %v1668 = vpop.permute.xlu0 %1667
    %1669 = vrot.lane.b32.xlu0 %v1582, 118
    %v1670 = vpop.permute.xlu0 %1669
    %vm1671 = vcmask 965632
    %v1672 = vsel %vm1671, %v1628, %v1630
    %v1673 = vsel %vm1671, %v1632, %v1634
    %v1674 = vsel %vm1671, %v1636, %v1638
    %v1675 = vsel %vm1671, %v1640, %v1642
    %v1676 = vsel %vm1671, %v1644, %v1646
    %v1677 = vsel %vm1671, %v1648, %v1650
    %v1678 = vsel %vm1671, %v1652, %v1654
    %v1679 = vsel %vm1671, %v1656, %v1658
    %v1680 = vsel %vm1671, %v1660, %v1662
    %v1681 = vsel %vm1671, %v1664, %v1666
    %v1682 = vsel %vm1671, %v1668, %v1670
    %v1694 = vadd.f32 %v1561, %v1672
    %v1695 = vadd.f32 %v1563, %v1673
    %v1696 = vadd.f32 %v1565, %v1674
    %v1697 = vadd.f32 %v1567, %v1675
    %v1698 = vadd.f32 %v1569, %v1676
    %v1699 = vadd.f32 %v1571, %v1677
    %v1700 = vadd.f32 %v1573, %v1678
    %v1701 = vadd.f32 %v1575, %v1679
    %v1702 = vadd.f32 %v1577, %v1680
    %v1703 = vadd.f32 %v1579, %v1681
    %v1704 = vadd.f32 %v1581, %v1682
    %v1705 = vmul.f32 %v1694, 0.0010283801
    %v1706 = vmul.f32 %v1695, 0.0010283801
    %v1707 = vmul.f32 %v1696, 0.0010283801
    %v1708 = vmul.f32 %v1697, 0.0010283801
    %v1709 = vmul.f32 %v1698, 0.0010283801
    %v1710 = vmul.f32 %v1699, 0.0010283801
    %v1711 = vmul.f32 %v1700, 0.0010283801
    %v1712 = vmul.f32 %v1701, 0.0010283801
    %v1713 = vmul.f32 %v1702, 0.0010283801
    %v1714 = vmul.f32 %v1703, 0.0010283801
    %v1715 = vmul.f32 %v1704, 0.0010283801
    %1727 = vrot.lane.b32.xlu0 %v1705, 5
    %v1728 = vpop.permute.xlu0 %1727
    %1729 = vrot.lane.b32.xlu0 %v1706, 5
    %v1730 = vpop.permute.xlu0 %1729
    %1731 = vrot.lane.b32.xlu0 %v1707, 5
    %v1732 = vpop.permute.xlu0 %1731
    %1733 = vrot.lane.b32.xlu0 %v1708, 5
    %v1734 = vpop.permute.xlu0 %1733
    %1735 = vrot.lane.b32.xlu0 %v1709, 5
    %v1736 = vpop.permute.xlu0 %1735
    %1737 = vrot.lane.b32.xlu0 %v1710, 5
    %v1738 = vpop.permute.xlu0 %1737
    %1739 = vrot.lane.b32.xlu0 %v1711, 5
    %v1740 = vpop.permute.xlu0 %1739
    %1741 = vrot.lane.b32.xlu0 %v1712, 5
    %v1742 = vpop.permute.xlu0 %1741
    %1743 = vrot.lane.b32.xlu0 %v1713, 5
    %v1744 = vpop.permute.xlu0 %1743
    %1745 = vrot.lane.b32.xlu0 %v1714, 5
    %v1746 = vpop.permute.xlu0 %1745
    %1747 = vrot.lane.b32.xlu0 %v1715, 5
    %v1748 = vpop.permute.xlu0 %1747
    %v1760 = vadd.f32 %v1583, %v1728
    %v1761 = vadd.f32 %v1584, %v1728
    %v1762 = vadd.f32 %v1585, %v1730
    %v1763 = vadd.f32 %v1586, %v1730
    %v1764 = vadd.f32 %v1587, %v1732
    %v1765 = vadd.f32 %v1588, %v1732
    %v1766 = vadd.f32 %v1589, %v1734
    %v1767 = vadd.f32 %v1590, %v1734
    %v1768 = vadd.f32 %v1591, %v1736
    %v1769 = vadd.f32 %v1592, %v1736
    %v1770 = vadd.f32 %v1593, %v1738
    %v1771 = vadd.f32 %v1594, %v1738
    %v1772 = vadd.f32 %v1595, %v1740
    %v1773 = vadd.f32 %v1596, %v1740
    %v1774 = vadd.f32 %v1597, %v1742
    %v1775 = vadd.f32 %v1598, %v1742
    %v1776 = vadd.f32 %v1599, %v1744
    %v1777 = vadd.f32 %v1600, %v1744
    %v1778 = vadd.f32 %v1601, %v1746
    %v1779 = vadd.f32 %v1602, %v1746
    %v1780 = vadd.f32 %v1603, %v1748
    %v1781 = vadd.f32 %v1604, %v1748
    %1782 = vrot.lane.b32.xlu0 %v1561, 120
    %v1783 = vpop.permute.xlu0 %1782
    %1784 = vrot.lane.b32.xlu0 %v1562, 120
    %v1785 = vpop.permute.xlu0 %1784
    %1786 = vrot.lane.b32.xlu0 %v1563, 120
    %v1787 = vpop.permute.xlu0 %1786
    %1788 = vrot.lane.b32.xlu0 %v1564, 120
    %v1789 = vpop.permute.xlu0 %1788
    %1790 = vrot.lane.b32.xlu0 %v1565, 120
    %v1791 = vpop.permute.xlu0 %1790
    %1792 = vrot.lane.b32.xlu0 %v1566, 120
    %v1793 = vpop.permute.xlu0 %1792
    %1794 = vrot.lane.b32.xlu0 %v1567, 120
    %v1795 = vpop.permute.xlu0 %1794
    %1796 = vrot.lane.b32.xlu0 %v1568, 120
    %v1797 = vpop.permute.xlu0 %1796
    %1798 = vrot.lane.b32.xlu0 %v1569, 120
    %v1799 = vpop.permute.xlu0 %1798
    %1800 = vrot.lane.b32.xlu0 %v1570, 120
    %v1801 = vpop.permute.xlu0 %1800
    %1802 = vrot.lane.b32.xlu0 %v1571, 120
    %v1803 = vpop.permute.xlu0 %1802
    %1804 = vrot.lane.b32.xlu0 %v1572, 120
    %v1805 = vpop.permute.xlu0 %1804
    %1806 = vrot.lane.b32.xlu0 %v1573, 120
    %v1807 = vpop.permute.xlu0 %1806
    %1808 = vrot.lane.b32.xlu0 %v1574, 120
    %v1809 = vpop.permute.xlu0 %1808
    %1810 = vrot.lane.b32.xlu0 %v1575, 120
    %v1811 = vpop.permute.xlu0 %1810
    %1812 = vrot.lane.b32.xlu0 %v1576, 120
    %v1813 = vpop.permute.xlu0 %1812
    %1814 = vrot.lane.b32.xlu0 %v1577, 120
    %v1815 = vpop.permute.xlu0 %1814
    %1816 = vrot.lane.b32.xlu0 %v1578, 120
    %v1817 = vpop.permute.xlu0 %1816
    %1818 = vrot.lane.b32.xlu0 %v1579, 120
    %v1819 = vpop.permute.xlu0 %1818
    %1820 = vrot.lane.b32.xlu0 %v1580, 120
    %v1821 = vpop.permute.xlu0 %1820
    %1822 = vrot.lane.b32.xlu0 %v1581, 120
    %v1823 = vpop.permute.xlu0 %1822
    %1824 = vrot.lane.b32.xlu0 %v1582, 120
    %v1825 = vpop.permute.xlu0 %1824
    %vm1826 = vcmask 982016
    %v1827 = vsel %vm1826, %v1783, %v1785
    %v1828 = vsel %vm1826, %v1787, %v1789
    %v1829 = vsel %vm1826, %v1791, %v1793
    %v1830 = vsel %vm1826, %v1795, %v1797
    %v1831 = vsel %vm1826, %v1799, %v1801
    %v1832 = vsel %vm1826, %v1803, %v1805
    %v1833 = vsel %vm1826, %v1807, %v1809
    %v1834 = vsel %vm1826, %v1811, %v1813
    %v1835 = vsel %vm1826, %v1815, %v1817
    %v1836 = vsel %vm1826, %v1819, %v1821
    %v1837 = vsel %vm1826, %v1823, %v1825
    %v1860 = vadd.f32 %v1561, %v1827
    %v1861 = vadd.f32 %v1562, %v1785
    %v1862 = vadd.f32 %v1563, %v1828
    %v1863 = vadd.f32 %v1564, %v1789
    %v1864 = vadd.f32 %v1565, %v1829
    %v1865 = vadd.f32 %v1566, %v1793
    %v1866 = vadd.f32 %v1567, %v1830
    %v1867 = vadd.f32 %v1568, %v1797
    %v1868 = vadd.f32 %v1569, %v1831
    %v1869 = vadd.f32 %v1570, %v1801
    %v1870 = vadd.f32 %v1571, %v1832
    %v1871 = vadd.f32 %v1572, %v1805
    %v1872 = vadd.f32 %v1573, %v1833
    %v1873 = vadd.f32 %v1574, %v1809
    %v1874 = vadd.f32 %v1575, %v1834
    %v1875 = vadd.f32 %v1576, %v1813
    %v1876 = vadd.f32 %v1577, %v1835
    %v1877 = vadd.f32 %v1578, %v1817
    %v1878 = vadd.f32 %v1579, %v1836
    %v1879 = vadd.f32 %v1580, %v1821
    %v1880 = vadd.f32 %v1581, %v1837
    %v1881 = vadd.f32 %v1582, %v1825
    %v1882 = vmul.f32 %v1860, 0.007598758
    %v1883 = vmul.f32 %v1861, 0.007598758
    %v1884 = vmul.f32 %v1862, 0.007598758
    %v1885 = vmul.f32 %v1863, 0.007598758
    %v1886 = vmul.f32 %v1864, 0.007598758
    %v1887 = vmul.f32 %v1865, 0.007598758
    %v1888 = vmul.f32 %v1866, 0.007598758
    %v1889 = vmul.f32 %v1867, 0.007598758
    %v1890 = vmul.f32 %v1868, 0.007598758
    %v1891 = vmul.f32 %v1869, 0.007598758
    %v1892 = vmul.f32 %v1870, 0.007598758
    %v1893 = vmul.f32 %v1871, 0.007598758
    %v1894 = vmul.f32 %v1872, 0.007598758
    %v1895 = vmul.f32 %v1873, 0.007598758
    %v1896 = vmul.f32 %v1874, 0.007598758
    %v1897 = vmul.f32 %v1875, 0.007598758
    %v1898 = vmul.f32 %v1876, 0.007598758
    %v1899 = vmul.f32 %v1877, 0.007598758
    %v1900 = vmul.f32 %v1878, 0.007598758
    %v1901 = vmul.f32 %v1879, 0.007598758
    %v1902 = vmul.f32 %v1880, 0.007598758
    %v1903 = vmul.f32 %v1881, 0.007598758
    %1926 = vrot.lane.b32.xlu0 %v1882, 4
    %v1927 = vpop.permute.xlu0 %1926
    %1928 = vrot.lane.b32.xlu0 %v1883, 4
    %v1929 = vpop.permute.xlu0 %1928
    %1930 = vrot.lane.b32.xlu0 %v1884, 4
    %v1931 = vpop.permute.xlu0 %1930
    %1932 = vrot.lane.b32.xlu0 %v1885, 4
    %v1933 = vpop.permute.xlu0 %1932
    %1934 = vrot.lane.b32.xlu0 %v1886, 4
    %v1935 = vpop.permute.xlu0 %1934
    %1936 = vrot.lane.b32.xlu0 %v1887, 4
    %v1937 = vpop.permute.xlu0 %1936
    %1938 = vrot.lane.b32.xlu0 %v1888, 4
    %v1939 = vpop.permute.xlu0 %1938
    %1940 = vrot.lane.b32.xlu0 %v1889, 4
    %v1941 = vpop.permute.xlu0 %1940
    %1942 = vrot.lane.b32.xlu0 %v1890, 4
    %v1943 = vpop.permute.xlu0 %1942
    %1944 = vrot.lane.b32.xlu0 %v1891, 4
    %v1945 = vpop.permute.xlu0 %1944
    %1946 = vrot.lane.b32.xlu0 %v1892, 4
    %v1947 = vpop.permute.xlu0 %1946
    %1948 = vrot.lane.b32.xlu0 %v1893, 4
    %v1949 = vpop.permute.xlu0 %1948
    %1950 = vrot.lane.b32.xlu0 %v1894, 4
    %v1951 = vpop.permute.xlu0 %1950
    %1952 = vrot.lane.b32.xlu0 %v1895, 4
    %v1953 = vpop.permute.xlu0 %1952
    %1954 = vrot.lane.b32.xlu0 %v1896, 4
    %v1955 = vpop.permute.xlu0 %1954
    %1956 = vrot.lane.b32.xlu0 %v1897, 4
    %v1957 = vpop.permute.xlu0 %1956
    %1958 = vrot.lane.b32.xlu0 %v1898, 4
    %v1959 = vpop.permute.xlu0 %1958
    %1960 = vrot.lane.b32.xlu0 %v1899, 4
    %v1961 = vpop.permute.xlu0 %1960
    %1962 = vrot.lane.b32.xlu0 %v1900, 4
    %v1963 = vpop.permute.xlu0 %1962
    %1964 = vrot.lane.b32.xlu0 %v1901, 4
    %v1965 = vpop.permute.xlu0 %1964
    %1966 = vrot.lane.b32.xlu0 %v1902, 4
    %v1967 = vpop.permute.xlu0 %1966
    %1968 = vrot.lane.b32.xlu0 %v1903, 4
    %v1969 = vpop.permute.xlu0 %1968
    %vm1970 = vcmask 31744
    %v1971 = vsel %vm1970, %v1927, %v1929
    %v1972 = vsel %vm1970, %v1931, %v1933
    %v1973 = vsel %vm1970, %v1935, %v1937
    %v1974 = vsel %vm1970, %v1939, %v1941
    %v1975 = vsel %vm1970, %v1943, %v1945
    %v1976 = vsel %vm1970, %v1947, %v1949
    %v1977 = vsel %vm1970, %v1951, %v1953
    %v1978 = vsel %vm1970, %v1955, %v1957
    %v1979 = vsel %vm1970, %v1959, %v1961
    %v1980 = vsel %vm1970, %v1963, %v1965
    %v1981 = vsel %vm1970, %v1967, %v1969
    %v2004 = vadd.f32 %v1760, %v1927
    %v2005 = vadd.f32 %v1761, %v1971
    %v2006 = vadd.f32 %v1762, %v1931
    %v2007 = vadd.f32 %v1763, %v1972
    %v2008 = vadd.f32 %v1764, %v1935
    %v2009 = vadd.f32 %v1765, %v1973
    %v2010 = vadd.f32 %v1766, %v1939
    %v2011 = vadd.f32 %v1767, %v1974
    %v2012 = vadd.f32 %v1768, %v1943
    %v2013 = vadd.f32 %v1769, %v1975
    %v2014 = vadd.f32 %v1770, %v1947
    %v2015 = vadd.f32 %v1771, %v1976
    %v2016 = vadd.f32 %v1772, %v1951
    %v2017 = vadd.f32 %v1773, %v1977
    %v2018 = vadd.f32 %v1774, %v1955
    %v2019 = vadd.f32 %v1775, %v1978
    %v2020 = vadd.f32 %v1776, %v1959
    %v2021 = vadd.f32 %v1777, %v1979
    %v2022 = vadd.f32 %v1778, %v1963
    %v2023 = vadd.f32 %v1779, %v1980
    %v2024 = vadd.f32 %v1780, %v1967
    %v2025 = vadd.f32 %v1781, %v1981
    %2026 = vrot.lane.b32.xlu0 %v1561, 122
    %v2027 = vpop.permute.xlu0 %2026
    %2028 = vrot.lane.b32.xlu0 %v1562, 122
    %v2029 = vpop.permute.xlu0 %2028
    %2030 = vrot.lane.b32.xlu0 %v1563, 122
    %v2031 = vpop.permute.xlu0 %2030
    %2032 = vrot.lane.b32.xlu0 %v1564, 122
    %v2033 = vpop.permute.xlu0 %2032
    %2034 = vrot.lane.b32.xlu0 %v1565, 122
    %v2035 = vpop.permute.xlu0 %2034
    %2036 = vrot.lane.b32.xlu0 %v1566, 122
    %v2037 = vpop.permute.xlu0 %2036
    %2038 = vrot.lane.b32.xlu0 %v1567, 122
    %v2039 = vpop.permute.xlu0 %2038
    %2040 = vrot.lane.b32.xlu0 %v1568, 122
    %v2041 = vpop.permute.xlu0 %2040
    %2042 = vrot.lane.b32.xlu0 %v1569, 122
    %v2043 = vpop.permute.xlu0 %2042
    %2044 = vrot.lane.b32.xlu0 %v1570, 122
    %v2045 = vpop.permute.xlu0 %2044
    %2046 = vrot.lane.b32.xlu0 %v1571, 122
    %v2047 = vpop.permute.xlu0 %2046
    %2048 = vrot.lane.b32.xlu0 %v1572, 122
    %v2049 = vpop.permute.xlu0 %2048
    %2050 = vrot.lane.b32.xlu0 %v1573, 122
    %v2051 = vpop.permute.xlu0 %2050
    %2052 = vrot.lane.b32.xlu0 %v1574, 122
    %v2053 = vpop.permute.xlu0 %2052
    %2054 = vrot.lane.b32.xlu0 %v1575, 122
    %v2055 = vpop.permute.xlu0 %2054
    %2056 = vrot.lane.b32.xlu0 %v1576, 122
    %v2057 = vpop.permute.xlu0 %2056
    %2058 = vrot.lane.b32.xlu0 %v1577, 122
    %v2059 = vpop.permute.xlu0 %2058
    %2060 = vrot.lane.b32.xlu0 %v1578, 122
    %v2061 = vpop.permute.xlu0 %2060
    %2062 = vrot.lane.b32.xlu0 %v1579, 122
    %v2063 = vpop.permute.xlu0 %2062
    %2064 = vrot.lane.b32.xlu0 %v1580, 122
    %v2065 = vpop.permute.xlu0 %2064
    %2066 = vrot.lane.b32.xlu0 %v1581, 122
    %v2067 = vpop.permute.xlu0 %2066
    %2068 = vrot.lane.b32.xlu0 %v1582, 122
    %v2069 = vpop.permute.xlu0 %2068
    %vm2070 = vcmask 998400
    %v2071 = vsel %vm2070, %v2027, %v2029
    %v2072 = vsel %vm2070, %v2031, %v2033
    %v2073 = vsel %vm2070, %v2035, %v2037
    %v2074 = vsel %vm2070, %v2039, %v2041
    %v2075 = vsel %vm2070, %v2043, %v2045
    %v2076 = vsel %vm2070, %v2047, %v2049
    %v2077 = vsel %vm2070, %v2051, %v2053
    %v2078 = vsel %vm2070, %v2055, %v2057
    %v2079 = vsel %vm2070, %v2059, %v2061
    %v2080 = vsel %vm2070, %v2063, %v2065
    %v2081 = vsel %vm2070, %v2067, %v2069
    %v2104 = vadd.f32 %v1561, %v2071
    %v2105 = vadd.f32 %v1562, %v2029
    %v2106 = vadd.f32 %v1563, %v2072
    %v2107 = vadd.f32 %v1564, %v2033
    %v2108 = vadd.f32 %v1565, %v2073
    %v2109 = vadd.f32 %v1566, %v2037
    %v2110 = vadd.f32 %v1567, %v2074
    %v2111 = vadd.f32 %v1568, %v2041
    %v2112 = vadd.f32 %v1569, %v2075
    %v2113 = vadd.f32 %v1570, %v2045
    %v2114 = vadd.f32 %v1571, %v2076
    %v2115 = vadd.f32 %v1572, %v2049
    %v2116 = vadd.f32 %v1573, %v2077
    %v2117 = vadd.f32 %v1574, %v2053
    %v2118 = vadd.f32 %v1575, %v2078
    %v2119 = vadd.f32 %v1576, %v2057
    %v2120 = vadd.f32 %v1577, %v2079
    %v2121 = vadd.f32 %v1578, %v2061
    %v2122 = vadd.f32 %v1579, %v2080
    %v2123 = vadd.f32 %v1580, %v2065
    %v2124 = vadd.f32 %v1581, %v2081
    %v2125 = vadd.f32 %v1582, %v2069
    %v2126 = vmul.f32 %v2104, 0.036000773
    %v2127 = vmul.f32 %v2105, 0.036000773
    %v2128 = vmul.f32 %v2106, 0.036000773
    %v2129 = vmul.f32 %v2107, 0.036000773
    %v2130 = vmul.f32 %v2108, 0.036000773
    %v2131 = vmul.f32 %v2109, 0.036000773
    %v2132 = vmul.f32 %v2110, 0.036000773
    %v2133 = vmul.f32 %v2111, 0.036000773
    %v2134 = vmul.f32 %v2112, 0.036000773
    %v2135 = vmul.f32 %v2113, 0.036000773
    %v2136 = vmul.f32 %v2114, 0.036000773
    %v2137 = vmul.f32 %v2115, 0.036000773
    %v2138 = vmul.f32 %v2116, 0.036000773
    %v2139 = vmul.f32 %v2117, 0.036000773
    %v2140 = vmul.f32 %v2118, 0.036000773
    %v2141 = vmul.f32 %v2119, 0.036000773
    %v2142 = vmul.f32 %v2120, 0.036000773
    %v2143 = vmul.f32 %v2121, 0.036000773
    %v2144 = vmul.f32 %v2122, 0.036000773
    %v2145 = vmul.f32 %v2123, 0.036000773
    %v2146 = vmul.f32 %v2124, 0.036000773
    %v2147 = vmul.f32 %v2125, 0.036000773
    %2170 = vrot.lane.b32.xlu0 %v2126, 3
    %v2171 = vpop.permute.xlu0 %2170
    %2172 = vrot.lane.b32.xlu0 %v2127, 3
    %v2173 = vpop.permute.xlu0 %2172
    %2174 = vrot.lane.b32.xlu0 %v2128, 3
    %v2175 = vpop.permute.xlu0 %2174
    %2176 = vrot.lane.b32.xlu0 %v2129, 3
    %v2177 = vpop.permute.xlu0 %2176
    %2178 = vrot.lane.b32.xlu0 %v2130, 3
    %v2179 = vpop.permute.xlu0 %2178
    %2180 = vrot.lane.b32.xlu0 %v2131, 3
    %v2181 = vpop.permute.xlu0 %2180
    %2182 = vrot.lane.b32.xlu0 %v2132, 3
    %v2183 = vpop.permute.xlu0 %2182
    %2184 = vrot.lane.b32.xlu0 %v2133, 3
    %v2185 = vpop.permute.xlu0 %2184
    %2186 = vrot.lane.b32.xlu0 %v2134, 3
    %v2187 = vpop.permute.xlu0 %2186
    %2188 = vrot.lane.b32.xlu0 %v2135, 3
    %v2189 = vpop.permute.xlu0 %2188
    %2190 = vrot.lane.b32.xlu0 %v2136, 3
    %v2191 = vpop.permute.xlu0 %2190
    %2192 = vrot.lane.b32.xlu0 %v2137, 3
    %v2193 = vpop.permute.xlu0 %2192
    %2194 = vrot.lane.b32.xlu0 %v2138, 3
    %v2195 = vpop.permute.xlu0 %2194
    %2196 = vrot.lane.b32.xlu0 %v2139, 3
    %v2197 = vpop.permute.xlu0 %2196
    %2198 = vrot.lane.b32.xlu0 %v2140, 3
    %v2199 = vpop.permute.xlu0 %2198
    %2200 = vrot.lane.b32.xlu0 %v2141, 3
    %v2201 = vpop.permute.xlu0 %2200
    %2202 = vrot.lane.b32.xlu0 %v2142, 3
    %v2203 = vpop.permute.xlu0 %2202
    %2204 = vrot.lane.b32.xlu0 %v2143, 3
    %v2205 = vpop.permute.xlu0 %2204
    %2206 = vrot.lane.b32.xlu0 %v2144, 3
    %v2207 = vpop.permute.xlu0 %2206
    %2208 = vrot.lane.b32.xlu0 %v2145, 3
    %v2209 = vpop.permute.xlu0 %2208
    %2210 = vrot.lane.b32.xlu0 %v2146, 3
    %v2211 = vpop.permute.xlu0 %2210
    %2212 = vrot.lane.b32.xlu0 %v2147, 3
    %v2213 = vpop.permute.xlu0 %2212
    %vm2214 = vcmask 23552
    %v2215 = vsel %vm2214, %v2171, %v2173
    %v2216 = vsel %vm2214, %v2175, %v2177
    %v2217 = vsel %vm2214, %v2179, %v2181
    %v2218 = vsel %vm2214, %v2183, %v2185
    %v2219 = vsel %vm2214, %v2187, %v2189
    %v2220 = vsel %vm2214, %v2191, %v2193
    %v2221 = vsel %vm2214, %v2195, %v2197
    %v2222 = vsel %vm2214, %v2199, %v2201
    %v2223 = vsel %vm2214, %v2203, %v2205
    %v2224 = vsel %vm2214, %v2207, %v2209
    %v2225 = vsel %vm2214, %v2211, %v2213
    %v2248 = vadd.f32 %v2004, %v2171
    %v2249 = vadd.f32 %v2005, %v2215
    %v2250 = vadd.f32 %v2006, %v2175
    %v2251 = vadd.f32 %v2007, %v2216
    %v2252 = vadd.f32 %v2008, %v2179
    %v2253 = vadd.f32 %v2009, %v2217
    %v2254 = vadd.f32 %v2010, %v2183
    %v2255 = vadd.f32 %v2011, %v2218
    %v2256 = vadd.f32 %v2012, %v2187
    %v2257 = vadd.f32 %v2013, %v2219
    %v2258 = vadd.f32 %v2014, %v2191
    %v2259 = vadd.f32 %v2015, %v2220
    %v2260 = vadd.f32 %v2016, %v2195
    %v2261 = vadd.f32 %v2017, %v2221
    %v2262 = vadd.f32 %v2018, %v2199
    %v2263 = vadd.f32 %v2019, %v2222
    %v2264 = vadd.f32 %v2020, %v2203
    %v2265 = vadd.f32 %v2021, %v2223
    %v2266 = vadd.f32 %v2022, %v2207
    %v2267 = vadd.f32 %v2023, %v2224
    %v2268 = vadd.f32 %v2024, %v2211
    %v2269 = vadd.f32 %v2025, %v2225
    %2270 = vrot.lane.b32.xlu0 %v1561, 124
    %v2271 = vpop.permute.xlu0 %2270
    %2272 = vrot.lane.b32.xlu0 %v1562, 124
    %v2273 = vpop.permute.xlu0 %2272
    %2274 = vrot.lane.b32.xlu0 %v1563, 124
    %v2275 = vpop.permute.xlu0 %2274
    %2276 = vrot.lane.b32.xlu0 %v1564, 124
    %v2277 = vpop.permute.xlu0 %2276
    %2278 = vrot.lane.b32.xlu0 %v1565, 124
    %v2279 = vpop.permute.xlu0 %2278
    %2280 = vrot.lane.b32.xlu0 %v1566, 124
    %v2281 = vpop.permute.xlu0 %2280
    %2282 = vrot.lane.b32.xlu0 %v1567, 124
    %v2283 = vpop.permute.xlu0 %2282
    %2284 = vrot.lane.b32.xlu0 %v1568, 124
    %v2285 = vpop.permute.xlu0 %2284
    %2286 = vrot.lane.b32.xlu0 %v1569, 124
    %v2287 = vpop.permute.xlu0 %2286
    %2288 = vrot.lane.b32.xlu0 %v1570, 124
    %v2289 = vpop.permute.xlu0 %2288
    %2290 = vrot.lane.b32.xlu0 %v1571, 124
    %v2291 = vpop.permute.xlu0 %2290
    %2292 = vrot.lane.b32.xlu0 %v1572, 124
    %v2293 = vpop.permute.xlu0 %2292
    %2294 = vrot.lane.b32.xlu0 %v1573, 124
    %v2295 = vpop.permute.xlu0 %2294
    %2296 = vrot.lane.b32.xlu0 %v1574, 124
    %v2297 = vpop.permute.xlu0 %2296
    %2298 = vrot.lane.b32.xlu0 %v1575, 124
    %v2299 = vpop.permute.xlu0 %2298
    %2300 = vrot.lane.b32.xlu0 %v1576, 124
    %v2301 = vpop.permute.xlu0 %2300
    %2302 = vrot.lane.b32.xlu0 %v1577, 124
    %v2303 = vpop.permute.xlu0 %2302
    %2304 = vrot.lane.b32.xlu0 %v1578, 124
    %v2305 = vpop.permute.xlu0 %2304
    %2306 = vrot.lane.b32.xlu0 %v1579, 124
    %v2307 = vpop.permute.xlu0 %2306
    %2308 = vrot.lane.b32.xlu0 %v1580, 124
    %v2309 = vpop.permute.xlu0 %2308
    %2310 = vrot.lane.b32.xlu0 %v1581, 124
    %v2311 = vpop.permute.xlu0 %2310
    %2312 = vrot.lane.b32.xlu0 %v1582, 124
    %v2313 = vpop.permute.xlu0 %2312
    %vm2314 = vcmask 1014784
    %v2315 = vsel %vm2314, %v2271, %v2273
    %v2316 = vsel %vm2314, %v2275, %v2277
    %v2317 = vsel %vm2314, %v2279, %v2281
    %v2318 = vsel %vm2314, %v2283, %v2285
    %v2319 = vsel %vm2314, %v2287, %v2289
    %v2320 = vsel %vm2314, %v2291, %v2293
    %v2321 = vsel %vm2314, %v2295, %v2297
    %v2322 = vsel %vm2314, %v2299, %v2301
    %v2323 = vsel %vm2314, %v2303, %v2305
    %v2324 = vsel %vm2314, %v2307, %v2309
    %v2325 = vsel %vm2314, %v2311, %v2313
    %v2348 = vadd.f32 %v1561, %v2315
    %v2349 = vadd.f32 %v1562, %v2273
    %v2350 = vadd.f32 %v1563, %v2316
    %v2351 = vadd.f32 %v1564, %v2277
    %v2352 = vadd.f32 %v1565, %v2317
    %v2353 = vadd.f32 %v1566, %v2281
    %v2354 = vadd.f32 %v1567, %v2318
    %v2355 = vadd.f32 %v1568, %v2285
    %v2356 = vadd.f32 %v1569, %v2319
    %v2357 = vadd.f32 %v1570, %v2289
    %v2358 = vadd.f32 %v1571, %v2320
    %v2359 = vadd.f32 %v1572, %v2293
    %v2360 = vadd.f32 %v1573, %v2321
    %v2361 = vadd.f32 %v1574, %v2297
    %v2362 = vadd.f32 %v1575, %v2322
    %v2363 = vadd.f32 %v1576, %v2301
    %v2364 = vadd.f32 %v1577, %v2323
    %v2365 = vadd.f32 %v1578, %v2305
    %v2366 = vadd.f32 %v1579, %v2324
    %v2367 = vadd.f32 %v1580, %v2309
    %v2368 = vadd.f32 %v1581, %v2325
    %v2369 = vadd.f32 %v1582, %v2313
    %v2370 = vmul.f32 %v2348, 0.10936069
    %v2371 = vmul.f32 %v2349, 0.10936069
    %v2372 = vmul.f32 %v2350, 0.10936069
    %v2373 = vmul.f32 %v2351, 0.10936069
    %v2374 = vmul.f32 %v2352, 0.10936069
    %v2375 = vmul.f32 %v2353, 0.10936069
    %v2376 = vmul.f32 %v2354, 0.10936069
    %v2377 = vmul.f32 %v2355, 0.10936069
    %v2378 = vmul.f32 %v2356, 0.10936069
    %v2379 = vmul.f32 %v2357, 0.10936069
    %v2380 = vmul.f32 %v2358, 0.10936069
    %v2381 = vmul.f32 %v2359, 0.10936069
    %v2382 = vmul.f32 %v2360, 0.10936069
    %v2383 = vmul.f32 %v2361, 0.10936069
    %v2384 = vmul.f32 %v2362, 0.10936069
    %v2385 = vmul.f32 %v2363, 0.10936069
    %v2386 = vmul.f32 %v2364, 0.10936069
    %v2387 = vmul.f32 %v2365, 0.10936069
    %v2388 = vmul.f32 %v2366, 0.10936069
    %v2389 = vmul.f32 %v2367, 0.10936069
    %v2390 = vmul.f32 %v2368, 0.10936069
    %v2391 = vmul.f32 %v2369, 0.10936069
    %2414 = vrot.lane.b32.xlu0 %v2370, 2
    %v2415 = vpop.permute.xlu0 %2414
    %2416 = vrot.lane.b32.xlu0 %v2371, 2
    %v2417 = vpop.permute.xlu0 %2416
    %2418 = vrot.lane.b32.xlu0 %v2372, 2
    %v2419 = vpop.permute.xlu0 %2418
    %2420 = vrot.lane.b32.xlu0 %v2373, 2
    %v2421 = vpop.permute.xlu0 %2420
    %2422 = vrot.lane.b32.xlu0 %v2374, 2
    %v2423 = vpop.permute.xlu0 %2422
    %2424 = vrot.lane.b32.xlu0 %v2375, 2
    %v2425 = vpop.permute.xlu0 %2424
    %2426 = vrot.lane.b32.xlu0 %v2376, 2
    %v2427 = vpop.permute.xlu0 %2426
    %2428 = vrot.lane.b32.xlu0 %v2377, 2
    %v2429 = vpop.permute.xlu0 %2428
    %2430 = vrot.lane.b32.xlu0 %v2378, 2
    %v2431 = vpop.permute.xlu0 %2430
    %2432 = vrot.lane.b32.xlu0 %v2379, 2
    %v2433 = vpop.permute.xlu0 %2432
    %2434 = vrot.lane.b32.xlu0 %v2380, 2
    %v2435 = vpop.permute.xlu0 %2434
    %2436 = vrot.lane.b32.xlu0 %v2381, 2
    %v2437 = vpop.permute.xlu0 %2436
    %2438 = vrot.lane.b32.xlu0 %v2382, 2
    %v2439 = vpop.permute.xlu0 %2438
    %2440 = vrot.lane.b32.xlu0 %v2383, 2
    %v2441 = vpop.permute.xlu0 %2440
    %2442 = vrot.lane.b32.xlu0 %v2384, 2
    %v2443 = vpop.permute.xlu0 %2442
    %2444 = vrot.lane.b32.xlu0 %v2385, 2
    %v2445 = vpop.permute.xlu0 %2444
    %2446 = vrot.lane.b32.xlu0 %v2386, 2
    %v2447 = vpop.permute.xlu0 %2446
    %2448 = vrot.lane.b32.xlu0 %v2387, 2
    %v2449 = vpop.permute.xlu0 %2448
    %2450 = vrot.lane.b32.xlu0 %v2388, 2
    %v2451 = vpop.permute.xlu0 %2450
    %2452 = vrot.lane.b32.xlu0 %v2389, 2
    %v2453 = vpop.permute.xlu0 %2452
    %2454 = vrot.lane.b32.xlu0 %v2390, 2
    %v2455 = vpop.permute.xlu0 %2454
    %2456 = vrot.lane.b32.xlu0 %v2391, 2
    %v2457 = vpop.permute.xlu0 %2456
    %vm2458 = vcmask 15360
    %v2459 = vsel %vm2458, %v2415, %v2417
    %v2460 = vsel %vm2458, %v2419, %v2421
    %v2461 = vsel %vm2458, %v2423, %v2425
    %v2462 = vsel %vm2458, %v2427, %v2429
    %v2463 = vsel %vm2458, %v2431, %v2433
    %v2464 = vsel %vm2458, %v2435, %v2437
    %v2465 = vsel %vm2458, %v2439, %v2441
    %v2466 = vsel %vm2458, %v2443, %v2445
    %v2467 = vsel %vm2458, %v2447, %v2449
    %v2468 = vsel %vm2458, %v2451, %v2453
    %v2469 = vsel %vm2458, %v2455, %v2457
    %v2492 = vadd.f32 %v2248, %v2415
    %v2493 = vadd.f32 %v2249, %v2459
    %v2494 = vadd.f32 %v2250, %v2419
    %v2495 = vadd.f32 %v2251, %v2460
    %v2496 = vadd.f32 %v2252, %v2423
    %v2497 = vadd.f32 %v2253, %v2461
    %v2498 = vadd.f32 %v2254, %v2427
    %v2499 = vadd.f32 %v2255, %v2462
    %v2500 = vadd.f32 %v2256, %v2431
    %v2501 = vadd.f32 %v2257, %v2463
    %v2502 = vadd.f32 %v2258, %v2435
    %v2503 = vadd.f32 %v2259, %v2464
    %v2504 = vadd.f32 %v2260, %v2439
    %v2505 = vadd.f32 %v2261, %v2465
    %v2506 = vadd.f32 %v2262, %v2443
    %v2507 = vadd.f32 %v2263, %v2466
    %v2508 = vadd.f32 %v2264, %v2447
    %v2509 = vadd.f32 %v2265, %v2467
    %v2510 = vadd.f32 %v2266, %v2451
    %v2511 = vadd.f32 %v2267, %v2468
    %v2512 = vadd.f32 %v2268, %v2455
    %v2513 = vadd.f32 %v2269, %v2469
    %2514 = vrot.lane.b32.xlu0 %v1561, 126
    %v2515 = vpop.permute.xlu0 %2514
    %2516 = vrot.lane.b32.xlu0 %v1562, 126
    %v2517 = vpop.permute.xlu0 %2516
    %2518 = vrot.lane.b32.xlu0 %v1563, 126
    %v2519 = vpop.permute.xlu0 %2518
    %2520 = vrot.lane.b32.xlu0 %v1564, 126
    %v2521 = vpop.permute.xlu0 %2520
    %2522 = vrot.lane.b32.xlu0 %v1565, 126
    %v2523 = vpop.permute.xlu0 %2522
    %2524 = vrot.lane.b32.xlu0 %v1566, 126
    %v2525 = vpop.permute.xlu0 %2524
    %2526 = vrot.lane.b32.xlu0 %v1567, 126
    %v2527 = vpop.permute.xlu0 %2526
    %2528 = vrot.lane.b32.xlu0 %v1568, 126
    %v2529 = vpop.permute.xlu0 %2528
    %2530 = vrot.lane.b32.xlu0 %v1569, 126
    %v2531 = vpop.permute.xlu0 %2530
    %2532 = vrot.lane.b32.xlu0 %v1570, 126
    %v2533 = vpop.permute.xlu0 %2532
    %2534 = vrot.lane.b32.xlu0 %v1571, 126
    %v2535 = vpop.permute.xlu0 %2534
    %2536 = vrot.lane.b32.xlu0 %v1572, 126
    %v2537 = vpop.permute.xlu0 %2536
    %2538 = vrot.lane.b32.xlu0 %v1573, 126
    %v2539 = vpop.permute.xlu0 %2538
    %2540 = vrot.lane.b32.xlu0 %v1574, 126
    %v2541 = vpop.permute.xlu0 %2540
    %2542 = vrot.lane.b32.xlu0 %v1575, 126
    %v2543 = vpop.permute.xlu0 %2542
    %2544 = vrot.lane.b32.xlu0 %v1576, 126
    %v2545 = vpop.permute.xlu0 %2544
    %2546 = vrot.lane.b32.xlu0 %v1577, 126
    %v2547 = vpop.permute.xlu0 %2546
    %2548 = vrot.lane.b32.xlu0 %v1578, 126
    %v2549 = vpop.permute.xlu0 %2548
    %2550 = vrot.lane.b32.xlu0 %v1579, 126
    %v2551 = vpop.permute.xlu0 %2550
    %2552 = vrot.lane.b32.xlu0 %v1580, 126
    %v2553 = vpop.permute.xlu0 %2552
    %2554 = vrot.lane.b32.xlu0 %v1581, 126
    %v2555 = vpop.permute.xlu0 %2554
    %2556 = vrot.lane.b32.xlu0 %v1582, 126
    %v2557 = vpop.permute.xlu0 %2556
    %vm2558 = vcmask 1031168
    %v2559 = vsel %vm2558, %v2515, %v2517
    %v2560 = vsel %vm2558, %v2519, %v2521
    %v2561 = vsel %vm2558, %v2523, %v2525
    %v2562 = vsel %vm2558, %v2527, %v2529
    %v2563 = vsel %vm2558, %v2531, %v2533
    %v2564 = vsel %vm2558, %v2535, %v2537
    %v2565 = vsel %vm2558, %v2539, %v2541
    %v2566 = vsel %vm2558, %v2543, %v2545
    %v2567 = vsel %vm2558, %v2547, %v2549
    %v2568 = vsel %vm2558, %v2551, %v2553
    %v2569 = vsel %vm2558, %v2555, %v2557
    %v2592 = vadd.f32 %v1561, %v2559
    %v2593 = vadd.f32 %v1562, %v2517
    %v2594 = vadd.f32 %v1563, %v2560
    %v2595 = vadd.f32 %v1564, %v2521
    %v2596 = vadd.f32 %v1565, %v2561
    %v2597 = vadd.f32 %v1566, %v2525
    %v2598 = vadd.f32 %v1567, %v2562
    %v2599 = vadd.f32 %v1568, %v2529
    %v2600 = vadd.f32 %v1569, %v2563
    %v2601 = vadd.f32 %v1570, %v2533
    %v2602 = vadd.f32 %v1571, %v2564
    %v2603 = vadd.f32 %v1572, %v2537
    %v2604 = vadd.f32 %v1573, %v2565
    %v2605 = vadd.f32 %v1574, %v2541
    %v2606 = vadd.f32 %v1575, %v2566
    %v2607 = vadd.f32 %v1576, %v2545
    %v2608 = vadd.f32 %v1577, %v2567
    %v2609 = vadd.f32 %v1578, %v2549
    %v2610 = vadd.f32 %v1579, %v2568
    %v2611 = vadd.f32 %v1580, %v2553
    %v2612 = vadd.f32 %v1581, %v2569
    %v2613 = vadd.f32 %v1582, %v2557
    %v2614 = vmul.f32 %v2592, 0.21300554
    %v2615 = vmul.f32 %v2593, 0.21300554
    %v2616 = vmul.f32 %v2594, 0.21300554
    %v2617 = vmul.f32 %v2595, 0.21300554
    %v2618 = vmul.f32 %v2596, 0.21300554
    %v2619 = vmul.f32 %v2597, 0.21300554
    %v2620 = vmul.f32 %v2598, 0.21300554
    %v2621 = vmul.f32 %v2599, 0.21300554
    %v2622 = vmul.f32 %v2600, 0.21300554
    %v2623 = vmul.f32 %v2601, 0.21300554
    %v2624 = vmul.f32 %v2602, 0.21300554
    %v2625 = vmul.f32 %v2603, 0.21300554
    %v2626 = vmul.f32 %v2604, 0.21300554
    %v2627 = vmul.f32 %v2605, 0.21300554
    %v2628 = vmul.f32 %v2606, 0.21300554
    %v2629 = vmul.f32 %v2607, 0.21300554
    %v2630 = vmul.f32 %v2608, 0.21300554
    %v2631 = vmul.f32 %v2609, 0.21300554
    %v2632 = vmul.f32 %v2610, 0.21300554
    %v2633 = vmul.f32 %v2611, 0.21300554
    %v2634 = vmul.f32 %v2612, 0.21300554
    %v2635 = vmul.f32 %v2613, 0.21300554
    %2658 = vrot.lane.b32.xlu0 %v2614, 1
    %v2659 = vpop.permute.xlu0 %2658
    %2660 = vrot.lane.b32.xlu0 %v2615, 1
    %v2661 = vpop.permute.xlu0 %2660
    %2662 = vrot.lane.b32.xlu0 %v2616, 1
    %v2663 = vpop.permute.xlu0 %2662
    %2664 = vrot.lane.b32.xlu0 %v2617, 1
    %v2665 = vpop.permute.xlu0 %2664
    %2666 = vrot.lane.b32.xlu0 %v2618, 1
    %v2667 = vpop.permute.xlu0 %2666
    %2668 = vrot.lane.b32.xlu0 %v2619, 1
    %v2669 = vpop.permute.xlu0 %2668
    %2670 = vrot.lane.b32.xlu0 %v2620, 1
    %v2671 = vpop.permute.xlu0 %2670
    %2672 = vrot.lane.b32.xlu0 %v2621, 1
    %v2673 = vpop.permute.xlu0 %2672
    %2674 = vrot.lane.b32.xlu0 %v2622, 1
    %v2675 = vpop.permute.xlu0 %2674
    %2676 = vrot.lane.b32.xlu0 %v2623, 1
    %v2677 = vpop.permute.xlu0 %2676
    %2678 = vrot.lane.b32.xlu0 %v2624, 1
    %v2679 = vpop.permute.xlu0 %2678
    %2680 = vrot.lane.b32.xlu0 %v2625, 1
    %v2681 = vpop.permute.xlu0 %2680
    %2682 = vrot.lane.b32.xlu0 %v2626, 1
    %v2683 = vpop.permute.xlu0 %2682
    %2684 = vrot.lane.b32.xlu0 %v2627, 1
    %v2685 = vpop.permute.xlu0 %2684
    %2686 = vrot.lane.b32.xlu0 %v2628, 1
    %v2687 = vpop.permute.xlu0 %2686
    %2688 = vrot.lane.b32.xlu0 %v2629, 1
    %v2689 = vpop.permute.xlu0 %2688
    %2690 = vrot.lane.b32.xlu0 %v2630, 1
    %v2691 = vpop.permute.xlu0 %2690
    %2692 = vrot.lane.b32.xlu0 %v2631, 1
    %v2693 = vpop.permute.xlu0 %2692
    %2694 = vrot.lane.b32.xlu0 %v2632, 1
    %v2695 = vpop.permute.xlu0 %2694
    %2696 = vrot.lane.b32.xlu0 %v2633, 1
    %v2697 = vpop.permute.xlu0 %2696
    %2698 = vrot.lane.b32.xlu0 %v2634, 1
    %v2699 = vpop.permute.xlu0 %2698
    %2700 = vrot.lane.b32.xlu0 %v2635, 1
    %v2701 = vpop.permute.xlu0 %2700
    %vm2702 = vcmask 7168
    %v2703 = vsel %vm2702, %v2659, %v2661
    %v2704 = vsel %vm2702, %v2663, %v2665
    %v2705 = vsel %vm2702, %v2667, %v2669
    %v2706 = vsel %vm2702, %v2671, %v2673
    %v2707 = vsel %vm2702, %v2675, %v2677
    %v2708 = vsel %vm2702, %v2679, %v2681
    %v2709 = vsel %vm2702, %v2683, %v2685
    %v2710 = vsel %vm2702, %v2687, %v2689
    %v2711 = vsel %vm2702, %v2691, %v2693
    %v2712 = vsel %vm2702, %v2695, %v2697
    %v2713 = vsel %vm2702, %v2699, %v2701
    %v2736 = vadd.f32 %v2492, %v2659
    %v2737 = vadd.f32 %v2493, %v2703
    %v2738 = vadd.f32 %v2494, %v2663
    %v2739 = vadd.f32 %v2495, %v2704
    %v2740 = vadd.f32 %v2496, %v2667
    %v2741 = vadd.f32 %v2497, %v2705
    %v2742 = vadd.f32 %v2498, %v2671
    %v2743 = vadd.f32 %v2499, %v2706
    %v2744 = vadd.f32 %v2500, %v2675
    %v2745 = vadd.f32 %v2501, %v2707
    %v2746 = vadd.f32 %v2502, %v2679
    %v2747 = vadd.f32 %v2503, %v2708
    %v2748 = vadd.f32 %v2504, %v2683
    %v2749 = vadd.f32 %v2505, %v2709
    %v2750 = vadd.f32 %v2506, %v2687
    %v2751 = vadd.f32 %v2507, %v2710
    %v2752 = vadd.f32 %v2508, %v2691
    %v2753 = vadd.f32 %v2509, %v2711
    %v2754 = vadd.f32 %v2510, %v2695
    %v2755 = vadd.f32 %v2511, %v2712
    %v2756 = vadd.f32 %v2512, %v2699
    %v2757 = vadd.f32 %v2513, %v2713
    %v2758 = vld [vmem:[#allocation3] sm:$0xe0]
    %v2759 = vld [vmem:[#allocation3 + $0x8] sm:$0xe0]
    %v2760 = vld [vmem:[#allocation3 + $0x10] sm:$0xff]
    %v2761 = vld [vmem:[#allocation3 + $0x18] sm:$0xff]
    %v2762 = vld [vmem:[#allocation3 + $0x20] sm:$0xff]
    %v2763 = vld [vmem:[#allocation3 + $0x28] sm:$0xff]
    %v2764 = vld [vmem:[#allocation3 + $0x30] sm:$0xff]
    %v2765 = vld [vmem:[#allocation3 + $0x38] sm:$0xff]
    %v2766 = vld [vmem:[#allocation3 + $0x40] sm:$0xff]
    %v2767 = vld [vmem:[#allocation3 + $0x48] sm:$0xff]
    %v2768 = vld [vmem:[#allocation3 + $0x50] sm:$0xff]
    %v2769 = vld [vmem:[#allocation3 + $0x58] sm:$0xff]
    %v2770 = vld [vmem:[#allocation3 + $0x60] sm:$0xff]
    %v2771 = vld [vmem:[#allocation3 + $0x68] sm:$0xff]
    %v2772 = vld [vmem:[#allocation3 + $0x70] sm:$0xff]
    %v2773 = vld [vmem:[#allocation3 + $0x78] sm:$0xff]
    %v2774 = vld [vmem:[#allocation3 + $0x80] sm:$0xff]
    %v2775 = vld [vmem:[#allocation3 + $0x88] sm:$0xff]
    %v2776 = vld [vmem:[#allocation3 + $0x90] sm:$0xff]
    %v2777 = vld [vmem:[#allocation3 + $0x98] sm:$0xff]
    %v2778 = vld [vmem:[#allocation3 + $0xa0] sm:$0x1f]
    %v2779 = vld [vmem:[#allocation3 + $0xa8] sm:$0x1f]
    %v2780 = vmul.f32 %v2758, 0.26601171
    %v2781 = vmul.f32 %v2759, 0.26601171
    %v2782 = vmul.f32 %v2760, 0.26601171
    %v2783 = vmul.f32 %v2761, 0.26601171
    %v2784 = vmul.f32 %v2762, 0.26601171
    %v2785 = vmul.f32 %v2763, 0.26601171
    %v2786 = vmul.f32 %v2764, 0.26601171
    %v2787 = vmul.f32 %v2765, 0.26601171
    %v2788 = vmul.f32 %v2766, 0.26601171
    %v2789 = vmul.f32 %v2767, 0.26601171
    %v2790 = vmul.f32 %v2768, 0.26601171
    %v2791 = vmul.f32 %v2769, 0.26601171
    %v2792 = vmul.f32 %v2770, 0.26601171
    %v2793 = vmul.f32 %v2771, 0.26601171
    %v2794 = vmul.f32 %v2772, 0.26601171
    %v2795 = vmul.f32 %v2773, 0.26601171
    %v2796 = vmul.f32 %v2774, 0.26601171
    %v2797 = vmul.f32 %v2775, 0.26601171
    %v2798 = vmul.f32 %v2776, 0.26601171
    %v2799 = vmul.f32 %v2777, 0.26601171
    %v2800 = vmul.f32 %v2778, 0.26601171
    %v2801 = vmul.f32 %v2779, 0.26601171
    %v2802 = vld [vmem:[#allocation3] sm:$0xff]
    %v2803 = vld [vmem:[#allocation3 + $0x8] sm:$0xff]
    %v2804 = vld [vmem:[#allocation3 + $0x10] sm:$0xfc]
    %v2805 = vld [vmem:[#allocation3 + $0x18] sm:$0xfc]
    %v2806 = vld [vmem:[#allocation3 + $0x20] sm:$0xff]
    %v2807 = vld [vmem:[#allocation3 + $0x28] sm:$0xff]
    %v2808 = vld [vmem:[#allocation3 + $0x30] sm:$0xff]
    %v2809 = vld [vmem:[#allocation3 + $0x38] sm:$0xff]
    %v2810 = vld [vmem:[#allocation3 + $0x40] sm:$0xff]
    %v2811 = vld [vmem:[#allocation3 + $0x48] sm:$0xff]
    %v2812 = vld [vmem:[#allocation3 + $0x50] sm:$0xff]
    %v2813 = vld [vmem:[#allocation3 + $0x58] sm:$0xff]
    %v2814 = vld [vmem:[#allocation3 + $0x60] sm:$0xff]
    %v2815 = vld [vmem:[#allocation3 + $0x68] sm:$0xff]
    %v2816 = vld [vmem:[#allocation3 + $0x70] sm:$0xff]
    %v2817 = vld [vmem:[#allocation3 + $0x78] sm:$0xff]
    %v2818 = vld [vmem:[#allocation3 + $0x80] sm:$0xff]
    %v2819 = vld [vmem:[#allocation3 + $0x88] sm:$0xff]
    %v2820 = vld [vmem:[#allocation3 + $0x90] sm:$0xff]
    %v2821 = vld [vmem:[#allocation3 + $0x98] sm:$0xff]
    %v2822 = vld [vmem:[#allocation3 + $0xa0] sm:$0xff]
    %v2823 = vld [vmem:[#allocation3 + $0xa8] sm:$0xff]
    %v2824 = vld [vmem:[#allocation3 + $0xb0] sm:$0x3]
    %v2825 = vld [vmem:[#allocation3 + $0xb8] sm:$0x3]
    %v2848 = vrot.slane %v2804, 2
    %v2849 = vrot.slane %v2806, 2
    %v2850 = vsel %vm519, %v2848, %v2849
    %v2851 = vrot.slane %v2805, 2
    %v2852 = vrot.slane %v2807, 2
    %v2853 = vsel %vm519, %v2851, %v2852
    %v2854 = vrot.slane %v2808, 2
    %v2855 = vsel %vm519, %v2849, %v2854
    %v2856 = vrot.slane %v2809, 2
    %v2857 = vsel %vm519, %v2852, %v2856
    %v2858 = vrot.slane %v2810, 2
    %v2859 = vsel %vm519, %v2854, %v2858
    %v2860 = vrot.slane %v2811, 2
    %v2861 = vsel %vm519, %v2856, %v2860
    %v2862 = vrot.slane %v2812, 2
    %v2863 = vsel %vm519, %v2858, %v2862
    %v2864 = vrot.slane %v2813, 2
    %v2865 = vsel %vm519, %v2860, %v2864
    %v2866 = vrot.slane %v2814, 2
    %v2867 = vsel %vm519, %v2862, %v2866
    %v2868 = vrot.slane %v2815, 2
    %v2869 = vsel %vm519, %v2864, %v2868
    %v2870 = vrot.slane %v2816, 2
    %v2871 = vsel %vm519, %v2866, %v2870
    %v2872 = vrot.slane %v2817, 2
    %v2873 = vsel %vm519, %v2868, %v2872
    %v2874 = vrot.slane %v2818, 2
    %v2875 = vsel %vm519, %v2870, %v2874
    %v2876 = vrot.slane %v2819, 2
    %v2877 = vsel %vm519, %v2872, %v2876
    %v2878 = vrot.slane %v2820, 2
    %v2879 = vsel %vm519, %v2874, %v2878
    %v2880 = vrot.slane %v2821, 2
    %v2881 = vsel %vm519, %v2876, %v2880
    %v2882 = vrot.slane %v2822, 2
    %v2883 = vsel %vm519, %v2878, %v2882
    %v2884 = vrot.slane %v2823, 2
    %v2885 = vsel %vm519, %v2880, %v2884
    %v2886 = vrot.slane %v2824, 2
    %v2887 = vsel %vm519, %v2882, %v2886
    %v2888 = vrot.slane %v2825, 2
    %v2889 = vsel %vm519, %v2884, %v2888
    %v2910 = vadd.f32 %v2802, %v2850
    %v2911 = vadd.f32 %v2803, %v2853
    %v2912 = vadd.f32 %v2760, %v2855
    %v2913 = vadd.f32 %v2761, %v2857
    %v2914 = vadd.f32 %v2762, %v2859
    %v2915 = vadd.f32 %v2763, %v2861
    %v2916 = vadd.f32 %v2764, %v2863
    %v2917 = vadd.f32 %v2765, %v2865
    %v2918 = vadd.f32 %v2766, %v2867
    %v2919 = vadd.f32 %v2767, %v2869
    %v2920 = vadd.f32 %v2768, %v2871
    %v2921 = vadd.f32 %v2769, %v2873
    %v2922 = vadd.f32 %v2770, %v2875
    %v2923 = vadd.f32 %v2771, %v2877
    %v2924 = vadd.f32 %v2772, %v2879
    %v2925 = vadd.f32 %v2773, %v2881
    %v2926 = vadd.f32 %v2774, %v2883
    %v2927 = vadd.f32 %v2775, %v2885
    %v2928 = vadd.f32 %v2776, %v2887
    %v2929 = vadd.f32 %v2777, %v2889
    %v2930 = vmul.f32 %v2910, 0.0010283801
    %v2931 = vmul.f32 %v2911, 0.0010283801
    %v2932 = vmul.f32 %v2912, 0.0010283801
    %v2933 = vmul.f32 %v2913, 0.0010283801
    %v2934 = vmul.f32 %v2914, 0.0010283801
    %v2935 = vmul.f32 %v2915, 0.0010283801
    %v2936 = vmul.f32 %v2916, 0.0010283801
    %v2937 = vmul.f32 %v2917, 0.0010283801
    %v2938 = vmul.f32 %v2918, 0.0010283801
    %v2939 = vmul.f32 %v2919, 0.0010283801
    %v2940 = vmul.f32 %v2920, 0.0010283801
    %v2941 = vmul.f32 %v2921, 0.0010283801
    %v2942 = vmul.f32 %v2922, 0.0010283801
    %v2943 = vmul.f32 %v2923, 0.0010283801
    %v2944 = vmul.f32 %v2924, 0.0010283801
    %v2945 = vmul.f32 %v2925, 0.0010283801
    %v2946 = vmul.f32 %v2926, 0.0010283801
    %v2947 = vmul.f32 %v2927, 0.0010283801
    %v2948 = vmul.f32 %v2928, 0.0010283801
    %v2949 = vmul.f32 %v2929, 0.0010283801
    %v2970 = vrot.slane %v2930, 3
    %v2971 = vrot.slane %v2931, 3
    %v2972 = vrot.slane %v2932, 3
    %v2973 = vsel %vm642, %v2970, %v2972
    %v2974 = vrot.slane %v2933, 3
    %v2975 = vsel %vm642, %v2971, %v2974
    %v2976 = vrot.slane %v2934, 3
    %v2977 = vsel %vm642, %v2972, %v2976
    %v2978 = vrot.slane %v2935, 3
    %v2979 = vsel %vm642, %v2974, %v2978
    %v2980 = vrot.slane %v2936, 3
    %v2981 = vsel %vm642, %v2976, %v2980
    %v2982 = vrot.slane %v2937, 3
    %v2983 = vsel %vm642, %v2978, %v2982
    %v2984 = vrot.slane %v2938, 3
    %v2985 = vsel %vm642, %v2980, %v2984
    %v2986 = vrot.slane %v2939, 3
    %v2987 = vsel %vm642, %v2982, %v2986
    %v2988 = vrot.slane %v2940, 3
    %v2989 = vsel %vm642, %v2984, %v2988
    %v2990 = vrot.slane %v2941, 3
    %v2991 = vsel %vm642, %v2986, %v2990
    %v2992 = vrot.slane %v2942, 3
    %v2993 = vsel %vm642, %v2988, %v2992
    %v2994 = vrot.slane %v2943, 3
    %v2995 = vsel %vm642, %v2990, %v2994
    %v2996 = vrot.slane %v2944, 3
    %v2997 = vsel %vm642, %v2992, %v2996
    %v2998 = vrot.slane %v2945, 3
    %v2999 = vsel %vm642, %v2994, %v2998
    %v3000 = vrot.slane %v2946, 3
    %v3001 = vsel %vm642, %v2996, %v3000
    %v3002 = vrot.slane %v2947, 3
    %v3003 = vsel %vm642, %v2998, %v3002
    %v3004 = vrot.slane %v2948, 3
    %v3005 = vsel %vm642, %v3000, %v3004
    %v3006 = vrot.slane %v2949, 3
    %v3007 = vsel %vm642, %v3002, %v3006
    %v3030 = vadd.f32 %v2780, %v2970
    %v3031 = vadd.f32 %v2781, %v2971
    %v3032 = vadd.f32 %v2782, %v2973
    %v3033 = vadd.f32 %v2783, %v2975
    %v3034 = vadd.f32 %v2784, %v2977
    %v3035 = vadd.f32 %v2785, %v2979
    %v3036 = vadd.f32 %v2786, %v2981
    %v3037 = vadd.f32 %v2787, %v2983
    %v3038 = vadd.f32 %v2788, %v2985
    %v3039 = vadd.f32 %v2789, %v2987
    %v3040 = vadd.f32 %v2790, %v2989
    %v3041 = vadd.f32 %v2791, %v2991
    %v3042 = vadd.f32 %v2792, %v2993
    %v3043 = vadd.f32 %v2793, %v2995
    %v3044 = vadd.f32 %v2794, %v2997
    %v3045 = vadd.f32 %v2795, %v2999
    %v3046 = vadd.f32 %v2796, %v3001
    %v3047 = vadd.f32 %v2797, %v3003
    %v3048 = vadd.f32 %v2798, %v3005
    %v3049 = vadd.f32 %v2799, %v3007
    %v3050 = vadd.f32 %v2800, %v3004
    %v3051 = vadd.f32 %v2801, %v3006
    %v3052 = vld [vmem:[#allocation3] sm:$0xfe]
    %v3053 = vld [vmem:[#allocation3 + $0x8] sm:$0xfe]
    %v3054 = vld [vmem:[#allocation3 + $0xa0] sm:$0x1]
    %v3055 = vld [vmem:[#allocation3 + $0xa8] sm:$0x1]
    %v3056 = vld [vmem:[#allocation3 + $0x10] sm:$0xfe]
    %v3057 = vld [vmem:[#allocation3 + $0x18] sm:$0xfe]
    %v3058 = vld [vmem:[#allocation3 + $0xb0] sm:$0x1]
    %v3059 = vld [vmem:[#allocation3 + $0xb8] sm:$0x1]
    %v3060 = vadd.f32 %v3052, %v3056
    %v3061 = vadd.f32 %v3053, %v3057
    %v3062 = vadd.f32 %v2760, %v2806
    %v3063 = vadd.f32 %v2761, %v2807
    %v3064 = vadd.f32 %v2762, %v2808
    %v3065 = vadd.f32 %v2763, %v2809
    %v3066 = vadd.f32 %v2764, %v2810
    %v3067 = vadd.f32 %v2765, %v2811
    %v3068 = vadd.f32 %v2766, %v2812
    %v3069 = vadd.f32 %v2767, %v2813
    %v3070 = vadd.f32 %v2768, %v2814
    %v3071 = vadd.f32 %v2769, %v2815
    %v3072 = vadd.f32 %v2770, %v2816
    %v3073 = vadd.f32 %v2771, %v2817
    %v3074 = vadd.f32 %v2772, %v2818
    %v3075 = vadd.f32 %v2773, %v2819
    %v3076 = vadd.f32 %v2774, %v2820
    %v3077 = vadd.f32 %v2775, %v2821
    %v3078 = vadd.f32 %v2776, %v2822
    %v3079 = vadd.f32 %v2777, %v2823
    %v3080 = vadd.f32 %v3054, %v3058
    %v3081 = vadd.f32 %v3055, %v3059
    %v3082 = vmul.f32 %v3060, 0.007598758
    %v3083 = vmul.f32 %v3061, 0.007598758
    %v3084 = vmul.f32 %v3062, 0.007598758
    %v3085 = vmul.f32 %v3063, 0.007598758
    %v3086 = vmul.f32 %v3064, 0.007598758
    %v3087 = vmul.f32 %v3065, 0.007598758
    %v3088 = vmul.f32 %v3066, 0.007598758
    %v3089 = vmul.f32 %v3067, 0.007598758
    %v3090 = vmul.f32 %v3068, 0.007598758
    %v3091 = vmul.f32 %v3069, 0.007598758
    %v3092 = vmul.f32 %v3070, 0.007598758
    %v3093 = vmul.f32 %v3071, 0.007598758
    %v3094 = vmul.f32 %v3072, 0.007598758
    %v3095 = vmul.f32 %v3073, 0.007598758
    %v3096 = vmul.f32 %v3074, 0.007598758
    %v3097 = vmul.f32 %v3075, 0.007598758
    %v3098 = vmul.f32 %v3076, 0.007598758
    %v3099 = vmul.f32 %v3077, 0.007598758
    %v3100 = vmul.f32 %v3078, 0.007598758
    %v3101 = vmul.f32 %v3079, 0.007598758
    %v3102 = vmul.f32 %v3080, 0.007598758
    %v3103 = vmul.f32 %v3081, 0.007598758
    %v3126 = vrot.slane %v3082, 4
    %v3127 = vrot.slane %v3083, 4
    %v3128 = vrot.slane %v3084, 4
    %v3129 = vsel %vm799, %v3126, %v3128
    %v3130 = vrot.slane %v3085, 4
    %v3131 = vsel %vm799, %v3127, %v3130
    %v3132 = vrot.slane %v3086, 4
    %v3133 = vsel %vm799, %v3128, %v3132
    %v3134 = vrot.slane %v3087, 4
    %v3135 = vsel %vm799, %v3130, %v3134
    %v3136 = vrot.slane %v3088, 4
    %v3137 = vsel %vm799, %v3132, %v3136
    %v3138 = vrot.slane %v3089, 4
    %v3139 = vsel %vm799, %v3134, %v3138
    %v3140 = vrot.slane %v3090, 4
    %v3141 = vsel %vm799, %v3136, %v3140
    %v3142 = vrot.slane %v3091, 4
    %v3143 = vsel %vm799, %v3138, %v3142
    %v3144 = vrot.slane %v3092, 4
    %v3145 = vsel %vm799, %v3140, %v3144
    %v3146 = vrot.slane %v3093, 4
    %v3147 = vsel %vm799, %v3142, %v3146
    %v3148 = vrot.slane %v3094, 4
    %v3149 = vsel %vm799, %v3144, %v3148
    %v3150 = vrot.slane %v3095, 4
    %v3151 = vsel %vm799, %v3146, %v3150
    %v3152 = vrot.slane %v3096, 4
    %v3153 = vsel %vm799, %v3148, %v3152
    %v3154 = vrot.slane %v3097, 4
    %v3155 = vsel %vm799, %v3150, %v3154
    %v3156 = vrot.slane %v3098, 4
    %v3157 = vsel %vm799, %v3152, %v3156
    %v3158 = vrot.slane %v3099, 4
    %v3159 = vsel %vm799, %v3154, %v3158
    %v3160 = vrot.slane %v3100, 4
    %v3161 = vsel %vm799, %v3156, %v3160
    %v3162 = vrot.slane %v3101, 4
    %v3163 = vsel %vm799, %v3158, %v3162
    %v3164 = vrot.slane %v3102, 4
    %v3165 = vsel %vm799, %v3160, %v3164
    %v3166 = vrot.slane %v3103, 4
    %v3167 = vsel %vm799, %v3162, %v3166
    %v3190 = vadd.f32 %v3030, %v3126
    %v3191 = vadd.f32 %v3031, %v3127
    %v3192 = vadd.f32 %v3032, %v3129
    %v3193 = vadd.f32 %v3033, %v3131
    %v3194 = vadd.f32 %v3034, %v3133
    %v3195 = vadd.f32 %v3035, %v3135
    %v3196 = vadd.f32 %v3036, %v3137
    %v3197 = vadd.f32 %v3037, %v3139
    %v3198 = vadd.f32 %v3038, %v3141
    %v3199 = vadd.f32 %v3039, %v3143
    %v3200 = vadd.f32 %v3040, %v3145
    %v3201 = vadd.f32 %v3041, %v3147
    %v3202 = vadd.f32 %v3042, %v3149
    %v3203 = vadd.f32 %v3043, %v3151
    %v3204 = vadd.f32 %v3044, %v3153
    %v3205 = vadd.f32 %v3045, %v3155
    %v3206 = vadd.f32 %v3046, %v3157
    %v3207 = vadd.f32 %v3047, %v3159
    %v3208 = vadd.f32 %v3048, %v3161
    %v3209 = vadd.f32 %v3049, %v3163
    %v3210 = vadd.f32 %v3050, %v3165
    %v3211 = vadd.f32 %v3051, %v3167
    %v3212 = vld [vmem:[#allocation3] sm:$0xfc]
    %v3213 = vld [vmem:[#allocation3 + $0x8] sm:$0xfc]
    %v3214 = vld [vmem:[#allocation3 + $0xa0] sm:$0x3]
    %v3215 = vld [vmem:[#allocation3 + $0xa8] sm:$0x3]
    %v3216 = vld [vmem:[#allocation3 + $0xa0] sm:$0xff]
    %v3217 = vld [vmem:[#allocation3 + $0xa8] sm:$0xff]
    %v3238 = vrot.slane %v2760, 6
    %v3239 = vrot.slane %v2761, 6
    %v3240 = vrot.slane %v2762, 6
    %v3241 = vsel %vm912, %v3238, %v3240
    %v3242 = vrot.slane %v2763, 6
    %v3243 = vsel %vm912, %v3239, %v3242
    %v3244 = vrot.slane %v2764, 6
    %v3245 = vsel %vm912, %v3240, %v3244
    %v3246 = vrot.slane %v2765, 6
    %v3247 = vsel %vm912, %v3242, %v3246
    %v3248 = vrot.slane %v2766, 6
    %v3249 = vsel %vm912, %v3244, %v3248
    %v3250 = vrot.slane %v2767, 6
    %v3251 = vsel %vm912, %v3246, %v3250
    %v3252 = vrot.slane %v2768, 6
    %v3253 = vsel %vm912, %v3248, %v3252
    %v3254 = vrot.slane %v2769, 6
    %v3255 = vsel %vm912, %v3250, %v3254
    %v3256 = vrot.slane %v2770, 6
    %v3257 = vsel %vm912, %v3252, %v3256
    %v3258 = vrot.slane %v2771, 6
    %v3259 = vsel %vm912, %v3254, %v3258
    %v3260 = vrot.slane %v2772, 6
    %v3261 = vsel %vm912, %v3256, %v3260
    %v3262 = vrot.slane %v2773, 6
    %v3263 = vsel %vm912, %v3258, %v3262
    %v3264 = vrot.slane %v2774, 6
    %v3265 = vsel %vm912, %v3260, %v3264
    %v3266 = vrot.slane %v2775, 6
    %v3267 = vsel %vm912, %v3262, %v3266
    %v3268 = vrot.slane %v2776, 6
    %v3269 = vsel %vm912, %v3264, %v3268
    %v3270 = vrot.slane %v2777, 6
    %v3271 = vsel %vm912, %v3266, %v3270
    %v3272 = vrot.slane %v3216, 6
    %v3273 = vsel %vm912, %v3268, %v3272
    %v3274 = vrot.slane %v3217, 6
    %v3275 = vsel %vm912, %v3270, %v3274
    %v3298 = vadd.f32 %v3212, %v3238
    %v3299 = vadd.f32 %v3213, %v3239
    %v3300 = vadd.f32 %v2760, %v3241
    %v3301 = vadd.f32 %v2761, %v3243
    %v3302 = vadd.f32 %v2762, %v3245
    %v3303 = vadd.f32 %v2763, %v3247
    %v3304 = vadd.f32 %v2764, %v3249
    %v3305 = vadd.f32 %v2765, %v3251
    %v3306 = vadd.f32 %v2766, %v3253
    %v3307 = vadd.f32 %v2767, %v3255
    %v3308 = vadd.f32 %v2768, %v3257
    %v3309 = vadd.f32 %v2769, %v3259
    %v3310 = vadd.f32 %v2770, %v3261
    %v3311 = vadd.f32 %v2771, %v3263
    %v3312 = vadd.f32 %v2772, %v3265
    %v3313 = vadd.f32 %v2773, %v3267
    %v3314 = vadd.f32 %v2774, %v3269
    %v3315 = vadd.f32 %v2775, %v3271
    %v3316 = vadd.f32 %v2776, %v3273
    %v3317 = vadd.f32 %v2777, %v3275
    %v3318 = vadd.f32 %v3214, %v3272
    %v3319 = vadd.f32 %v3215, %v3274
    %v3320 = vmul.f32 %v3298, 0.036000773
    %v3321 = vmul.f32 %v3299, 0.036000773
    %v3322 = vmul.f32 %v3300, 0.036000773
    %v3323 = vmul.f32 %v3301, 0.036000773
    %v3324 = vmul.f32 %v3302, 0.036000773
    %v3325 = vmul.f32 %v3303, 0.036000773
    %v3326 = vmul.f32 %v3304, 0.036000773
    %v3327 = vmul.f32 %v3305, 0.036000773
    %v3328 = vmul.f32 %v3306, 0.036000773
    %v3329 = vmul.f32 %v3307, 0.036000773
    %v3330 = vmul.f32 %v3308, 0.036000773
    %v3331 = vmul.f32 %v3309, 0.036000773
    %v3332 = vmul.f32 %v3310, 0.036000773
    %v3333 = vmul.f32 %v3311, 0.036000773
    %v3334 = vmul.f32 %v3312, 0.036000773
    %v3335 = vmul.f32 %v3313, 0.036000773
    %v3336 = vmul.f32 %v3314, 0.036000773
    %v3337 = vmul.f32 %v3315, 0.036000773
    %v3338 = vmul.f32 %v3316, 0.036000773
    %v3339 = vmul.f32 %v3317, 0.036000773
    %v3340 = vmul.f32 %v3318, 0.036000773
    %v3341 = vmul.f32 %v3319, 0.036000773
    %v3364 = vrot.slane %v3320, 5
    %v3365 = vrot.slane %v3321, 5
    %v3366 = vrot.slane %v3322, 5
    %v3367 = vsel %vm1039, %v3364, %v3366
    %v3368 = vrot.slane %v3323, 5
    %v3369 = vsel %vm1039, %v3365, %v3368
    %v3370 = vrot.slane %v3324, 5
    %v3371 = vsel %vm1039, %v3366, %v3370
    %v3372 = vrot.slane %v3325, 5
    %v3373 = vsel %vm1039, %v3368, %v3372
    %v3374 = vrot.slane %v3326, 5
    %v3375 = vsel %vm1039, %v3370, %v3374
    %v3376 = vrot.slane %v3327, 5
    %v3377 = vsel %vm1039, %v3372, %v3376
    %v3378 = vrot.slane %v3328, 5
    %v3379 = vsel %vm1039, %v3374, %v3378
    %v3380 = vrot.slane %v3329, 5
    %v3381 = vsel %vm1039, %v3376, %v3380
    %v3382 = vrot.slane %v3330, 5
    %v3383 = vsel %vm1039, %v3378, %v3382
    %v3384 = vrot.slane %v3331, 5
    %v3385 = vsel %vm1039, %v3380, %v3384
    %v3386 = vrot.slane %v3332, 5
    %v3387 = vsel %vm1039, %v3382, %v3386
    %v3388 = vrot.slane %v3333, 5
    %v3389 = vsel %vm1039, %v3384, %v3388
    %v3390 = vrot.slane %v3334, 5
    %v3391 = vsel %vm1039, %v3386, %v3390
    %v3392 = vrot.slane %v3335, 5
    %v3393 = vsel %vm1039, %v3388, %v3392
    %v3394 = vrot.slane %v3336, 5
    %v3395 = vsel %vm1039, %v3390, %v3394
    %v3396 = vrot.slane %v3337, 5
    %v3397 = vsel %vm1039, %v3392, %v3396
    %v3398 = vrot.slane %v3338, 5
    %v3399 = vsel %vm1039, %v3394, %v3398
    %v3400 = vrot.slane %v3339, 5
    %v3401 = vsel %vm1039, %v3396, %v3400
    %v3402 = vrot.slane %v3340, 5
    %v3403 = vsel %vm1039, %v3398, %v3402
    %v3404 = vrot.slane %v3341, 5
    %v3405 = vsel %vm1039, %v3400, %v3404
    %v3428 = vadd.f32 %v3190, %v3364
    %v3429 = vadd.f32 %v3191, %v3365
    %v3430 = vadd.f32 %v3192, %v3367
    %v3431 = vadd.f32 %v3193, %v3369
    %v3432 = vadd.f32 %v3194, %v3371
    %v3433 = vadd.f32 %v3195, %v3373
    %v3434 = vadd.f32 %v3196, %v3375
    %v3435 = vadd.f32 %v3197, %v3377
    %v3436 = vadd.f32 %v3198, %v3379
    %v3437 = vadd.f32 %v3199, %v3381
    %v3438 = vadd.f32 %v3200, %v3383
    %v3439 = vadd.f32 %v3201, %v3385
    %v3440 = vadd.f32 %v3202, %v3387
    %v3441 = vadd.f32 %v3203, %v3389
    %v3442 = vadd.f32 %v3204, %v3391
    %v3443 = vadd.f32 %v3205, %v3393
    %v3444 = vadd.f32 %v3206, %v3395
    %v3445 = vadd.f32 %v3207, %v3397
    %v3446 = vadd.f32 %v3208, %v3399
    %v3447 = vadd.f32 %v3209, %v3401
    %v3448 = vadd.f32 %v3210, %v3403
    %v3449 = vadd.f32 %v3211, %v3405
    %v3450 = vld [vmem:[#allocation3] sm:$0xf8]
    %v3451 = vld [vmem:[#allocation3 + $0x8] sm:$0xf8]
    %v3452 = vld [vmem:[#allocation3 + $0xa0] sm:$0x7]
    %v3453 = vld [vmem:[#allocation3 + $0xa8] sm:$0x7]
    %v3454 = vld [vmem:[#allocation3] sm:$0x80]
    %v3455 = vld [vmem:[#allocation3 + $0x8] sm:$0x80]
    %v3456 = vld [vmem:[#allocation3 + $0xa0] sm:$0x7f]
    %v3457 = vld [vmem:[#allocation3 + $0xa8] sm:$0x7f]
    %v3462 = vrot.slane %v3454, 4
    %v3463 = vrot.slane %v2760, 4
    %v3464 = vsel %vm799, %v3462, %v3463
    %v3465 = vrot.slane %v3455, 4
    %v3466 = vrot.slane %v2761, 4
    %v3467 = vsel %vm799, %v3465, %v3466
    %v3468 = vrot.slane %v2762, 4
    %v3469 = vsel %vm799, %v3463, %v3468
    %v3470 = vrot.slane %v2763, 4
    %v3471 = vsel %vm799, %v3466, %v3470
    %v3472 = vrot.slane %v2764, 4
    %v3473 = vsel %vm799, %v3468, %v3472
    %v3474 = vrot.slane %v2765, 4
    %v3475 = vsel %vm799, %v3470, %v3474
    %v3476 = vrot.slane %v2766, 4
    %v3477 = vsel %vm799, %v3472, %v3476
    %v3478 = vrot.slane %v2767, 4
    %v3479 = vsel %vm799, %v3474, %v3478
    %v3480 = vrot.slane %v2768, 4
    %v3481 = vsel %vm799, %v3476, %v3480
    %v3482 = vrot.slane %v2769, 4
    %v3483 = vsel %vm799, %v3478, %v3482
    %v3484 = vrot.slane %v2770, 4
    %v3485 = vsel %vm799, %v3480, %v3484
    %v3486 = vrot.slane %v2771, 4
    %v3487 = vsel %vm799, %v3482, %v3486
    %v3488 = vrot.slane %v2772, 4
    %v3489 = vsel %vm799, %v3484, %v3488
    %v3490 = vrot.slane %v2773, 4
    %v3491 = vsel %vm799, %v3486, %v3490
    %v3492 = vrot.slane %v2774, 4
    %v3493 = vsel %vm799, %v3488, %v3492
    %v3494 = vrot.slane %v2775, 4
    %v3495 = vsel %vm799, %v3490, %v3494
    %v3496 = vrot.slane %v2776, 4
    %v3497 = vsel %vm799, %v3492, %v3496
    %v3498 = vrot.slane %v2777, 4
    %v3499 = vsel %vm799, %v3494, %v3498
    %v3500 = vrot.slane %v3456, 4
    %v3501 = vsel %vm799, %v3496, %v3500
    %v3502 = vrot.slane %v3457, 4
    %v3503 = vsel %vm799, %v3498, %v3502
    %v3526 = vadd.f32 %v3450, %v3464
    %v3527 = vadd.f32 %v3451, %v3467
    %v3528 = vadd.f32 %v2760, %v3469
    %v3529 = vadd.f32 %v2761, %v3471
    %v3530 = vadd.f32 %v2762, %v3473
    %v3531 = vadd.f32 %v2763, %v3475
    %v3532 = vadd.f32 %v2764, %v3477
    %v3533 = vadd.f32 %v2765, %v3479
    %v3534 = vadd.f32 %v2766, %v3481
    %v3535 = vadd.f32 %v2767, %v3483
    %v3536 = vadd.f32 %v2768, %v3485
    %v3537 = vadd.f32 %v2769, %v3487
    %v3538 = vadd.f32 %v2770, %v3489
    %v3539 = vadd.f32 %v2771, %v3491
    %v3540 = vadd.f32 %v2772, %v3493
    %v3541 = vadd.f32 %v2773, %v3495
    %v3542 = vadd.f32 %v2774, %v3497
    %v3543 = vadd.f32 %v2775, %v3499
    %v3544 = vadd.f32 %v2776, %v3501
    %v3545 = vadd.f32 %v2777, %v3503
    %v3546 = vadd.f32 %v3452, %v3500
    %v3547 = vadd.f32 %v3453, %v3502
    %v3548 = vmul.f32 %v3526, 0.10936069
    %v3549 = vmul.f32 %v3527, 0.10936069
    %v3550 = vmul.f32 %v3528, 0.10936069
    %v3551 = vmul.f32 %v3529, 0.10936069
    %v3552 = vmul.f32 %v3530, 0.10936069
    %v3553 = vmul.f32 %v3531, 0.10936069
    %v3554 = vmul.f32 %v3532, 0.10936069
    %v3555 = vmul.f32 %v3533, 0.10936069
    %v3556 = vmul.f32 %v3534, 0.10936069
    %v3557 = vmul.f32 %v3535, 0.10936069
    %v3558 = vmul.f32 %v3536, 0.10936069
    %v3559 = vmul.f32 %v3537, 0.10936069
    %v3560 = vmul.f32 %v3538, 0.10936069
    %v3561 = vmul.f32 %v3539, 0.10936069
    %v3562 = vmul.f32 %v3540, 0.10936069
    %v3563 = vmul.f32 %v3541, 0.10936069
    %v3564 = vmul.f32 %v3542, 0.10936069
    %v3565 = vmul.f32 %v3543, 0.10936069
    %v3566 = vmul.f32 %v3544, 0.10936069
    %v3567 = vmul.f32 %v3545, 0.10936069
    %v3568 = vmul.f32 %v3546, 0.10936069
    %v3569 = vmul.f32 %v3547, 0.10936069
    %v3592 = vrot.slane %v3548, 6
    %v3593 = vrot.slane %v3549, 6
    %v3594 = vrot.slane %v3550, 6
    %v3595 = vsel %vm912, %v3592, %v3594
    %v3596 = vrot.slane %v3551, 6
    %v3597 = vsel %vm912, %v3593, %v3596
    %v3598 = vrot.slane %v3552, 6
    %v3599 = vsel %vm912, %v3594, %v3598
    %v3600 = vrot.slane %v3553, 6
    %v3601 = vsel %vm912, %v3596, %v3600
    %v3602 = vrot.slane %v3554, 6
    %v3603 = vsel %vm912, %v3598, %v3602
    %v3604 = vrot.slane %v3555, 6
    %v3605 = vsel %vm912, %v3600, %v3604
    %v3606 = vrot.slane %v3556, 6
    %v3607 = vsel %vm912, %v3602, %v3606
    %v3608 = vrot.slane %v3557, 6
    %v3609 = vsel %vm912, %v3604, %v3608
    %v3610 = vrot.slane %v3558, 6
    %v3611 = vsel %vm912, %v3606, %v3610
    %v3612 = vrot.slane %v3559, 6
    %v3613 = vsel %vm912, %v3608, %v3612
    %v3614 = vrot.slane %v3560, 6
    %v3615 = vsel %vm912, %v3610, %v3614
    %v3616 = vrot.slane %v3561, 6
    %v3617 = vsel %vm912, %v3612, %v3616
    %v3618 = vrot.slane %v3562, 6
    %v3619 = vsel %vm912, %v3614, %v3618
    %v3620 = vrot.slane %v3563, 6
    %v3621 = vsel %vm912, %v3616, %v3620
    %v3622 = vrot.slane %v3564, 6
    %v3623 = vsel %vm912, %v3618, %v3622
    %v3624 = vrot.slane %v3565, 6
    %v3625 = vsel %vm912, %v3620, %v3624
    %v3626 = vrot.slane %v3566, 6
    %v3627 = vsel %vm912, %v3622, %v3626
    %v3628 = vrot.slane %v3567, 6
    %v3629 = vsel %vm912, %v3624, %v3628
    %v3630 = vrot.slane %v3568, 6
    %v3631 = vsel %vm912, %v3626, %v3630
    %v3632 = vrot.slane %v3569, 6
    %v3633 = vsel %vm912, %v3628, %v3632
    %v3656 = vadd.f32 %v3428, %v3592
    %v3657 = vadd.f32 %v3429, %v3593
    %v3658 = vadd.f32 %v3430, %v3595
    %v3659 = vadd.f32 %v3431, %v3597
    %v3660 = vadd.f32 %v3432, %v3599
    %v3661 = vadd.f32 %v3433, %v3601
    %v3662 = vadd.f32 %v3434, %v3603
    %v3663 = vadd.f32 %v3435, %v3605
    %v3664 = vadd.f32 %v3436, %v3607
    %v3665 = vadd.f32 %v3437, %v3609
    %v3666 = vadd.f32 %v3438, %v3611
    %v3667 = vadd.f32 %v3439, %v3613
    %v3668 = vadd.f32 %v3440, %v3615
    %v3669 = vadd.f32 %v3441, %v3617
    %v3670 = vadd.f32 %v3442, %v3619
    %v3671 = vadd.f32 %v3443, %v3621
    %v3672 = vadd.f32 %v3444, %v3623
    %v3673 = vadd.f32 %v3445, %v3625
    %v3674 = vadd.f32 %v3446, %v3627
    %v3675 = vadd.f32 %v3447, %v3629
    %v3676 = vadd.f32 %v3448, %v3631
    %v3677 = vadd.f32 %v3449, %v3633
    %v3678 = vld [vmem:[#allocation3] sm:$0xf0]
    %v3679 = vld [vmem:[#allocation3 + $0x8] sm:$0xf0]
    %v3680 = vld [vmem:[#allocation3 + $0xa0] sm:$0xf]
    %v3681 = vld [vmem:[#allocation3 + $0xa8] sm:$0xf]
    %v3682 = vld [vmem:[#allocation3] sm:$0xc0]
    %v3683 = vld [vmem:[#allocation3 + $0x8] sm:$0xc0]
    %v3684 = vld [vmem:[#allocation3 + $0xa0] sm:$0x3f]
    %v3685 = vld [vmem:[#allocation3 + $0xa8] sm:$0x3f]
    %v3690 = vrot.slane %v3682, 2
    %v3691 = vrot.slane %v2760, 2
    %v3692 = vsel %vm519, %v3690, %v3691
    %v3693 = vrot.slane %v3683, 2
    %v3694 = vrot.slane %v2761, 2
    %v3695 = vsel %vm519, %v3693, %v3694
    %v3696 = vrot.slane %v2762, 2
    %v3697 = vsel %vm519, %v3691, %v3696
    %v3698 = vrot.slane %v2763, 2
    %v3699 = vsel %vm519, %v3694, %v3698
    %v3700 = vrot.slane %v2764, 2
    %v3701 = vsel %vm519, %v3696, %v3700
    %v3702 = vrot.slane %v2765, 2
    %v3703 = vsel %vm519, %v3698, %v3702
    %v3704 = vrot.slane %v2766, 2
    %v3705 = vsel %vm519, %v3700, %v3704
    %v3706 = vrot.slane %v2767, 2
    %v3707 = vsel %vm519, %v3702, %v3706
    %v3708 = vrot.slane %v2768, 2
    %v3709 = vsel %vm519, %v3704, %v3708
    %v3710 = vrot.slane %v2769, 2
    %v3711 = vsel %vm519, %v3706, %v3710
    %v3712 = vrot.slane %v2770, 2
    %v3713 = vsel %vm519, %v3708, %v3712
    %v3714 = vrot.slane %v2771, 2
    %v3715 = vsel %vm519, %v3710, %v3714
    %v3716 = vrot.slane %v2772, 2
    %v3717 = vsel %vm519, %v3712, %v3716
    %v3718 = vrot.slane %v2773, 2
    %v3719 = vsel %vm519, %v3714, %v3718
    %v3720 = vrot.slane %v2774, 2
    %v3721 = vsel %vm519, %v3716, %v3720
    %v3722 = vrot.slane %v2775, 2
    %v3723 = vsel %vm519, %v3718, %v3722
    %v3724 = vrot.slane %v2776, 2
    %v3725 = vsel %vm519, %v3720, %v3724
    %v3726 = vrot.slane %v2777, 2
    %v3727 = vsel %vm519, %v3722, %v3726
    %v3728 = vrot.slane %v3684, 2
    %v3729 = vsel %vm519, %v3724, %v3728
    %v3730 = vrot.slane %v3685, 2
    %v3731 = vsel %vm519, %v3726, %v3730
    %v3754 = vadd.f32 %v3678, %v3692
    %v3755 = vadd.f32 %v3679, %v3695
    %v3756 = vadd.f32 %v2760, %v3697
    %v3757 = vadd.f32 %v2761, %v3699
    %v3758 = vadd.f32 %v2762, %v3701
    %v3759 = vadd.f32 %v2763, %v3703
    %v3760 = vadd.f32 %v2764, %v3705
    %v3761 = vadd.f32 %v2765, %v3707
    %v3762 = vadd.f32 %v2766, %v3709
    %v3763 = vadd.f32 %v2767, %v3711
    %v3764 = vadd.f32 %v2768, %v3713
    %v3765 = vadd.f32 %v2769, %v3715
    %v3766 = vadd.f32 %v2770, %v3717
    %v3767 = vadd.f32 %v2771, %v3719
    %v3768 = vadd.f32 %v2772, %v3721
    %v3769 = vadd.f32 %v2773, %v3723
    %v3770 = vadd.f32 %v2774, %v3725
    %v3771 = vadd.f32 %v2775, %v3727
    %v3772 = vadd.f32 %v2776, %v3729
    %v3773 = vadd.f32 %v2777, %v3731
    %v3774 = vadd.f32 %v3680, %v3728
    %v3775 = vadd.f32 %v3681, %v3730
    %v3776 = vmul.f32 %v3754, 0.21300554
    %v3777 = vmul.f32 %v3755, 0.21300554
    %v3778 = vmul.f32 %v3756, 0.21300554
    %v3779 = vmul.f32 %v3757, 0.21300554
    %v3780 = vmul.f32 %v3758, 0.21300554
    %v3781 = vmul.f32 %v3759, 0.21300554
    %v3782 = vmul.f32 %v3760, 0.21300554
    %v3783 = vmul.f32 %v3761, 0.21300554
    %v3784 = vmul.f32 %v3762, 0.21300554
    %v3785 = vmul.f32 %v3763, 0.21300554
    %v3786 = vmul.f32 %v3764, 0.21300554
    %v3787 = vmul.f32 %v3765, 0.21300554
    %v3788 = vmul.f32 %v3766, 0.21300554
    %v3789 = vmul.f32 %v3767, 0.21300554
    %v3790 = vmul.f32 %v3768, 0.21300554
    %v3791 = vmul.f32 %v3769, 0.21300554
    %v3792 = vmul.f32 %v3770, 0.21300554
    %v3793 = vmul.f32 %v3771, 0.21300554
    %v3794 = vmul.f32 %v3772, 0.21300554
    %v3795 = vmul.f32 %v3773, 0.21300554
    %v3796 = vmul.f32 %v3774, 0.21300554
    %v3797 = vmul.f32 %v3775, 0.21300554
    %v3820 = vrot.slane %v3776, 7
    %v3821 = vrot.slane %v3777, 7
    %v3822 = vrot.slane %v3778, 7
    %v3823 = vsel %vm1496, %v3820, %v3822
    %v3824 = vrot.slane %v3779, 7
    %v3825 = vsel %vm1496, %v3821, %v3824
    %v3826 = vrot.slane %v3780, 7
    %v3827 = vsel %vm1496, %v3822, %v3826
    %v3828 = vrot.slane %v3781, 7
    %v3829 = vsel %vm1496, %v3824, %v3828
    %v3830 = vrot.slane %v3782, 7
    %v3831 = vsel %vm1496, %v3826, %v3830
    %v3832 = vrot.slane %v3783, 7
    %v3833 = vsel %vm1496, %v3828, %v3832
    %v3834 = vrot.slane %v3784, 7
    %v3835 = vsel %vm1496, %v3830, %v3834
    %v3836 = vrot.slane %v3785, 7
    %v3837 = vsel %vm1496, %v3832, %v3836
    %v3838 = vrot.slane %v3786, 7
    %v3839 = vsel %vm1496, %v3834, %v3838
    %v3840 = vrot.slane %v3787, 7
    %v3841 = vsel %vm1496, %v3836, %v3840
    %v3842 = vrot.slane %v3788, 7
    %v3843 = vsel %vm1496, %v3838, %v3842
    %v3844 = vrot.slane %v3789, 7
    %v3845 = vsel %vm1496, %v3840, %v3844
    %v3846 = vrot.slane %v3790, 7
    %v3847 = vsel %vm1496, %v3842, %v3846
    %v3848 = vrot.slane %v3791, 7
    %v3849 = vsel %vm1496, %v3844, %v3848
    %v3850 = vrot.slane %v3792, 7
    %v3851 = vsel %vm1496, %v3846, %v3850
    %v3852 = vrot.slane %v3793, 7
    %v3853 = vsel %vm1496, %v3848, %v3852
    %v3854 = vrot.slane %v3794, 7
    %v3855 = vsel %vm1496, %v3850, %v3854
    %v3856 = vrot.slane %v3795, 7
    %v3857 = vsel %vm1496, %v3852, %v3856
    %v3858 = vrot.slane %v3796, 7
    %v3859 = vsel %vm1496, %v3854, %v3858
    %v3860 = vrot.slane %v3797, 7
    %v3861 = vsel %vm1496, %v3856, %v3860
    %v3884 = vadd.f32 %v3656, %v3820
    %v3885 = vadd.f32 %v3657, %v3821
    %v3886 = vadd.f32 %v3658, %v3823
    %v3887 = vadd.f32 %v3659, %v3825
    %v3888 = vadd.f32 %v3660, %v3827
    %v3889 = vadd.f32 %v3661, %v3829
    %v3890 = vadd.f32 %v3662, %v3831
    %v3891 = vadd.f32 %v3663, %v3833
    %v3892 = vadd.f32 %v3664, %v3835
    %v3893 = vadd.f32 %v3665, %v3837
    %v3894 = vadd.f32 %v3666, %v3839
    %v3895 = vadd.f32 %v3667, %v3841
    %v3896 = vadd.f32 %v3668, %v3843
    %v3897 = vadd.f32 %v3669, %v3845
    %v3898 = vadd.f32 %v3670, %v3847
    %v3899 = vadd.f32 %v3671, %v3849
    %v3900 = vadd.f32 %v3672, %v3851
    %v3901 = vadd.f32 %v3673, %v3853
    %v3902 = vadd.f32 %v3674, %v3855
    %v3903 = vadd.f32 %v3675, %v3857
    %v3904 = vadd.f32 %v3676, %v3859
    %v3905 = vadd.f32 %v3677, %v3861
    %v3906 = vmul.f32 %v3884, 0.26601171
    %v3907 = vmul.f32 %v3885, 0.26601171
    %v3908 = vmul.f32 %v3886, 0.26601171
    %v3909 = vmul.f32 %v3887, 0.26601171
    %v3910 = vmul.f32 %v3888, 0.26601171
    %v3911 = vmul.f32 %v3889, 0.26601171
    %v3912 = vmul.f32 %v3890, 0.26601171
    %v3913 = vmul.f32 %v3891, 0.26601171
    %v3914 = vmul.f32 %v3892, 0.26601171
    %v3915 = vmul.f32 %v3893, 0.26601171
    %v3916 = vmul.f32 %v3894, 0.26601171
    %v3917 = vmul.f32 %v3895, 0.26601171
    %v3918 = vmul.f32 %v3896, 0.26601171
    %v3919 = vmul.f32 %v3897, 0.26601171
    %v3920 = vmul.f32 %v3898, 0.26601171
    %v3921 = vmul.f32 %v3899, 0.26601171
    %v3922 = vmul.f32 %v3900, 0.26601171
    %v3923 = vmul.f32 %v3901, 0.26601171
    %v3924 = vmul.f32 %v3902, 0.26601171
    %v3925 = vmul.f32 %v3903, 0.26601171
    %v3926 = vmul.f32 %v3904, 0.26601171
    %v3927 = vmul.f32 %v3905, 0.26601171
    %3950 = vrot.lane.b32.xlu0 %v3884, 118
    %v3951 = vpop.permute.xlu0 %3950
    %3952 = vrot.lane.b32.xlu0 %v3885, 118
    %v3953 = vpop.permute.xlu0 %3952
    %3954 = vrot.lane.b32.xlu0 %v3886, 118
    %v3955 = vpop.permute.xlu0 %3954
    %3956 = vrot.lane.b32.xlu0 %v3887, 118
    %v3957 = vpop.permute.xlu0 %3956
    %3958 = vrot.lane.b32.xlu0 %v3888, 118
    %v3959 = vpop.permute.xlu0 %3958
    %3960 = vrot.lane.b32.xlu0 %v3889, 118
    %v3961 = vpop.permute.xlu0 %3960
    %3962 = vrot.lane.b32.xlu0 %v3890, 118
    %v3963 = vpop.permute.xlu0 %3962
    %3964 = vrot.lane.b32.xlu0 %v3891, 118
    %v3965 = vpop.permute.xlu0 %3964
    %3966 = vrot.lane.b32.xlu0 %v3892, 118
    %v3967 = vpop.permute.xlu0 %3966
    %3968 = vrot.lane.b32.xlu0 %v3893, 118
    %v3969 = vpop.permute.xlu0 %3968
    %3970 = vrot.lane.b32.xlu0 %v3894, 118
    %v3971 = vpop.permute.xlu0 %3970
    %3972 = vrot.lane.b32.xlu0 %v3895, 118
    %v3973 = vpop.permute.xlu0 %3972
    %3974 = vrot.lane.b32.xlu0 %v3896, 118
    %v3975 = vpop.permute.xlu0 %3974
    %3976 = vrot.lane.b32.xlu0 %v3897, 118
    %v3977 = vpop.permute.xlu0 %3976
    %3978 = vrot.lane.b32.xlu0 %v3898, 118
    %v3979 = vpop.permute.xlu0 %3978
    %3980 = vrot.lane.b32.xlu0 %v3899, 118
    %v3981 = vpop.permute.xlu0 %3980
    %3982 = vrot.lane.b32.xlu0 %v3900, 118
    %v3983 = vpop.permute.xlu0 %3982
    %3984 = vrot.lane.b32.xlu0 %v3901, 118
    %v3985 = vpop.permute.xlu0 %3984
    %3986 = vrot.lane.b32.xlu0 %v3902, 118
    %v3987 = vpop.permute.xlu0 %3986
    %3988 = vrot.lane.b32.xlu0 %v3903, 118
    %v3989 = vpop.permute.xlu0 %3988
    %3990 = vrot.lane.b32.xlu0 %v3904, 118
    %v3991 = vpop.permute.xlu0 %3990
    %3992 = vrot.lane.b32.xlu0 %v3905, 118
    %v3993 = vpop.permute.xlu0 %3992
    %v3994 = vsel %vm1671, %v3951, %v3953
    %v3995 = vsel %vm1671, %v3955, %v3957
    %v3996 = vsel %vm1671, %v3959, %v3961
    %v3997 = vsel %vm1671, %v3963, %v3965
    %v3998 = vsel %vm1671, %v3967, %v3969
    %v3999 = vsel %vm1671, %v3971, %v3973
    %v4000 = vsel %vm1671, %v3975, %v3977
    %v4001 = vsel %vm1671, %v3979, %v3981
    %v4002 = vsel %vm1671, %v3983, %v3985
    %v4003 = vsel %vm1671, %v3987, %v3989
    %v4004 = vsel %vm1671, %v3991, %v3993
    %v4016 = vadd.f32 %v3884, %v3994
    %v4017 = vadd.f32 %v3886, %v3995
    %v4018 = vadd.f32 %v3888, %v3996
    %v4019 = vadd.f32 %v3890, %v3997
    %v4020 = vadd.f32 %v3892, %v3998
    %v4021 = vadd.f32 %v3894, %v3999
    %v4022 = vadd.f32 %v3896, %v4000
    %v4023 = vadd.f32 %v3898, %v4001
    %v4024 = vadd.f32 %v3900, %v4002
    %v4025 = vadd.f32 %v3902, %v4003
    %v4026 = vadd.f32 %v3904, %v4004
    %v4027 = vmul.f32 %v4016, 0.0010283801
    %v4028 = vmul.f32 %v4017, 0.0010283801
    %v4029 = vmul.f32 %v4018, 0.0010283801
    %v4030 = vmul.f32 %v4019, 0.0010283801
    %v4031 = vmul.f32 %v4020, 0.0010283801
    %v4032 = vmul.f32 %v4021, 0.0010283801
    %v4033 = vmul.f32 %v4022, 0.0010283801
    %v4034 = vmul.f32 %v4023, 0.0010283801
    %v4035 = vmul.f32 %v4024, 0.0010283801
    %v4036 = vmul.f32 %v4025, 0.0010283801
    %v4037 = vmul.f32 %v4026, 0.0010283801
    %4049 = vrot.lane.b32.xlu0 %v4027, 5
    %v4050 = vpop.permute.xlu0 %4049
    %4051 = vrot.lane.b32.xlu0 %v4028, 5
    %v4052 = vpop.permute.xlu0 %4051
    %4053 = vrot.lane.b32.xlu0 %v4029, 5
    %v4054 = vpop.permute.xlu0 %4053
    %4055 = vrot.lane.b32.xlu0 %v4030, 5
    %v4056 = vpop.permute.xlu0 %4055
    %4057 = vrot.lane.b32.xlu0 %v4031, 5
    %v4058 = vpop.permute.xlu0 %4057
    %4059 = vrot.lane.b32.xlu0 %v4032, 5
    %v4060 = vpop.permute.xlu0 %4059
    %4061 = vrot.lane.b32.xlu0 %v4033, 5
    %v4062 = vpop.permute.xlu0 %4061
    %4063 = vrot.lane.b32.xlu0 %v4034, 5
    %v4064 = vpop.permute.xlu0 %4063
    %4065 = vrot.lane.b32.xlu0 %v4035, 5
    %v4066 = vpop.permute.xlu0 %4065
    %4067 = vrot.lane.b32.xlu0 %v4036, 5
    %v4068 = vpop.permute.xlu0 %4067
    %4069 = vrot.lane.b32.xlu0 %v4037, 5
    %v4070 = vpop.permute.xlu0 %4069
    %v4082 = vadd.f32 %v3906, %v4050
    %v4083 = vadd.f32 %v3907, %v4050
    %v4084 = vadd.f32 %v3908, %v4052
    %v4085 = vadd.f32 %v3909, %v4052
    %v4086 = vadd.f32 %v3910, %v4054
    %v4087 = vadd.f32 %v3911, %v4054
    %v4088 = vadd.f32 %v3912, %v4056
    %v4089 = vadd.f32 %v3913, %v4056
    %v4090 = vadd.f32 %v3914, %v4058
    %v4091 = vadd.f32 %v3915, %v4058
    %v4092 = vadd.f32 %v3916, %v4060
    %v4093 = vadd.f32 %v3917, %v4060
    %v4094 = vadd.f32 %v3918, %v4062
    %v4095 = vadd.f32 %v3919, %v4062
    %v4096 = vadd.f32 %v3920, %v4064
    %v4097 = vadd.f32 %v3921, %v4064
    %v4098 = vadd.f32 %v3922, %v4066
    %v4099 = vadd.f32 %v3923, %v4066
    %v4100 = vadd.f32 %v3924, %v4068
    %v4101 = vadd.f32 %v3925, %v4068
    %v4102 = vadd.f32 %v3926, %v4070
    %v4103 = vadd.f32 %v3927, %v4070
    %4104 = vrot.lane.b32.xlu0 %v3884, 120
    %v4105 = vpop.permute.xlu0 %4104
    %4106 = vrot.lane.b32.xlu0 %v3885, 120
    %v4107 = vpop.permute.xlu0 %4106
    %4108 = vrot.lane.b32.xlu0 %v3886, 120
    %v4109 = vpop.permute.xlu0 %4108
    %4110 = vrot.lane.b32.xlu0 %v3887, 120
    %v4111 = vpop.permute.xlu0 %4110
    %4112 = vrot.lane.b32.xlu0 %v3888, 120
    %v4113 = vpop.permute.xlu0 %4112
    %4114 = vrot.lane.b32.xlu0 %v3889, 120
    %v4115 = vpop.permute.xlu0 %4114
    %4116 = vrot.lane.b32.xlu0 %v3890, 120
    %v4117 = vpop.permute.xlu0 %4116
    %4118 = vrot.lane.b32.xlu0 %v3891, 120
    %v4119 = vpop.permute.xlu0 %4118
    %4120 = vrot.lane.b32.xlu0 %v3892, 120
    %v4121 = vpop.permute.xlu0 %4120
    %4122 = vrot.lane.b32.xlu0 %v3893, 120
    %v4123 = vpop.permute.xlu0 %4122
    %4124 = vrot.lane.b32.xlu0 %v3894, 120
    %v4125 = vpop.permute.xlu0 %4124
    %4126 = vrot.lane.b32.xlu0 %v3895, 120
    %v4127 = vpop.permute.xlu0 %4126
    %4128 = vrot.lane.b32.xlu0 %v3896, 120
    %v4129 = vpop.permute.xlu0 %4128
    %4130 = vrot.lane.b32.xlu0 %v3897, 120
    %v4131 = vpop.permute.xlu0 %4130
    %4132 = vrot.lane.b32.xlu0 %v3898, 120
    %v4133 = vpop.permute.xlu0 %4132
    %4134 = vrot.lane.b32.xlu0 %v3899, 120
    %v4135 = vpop.permute.xlu0 %4134
    %4136 = vrot.lane.b32.xlu0 %v3900, 120
    %v4137 = vpop.permute.xlu0 %4136
    %4138 = vrot.lane.b32.xlu0 %v3901, 120
    %v4139 = vpop.permute.xlu0 %4138
    %4140 = vrot.lane.b32.xlu0 %v3902, 120
    %v4141 = vpop.permute.xlu0 %4140
    %4142 = vrot.lane.b32.xlu0 %v3903, 120
    %v4143 = vpop.permute.xlu0 %4142
    %4144 = vrot.lane.b32.xlu0 %v3904, 120
    %v4145 = vpop.permute.xlu0 %4144
    %4146 = vrot.lane.b32.xlu0 %v3905, 120
    %v4147 = vpop.permute.xlu0 %4146
    %v4148 = vsel %vm1826, %v4105, %v4107
    %v4149 = vsel %vm1826, %v4109, %v4111
    %v4150 = vsel %vm1826, %v4113, %v4115
    %v4151 = vsel %vm1826, %v4117, %v4119
    %v4152 = vsel %vm1826, %v4121, %v4123
    %v4153 = vsel %vm1826, %v4125, %v4127
    %v4154 = vsel %vm1826, %v4129, %v4131
    %v4155 = vsel %vm1826, %v4133, %v4135
    %v4156 = vsel %vm1826, %v4137, %v4139
    %v4157 = vsel %vm1826, %v4141, %v4143
    %v4158 = vsel %vm1826, %v4145, %v4147
    %v4181 = vadd.f32 %v3884, %v4148
    %v4182 = vadd.f32 %v3885, %v4107
    %v4183 = vadd.f32 %v3886, %v4149
    %v4184 = vadd.f32 %v3887, %v4111
    %v4185 = vadd.f32 %v3888, %v4150
    %v4186 = vadd.f32 %v3889, %v4115
    %v4187 = vadd.f32 %v3890, %v4151
    %v4188 = vadd.f32 %v3891, %v4119
    %v4189 = vadd.f32 %v3892, %v4152
    %v4190 = vadd.f32 %v3893, %v4123
    %v4191 = vadd.f32 %v3894, %v4153
    %v4192 = vadd.f32 %v3895, %v4127
    %v4193 = vadd.f32 %v3896, %v4154
    %v4194 = vadd.f32 %v3897, %v4131
    %v4195 = vadd.f32 %v3898, %v4155
    %v4196 = vadd.f32 %v3899, %v4135
    %v4197 = vadd.f32 %v3900, %v4156
    %v4198 = vadd.f32 %v3901, %v4139
    %v4199 = vadd.f32 %v3902, %v4157
    %v4200 = vadd.f32 %v3903, %v4143
    %v4201 = vadd.f32 %v3904, %v4158
    %v4202 = vadd.f32 %v3905, %v4147
    %v4203 = vmul.f32 %v4181, 0.007598758
    %v4204 = vmul.f32 %v4182, 0.007598758
    %v4205 = vmul.f32 %v4183, 0.007598758
    %v4206 = vmul.f32 %v4184, 0.007598758
    %v4207 = vmul.f32 %v4185, 0.007598758
    %v4208 = vmul.f32 %v4186, 0.007598758
    %v4209 = vmul.f32 %v4187, 0.007598758
    %v4210 = vmul.f32 %v4188, 0.007598758
    %v4211 = vmul.f32 %v4189, 0.007598758
    %v4212 = vmul.f32 %v4190, 0.007598758
    %v4213 = vmul.f32 %v4191, 0.007598758
    %v4214 = vmul.f32 %v4192, 0.007598758
    %v4215 = vmul.f32 %v4193, 0.007598758
    %v4216 = vmul.f32 %v4194, 0.007598758
    %v4217 = vmul.f32 %v4195, 0.007598758
    %v4218 = vmul.f32 %v4196, 0.007598758
    %v4219 = vmul.f32 %v4197, 0.007598758
    %v4220 = vmul.f32 %v4198, 0.007598758
    %v4221 = vmul.f32 %v4199, 0.007598758
    %v4222 = vmul.f32 %v4200, 0.007598758
    %v4223 = vmul.f32 %v4201, 0.007598758
    %v4224 = vmul.f32 %v4202, 0.007598758
    %4247 = vrot.lane.b32.xlu0 %v4203, 4
    %v4248 = vpop.permute.xlu0 %4247
    %4249 = vrot.lane.b32.xlu0 %v4204, 4
    %v4250 = vpop.permute.xlu0 %4249
    %4251 = vrot.lane.b32.xlu0 %v4205, 4
    %v4252 = vpop.permute.xlu0 %4251
    %4253 = vrot.lane.b32.xlu0 %v4206, 4
    %v4254 = vpop.permute.xlu0 %4253
    %4255 = vrot.lane.b32.xlu0 %v4207, 4
    %v4256 = vpop.permute.xlu0 %4255
    %4257 = vrot.lane.b32.xlu0 %v4208, 4
    %v4258 = vpop.permute.xlu0 %4257
    %4259 = vrot.lane.b32.xlu0 %v4209, 4
    %v4260 = vpop.permute.xlu0 %4259
    %4261 = vrot.lane.b32.xlu0 %v4210, 4
    %v4262 = vpop.permute.xlu0 %4261
    %4263 = vrot.lane.b32.xlu0 %v4211, 4
    %v4264 = vpop.permute.xlu0 %4263
    %4265 = vrot.lane.b32.xlu0 %v4212, 4
    %v4266 = vpop.permute.xlu0 %4265
    %4267 = vrot.lane.b32.xlu0 %v4213, 4
    %v4268 = vpop.permute.xlu0 %4267
    %4269 = vrot.lane.b32.xlu0 %v4214, 4
    %v4270 = vpop.permute.xlu0 %4269
    %4271 = vrot.lane.b32.xlu0 %v4215, 4
    %v4272 = vpop.permute.xlu0 %4271
    %4273 = vrot.lane.b32.xlu0 %v4216, 4
    %v4274 = vpop.permute.xlu0 %4273
    %4275 = vrot.lane.b32.xlu0 %v4217, 4
    %v4276 = vpop.permute.xlu0 %4275
    %4277 = vrot.lane.b32.xlu0 %v4218, 4
    %v4278 = vpop.permute.xlu0 %4277
    %4279 = vrot.lane.b32.xlu0 %v4219, 4
    %v4280 = vpop.permute.xlu0 %4279
    %4281 = vrot.lane.b32.xlu0 %v4220, 4
    %v4282 = vpop.permute.xlu0 %4281
    %4283 = vrot.lane.b32.xlu0 %v4221, 4
    %v4284 = vpop.permute.xlu0 %4283
    %4285 = vrot.lane.b32.xlu0 %v4222, 4
    %v4286 = vpop.permute.xlu0 %4285
    %4287 = vrot.lane.b32.xlu0 %v4223, 4
    %v4288 = vpop.permute.xlu0 %4287
    %4289 = vrot.lane.b32.xlu0 %v4224, 4
    %v4290 = vpop.permute.xlu0 %4289
    %v4291 = vsel %vm1970, %v4248, %v4250
    %v4292 = vsel %vm1970, %v4252, %v4254
    %v4293 = vsel %vm1970, %v4256, %v4258
    %v4294 = vsel %vm1970, %v4260, %v4262
    %v4295 = vsel %vm1970, %v4264, %v4266
    %v4296 = vsel %vm1970, %v4268, %v4270
    %v4297 = vsel %vm1970, %v4272, %v4274
    %v4298 = vsel %vm1970, %v4276, %v4278
    %v4299 = vsel %vm1970, %v4280, %v4282
    %v4300 = vsel %vm1970, %v4284, %v4286
    %v4301 = vsel %vm1970, %v4288, %v4290
    %v4324 = vadd.f32 %v4082, %v4248
    %v4325 = vadd.f32 %v4083, %v4291
    %v4326 = vadd.f32 %v4084, %v4252
    %v4327 = vadd.f32 %v4085, %v4292
    %v4328 = vadd.f32 %v4086, %v4256
    %v4329 = vadd.f32 %v4087, %v4293
    %v4330 = vadd.f32 %v4088, %v4260
    %v4331 = vadd.f32 %v4089, %v4294
    %v4332 = vadd.f32 %v4090, %v4264
    %v4333 = vadd.f32 %v4091, %v4295
    %v4334 = vadd.f32 %v4092, %v4268
    %v4335 = vadd.f32 %v4093, %v4296
    %v4336 = vadd.f32 %v4094, %v4272
    %v4337 = vadd.f32 %v4095, %v4297
    %v4338 = vadd.f32 %v4096, %v4276
    %v4339 = vadd.f32 %v4097, %v4298
    %v4340 = vadd.f32 %v4098, %v4280
    %v4341 = vadd.f32 %v4099, %v4299
    %v4342 = vadd.f32 %v4100, %v4284
    %v4343 = vadd.f32 %v4101, %v4300
    %v4344 = vadd.f32 %v4102, %v4288
    %v4345 = vadd.f32 %v4103, %v4301
    %4346 = vrot.lane.b32.xlu0 %v3884, 122
    %v4347 = vpop.permute.xlu0 %4346
    %4348 = vrot.lane.b32.xlu0 %v3885, 122
    %v4349 = vpop.permute.xlu0 %4348
    %4350 = vrot.lane.b32.xlu0 %v3886, 122
    %v4351 = vpop.permute.xlu0 %4350
    %4352 = vrot.lane.b32.xlu0 %v3887, 122
    %v4353 = vpop.permute.xlu0 %4352
    %4354 = vrot.lane.b32.xlu0 %v3888, 122
    %v4355 = vpop.permute.xlu0 %4354
    %4356 = vrot.lane.b32.xlu0 %v3889, 122
    %v4357 = vpop.permute.xlu0 %4356
    %4358 = vrot.lane.b32.xlu0 %v3890, 122
    %v4359 = vpop.permute.xlu0 %4358
    %4360 = vrot.lane.b32.xlu0 %v3891, 122
    %v4361 = vpop.permute.xlu0 %4360
    %4362 = vrot.lane.b32.xlu0 %v3892, 122
    %v4363 = vpop.permute.xlu0 %4362
    %4364 = vrot.lane.b32.xlu0 %v3893, 122
    %v4365 = vpop.permute.xlu0 %4364
    %4366 = vrot.lane.b32.xlu0 %v3894, 122
    %v4367 = vpop.permute.xlu0 %4366
    %4368 = vrot.lane.b32.xlu0 %v3895, 122
    %v4369 = vpop.permute.xlu0 %4368
    %4370 = vrot.lane.b32.xlu0 %v3896, 122
    %v4371 = vpop.permute.xlu0 %4370
    %4372 = vrot.lane.b32.xlu0 %v3897, 122
    %v4373 = vpop.permute.xlu0 %4372
    %4374 = vrot.lane.b32.xlu0 %v3898, 122
    %v4375 = vpop.permute.xlu0 %4374
    %4376 = vrot.lane.b32.xlu0 %v3899, 122
    %v4377 = vpop.permute.xlu0 %4376
    %4378 = vrot.lane.b32.xlu0 %v3900, 122
    %v4379 = vpop.permute.xlu0 %4378
    %4380 = vrot.lane.b32.xlu0 %v3901, 122
    %v4381 = vpop.permute.xlu0 %4380
    %4382 = vrot.lane.b32.xlu0 %v3902, 122
    %v4383 = vpop.permute.xlu0 %4382
    %4384 = vrot.lane.b32.xlu0 %v3903, 122
    %v4385 = vpop.permute.xlu0 %4384
    %4386 = vrot.lane.b32.xlu0 %v3904, 122
    %v4387 = vpop.permute.xlu0 %4386
    %4388 = vrot.lane.b32.xlu0 %v3905, 122
    %v4389 = vpop.permute.xlu0 %4388
    %v4390 = vsel %vm2070, %v4347, %v4349
    %v4391 = vsel %vm2070, %v4351, %v4353
    %v4392 = vsel %vm2070, %v4355, %v4357
    %v4393 = vsel %vm2070, %v4359, %v4361
    %v4394 = vsel %vm2070, %v4363, %v4365
    %v4395 = vsel %vm2070, %v4367, %v4369
    %v4396 = vsel %vm2070, %v4371, %v4373
    %v4397 = vsel %vm2070, %v4375, %v4377
    %v4398 = vsel %vm2070, %v4379, %v4381
    %v4399 = vsel %vm2070, %v4383, %v4385
    %v4400 = vsel %vm2070, %v4387, %v4389
    %v4423 = vadd.f32 %v3884, %v4390
    %v4424 = vadd.f32 %v3885, %v4349
    %v4425 = vadd.f32 %v3886, %v4391
    %v4426 = vadd.f32 %v3887, %v4353
    %v4427 = vadd.f32 %v3888, %v4392
    %v4428 = vadd.f32 %v3889, %v4357
    %v4429 = vadd.f32 %v3890, %v4393
    %v4430 = vadd.f32 %v3891, %v4361
    %v4431 = vadd.f32 %v3892, %v4394
    %v4432 = vadd.f32 %v3893, %v4365
    %v4433 = vadd.f32 %v3894, %v4395
    %v4434 = vadd.f32 %v3895, %v4369
    %v4435 = vadd.f32 %v3896, %v4396
    %v4436 = vadd.f32 %v3897, %v4373
    %v4437 = vadd.f32 %v3898, %v4397
    %v4438 = vadd.f32 %v3899, %v4377
    %v4439 = vadd.f32 %v3900, %v4398
    %v4440 = vadd.f32 %v3901, %v4381
    %v4441 = vadd.f32 %v3902, %v4399
    %v4442 = vadd.f32 %v3903, %v4385
    %v4443 = vadd.f32 %v3904, %v4400
    %v4444 = vadd.f32 %v3905, %v4389
    %v4445 = vmul.f32 %v4423, 0.036000773
    %v4446 = vmul.f32 %v4424, 0.036000773
    %v4447 = vmul.f32 %v4425, 0.036000773
    %v4448 = vmul.f32 %v4426, 0.036000773
    %v4449 = vmul.f32 %v4427, 0.036000773
    %v4450 = vmul.f32 %v4428, 0.036000773
    %v4451 = vmul.f32 %v4429, 0.036000773
    %v4452 = vmul.f32 %v4430, 0.036000773
    %v4453 = vmul.f32 %v4431, 0.036000773
    %v4454 = vmul.f32 %v4432, 0.036000773
    %v4455 = vmul.f32 %v4433, 0.036000773
    %v4456 = vmul.f32 %v4434, 0.036000773
    %v4457 = vmul.f32 %v4435, 0.036000773
    %v4458 = vmul.f32 %v4436, 0.036000773
    %v4459 = vmul.f32 %v4437, 0.036000773
    %v4460 = vmul.f32 %v4438, 0.036000773
    %v4461 = vmul.f32 %v4439, 0.036000773
    %v4462 = vmul.f32 %v4440, 0.036000773
    %v4463 = vmul.f32 %v4441, 0.036000773
    %v4464 = vmul.f32 %v4442, 0.036000773
    %v4465 = vmul.f32 %v4443, 0.036000773
    %v4466 = vmul.f32 %v4444, 0.036000773
    %4489 = vrot.lane.b32.xlu0 %v4445, 3
    %v4490 = vpop.permute.xlu0 %4489
    %4491 = vrot.lane.b32.xlu0 %v4446, 3
    %v4492 = vpop.permute.xlu0 %4491
    %4493 = vrot.lane.b32.xlu0 %v4447, 3
    %v4494 = vpop.permute.xlu0 %4493
    %4495 = vrot.lane.b32.xlu0 %v4448, 3
    %v4496 = vpop.permute.xlu0 %4495
    %4497 = vrot.lane.b32.xlu0 %v4449, 3
    %v4498 = vpop.permute.xlu0 %4497
    %4499 = vrot.lane.b32.xlu0 %v4450, 3
    %v4500 = vpop.permute.xlu0 %4499
    %4501 = vrot.lane.b32.xlu0 %v4451, 3
    %v4502 = vpop.permute.xlu0 %4501
    %4503 = vrot.lane.b32.xlu0 %v4452, 3
    %v4504 = vpop.permute.xlu0 %4503
    %4505 = vrot.lane.b32.xlu0 %v4453, 3
    %v4506 = vpop.permute.xlu0 %4505
    %4507 = vrot.lane.b32.xlu0 %v4454, 3
    %v4508 = vpop.permute.xlu0 %4507
    %4509 = vrot.lane.b32.xlu0 %v4455, 3
    %v4510 = vpop.permute.xlu0 %4509
    %4511 = vrot.lane.b32.xlu0 %v4456, 3
    %v4512 = vpop.permute.xlu0 %4511
    %4513 = vrot.lane.b32.xlu0 %v4457, 3
    %v4514 = vpop.permute.xlu0 %4513
    %4515 = vrot.lane.b32.xlu0 %v4458, 3
    %v4516 = vpop.permute.xlu0 %4515
    %4517 = vrot.lane.b32.xlu0 %v4459, 3
    %v4518 = vpop.permute.xlu0 %4517
    %4519 = vrot.lane.b32.xlu0 %v4460, 3
    %v4520 = vpop.permute.xlu0 %4519
    %4521 = vrot.lane.b32.xlu0 %v4461, 3
    %v4522 = vpop.permute.xlu0 %4521
    %4523 = vrot.lane.b32.xlu0 %v4462, 3
    %v4524 = vpop.permute.xlu0 %4523
    %4525 = vrot.lane.b32.xlu0 %v4463, 3
    %v4526 = vpop.permute.xlu0 %4525
    %4527 = vrot.lane.b32.xlu0 %v4464, 3
    %v4528 = vpop.permute.xlu0 %4527
    %4529 = vrot.lane.b32.xlu0 %v4465, 3
    %v4530 = vpop.permute.xlu0 %4529
    %4531 = vrot.lane.b32.xlu0 %v4466, 3
    %v4532 = vpop.permute.xlu0 %4531
    %v4533 = vsel %vm2214, %v4490, %v4492
    %v4534 = vsel %vm2214, %v4494, %v4496
    %v4535 = vsel %vm2214, %v4498, %v4500
    %v4536 = vsel %vm2214, %v4502, %v4504
    %v4537 = vsel %vm2214, %v4506, %v4508
    %v4538 = vsel %vm2214, %v4510, %v4512
    %v4539 = vsel %vm2214, %v4514, %v4516
    %v4540 = vsel %vm2214, %v4518, %v4520
    %v4541 = vsel %vm2214, %v4522, %v4524
    %v4542 = vsel %vm2214, %v4526, %v4528
    %v4543 = vsel %vm2214, %v4530, %v4532
    %v4566 = vadd.f32 %v4324, %v4490
    %v4567 = vadd.f32 %v4325, %v4533
    %v4568 = vadd.f32 %v4326, %v4494
    %v4569 = vadd.f32 %v4327, %v4534
    %v4570 = vadd.f32 %v4328, %v4498
    %v4571 = vadd.f32 %v4329, %v4535
    %v4572 = vadd.f32 %v4330, %v4502
    %v4573 = vadd.f32 %v4331, %v4536
    %v4574 = vadd.f32 %v4332, %v4506
    %v4575 = vadd.f32 %v4333, %v4537
    %v4576 = vadd.f32 %v4334, %v4510
    %v4577 = vadd.f32 %v4335, %v4538
    %v4578 = vadd.f32 %v4336, %v4514
    %v4579 = vadd.f32 %v4337, %v4539
    %v4580 = vadd.f32 %v4338, %v4518
    %v4581 = vadd.f32 %v4339, %v4540
    %v4582 = vadd.f32 %v4340, %v4522
    %v4583 = vadd.f32 %v4341, %v4541
    %v4584 = vadd.f32 %v4342, %v4526
    %v4585 = vadd.f32 %v4343, %v4542
    %v4586 = vadd.f32 %v4344, %v4530
    %v4587 = vadd.f32 %v4345, %v4543
    %4588 = vrot.lane.b32.xlu0 %v3884, 124
    %v4589 = vpop.permute.xlu0 %4588
    %4590 = vrot.lane.b32.xlu0 %v3885, 124
    %v4591 = vpop.permute.xlu0 %4590
    %4592 = vrot.lane.b32.xlu0 %v3886, 124
    %v4593 = vpop.permute.xlu0 %4592
    %4594 = vrot.lane.b32.xlu0 %v3887, 124
    %v4595 = vpop.permute.xlu0 %4594
    %4596 = vrot.lane.b32.xlu0 %v3888, 124
    %v4597 = vpop.permute.xlu0 %4596
    %4598 = vrot.lane.b32.xlu0 %v3889, 124
    %v4599 = vpop.permute.xlu0 %4598
    %4600 = vrot.lane.b32.xlu0 %v3890, 124
    %v4601 = vpop.permute.xlu0 %4600
    %4602 = vrot.lane.b32.xlu0 %v3891, 124
    %v4603 = vpop.permute.xlu0 %4602
    %4604 = vrot.lane.b32.xlu0 %v3892, 124
    %v4605 = vpop.permute.xlu0 %4604
    %4606 = vrot.lane.b32.xlu0 %v3893, 124
    %v4607 = vpop.permute.xlu0 %4606
    %4608 = vrot.lane.b32.xlu0 %v3894, 124
    %v4609 = vpop.permute.xlu0 %4608
    %4610 = vrot.lane.b32.xlu0 %v3895, 124
    %v4611 = vpop.permute.xlu0 %4610
    %4612 = vrot.lane.b32.xlu0 %v3896, 124
    %v4613 = vpop.permute.xlu0 %4612
    %4614 = vrot.lane.b32.xlu0 %v3897, 124
    %v4615 = vpop.permute.xlu0 %4614
    %4616 = vrot.lane.b32.xlu0 %v3898, 124
    %v4617 = vpop.permute.xlu0 %4616
    %4618 = vrot.lane.b32.xlu0 %v3899, 124
    %v4619 = vpop.permute.xlu0 %4618
    %4620 = vrot.lane.b32.xlu0 %v3900, 124
    %v4621 = vpop.permute.xlu0 %4620
    %4622 = vrot.lane.b32.xlu0 %v3901, 124
    %v4623 = vpop.permute.xlu0 %4622
    %4624 = vrot.lane.b32.xlu0 %v3902, 124
    %v4625 = vpop.permute.xlu0 %4624
    %4626 = vrot.lane.b32.xlu0 %v3903, 124
    %v4627 = vpop.permute.xlu0 %4626
    %4628 = vrot.lane.b32.xlu0 %v3904, 124
    %v4629 = vpop.permute.xlu0 %4628
    %4630 = vrot.lane.b32.xlu0 %v3905, 124
    %v4631 = vpop.permute.xlu0 %4630
    %v4632 = vsel %vm2314, %v4589, %v4591
    %v4633 = vsel %vm2314, %v4593, %v4595
    %v4634 = vsel %vm2314, %v4597, %v4599
    %v4635 = vsel %vm2314, %v4601, %v4603
    %v4636 = vsel %vm2314, %v4605, %v4607
    %v4637 = vsel %vm2314, %v4609, %v4611
    %v4638 = vsel %vm2314, %v4613, %v4615
    %v4639 = vsel %vm2314, %v4617, %v4619
    %v4640 = vsel %vm2314, %v4621, %v4623
    %v4641 = vsel %vm2314, %v4625, %v4627
    %v4642 = vsel %vm2314, %v4629, %v4631
    %v4665 = vadd.f32 %v3884, %v4632
    %v4666 = vadd.f32 %v3885, %v4591
    %v4667 = vadd.f32 %v3886, %v4633
    %v4668 = vadd.f32 %v3887, %v4595
    %v4669 = vadd.f32 %v3888, %v4634
    %v4670 = vadd.f32 %v3889, %v4599
    %v4671 = vadd.f32 %v3890, %v4635
    %v4672 = vadd.f32 %v3891, %v4603
    %v4673 = vadd.f32 %v3892, %v4636
    %v4674 = vadd.f32 %v3893, %v4607
    %v4675 = vadd.f32 %v3894, %v4637
    %v4676 = vadd.f32 %v3895, %v4611
    %v4677 = vadd.f32 %v3896, %v4638
    %v4678 = vadd.f32 %v3897, %v4615
    %v4679 = vadd.f32 %v3898, %v4639
    %v4680 = vadd.f32 %v3899, %v4619
    %v4681 = vadd.f32 %v3900, %v4640
    %v4682 = vadd.f32 %v3901, %v4623
    %v4683 = vadd.f32 %v3902, %v4641
    %v4684 = vadd.f32 %v3903, %v4627
    %v4685 = vadd.f32 %v3904, %v4642
    %v4686 = vadd.f32 %v3905, %v4631
    %v4687 = vmul.f32 %v4665, 0.10936069
    %v4688 = vmul.f32 %v4666, 0.10936069
    %v4689 = vmul.f32 %v4667, 0.10936069
    %v4690 = vmul.f32 %v4668, 0.10936069
    %v4691 = vmul.f32 %v4669, 0.10936069
    %v4692 = vmul.f32 %v4670, 0.10936069
    %v4693 = vmul.f32 %v4671, 0.10936069
    %v4694 = vmul.f32 %v4672, 0.10936069
    %v4695 = vmul.f32 %v4673, 0.10936069
    %v4696 = vmul.f32 %v4674, 0.10936069
    %v4697 = vmul.f32 %v4675, 0.10936069
    %v4698 = vmul.f32 %v4676, 0.10936069
    %v4699 = vmul.f32 %v4677, 0.10936069
    %v4700 = vmul.f32 %v4678, 0.10936069
    %v4701 = vmul.f32 %v4679, 0.10936069
    %v4702 = vmul.f32 %v4680, 0.10936069
    %v4703 = vmul.f32 %v4681, 0.10936069
    %v4704 = vmul.f32 %v4682, 0.10936069
    %v4705 = vmul.f32 %v4683, 0.10936069
    %v4706 = vmul.f32 %v4684, 0.10936069
    %v4707 = vmul.f32 %v4685, 0.10936069
    %v4708 = vmul.f32 %v4686, 0.10936069
    %4731 = vrot.lane.b32.xlu0 %v4687, 2
    %v4732 = vpop.permute.xlu0 %4731
    %4733 = vrot.lane.b32.xlu0 %v4688, 2
    %v4734 = vpop.permute.xlu0 %4733
    %4735 = vrot.lane.b32.xlu0 %v4689, 2
    %v4736 = vpop.permute.xlu0 %4735
    %4737 = vrot.lane.b32.xlu0 %v4690, 2
    %v4738 = vpop.permute.xlu0 %4737
    %4739 = vrot.lane.b32.xlu0 %v4691, 2
    %v4740 = vpop.permute.xlu0 %4739
    %4741 = vrot.lane.b32.xlu0 %v4692, 2
    %v4742 = vpop.permute.xlu0 %4741
    %4743 = vrot.lane.b32.xlu0 %v4693, 2
    %v4744 = vpop.permute.xlu0 %4743
    %4745 = vrot.lane.b32.xlu0 %v4694, 2
    %v4746 = vpop.permute.xlu0 %4745
    %4747 = vrot.lane.b32.xlu0 %v4695, 2
    %v4748 = vpop.permute.xlu0 %4747
    %4749 = vrot.lane.b32.xlu0 %v4696, 2
    %v4750 = vpop.permute.xlu0 %4749
    %4751 = vrot.lane.b32.xlu0 %v4697, 2
    %v4752 = vpop.permute.xlu0 %4751
    %4753 = vrot.lane.b32.xlu0 %v4698, 2
    %v4754 = vpop.permute.xlu0 %4753
    %4755 = vrot.lane.b32.xlu0 %v4699, 2
    %v4756 = vpop.permute.xlu0 %4755
    %4757 = vrot.lane.b32.xlu0 %v4700, 2
    %v4758 = vpop.permute.xlu0 %4757
    %4759 = vrot.lane.b32.xlu0 %v4701, 2
    %v4760 = vpop.permute.xlu0 %4759
    %4761 = vrot.lane.b32.xlu0 %v4702, 2
    %v4762 = vpop.permute.xlu0 %4761
    %4763 = vrot.lane.b32.xlu0 %v4703, 2
    %v4764 = vpop.permute.xlu0 %4763
    %4765 = vrot.lane.b32.xlu0 %v4704, 2
    %v4766 = vpop.permute.xlu0 %4765
    %4767 = vrot.lane.b32.xlu0 %v4705, 2
    %v4768 = vpop.permute.xlu0 %4767
    %4769 = vrot.lane.b32.xlu0 %v4706, 2
    %v4770 = vpop.permute.xlu0 %4769
    %4771 = vrot.lane.b32.xlu0 %v4707, 2
    %v4772 = vpop.permute.xlu0 %4771
    %4773 = vrot.lane.b32.xlu0 %v4708, 2
    %v4774 = vpop.permute.xlu0 %4773
    %v4775 = vsel %vm2458, %v4732, %v4734
    %v4776 = vsel %vm2458, %v4736, %v4738
    %v4777 = vsel %vm2458, %v4740, %v4742
    %v4778 = vsel %vm2458, %v4744, %v4746
    %v4779 = vsel %vm2458, %v4748, %v4750
    %v4780 = vsel %vm2458, %v4752, %v4754
    %v4781 = vsel %vm2458, %v4756, %v4758
    %v4782 = vsel %vm2458, %v4760, %v4762
    %v4783 = vsel %vm2458, %v4764, %v4766
    %v4784 = vsel %vm2458, %v4768, %v4770
    %v4785 = vsel %vm2458, %v4772, %v4774
    %v4808 = vadd.f32 %v4566, %v4732
    %v4809 = vadd.f32 %v4567, %v4775
    %v4810 = vadd.f32 %v4568, %v4736
    %v4811 = vadd.f32 %v4569, %v4776
    %v4812 = vadd.f32 %v4570, %v4740
    %v4813 = vadd.f32 %v4571, %v4777
    %v4814 = vadd.f32 %v4572, %v4744
    %v4815 = vadd.f32 %v4573, %v4778
    %v4816 = vadd.f32 %v4574, %v4748
    %v4817 = vadd.f32 %v4575, %v4779
    %v4818 = vadd.f32 %v4576, %v4752
    %v4819 = vadd.f32 %v4577, %v4780
    %v4820 = vadd.f32 %v4578, %v4756
    %v4821 = vadd.f32 %v4579, %v4781
    %v4822 = vadd.f32 %v4580, %v4760
    %v4823 = vadd.f32 %v4581, %v4782
    %v4824 = vadd.f32 %v4582, %v4764
    %v4825 = vadd.f32 %v4583, %v4783
    %v4826 = vadd.f32 %v4584, %v4768
    %v4827 = vadd.f32 %v4585, %v4784
    %v4828 = vadd.f32 %v4586, %v4772
    %v4829 = vadd.f32 %v4587, %v4785
    %4830 = vrot.lane.b32.xlu0 %v3884, 126
    %v4831 = vpop.permute.xlu0 %4830
    %4832 = vrot.lane.b32.xlu0 %v3885, 126
    %v4833 = vpop.permute.xlu0 %4832
    %4834 = vrot.lane.b32.xlu0 %v3886, 126
    %v4835 = vpop.permute.xlu0 %4834
    %4836 = vrot.lane.b32.xlu0 %v3887, 126
    %v4837 = vpop.permute.xlu0 %4836
    %4838 = vrot.lane.b32.xlu0 %v3888, 126
    %v4839 = vpop.permute.xlu0 %4838
    %4840 = vrot.lane.b32.xlu0 %v3889, 126
    %v4841 = vpop.permute.xlu0 %4840
    %4842 = vrot.lane.b32.xlu0 %v3890, 126
    %v4843 = vpop.permute.xlu0 %4842
    %4844 = vrot.lane.b32.xlu0 %v3891, 126
    %v4845 = vpop.permute.xlu0 %4844
    %4846 = vrot.lane.b32.xlu0 %v3892, 126
    %v4847 = vpop.permute.xlu0 %4846
    %4848 = vrot.lane.b32.xlu0 %v3893, 126
    %v4849 = vpop.permute.xlu0 %4848
    %4850 = vrot.lane.b32.xlu0 %v3894, 126
    %v4851 = vpop.permute.xlu0 %4850
    %4852 = vrot.lane.b32.xlu0 %v3895, 126
    %v4853 = vpop.permute.xlu0 %4852
    %4854 = vrot.lane.b32.xlu0 %v3896, 126
    %v4855 = vpop.permute.xlu0 %4854
    %4856 = vrot.lane.b32.xlu0 %v3897, 126
    %v4857 = vpop.permute.xlu0 %4856
    %4858 = vrot.lane.b32.xlu0 %v3898, 126
    %v4859 = vpop.permute.xlu0 %4858
    %4860 = vrot.lane.b32.xlu0 %v3899, 126
    %v4861 = vpop.permute.xlu0 %4860
    %4862 = vrot.lane.b32.xlu0 %v3900, 126
    %v4863 = vpop.permute.xlu0 %4862
    %4864 = vrot.lane.b32.xlu0 %v3901, 126
    %v4865 = vpop.permute.xlu0 %4864
    %4866 = vrot.lane.b32.xlu0 %v3902, 126
    %v4867 = vpop.permute.xlu0 %4866
    %4868 = vrot.lane.b32.xlu0 %v3903, 126
    %v4869 = vpop.permute.xlu0 %4868
    %4870 = vrot.lane.b32.xlu0 %v3904, 126
    %v4871 = vpop.permute.xlu0 %4870
    %4872 = vrot.lane.b32.xlu0 %v3905, 126
    %v4873 = vpop.permute.xlu0 %4872
    %v4874 = vsel %vm2558, %v4831, %v4833
    %v4875 = vsel %vm2558, %v4835, %v4837
    %v4876 = vsel %vm2558, %v4839, %v4841
    %v4877 = vsel %vm2558, %v4843, %v4845
    %v4878 = vsel %vm2558, %v4847, %v4849
    %v4879 = vsel %vm2558, %v4851, %v4853
    %v4880 = vsel %vm2558, %v4855, %v4857
    %v4881 = vsel %vm2558, %v4859, %v4861
    %v4882 = vsel %vm2558, %v4863, %v4865
    %v4883 = vsel %vm2558, %v4867, %v4869
    %v4884 = vsel %vm2558, %v4871, %v4873
    %v4907 = vadd.f32 %v3884, %v4874
    %v4908 = vadd.f32 %v3885, %v4833
    %v4909 = vadd.f32 %v3886, %v4875
    %v4910 = vadd.f32 %v3887, %v4837
    %v4911 = vadd.f32 %v3888, %v4876
    %v4912 = vadd.f32 %v3889, %v4841
    %v4913 = vadd.f32 %v3890, %v4877
    %v4914 = vadd.f32 %v3891, %v4845
    %v4915 = vadd.f32 %v3892, %v4878
    %v4916 = vadd.f32 %v3893, %v4849
    %v4917 = vadd.f32 %v3894, %v4879
    %v4918 = vadd.f32 %v3895, %v4853
    %v4919 = vadd.f32 %v3896, %v4880
    %v4920 = vadd.f32 %v3897, %v4857
    %v4921 = vadd.f32 %v3898, %v4881
    %v4922 = vadd.f32 %v3899, %v4861
    %v4923 = vadd.f32 %v3900, %v4882
    %v4924 = vadd.f32 %v3901, %v4865
    %v4925 = vadd.f32 %v3902, %v4883
    %v4926 = vadd.f32 %v3903, %v4869
    %v4927 = vadd.f32 %v3904, %v4884
    %v4928 = vadd.f32 %v3905, %v4873
    %v4929 = vmul.f32 %v4907, 0.21300554
    %v4930 = vmul.f32 %v4908, 0.21300554
    %v4931 = vmul.f32 %v4909, 0.21300554
    %v4932 = vmul.f32 %v4910, 0.21300554
    %v4933 = vmul.f32 %v4911, 0.21300554
    %v4934 = vmul.f32 %v4912, 0.21300554
    %v4935 = vmul.f32 %v4913, 0.21300554
    %v4936 = vmul.f32 %v4914, 0.21300554
    %v4937 = vmul.f32 %v4915, 0.21300554
    %v4938 = vmul.f32 %v4916, 0.21300554
    %v4939 = vmul.f32 %v4917, 0.21300554
    %v4940 = vmul.f32 %v4918, 0.21300554
    %v4941 = vmul.f32 %v4919, 0.21300554
    %v4942 = vmul.f32 %v4920, 0.21300554
    %v4943 = vmul.f32 %v4921, 0.21300554
    %v4944 = vmul.f32 %v4922, 0.21300554
    %v4945 = vmul.f32 %v4923, 0.21300554
    %v4946 = vmul.f32 %v4924, 0.21300554
    %v4947 = vmul.f32 %v4925, 0.21300554
    %v4948 = vmul.f32 %v4926, 0.21300554
    %v4949 = vmul.f32 %v4927, 0.21300554
    %v4950 = vmul.f32 %v4928, 0.21300554
    %4973 = vrot.lane.b32.xlu0 %v4929, 1
    %v4974 = vpop.permute.xlu0 %4973
    %4975 = vrot.lane.b32.xlu0 %v4930, 1
    %v4976 = vpop.permute.xlu0 %4975
    %4977 = vrot.lane.b32.xlu0 %v4931, 1
    %v4978 = vpop.permute.xlu0 %4977
    %4979 = vrot.lane.b32.xlu0 %v4932, 1
    %v4980 = vpop.permute.xlu0 %4979
    %4981 = vrot.lane.b32.xlu0 %v4933, 1
    %v4982 = vpop.permute.xlu0 %4981
    %4983 = vrot.lane.b32.xlu0 %v4934, 1
    %v4984 = vpop.permute.xlu0 %4983
    %4985 = vrot.lane.b32.xlu0 %v4935, 1
    %v4986 = vpop.permute.xlu0 %4985
    %4987 = vrot.lane.b32.xlu0 %v4936, 1
    %v4988 = vpop.permute.xlu0 %4987
    %4989 = vrot.lane.b32.xlu0 %v4937, 1
    %v4990 = vpop.permute.xlu0 %4989
    %4991 = vrot.lane.b32.xlu0 %v4938, 1
    %v4992 = vpop.permute.xlu0 %4991
    %4993 = vrot.lane.b32.xlu0 %v4939, 1
    %v4994 = vpop.permute.xlu0 %4993
    %4995 = vrot.lane.b32.xlu0 %v4940, 1
    %v4996 = vpop.permute.xlu0 %4995
    %4997 = vrot.lane.b32.xlu0 %v4941, 1
    %v4998 = vpop.permute.xlu0 %4997
    %4999 = vrot.lane.b32.xlu0 %v4942, 1
    %v5000 = vpop.permute.xlu0 %4999
    %5001 = vrot.lane.b32.xlu0 %v4943, 1
    %v5002 = vpop.permute.xlu0 %5001
    %5003 = vrot.lane.b32.xlu0 %v4944, 1
    %v5004 = vpop.permute.xlu0 %5003
    %5005 = vrot.lane.b32.xlu0 %v4945, 1
    %v5006 = vpop.permute.xlu0 %5005
    %5007 = vrot.lane.b32.xlu0 %v4946, 1
    %v5008 = vpop.permute.xlu0 %5007
    %5009 = vrot.lane.b32.xlu0 %v4947, 1
    %v5010 = vpop.permute.xlu0 %5009
    %5011 = vrot.lane.b32.xlu0 %v4948, 1
    %v5012 = vpop.permute.xlu0 %5011
    %5013 = vrot.lane.b32.xlu0 %v4949, 1
    %v5014 = vpop.permute.xlu0 %5013
    %5015 = vrot.lane.b32.xlu0 %v4950, 1
    %v5016 = vpop.permute.xlu0 %5015
    %v5017 = vsel %vm2702, %v4974, %v4976
    %v5018 = vsel %vm2702, %v4978, %v4980
    %v5019 = vsel %vm2702, %v4982, %v4984
    %v5020 = vsel %vm2702, %v4986, %v4988
    %v5021 = vsel %vm2702, %v4990, %v4992
    %v5022 = vsel %vm2702, %v4994, %v4996
    %v5023 = vsel %vm2702, %v4998, %v5000
    %v5024 = vsel %vm2702, %v5002, %v5004
    %v5025 = vsel %vm2702, %v5006, %v5008
    %v5026 = vsel %vm2702, %v5010, %v5012
    %v5027 = vsel %vm2702, %v5014, %v5016
    %v5050 = vadd.f32 %v4808, %v4974
    %v5051 = vadd.f32 %v4809, %v5017
    %v5052 = vadd.f32 %v4810, %v4978
    %v5053 = vadd.f32 %v4811, %v5018
    %v5054 = vadd.f32 %v4812, %v4982
    %v5055 = vadd.f32 %v4813, %v5019
    %v5056 = vadd.f32 %v4814, %v4986
    %v5057 = vadd.f32 %v4815, %v5020
    %v5058 = vadd.f32 %v4816, %v4990
    %v5059 = vadd.f32 %v4817, %v5021
    %v5060 = vadd.f32 %v4818, %v4994
    %v5061 = vadd.f32 %v4819, %v5022
    %v5062 = vadd.f32 %v4820, %v4998
    %v5063 = vadd.f32 %v4821, %v5023
    %v5064 = vadd.f32 %v4822, %v5002
    %v5065 = vadd.f32 %v4823, %v5024
    %v5066 = vadd.f32 %v4824, %v5006
    %v5067 = vadd.f32 %v4825, %v5025
    %v5068 = vadd.f32 %v4826, %v5010
    %v5069 = vadd.f32 %v4827, %v5026
    %v5070 = vadd.f32 %v4828, %v5014
    %v5071 = vadd.f32 %v4829, %v5027
    %v5072 = vld [vmem:[#allocation4] sm:$0xe0]
    %v5073 = vld [vmem:[#allocation4 + $0x8] sm:$0xe0]
    %v5074 = vld [vmem:[#allocation4 + $0x10] sm:$0xff]
    %v5075 = vld [vmem:[#allocation4 + $0x18] sm:$0xff]
    %v5076 = vld [vmem:[#allocation4 + $0x20] sm:$0xff]
    %v5077 = vld [vmem:[#allocation4 + $0x28] sm:$0xff]
    %v5078 = vld [vmem:[#allocation4 + $0x30] sm:$0xff]
    %v5079 = vld [vmem:[#allocation4 + $0x38] sm:$0xff]
    %v5080 = vld [vmem:[#allocation4 + $0x40] sm:$0xff]
    %v5081 = vld [vmem:[#allocation4 + $0x48] sm:$0xff]
    %v5082 = vld [vmem:[#allocation4 + $0x50] sm:$0xff]
    %v5083 = vld [vmem:[#allocation4 + $0x58] sm:$0xff]
    %v5084 = vld [vmem:[#allocation4 + $0x60] sm:$0xff]
    %v5085 = vld [vmem:[#allocation4 + $0x68] sm:$0xff]
    %v5086 = vld [vmem:[#allocation4 + $0x70] sm:$0xff]
    %v5087 = vld [vmem:[#allocation4 + $0x78] sm:$0xff]
    %v5088 = vld [vmem:[#allocation4 + $0x80] sm:$0xff]
    %v5089 = vld [vmem:[#allocation4 + $0x88] sm:$0xff]
    %v5090 = vld [vmem:[#allocation4 + $0x90] sm:$0xff]
    %v5091 = vld [vmem:[#allocation4 + $0x98] sm:$0xff]
    %v5092 = vld [vmem:[#allocation4 + $0xa0] sm:$0x1f]
    %v5093 = vld [vmem:[#allocation4 + $0xa8] sm:$0x1f]
    %v5094 = vmul.f32 %v5072, 0.26601171
    %v5095 = vmul.f32 %v5073, 0.26601171
    %v5096 = vmul.f32 %v5074, 0.26601171
    %v5097 = vmul.f32 %v5075, 0.26601171
    %v5098 = vmul.f32 %v5076, 0.26601171
    %v5099 = vmul.f32 %v5077, 0.26601171
    %v5100 = vmul.f32 %v5078, 0.26601171
    %v5101 = vmul.f32 %v5079, 0.26601171
    %v5102 = vmul.f32 %v5080, 0.26601171
    %v5103 = vmul.f32 %v5081, 0.26601171
    %v5104 = vmul.f32 %v5082, 0.26601171
    %v5105 = vmul.f32 %v5083, 0.26601171
    %v5106 = vmul.f32 %v5084, 0.26601171
    %v5107 = vmul.f32 %v5085, 0.26601171
    %v5108 = vmul.f32 %v5086, 0.26601171
    %v5109 = vmul.f32 %v5087, 0.26601171
    %v5110 = vmul.f32 %v5088, 0.26601171
    %v5111 = vmul.f32 %v5089, 0.26601171
    %v5112 = vmul.f32 %v5090, 0.26601171
    %v5113 = vmul.f32 %v5091, 0.26601171
    %v5114 = vmul.f32 %v5092, 0.26601171
    %v5115 = vmul.f32 %v5093, 0.26601171
    %v5116 = vld [vmem:[#allocation4] sm:$0xff]
    %v5117 = vld [vmem:[#allocation4 + $0x8] sm:$0xff]
    %v5118 = vld [vmem:[#allocation4 + $0x10] sm:$0xfc]
    %v5119 = vld [vmem:[#allocation4 + $0x18] sm:$0xfc]
    %v5120 = vld [vmem:[#allocation4 + $0x20] sm:$0xff]
    %v5121 = vld [vmem:[#allocation4 + $0x28] sm:$0xff]
    %v5122 = vld [vmem:[#allocation4 + $0x30] sm:$0xff]
    %v5123 = vld [vmem:[#allocation4 + $0x38] sm:$0xff]
    %v5124 = vld [vmem:[#allocation4 + $0x40] sm:$0xff]
    %v5125 = vld [vmem:[#allocation4 + $0x48] sm:$0xff]
    %v5126 = vld [vmem:[#allocation4 + $0x50] sm:$0xff]
    %v5127 = vld [vmem:[#allocation4 + $0x58] sm:$0xff]
    %v5128 = vld [vmem:[#allocation4 + $0x60] sm:$0xff]
    %v5129 = vld [vmem:[#allocation4 + $0x68] sm:$0xff]
    %v5130 = vld [vmem:[#allocation4 + $0x70] sm:$0xff]
    %v5131 = vld [vmem:[#allocation4 + $0x78] sm:$0xff]
    %v5132 = vld [vmem:[#allocation4 + $0x80] sm:$0xff]
    %v5133 = vld [vmem:[#allocation4 + $0x88] sm:$0xff]
    %v5134 = vld [vmem:[#allocation4 + $0x90] sm:$0xff]
    %v5135 = vld [vmem:[#allocation4 + $0x98] sm:$0xff]
    %v5136 = vld [vmem:[#allocation4 + $0xa0] sm:$0xff]
    %v5137 = vld [vmem:[#allocation4 + $0xa8] sm:$0xff]
    %v5138 = vld [vmem:[#allocation4 + $0xb0] sm:$0x3]
    %v5139 = vld [vmem:[#allocation4 + $0xb8] sm:$0x3]
    %v5162 = vrot.slane %v5118, 2
    %v5163 = vrot.slane %v5120, 2
    %v5164 = vsel %vm519, %v5162, %v5163
    %v5165 = vrot.slane %v5119, 2
    %v5166 = vrot.slane %v5121, 2
    %v5167 = vsel %vm519, %v5165, %v5166
    %v5168 = vrot.slane %v5122, 2
    %v5169 = vsel %vm519, %v5163, %v5168
    %v5170 = vrot.slane %v5123, 2
    %v5171 = vsel %vm519, %v5166, %v5170
    %v5172 = vrot.slane %v5124, 2
    %v5173 = vsel %vm519, %v5168, %v5172
    %v5174 = vrot.slane %v5125, 2
    %v5175 = vsel %vm519, %v5170, %v5174
    %v5176 = vrot.slane %v5126, 2
    %v5177 = vsel %vm519, %v5172, %v5176
    %v5178 = vrot.slane %v5127, 2
    %v5179 = vsel %vm519, %v5174, %v5178
    %v5180 = vrot.slane %v5128, 2
    %v5181 = vsel %vm519, %v5176, %v5180
    %v5182 = vrot.slane %v5129, 2
    %v5183 = vsel %vm519, %v5178, %v5182
    %v5184 = vrot.slane %v5130, 2
    %v5185 = vsel %vm519, %v5180, %v5184
    %v5186 = vrot.slane %v5131, 2
    %v5187 = vsel %vm519, %v5182, %v5186
    %v5188 = vrot.slane %v5132, 2
    %v5189 = vsel %vm519, %v5184, %v5188
    %v5190 = vrot.slane %v5133, 2
    %v5191 = vsel %vm519, %v5186, %v5190
    %v5192 = vrot.slane %v5134, 2
    %v5193 = vsel %vm519, %v5188, %v5192
    %v5194 = vrot.slane %v5135, 2
    %v5195 = vsel %vm519, %v5190, %v5194
    %v5196 = vrot.slane %v5136, 2
    %v5197 = vsel %vm519, %v5192, %v5196
    %v5198 = vrot.slane %v5137, 2
    %v5199 = vsel %vm519, %v5194, %v5198
    %v5200 = vrot.slane %v5138, 2
    %v5201 = vsel %vm519, %v5196, %v5200
    %v5202 = vrot.slane %v5139, 2
    %v5203 = vsel %vm519, %v5198, %v5202
    %v5224 = vadd.f32 %v5116, %v5164
    %v5225 = vadd.f32 %v5117, %v5167
    %v5226 = vadd.f32 %v5074, %v5169
    %v5227 = vadd.f32 %v5075, %v5171
    %v5228 = vadd.f32 %v5076, %v5173
    %v5229 = vadd.f32 %v5077, %v5175
    %v5230 = vadd.f32 %v5078, %v5177
    %v5231 = vadd.f32 %v5079, %v5179
    %v5232 = vadd.f32 %v5080, %v5181
    %v5233 = vadd.f32 %v5081, %v5183
    %v5234 = vadd.f32 %v5082, %v5185
    %v5235 = vadd.f32 %v5083, %v5187
    %v5236 = vadd.f32 %v5084, %v5189
    %v5237 = vadd.f32 %v5085, %v5191
    %v5238 = vadd.f32 %v5086, %v5193
    %v5239 = vadd.f32 %v5087, %v5195
    %v5240 = vadd.f32 %v5088, %v5197
    %v5241 = vadd.f32 %v5089, %v5199
    %v5242 = vadd.f32 %v5090, %v5201
    %v5243 = vadd.f32 %v5091, %v5203
    %v5244 = vmul.f32 %v5224, 0.0010283801
    %v5245 = vmul.f32 %v5225, 0.0010283801
    %v5246 = vmul.f32 %v5226, 0.0010283801
    %v5247 = vmul.f32 %v5227, 0.0010283801
    %v5248 = vmul.f32 %v5228, 0.0010283801
    %v5249 = vmul.f32 %v5229, 0.0010283801
    %v5250 = vmul.f32 %v5230, 0.0010283801
    %v5251 = vmul.f32 %v5231, 0.0010283801
    %v5252 = vmul.f32 %v5232, 0.0010283801
    %v5253 = vmul.f32 %v5233, 0.0010283801
    %v5254 = vmul.f32 %v5234, 0.0010283801
    %v5255 = vmul.f32 %v5235, 0.0010283801
    %v5256 = vmul.f32 %v5236, 0.0010283801
    %v5257 = vmul.f32 %v5237, 0.0010283801
    %v5258 = vmul.f32 %v5238, 0.0010283801
    %v5259 = vmul.f32 %v5239, 0.0010283801
    %v5260 = vmul.f32 %v5240, 0.0010283801
    %v5261 = vmul.f32 %v5241, 0.0010283801
    %v5262 = vmul.f32 %v5242, 0.0010283801
    %v5263 = vmul.f32 %v5243, 0.0010283801
    %v5284 = vrot.slane %v5244, 3
    %v5285 = vrot.slane %v5245, 3
    %v5286 = vrot.slane %v5246, 3
    %v5287 = vsel %vm642, %v5284, %v5286
    %v5288 = vrot.slane %v5247, 3
    %v5289 = vsel %vm642, %v5285, %v5288
    %v5290 = vrot.slane %v5248, 3
    %v5291 = vsel %vm642, %v5286, %v5290
    %v5292 = vrot.slane %v5249, 3
    %v5293 = vsel %vm642, %v5288, %v5292
    %v5294 = vrot.slane %v5250, 3
    %v5295 = vsel %vm642, %v5290, %v5294
    %v5296 = vrot.slane %v5251, 3
    %v5297 = vsel %vm642, %v5292, %v5296
    %v5298 = vrot.slane %v5252, 3
    %v5299 = vsel %vm642, %v5294, %v5298
    %v5300 = vrot.slane %v5253, 3
    %v5301 = vsel %vm642, %v5296, %v5300
    %v5302 = vrot.slane %v5254, 3
    %v5303 = vsel %vm642, %v5298, %v5302
    %v5304 = vrot.slane %v5255, 3
    %v5305 = vsel %vm642, %v5300, %v5304
    %v5306 = vrot.slane %v5256, 3
    %v5307 = vsel %vm642, %v5302, %v5306
    %v5308 = vrot.slane %v5257, 3
    %v5309 = vsel %vm642, %v5304, %v5308
    %v5310 = vrot.slane %v5258, 3
    %v5311 = vsel %vm642, %v5306, %v5310
    %v5312 = vrot.slane %v5259, 3
    %v5313 = vsel %vm642, %v5308, %v5312
    %v5314 = vrot.slane %v5260, 3
    %v5315 = vsel %vm642, %v5310, %v5314
    %v5316 = vrot.slane %v5261, 3
    %v5317 = vsel %vm642, %v5312, %v5316
    %v5318 = vrot.slane %v5262, 3
    %v5319 = vsel %vm642, %v5314, %v5318
    %v5320 = vrot.slane %v5263, 3
    %v5321 = vsel %vm642, %v5316, %v5320
    %v5344 = vadd.f32 %v5094, %v5284
    %v5345 = vadd.f32 %v5095, %v5285
    %v5346 = vadd.f32 %v5096, %v5287
    %v5347 = vadd.f32 %v5097, %v5289
    %v5348 = vadd.f32 %v5098, %v5291
    %v5349 = vadd.f32 %v5099, %v5293
    %v5350 = vadd.f32 %v5100, %v5295
    %v5351 = vadd.f32 %v5101, %v5297
    %v5352 = vadd.f32 %v5102, %v5299
    %v5353 = vadd.f32 %v5103, %v5301
    %v5354 = vadd.f32 %v5104, %v5303
    %v5355 = vadd.f32 %v5105, %v5305
    %v5356 = vadd.f32 %v5106, %v5307
    %v5357 = vadd.f32 %v5107, %v5309
    %v5358 = vadd.f32 %v5108, %v5311
    %v5359 = vadd.f32 %v5109, %v5313
    %v5360 = vadd.f32 %v5110, %v5315
    %v5361 = vadd.f32 %v5111, %v5317
    %v5362 = vadd.f32 %v5112, %v5319
    %v5363 = vadd.f32 %v5113, %v5321
    %v5364 = vadd.f32 %v5114, %v5318
    %v5365 = vadd.f32 %v5115, %v5320
    %v5366 = vld [vmem:[#allocation4] sm:$0xfe]
    %v5367 = vld [vmem:[#allocation4 + $0x8] sm:$0xfe]
    %v5368 = vld [vmem:[#allocation4 + $0xa0] sm:$0x1]
    %v5369 = vld [vmem:[#allocation4 + $0xa8] sm:$0x1]
    %v5370 = vld [vmem:[#allocation4 + $0x10] sm:$0xfe]
    %v5371 = vld [vmem:[#allocation4 + $0x18] sm:$0xfe]
    %v5372 = vld [vmem:[#allocation4 + $0xb0] sm:$0x1]
    %v5373 = vld [vmem:[#allocation4 + $0xb8] sm:$0x1]
    %v5374 = vadd.f32 %v5366, %v5370
    %v5375 = vadd.f32 %v5367, %v5371
    %v5376 = vadd.f32 %v5074, %v5120
    %v5377 = vadd.f32 %v5075, %v5121
    %v5378 = vadd.f32 %v5076, %v5122
    %v5379 = vadd.f32 %v5077, %v5123
    %v5380 = vadd.f32 %v5078, %v5124
    %v5381 = vadd.f32 %v5079, %v5125
    %v5382 = vadd.f32 %v5080, %v5126
    %v5383 = vadd.f32 %v5081, %v5127
    %v5384 = vadd.f32 %v5082, %v5128
    %v5385 = vadd.f32 %v5083, %v5129
    %v5386 = vadd.f32 %v5084, %v5130
    %v5387 = vadd.f32 %v5085, %v5131
    %v5388 = vadd.f32 %v5086, %v5132
    %v5389 = vadd.f32 %v5087, %v5133
    %v5390 = vadd.f32 %v5088, %v5134
    %v5391 = vadd.f32 %v5089, %v5135
    %v5392 = vadd.f32 %v5090, %v5136
    %v5393 = vadd.f32 %v5091, %v5137
    %v5394 = vadd.f32 %v5368, %v5372
    %v5395 = vadd.f32 %v5369, %v5373
    %v5396 = vmul.f32 %v5374, 0.007598758
    %v5397 = vmul.f32 %v5375, 0.007598758
    %v5398 = vmul.f32 %v5376, 0.007598758
    %v5399 = vmul.f32 %v5377, 0.007598758
    %v5400 = vmul.f32 %v5378, 0.007598758
    %v5401 = vmul.f32 %v5379, 0.007598758
    %v5402 = vmul.f32 %v5380, 0.007598758
    %v5403 = vmul.f32 %v5381, 0.007598758
    %v5404 = vmul.f32 %v5382, 0.007598758
    %v5405 = vmul.f32 %v5383, 0.007598758
    %v5406 = vmul.f32 %v5384, 0.007598758
    %v5407 = vmul.f32 %v5385, 0.007598758
    %v5408 = vmul.f32 %v5386, 0.007598758
    %v5409 = vmul.f32 %v5387, 0.007598758
    %v5410 = vmul.f32 %v5388, 0.007598758
    %v5411 = vmul.f32 %v5389, 0.007598758
    %v5412 = vmul.f32 %v5390, 0.007598758
    %v5413 = vmul.f32 %v5391, 0.007598758
    %v5414 = vmul.f32 %v5392, 0.007598758
    %v5415 = vmul.f32 %v5393, 0.007598758
    %v5416 = vmul.f32 %v5394, 0.007598758
    %v5417 = vmul.f32 %v5395, 0.007598758
    %v5440 = vrot.slane %v5396, 4
    %v5441 = vrot.slane %v5397, 4
    %v5442 = vrot.slane %v5398, 4
    %v5443 = vsel %vm799, %v5440, %v5442
    %v5444 = vrot.slane %v5399, 4
    %v5445 = vsel %vm799, %v5441, %v5444
    %v5446 = vrot.slane %v5400, 4
    %v5447 = vsel %vm799, %v5442, %v5446
    %v5448 = vrot.slane %v5401, 4
    %v5449 = vsel %vm799, %v5444, %v5448
    %v5450 = vrot.slane %v5402, 4
    %v5451 = vsel %vm799, %v5446, %v5450
    %v5452 = vrot.slane %v5403, 4
    %v5453 = vsel %vm799, %v5448, %v5452
    %v5454 = vrot.slane %v5404, 4
    %v5455 = vsel %vm799, %v5450, %v5454
    %v5456 = vrot.slane %v5405, 4
    %v5457 = vsel %vm799, %v5452, %v5456
    %v5458 = vrot.slane %v5406, 4
    %v5459 = vsel %vm799, %v5454, %v5458
    %v5460 = vrot.slane %v5407, 4
    %v5461 = vsel %vm799, %v5456, %v5460
    %v5462 = vrot.slane %v5408, 4
    %v5463 = vsel %vm799, %v5458, %v5462
    %v5464 = vrot.slane %v5409, 4
    %v5465 = vsel %vm799, %v5460, %v5464
    %v5466 = vrot.slane %v5410, 4
    %v5467 = vsel %vm799, %v5462, %v5466
    %v5468 = vrot.slane %v5411, 4
    %v5469 = vsel %vm799, %v5464, %v5468
    %v5470 = vrot.slane %v5412, 4
    %v5471 = vsel %vm799, %v5466, %v5470
    %v5472 = vrot.slane %v5413, 4
    %v5473 = vsel %vm799, %v5468, %v5472
    %v5474 = vrot.slane %v5414, 4
    %v5475 = vsel %vm799, %v5470, %v5474
    %v5476 = vrot.slane %v5415, 4
    %v5477 = vsel %vm799, %v5472, %v5476
    %v5478 = vrot.slane %v5416, 4
    %v5479 = vsel %vm799, %v5474, %v5478
    %v5480 = vrot.slane %v5417, 4
    %v5481 = vsel %vm799, %v5476, %v5480
    %v5504 = vadd.f32 %v5344, %v5440
    %v5505 = vadd.f32 %v5345, %v5441
    %v5506 = vadd.f32 %v5346, %v5443
    %v5507 = vadd.f32 %v5347, %v5445
    %v5508 = vadd.f32 %v5348, %v5447
    %v5509 = vadd.f32 %v5349, %v5449
    %v5510 = vadd.f32 %v5350, %v5451
    %v5511 = vadd.f32 %v5351, %v5453
    %v5512 = vadd.f32 %v5352, %v5455
    %v5513 = vadd.f32 %v5353, %v5457
    %v5514 = vadd.f32 %v5354, %v5459
    %v5515 = vadd.f32 %v5355, %v5461
    %v5516 = vadd.f32 %v5356, %v5463
    %v5517 = vadd.f32 %v5357, %v5465
    %v5518 = vadd.f32 %v5358, %v5467
    %v5519 = vadd.f32 %v5359, %v5469
    %v5520 = vadd.f32 %v5360, %v5471
    %v5521 = vadd.f32 %v5361, %v5473
    %v5522 = vadd.f32 %v5362, %v5475
    %v5523 = vadd.f32 %v5363, %v5477
    %v5524 = vadd.f32 %v5364, %v5479
    %v5525 = vadd.f32 %v5365, %v5481
    %v5526 = vld [vmem:[#allocation4] sm:$0xfc]
    %v5527 = vld [vmem:[#allocation4 + $0x8] sm:$0xfc]
    %v5528 = vld [vmem:[#allocation4 + $0xa0] sm:$0x3]
    %v5529 = vld [vmem:[#allocation4 + $0xa8] sm:$0x3]
    %v5530 = vld [vmem:[#allocation4 + $0xa0] sm:$0xff]
    %v5531 = vld [vmem:[#allocation4 + $0xa8] sm:$0xff]
    %v5552 = vrot.slane %v5074, 6
    %v5553 = vrot.slane %v5075, 6
    %v5554 = vrot.slane %v5076, 6
    %v5555 = vsel %vm912, %v5552, %v5554
    %v5556 = vrot.slane %v5077, 6
    %v5557 = vsel %vm912, %v5553, %v5556
    %v5558 = vrot.slane %v5078, 6
    %v5559 = vsel %vm912, %v5554, %v5558
    %v5560 = vrot.slane %v5079, 6
    %v5561 = vsel %vm912, %v5556, %v5560
    %v5562 = vrot.slane %v5080, 6
    %v5563 = vsel %vm912, %v5558, %v5562
    %v5564 = vrot.slane %v5081, 6
    %v5565 = vsel %vm912, %v5560, %v5564
    %v5566 = vrot.slane %v5082, 6
    %v5567 = vsel %vm912, %v5562, %v5566
    %v5568 = vrot.slane %v5083, 6
    %v5569 = vsel %vm912, %v5564, %v5568
    %v5570 = vrot.slane %v5084, 6
    %v5571 = vsel %vm912, %v5566, %v5570
    %v5572 = vrot.slane %v5085, 6
    %v5573 = vsel %vm912, %v5568, %v5572
    %v5574 = vrot.slane %v5086, 6
    %v5575 = vsel %vm912, %v5570, %v5574
    %v5576 = vrot.slane %v5087, 6
    %v5577 = vsel %vm912, %v5572, %v5576
    %v5578 = vrot.slane %v5088, 6
    %v5579 = vsel %vm912, %v5574, %v5578
    %v5580 = vrot.slane %v5089, 6
    %v5581 = vsel %vm912, %v5576, %v5580
    %v5582 = vrot.slane %v5090, 6
    %v5583 = vsel %vm912, %v5578, %v5582
    %v5584 = vrot.slane %v5091, 6
    %v5585 = vsel %vm912, %v5580, %v5584
    %v5586 = vrot.slane %v5530, 6
    %v5587 = vsel %vm912, %v5582, %v5586
    %v5588 = vrot.slane %v5531, 6
    %v5589 = vsel %vm912, %v5584, %v5588
    %v5612 = vadd.f32 %v5526, %v5552
    %v5613 = vadd.f32 %v5527, %v5553
    %v5614 = vadd.f32 %v5074, %v5555
    %v5615 = vadd.f32 %v5075, %v5557
    %v5616 = vadd.f32 %v5076, %v5559
    %v5617 = vadd.f32 %v5077, %v5561
    %v5618 = vadd.f32 %v5078, %v5563
    %v5619 = vadd.f32 %v5079, %v5565
    %v5620 = vadd.f32 %v5080, %v5567
    %v5621 = vadd.f32 %v5081, %v5569
    %v5622 = vadd.f32 %v5082, %v5571
    %v5623 = vadd.f32 %v5083, %v5573
    %v5624 = vadd.f32 %v5084, %v5575
    %v5625 = vadd.f32 %v5085, %v5577
    %v5626 = vadd.f32 %v5086, %v5579
    %v5627 = vadd.f32 %v5087, %v5581
    %v5628 = vadd.f32 %v5088, %v5583
    %v5629 = vadd.f32 %v5089, %v5585
    %v5630 = vadd.f32 %v5090, %v5587
    %v5631 = vadd.f32 %v5091, %v5589
    %v5632 = vadd.f32 %v5528, %v5586
    %v5633 = vadd.f32 %v5529, %v5588
    %v5634 = vmul.f32 %v5612, 0.036000773
    %v5635 = vmul.f32 %v5613, 0.036000773
    %v5636 = vmul.f32 %v5614, 0.036000773
    %v5637 = vmul.f32 %v5615, 0.036000773
    %v5638 = vmul.f32 %v5616, 0.036000773
    %v5639 = vmul.f32 %v5617, 0.036000773
    %v5640 = vmul.f32 %v5618, 0.036000773
    %v5641 = vmul.f32 %v5619, 0.036000773
    %v5642 = vmul.f32 %v5620, 0.036000773
    %v5643 = vmul.f32 %v5621, 0.036000773
    %v5644 = vmul.f32 %v5622, 0.036000773
    %v5645 = vmul.f32 %v5623, 0.036000773
    %v5646 = vmul.f32 %v5624, 0.036000773
    %v5647 = vmul.f32 %v5625, 0.036000773
    %v5648 = vmul.f32 %v5626, 0.036000773
    %v5649 = vmul.f32 %v5627, 0.036000773
    %v5650 = vmul.f32 %v5628, 0.036000773
    %v5651 = vmul.f32 %v5629, 0.036000773
    %v5652 = vmul.f32 %v5630, 0.036000773
    %v5653 = vmul.f32 %v5631, 0.036000773
    %v5654 = vmul.f32 %v5632, 0.036000773
    %v5655 = vmul.f32 %v5633, 0.036000773
    %v5678 = vrot.slane %v5634, 5
    %v5679 = vrot.slane %v5635, 5
    %v5680 = vrot.slane %v5636, 5
    %v5681 = vsel %vm1039, %v5678, %v5680
    %v5682 = vrot.slane %v5637, 5
    %v5683 = vsel %vm1039, %v5679, %v5682
    %v5684 = vrot.slane %v5638, 5
    %v5685 = vsel %vm1039, %v5680, %v5684
    %v5686 = vrot.slane %v5639, 5
    %v5687 = vsel %vm1039, %v5682, %v5686
    %v5688 = vrot.slane %v5640, 5
    %v5689 = vsel %vm1039, %v5684, %v5688
    %v5690 = vrot.slane %v5641, 5
    %v5691 = vsel %vm1039, %v5686, %v5690
    %v5692 = vrot.slane %v5642, 5
    %v5693 = vsel %vm1039, %v5688, %v5692
    %v5694 = vrot.slane %v5643, 5
    %v5695 = vsel %vm1039, %v5690, %v5694
    %v5696 = vrot.slane %v5644, 5
    %v5697 = vsel %vm1039, %v5692, %v5696
    %v5698 = vrot.slane %v5645, 5
    %v5699 = vsel %vm1039, %v5694, %v5698
    %v5700 = vrot.slane %v5646, 5
    %v5701 = vsel %vm1039, %v5696, %v5700
    %v5702 = vrot.slane %v5647, 5
    %v5703 = vsel %vm1039, %v5698, %v5702
    %v5704 = vrot.slane %v5648, 5
    %v5705 = vsel %vm1039, %v5700, %v5704
    %v5706 = vrot.slane %v5649, 5
    %v5707 = vsel %vm1039, %v5702, %v5706
    %v5708 = vrot.slane %v5650, 5
    %v5709 = vsel %vm1039, %v5704, %v5708
    %v5710 = vrot.slane %v5651, 5
    %v5711 = vsel %vm1039, %v5706, %v5710
    %v5712 = vrot.slane %v5652, 5
    %v5713 = vsel %vm1039, %v5708, %v5712
    %v5714 = vrot.slane %v5653, 5
    %v5715 = vsel %vm1039, %v5710, %v5714
    %v5716 = vrot.slane %v5654, 5
    %v5717 = vsel %vm1039, %v5712, %v5716
    %v5718 = vrot.slane %v5655, 5
    %v5719 = vsel %vm1039, %v5714, %v5718
    %v5742 = vadd.f32 %v5504, %v5678
    %v5743 = vadd.f32 %v5505, %v5679
    %v5744 = vadd.f32 %v5506, %v5681
    %v5745 = vadd.f32 %v5507, %v5683
    %v5746 = vadd.f32 %v5508, %v5685
    %v5747 = vadd.f32 %v5509, %v5687
    %v5748 = vadd.f32 %v5510, %v5689
    %v5749 = vadd.f32 %v5511, %v5691
    %v5750 = vadd.f32 %v5512, %v5693
    %v5751 = vadd.f32 %v5513, %v5695
    %v5752 = vadd.f32 %v5514, %v5697
    %v5753 = vadd.f32 %v5515, %v5699
    %v5754 = vadd.f32 %v5516, %v5701
    %v5755 = vadd.f32 %v5517, %v5703
    %v5756 = vadd.f32 %v5518, %v5705
    %v5757 = vadd.f32 %v5519, %v5707
    %v5758 = vadd.f32 %v5520, %v5709
    %v5759 = vadd.f32 %v5521, %v5711
    %v5760 = vadd.f32 %v5522, %v5713
    %v5761 = vadd.f32 %v5523, %v5715
    %v5762 = vadd.f32 %v5524, %v5717
    %v5763 = vadd.f32 %v5525, %v5719
    %v5764 = vld [vmem:[#allocation4] sm:$0xf8]
    %v5765 = vld [vmem:[#allocation4 + $0x8] sm:$0xf8]
    %v5766 = vld [vmem:[#allocation4 + $0xa0] sm:$0x7]
    %v5767 = vld [vmem:[#allocation4 + $0xa8] sm:$0x7]
    %v5768 = vld [vmem:[#allocation4] sm:$0x80]
    %v5769 = vld [vmem:[#allocation4 + $0x8] sm:$0x80]
    %v5770 = vld [vmem:[#allocation4 + $0xa0] sm:$0x7f]
    %v5771 = vld [vmem:[#allocation4 + $0xa8] sm:$0x7f]
    %v5776 = vrot.slane %v5768, 4
    %v5777 = vrot.slane %v5074, 4
    %v5778 = vsel %vm799, %v5776, %v5777
    %v5779 = vrot.slane %v5769, 4
    %v5780 = vrot.slane %v5075, 4
    %v5781 = vsel %vm799, %v5779, %v5780
    %v5782 = vrot.slane %v5076, 4
    %v5783 = vsel %vm799, %v5777, %v5782
    %v5784 = vrot.slane %v5077, 4
    %v5785 = vsel %vm799, %v5780, %v5784
    %v5786 = vrot.slane %v5078, 4
    %v5787 = vsel %vm799, %v5782, %v5786
    %v5788 = vrot.slane %v5079, 4
    %v5789 = vsel %vm799, %v5784, %v5788
    %v5790 = vrot.slane %v5080, 4
    %v5791 = vsel %vm799, %v5786, %v5790
    %v5792 = vrot.slane %v5081, 4
    %v5793 = vsel %vm799, %v5788, %v5792
    %v5794 = vrot.slane %v5082, 4
    %v5795 = vsel %vm799, %v5790, %v5794
    %v5796 = vrot.slane %v5083, 4
    %v5797 = vsel %vm799, %v5792, %v5796
    %v5798 = vrot.slane %v5084, 4
    %v5799 = vsel %vm799, %v5794, %v5798
    %v5800 = vrot.slane %v5085, 4
    %v5801 = vsel %vm799, %v5796, %v5800
    %v5802 = vrot.slane %v5086, 4
    %v5803 = vsel %vm799, %v5798, %v5802
    %v5804 = vrot.slane %v5087, 4
    %v5805 = vsel %vm799, %v5800, %v5804
    %v5806 = vrot.slane %v5088, 4
    %v5807 = vsel %vm799, %v5802, %v5806
    %v5808 = vrot.slane %v5089, 4
    %v5809 = vsel %vm799, %v5804, %v5808
    %v5810 = vrot.slane %v5090, 4
    %v5811 = vsel %vm799, %v5806, %v5810
    %v5812 = vrot.slane %v5091, 4
    %v5813 = vsel %vm799, %v5808, %v5812
    %v5814 = vrot.slane %v5770, 4
    %v5815 = vsel %vm799, %v5810, %v5814
    %v5816 = vrot.slane %v5771, 4
    %v5817 = vsel %vm799, %v5812, %v5816
    %v5840 = vadd.f32 %v5764, %v5778
    %v5841 = vadd.f32 %v5765, %v5781
    %v5842 = vadd.f32 %v5074, %v5783
    %v5843 = vadd.f32 %v5075, %v5785
    %v5844 = vadd.f32 %v5076, %v5787
    %v5845 = vadd.f32 %v5077, %v5789
    %v5846 = vadd.f32 %v5078, %v5791
    %v5847 = vadd.f32 %v5079, %v5793
    %v5848 = vadd.f32 %v5080, %v5795
    %v5849 = vadd.f32 %v5081, %v5797
    %v5850 = vadd.f32 %v5082, %v5799
    %v5851 = vadd.f32 %v5083, %v5801
    %v5852 = vadd.f32 %v5084, %v5803
    %v5853 = vadd.f32 %v5085, %v5805
    %v5854 = vadd.f32 %v5086, %v5807
    %v5855 = vadd.f32 %v5087, %v5809
    %v5856 = vadd.f32 %v5088, %v5811
    %v5857 = vadd.f32 %v5089, %v5813
    %v5858 = vadd.f32 %v5090, %v5815
    %v5859 = vadd.f32 %v5091, %v5817
    %v5860 = vadd.f32 %v5766, %v5814
    %v5861 = vadd.f32 %v5767, %v5816
    %v5862 = vmul.f32 %v5840, 0.10936069
    %v5863 = vmul.f32 %v5841, 0.10936069
    %v5864 = vmul.f32 %v5842, 0.10936069
    %v5865 = vmul.f32 %v5843, 0.10936069
    %v5866 = vmul.f32 %v5844, 0.10936069
    %v5867 = vmul.f32 %v5845, 0.10936069
    %v5868 = vmul.f32 %v5846, 0.10936069
    %v5869 = vmul.f32 %v5847, 0.10936069
    %v5870 = vmul.f32 %v5848, 0.10936069
    %v5871 = vmul.f32 %v5849, 0.10936069
    %v5872 = vmul.f32 %v5850, 0.10936069
    %v5873 = vmul.f32 %v5851, 0.10936069
    %v5874 = vmul.f32 %v5852, 0.10936069
    %v5875 = vmul.f32 %v5853, 0.10936069
    %v5876 = vmul.f32 %v5854, 0.10936069
    %v5877 = vmul.f32 %v5855, 0.10936069
    %v5878 = vmul.f32 %v5856, 0.10936069
    %v5879 = vmul.f32 %v5857, 0.10936069
    %v5880 = vmul.f32 %v5858, 0.10936069
    %v5881 = vmul.f32 %v5859, 0.10936069
    %v5882 = vmul.f32 %v5860, 0.10936069
    %v5883 = vmul.f32 %v5861, 0.10936069
    %v5906 = vrot.slane %v5862, 6
    %v5907 = vrot.slane %v5863, 6
    %v5908 = vrot.slane %v5864, 6
    %v5909 = vsel %vm912, %v5906, %v5908
    %v5910 = vrot.slane %v5865, 6
    %v5911 = vsel %vm912, %v5907, %v5910
    %v5912 = vrot.slane %v5866, 6
    %v5913 = vsel %vm912, %v5908, %v5912
    %v5914 = vrot.slane %v5867, 6
    %v5915 = vsel %vm912, %v5910, %v5914
    %v5916 = vrot.slane %v5868, 6
    %v5917 = vsel %vm912, %v5912, %v5916
    %v5918 = vrot.slane %v5869, 6
    %v5919 = vsel %vm912, %v5914, %v5918
    %v5920 = vrot.slane %v5870, 6
    %v5921 = vsel %vm912, %v5916, %v5920
    %v5922 = vrot.slane %v5871, 6
    %v5923 = vsel %vm912, %v5918, %v5922
    %v5924 = vrot.slane %v5872, 6
    %v5925 = vsel %vm912, %v5920, %v5924
    %v5926 = vrot.slane %v5873, 6
    %v5927 = vsel %vm912, %v5922, %v5926
    %v5928 = vrot.slane %v5874, 6
    %v5929 = vsel %vm912, %v5924, %v5928
    %v5930 = vrot.slane %v5875, 6
    %v5931 = vsel %vm912, %v5926, %v5930
    %v5932 = vrot.slane %v5876, 6
    %v5933 = vsel %vm912, %v5928, %v5932
    %v5934 = vrot.slane %v5877, 6
    %v5935 = vsel %vm912, %v5930, %v5934
    %v5936 = vrot.slane %v5878, 6
    %v5937 = vsel %vm912, %v5932, %v5936
    %v5938 = vrot.slane %v5879, 6
    %v5939 = vsel %vm912, %v5934, %v5938
    %v5940 = vrot.slane %v5880, 6
    %v5941 = vsel %vm912, %v5936, %v5940
    %v5942 = vrot.slane %v5881, 6
    %v5943 = vsel %vm912, %v5938, %v5942
    %v5944 = vrot.slane %v5882, 6
    %v5945 = vsel %vm912, %v5940, %v5944
    %v5946 = vrot.slane %v5883, 6
    %v5947 = vsel %vm912, %v5942, %v5946
    %v5970 = vadd.f32 %v5742, %v5906
    %v5971 = vadd.f32 %v5743, %v5907
    %v5972 = vadd.f32 %v5744, %v5909
    %v5973 = vadd.f32 %v5745, %v5911
    %v5974 = vadd.f32 %v5746, %v5913
    %v5975 = vadd.f32 %v5747, %v5915
    %v5976 = vadd.f32 %v5748, %v5917
    %v5977 = vadd.f32 %v5749, %v5919
    %v5978 = vadd.f32 %v5750, %v5921
    %v5979 = vadd.f32 %v5751, %v5923
    %v5980 = vadd.f32 %v5752, %v5925
    %v5981 = vadd.f32 %v5753, %v5927
    %v5982 = vadd.f32 %v5754, %v5929
    %v5983 = vadd.f32 %v5755, %v5931
    %v5984 = vadd.f32 %v5756, %v5933
    %v5985 = vadd.f32 %v5757, %v5935
    %v5986 = vadd.f32 %v5758, %v5937
    %v5987 = vadd.f32 %v5759, %v5939
    %v5988 = vadd.f32 %v5760, %v5941
    %v5989 = vadd.f32 %v5761, %v5943
    %v5990 = vadd.f32 %v5762, %v5945
    %v5991 = vadd.f32 %v5763, %v5947
    %v5992 = vld [vmem:[#allocation4] sm:$0xf0]
    %v5993 = vld [vmem:[#allocation4 + $0x8] sm:$0xf0]
    %v5994 = vld [vmem:[#allocation4 + $0xa0] sm:$0xf]
    %v5995 = vld [vmem:[#allocation4 + $0xa8] sm:$0xf]
    %v5996 = vld [vmem:[#allocation4] sm:$0xc0]
    %v5997 = vld [vmem:[#allocation4 + $0x8] sm:$0xc0]
    %v5998 = vld [vmem:[#allocation4 + $0xa0] sm:$0x3f]
    %v5999 = vld [vmem:[#allocation4 + $0xa8] sm:$0x3f]
    %v6004 = vrot.slane %v5996, 2
    %v6005 = vrot.slane %v5074, 2
    %v6006 = vsel %vm519, %v6004, %v6005
    %v6007 = vrot.slane %v5997, 2
    %v6008 = vrot.slane %v5075, 2
    %v6009 = vsel %vm519, %v6007, %v6008
    %v6010 = vrot.slane %v5076, 2
    %v6011 = vsel %vm519, %v6005, %v6010
    %v6012 = vrot.slane %v5077, 2
    %v6013 = vsel %vm519, %v6008, %v6012
    %v6014 = vrot.slane %v5078, 2
    %v6015 = vsel %vm519, %v6010, %v6014
    %v6016 = vrot.slane %v5079, 2
    %v6017 = vsel %vm519, %v6012, %v6016
    %v6018 = vrot.slane %v5080, 2
    %v6019 = vsel %vm519, %v6014, %v6018
    %v6020 = vrot.slane %v5081, 2
    %v6021 = vsel %vm519, %v6016, %v6020
    %v6022 = vrot.slane %v5082, 2
    %v6023 = vsel %vm519, %v6018, %v6022
    %v6024 = vrot.slane %v5083, 2
    %v6025 = vsel %vm519, %v6020, %v6024
    %v6026 = vrot.slane %v5084, 2
    %v6027 = vsel %vm519, %v6022, %v6026
    %v6028 = vrot.slane %v5085, 2
    %v6029 = vsel %vm519, %v6024, %v6028
    %v6030 = vrot.slane %v5086, 2
    %v6031 = vsel %vm519, %v6026, %v6030
    %v6032 = vrot.slane %v5087, 2
    %v6033 = vsel %vm519, %v6028, %v6032
    %v6034 = vrot.slane %v5088, 2
    %v6035 = vsel %vm519, %v6030, %v6034
    %v6036 = vrot.slane %v5089, 2
    %v6037 = vsel %vm519, %v6032, %v6036
    %v6038 = vrot.slane %v5090, 2
    %v6039 = vsel %vm519, %v6034, %v6038
    %v6040 = vrot.slane %v5091, 2
    %v6041 = vsel %vm519, %v6036, %v6040
    %v6042 = vrot.slane %v5998, 2
    %v6043 = vsel %vm519, %v6038, %v6042
    %v6044 = vrot.slane %v5999, 2
    %v6045 = vsel %vm519, %v6040, %v6044
    %v6068 = vadd.f32 %v5992, %v6006
    %v6069 = vadd.f32 %v5993, %v6009
    %v6070 = vadd.f32 %v5074, %v6011
    %v6071 = vadd.f32 %v5075, %v6013
    %v6072 = vadd.f32 %v5076, %v6015
    %v6073 = vadd.f32 %v5077, %v6017
    %v6074 = vadd.f32 %v5078, %v6019
    %v6075 = vadd.f32 %v5079, %v6021
    %v6076 = vadd.f32 %v5080, %v6023
    %v6077 = vadd.f32 %v5081, %v6025
    %v6078 = vadd.f32 %v5082, %v6027
    %v6079 = vadd.f32 %v5083, %v6029
    %v6080 = vadd.f32 %v5084, %v6031
    %v6081 = vadd.f32 %v5085, %v6033
    %v6082 = vadd.f32 %v5086, %v6035
    %v6083 = vadd.f32 %v5087, %v6037
    %v6084 = vadd.f32 %v5088, %v6039
    %v6085 = vadd.f32 %v5089, %v6041
    %v6086 = vadd.f32 %v5090, %v6043
    %v6087 = vadd.f32 %v5091, %v6045
    %v6088 = vadd.f32 %v5994, %v6042
    %v6089 = vadd.f32 %v5995, %v6044
    %v6090 = vmul.f32 %v6068, 0.21300554
    %v6091 = vmul.f32 %v6069, 0.21300554
    %v6092 = vmul.f32 %v6070, 0.21300554
    %v6093 = vmul.f32 %v6071, 0.21300554
    %v6094 = vmul.f32 %v6072, 0.21300554
    %v6095 = vmul.f32 %v6073, 0.21300554
    %v6096 = vmul.f32 %v6074, 0.21300554
    %v6097 = vmul.f32 %v6075, 0.21300554
    %v6098 = vmul.f32 %v6076, 0.21300554
    %v6099 = vmul.f32 %v6077, 0.21300554
    %v6100 = vmul.f32 %v6078, 0.21300554
    %v6101 = vmul.f32 %v6079, 0.21300554
    %v6102 = vmul.f32 %v6080, 0.21300554
    %v6103 = vmul.f32 %v6081, 0.21300554
    %v6104 = vmul.f32 %v6082, 0.21300554
    %v6105 = vmul.f32 %v6083, 0.21300554
    %v6106 = vmul.f32 %v6084, 0.21300554
    %v6107 = vmul.f32 %v6085, 0.21300554
    %v6108 = vmul.f32 %v6086, 0.21300554
    %v6109 = vmul.f32 %v6087, 0.21300554
    %v6110 = vmul.f32 %v6088, 0.21300554
    %v6111 = vmul.f32 %v6089, 0.21300554
    %v6134 = vrot.slane %v6090, 7
    %v6135 = vrot.slane %v6091, 7
    %v6136 = vrot.slane %v6092, 7
    %v6137 = vsel %vm1496, %v6134, %v6136
    %v6138 = vrot.slane %v6093, 7
    %v6139 = vsel %vm1496, %v6135, %v6138
    %v6140 = vrot.slane %v6094, 7
    %v6141 = vsel %vm1496, %v6136, %v6140
    %v6142 = vrot.slane %v6095, 7
    %v6143 = vsel %vm1496, %v6138, %v6142
    %v6144 = vrot.slane %v6096, 7
    %v6145 = vsel %vm1496, %v6140, %v6144
    %v6146 = vrot.slane %v6097, 7
    %v6147 = vsel %vm1496, %v6142, %v6146
    %v6148 = vrot.slane %v6098, 7
    %v6149 = vsel %vm1496, %v6144, %v6148
    %v6150 = vrot.slane %v6099, 7
    %v6151 = vsel %vm1496, %v6146, %v6150
    %v6152 = vrot.slane %v6100, 7
    %v6153 = vsel %vm1496, %v6148, %v6152
    %v6154 = vrot.slane %v6101, 7
    %v6155 = vsel %vm1496, %v6150, %v6154
    %v6156 = vrot.slane %v6102, 7
    %v6157 = vsel %vm1496, %v6152, %v6156
    %v6158 = vrot.slane %v6103, 7
    %v6159 = vsel %vm1496, %v6154, %v6158
    %v6160 = vrot.slane %v6104, 7
    %v6161 = vsel %vm1496, %v6156, %v6160
    %v6162 = vrot.slane %v6105, 7
    %v6163 = vsel %vm1496, %v6158, %v6162
    %v6164 = vrot.slane %v6106, 7
    %v6165 = vsel %vm1496, %v6160, %v6164
    %v6166 = vrot.slane %v6107, 7
    %v6167 = vsel %vm1496, %v6162, %v6166
    %v6168 = vrot.slane %v6108, 7
    %v6169 = vsel %vm1496, %v6164, %v6168
    %v6170 = vrot.slane %v6109, 7
    %v6171 = vsel %vm1496, %v6166, %v6170
    %v6172 = vrot.slane %v6110, 7
    %v6173 = vsel %vm1496, %v6168, %v6172
    %v6174 = vrot.slane %v6111, 7
    %v6175 = vsel %vm1496, %v6170, %v6174
    %v6198 = vadd.f32 %v5970, %v6134
    %v6199 = vadd.f32 %v5971, %v6135
    %v6200 = vadd.f32 %v5972, %v6137
    %v6201 = vadd.f32 %v5973, %v6139
    %v6202 = vadd.f32 %v5974, %v6141
    %v6203 = vadd.f32 %v5975, %v6143
    %v6204 = vadd.f32 %v5976, %v6145
    %v6205 = vadd.f32 %v5977, %v6147
    %v6206 = vadd.f32 %v5978, %v6149
    %v6207 = vadd.f32 %v5979, %v6151
    %v6208 = vadd.f32 %v5980, %v6153
    %v6209 = vadd.f32 %v5981, %v6155
    %v6210 = vadd.f32 %v5982, %v6157
    %v6211 = vadd.f32 %v5983, %v6159
    %v6212 = vadd.f32 %v5984, %v6161
    %v6213 = vadd.f32 %v5985, %v6163
    %v6214 = vadd.f32 %v5986, %v6165
    %v6215 = vadd.f32 %v5987, %v6167
    %v6216 = vadd.f32 %v5988, %v6169
    %v6217 = vadd.f32 %v5989, %v6171
    %v6218 = vadd.f32 %v5990, %v6173
    %v6219 = vadd.f32 %v5991, %v6175
    %v6220 = vmul.f32 %v6198, 0.26601171
    %v6221 = vmul.f32 %v6199, 0.26601171
    %v6222 = vmul.f32 %v6200, 0.26601171
    %v6223 = vmul.f32 %v6201, 0.26601171
    %v6224 = vmul.f32 %v6202, 0.26601171
    %v6225 = vmul.f32 %v6203, 0.26601171
    %v6226 = vmul.f32 %v6204, 0.26601171
    %v6227 = vmul.f32 %v6205, 0.26601171
    %v6228 = vmul.f32 %v6206, 0.26601171
    %v6229 = vmul.f32 %v6207, 0.26601171
    %v6230 = vmul.f32 %v6208, 0.26601171
    %v6231 = vmul.f32 %v6209, 0.26601171
    %v6232 = vmul.f32 %v6210, 0.26601171
    %v6233 = vmul.f32 %v6211, 0.26601171
    %v6234 = vmul.f32 %v6212, 0.26601171
    %v6235 = vmul.f32 %v6213, 0.26601171
    %v6236 = vmul.f32 %v6214, 0.26601171
    %v6237 = vmul.f32 %v6215, 0.26601171
    %v6238 = vmul.f32 %v6216, 0.26601171
    %v6239 = vmul.f32 %v6217, 0.26601171
    %v6240 = vmul.f32 %v6218, 0.26601171
    %v6241 = vmul.f32 %v6219, 0.26601171
    %6264 = vrot.lane.b32.xlu0 %v6198, 118
    %v6265 = vpop.permute.xlu0 %6264
    %6266 = vrot.lane.b32.xlu0 %v6199, 118
    %v6267 = vpop.permute.xlu0 %6266
    %6268 = vrot.lane.b32.xlu0 %v6200, 118
    %v6269 = vpop.permute.xlu0 %6268
    %6270 = vrot.lane.b32.xlu0 %v6201, 118
    %v6271 = vpop.permute.xlu0 %6270
    %6272 = vrot.lane.b32.xlu0 %v6202, 118
    %v6273 = vpop.permute.xlu0 %6272
    %6274 = vrot.lane.b32.xlu0 %v6203, 118
    %v6275 = vpop.permute.xlu0 %6274
    %6276 = vrot.lane.b32.xlu0 %v6204, 118
    %v6277 = vpop.permute.xlu0 %6276
    %6278 = vrot.lane.b32.xlu0 %v6205, 118
    %v6279 = vpop.permute.xlu0 %6278
    %6280 = vrot.lane.b32.xlu0 %v6206, 118
    %v6281 = vpop.permute.xlu0 %6280
    %6282 = vrot.lane.b32.xlu0 %v6207, 118
    %v6283 = vpop.permute.xlu0 %6282
    %6284 = vrot.lane.b32.xlu0 %v6208, 118
    %v6285 = vpop.permute.xlu0 %6284
    %6286 = vrot.lane.b32.xlu0 %v6209, 118
    %v6287 = vpop.permute.xlu0 %6286
    %6288 = vrot.lane.b32.xlu0 %v6210, 118
    %v6289 = vpop.permute.xlu0 %6288
    %6290 = vrot.lane.b32.xlu0 %v6211, 118
    %v6291 = vpop.permute.xlu0 %6290
    %6292 = vrot.lane.b32.xlu0 %v6212, 118
    %v6293 = vpop.permute.xlu0 %6292
    %6294 = vrot.lane.b32.xlu0 %v6213, 118
    %v6295 = vpop.permute.xlu0 %6294
    %6296 = vrot.lane.b32.xlu0 %v6214, 118
    %v6297 = vpop.permute.xlu0 %6296
    %6298 = vrot.lane.b32.xlu0 %v6215, 118
    %v6299 = vpop.permute.xlu0 %6298
    %6300 = vrot.lane.b32.xlu0 %v6216, 118
    %v6301 = vpop.permute.xlu0 %6300
    %6302 = vrot.lane.b32.xlu0 %v6217, 118
    %v6303 = vpop.permute.xlu0 %6302
    %6304 = vrot.lane.b32.xlu0 %v6218, 118
    %v6305 = vpop.permute.xlu0 %6304
    %6306 = vrot.lane.b32.xlu0 %v6219, 118
    %v6307 = vpop.permute.xlu0 %6306
    %v6308 = vsel %vm1671, %v6265, %v6267
    %v6309 = vsel %vm1671, %v6269, %v6271
    %v6310 = vsel %vm1671, %v6273, %v6275
    %v6311 = vsel %vm1671, %v6277, %v6279
    %v6312 = vsel %vm1671, %v6281, %v6283
    %v6313 = vsel %vm1671, %v6285, %v6287
    %v6314 = vsel %vm1671, %v6289, %v6291
    %v6315 = vsel %vm1671, %v6293, %v6295
    %v6316 = vsel %vm1671, %v6297, %v6299
    %v6317 = vsel %vm1671, %v6301, %v6303
    %v6318 = vsel %vm1671, %v6305, %v6307
    %v6330 = vadd.f32 %v6198, %v6308
    %v6331 = vadd.f32 %v6200, %v6309
    %v6332 = vadd.f32 %v6202, %v6310
    %v6333 = vadd.f32 %v6204, %v6311
    %v6334 = vadd.f32 %v6206, %v6312
    %v6335 = vadd.f32 %v6208, %v6313
    %v6336 = vadd.f32 %v6210, %v6314
    %v6337 = vadd.f32 %v6212, %v6315
    %v6338 = vadd.f32 %v6214, %v6316
    %v6339 = vadd.f32 %v6216, %v6317
    %v6340 = vadd.f32 %v6218, %v6318
    %v6341 = vmul.f32 %v6330, 0.0010283801
    %v6342 = vmul.f32 %v6331, 0.0010283801
    %v6343 = vmul.f32 %v6332, 0.0010283801
    %v6344 = vmul.f32 %v6333, 0.0010283801
    %v6345 = vmul.f32 %v6334, 0.0010283801
    %v6346 = vmul.f32 %v6335, 0.0010283801
    %v6347 = vmul.f32 %v6336, 0.0010283801
    %v6348 = vmul.f32 %v6337, 0.0010283801
    %v6349 = vmul.f32 %v6338, 0.0010283801
    %v6350 = vmul.f32 %v6339, 0.0010283801
    %v6351 = vmul.f32 %v6340, 0.0010283801
    %6363 = vrot.lane.b32.xlu0 %v6341, 5
    %v6364 = vpop.permute.xlu0 %6363
    %6365 = vrot.lane.b32.xlu0 %v6342, 5
    %v6366 = vpop.permute.xlu0 %6365
    %6367 = vrot.lane.b32.xlu0 %v6343, 5
    %v6368 = vpop.permute.xlu0 %6367
    %6369 = vrot.lane.b32.xlu0 %v6344, 5
    %v6370 = vpop.permute.xlu0 %6369
    %6371 = vrot.lane.b32.xlu0 %v6345, 5
    %v6372 = vpop.permute.xlu0 %6371
    %6373 = vrot.lane.b32.xlu0 %v6346, 5
    %v6374 = vpop.permute.xlu0 %6373
    %6375 = vrot.lane.b32.xlu0 %v6347, 5
    %v6376 = vpop.permute.xlu0 %6375
    %6377 = vrot.lane.b32.xlu0 %v6348, 5
    %v6378 = vpop.permute.xlu0 %6377
    %6379 = vrot.lane.b32.xlu0 %v6349, 5
    %v6380 = vpop.permute.xlu0 %6379
    %6381 = vrot.lane.b32.xlu0 %v6350, 5
    %v6382 = vpop.permute.xlu0 %6381
    %6383 = vrot.lane.b32.xlu0 %v6351, 5
    %v6384 = vpop.permute.xlu0 %6383
    %v6396 = vadd.f32 %v6220, %v6364
    %v6397 = vadd.f32 %v6221, %v6364
    %v6398 = vadd.f32 %v6222, %v6366
    %v6399 = vadd.f32 %v6223, %v6366
    %v6400 = vadd.f32 %v6224, %v6368
    %v6401 = vadd.f32 %v6225, %v6368
    %v6402 = vadd.f32 %v6226, %v6370
    %v6403 = vadd.f32 %v6227, %v6370
    %v6404 = vadd.f32 %v6228, %v6372
    %v6405 = vadd.f32 %v6229, %v6372
    %v6406 = vadd.f32 %v6230, %v6374
    %v6407 = vadd.f32 %v6231, %v6374
    %v6408 = vadd.f32 %v6232, %v6376
    %v6409 = vadd.f32 %v6233, %v6376
    %v6410 = vadd.f32 %v6234, %v6378
    %v6411 = vadd.f32 %v6235, %v6378
    %v6412 = vadd.f32 %v6236, %v6380
    %v6413 = vadd.f32 %v6237, %v6380
    %v6414 = vadd.f32 %v6238, %v6382
    %v6415 = vadd.f32 %v6239, %v6382
    %v6416 = vadd.f32 %v6240, %v6384
    %v6417 = vadd.f32 %v6241, %v6384
    %6418 = vrot.lane.b32.xlu0 %v6198, 120
    %v6419 = vpop.permute.xlu0 %6418
    %6420 = vrot.lane.b32.xlu0 %v6199, 120
    %v6421 = vpop.permute.xlu0 %6420
    %6422 = vrot.lane.b32.xlu0 %v6200, 120
    %v6423 = vpop.permute.xlu0 %6422
    %6424 = vrot.lane.b32.xlu0 %v6201, 120
    %v6425 = vpop.permute.xlu0 %6424
    %6426 = vrot.lane.b32.xlu0 %v6202, 120
    %v6427 = vpop.permute.xlu0 %6426
    %6428 = vrot.lane.b32.xlu0 %v6203, 120
    %v6429 = vpop.permute.xlu0 %6428
    %6430 = vrot.lane.b32.xlu0 %v6204, 120
    %v6431 = vpop.permute.xlu0 %6430
    %6432 = vrot.lane.b32.xlu0 %v6205, 120
    %v6433 = vpop.permute.xlu0 %6432
    %6434 = vrot.lane.b32.xlu0 %v6206, 120
    %v6435 = vpop.permute.xlu0 %6434
    %6436 = vrot.lane.b32.xlu0 %v6207, 120
    %v6437 = vpop.permute.xlu0 %6436
    %6438 = vrot.lane.b32.xlu0 %v6208, 120
    %v6439 = vpop.permute.xlu0 %6438
    %6440 = vrot.lane.b32.xlu0 %v6209, 120
    %v6441 = vpop.permute.xlu0 %6440
    %6442 = vrot.lane.b32.xlu0 %v6210, 120
    %v6443 = vpop.permute.xlu0 %6442
    %6444 = vrot.lane.b32.xlu0 %v6211, 120
    %v6445 = vpop.permute.xlu0 %6444
    %6446 = vrot.lane.b32.xlu0 %v6212, 120
    %v6447 = vpop.permute.xlu0 %6446
    %6448 = vrot.lane.b32.xlu0 %v6213, 120
    %v6449 = vpop.permute.xlu0 %6448
    %6450 = vrot.lane.b32.xlu0 %v6214, 120
    %v6451 = vpop.permute.xlu0 %6450
    %6452 = vrot.lane.b32.xlu0 %v6215, 120
    %v6453 = vpop.permute.xlu0 %6452
    %6454 = vrot.lane.b32.xlu0 %v6216, 120
    %v6455 = vpop.permute.xlu0 %6454
    %6456 = vrot.lane.b32.xlu0 %v6217, 120
    %v6457 = vpop.permute.xlu0 %6456
    %6458 = vrot.lane.b32.xlu0 %v6218, 120
    %v6459 = vpop.permute.xlu0 %6458
    %6460 = vrot.lane.b32.xlu0 %v6219, 120
    %v6461 = vpop.permute.xlu0 %6460
    %v6462 = vsel %vm1826, %v6419, %v6421
    %v6463 = vsel %vm1826, %v6423, %v6425
    %v6464 = vsel %vm1826, %v6427, %v6429
    %v6465 = vsel %vm1826, %v6431, %v6433
    %v6466 = vsel %vm1826, %v6435, %v6437
    %v6467 = vsel %vm1826, %v6439, %v6441
    %v6468 = vsel %vm1826, %v6443, %v6445
    %v6469 = vsel %vm1826, %v6447, %v6449
    %v6470 = vsel %vm1826, %v6451, %v6453
    %v6471 = vsel %vm1826, %v6455, %v6457
    %v6472 = vsel %vm1826, %v6459, %v6461
    %v6495 = vadd.f32 %v6198, %v6462
    %v6496 = vadd.f32 %v6199, %v6421
    %v6497 = vadd.f32 %v6200, %v6463
    %v6498 = vadd.f32 %v6201, %v6425
    %v6499 = vadd.f32 %v6202, %v6464
    %v6500 = vadd.f32 %v6203, %v6429
    %v6501 = vadd.f32 %v6204, %v6465
    %v6502 = vadd.f32 %v6205, %v6433
    %v6503 = vadd.f32 %v6206, %v6466
    %v6504 = vadd.f32 %v6207, %v6437
    %v6505 = vadd.f32 %v6208, %v6467
    %v6506 = vadd.f32 %v6209, %v6441
    %v6507 = vadd.f32 %v6210, %v6468
    %v6508 = vadd.f32 %v6211, %v6445
    %v6509 = vadd.f32 %v6212, %v6469
    %v6510 = vadd.f32 %v6213, %v6449
    %v6511 = vadd.f32 %v6214, %v6470
    %v6512 = vadd.f32 %v6215, %v6453
    %v6513 = vadd.f32 %v6216, %v6471
    %v6514 = vadd.f32 %v6217, %v6457
    %v6515 = vadd.f32 %v6218, %v6472
    %v6516 = vadd.f32 %v6219, %v6461
    %v6517 = vmul.f32 %v6495, 0.007598758
    %v6518 = vmul.f32 %v6496, 0.007598758
    %v6519 = vmul.f32 %v6497, 0.007598758
    %v6520 = vmul.f32 %v6498, 0.007598758
    %v6521 = vmul.f32 %v6499, 0.007598758
    %v6522 = vmul.f32 %v6500, 0.007598758
    %v6523 = vmul.f32 %v6501, 0.007598758
    %v6524 = vmul.f32 %v6502, 0.007598758
    %v6525 = vmul.f32 %v6503, 0.007598758
    %v6526 = vmul.f32 %v6504, 0.007598758
    %v6527 = vmul.f32 %v6505, 0.007598758
    %v6528 = vmul.f32 %v6506, 0.007598758
    %v6529 = vmul.f32 %v6507, 0.007598758
    %v6530 = vmul.f32 %v6508, 0.007598758
    %v6531 = vmul.f32 %v6509, 0.007598758
    %v6532 = vmul.f32 %v6510, 0.007598758
    %v6533 = vmul.f32 %v6511, 0.007598758
    %v6534 = vmul.f32 %v6512, 0.007598758
    %v6535 = vmul.f32 %v6513, 0.007598758
    %v6536 = vmul.f32 %v6514, 0.007598758
    %v6537 = vmul.f32 %v6515, 0.007598758
    %v6538 = vmul.f32 %v6516, 0.007598758
    %6561 = vrot.lane.b32.xlu0 %v6517, 4
    %v6562 = vpop.permute.xlu0 %6561
    %6563 = vrot.lane.b32.xlu0 %v6518, 4
    %v6564 = vpop.permute.xlu0 %6563
    %6565 = vrot.lane.b32.xlu0 %v6519, 4
    %v6566 = vpop.permute.xlu0 %6565
    %6567 = vrot.lane.b32.xlu0 %v6520, 4
    %v6568 = vpop.permute.xlu0 %6567
    %6569 = vrot.lane.b32.xlu0 %v6521, 4
    %v6570 = vpop.permute.xlu0 %6569
    %6571 = vrot.lane.b32.xlu0 %v6522, 4
    %v6572 = vpop.permute.xlu0 %6571
    %6573 = vrot.lane.b32.xlu0 %v6523, 4
    %v6574 = vpop.permute.xlu0 %6573
    %6575 = vrot.lane.b32.xlu0 %v6524, 4
    %v6576 = vpop.permute.xlu0 %6575
    %6577 = vrot.lane.b32.xlu0 %v6525, 4
    %v6578 = vpop.permute.xlu0 %6577
    %6579 = vrot.lane.b32.xlu0 %v6526, 4
    %v6580 = vpop.permute.xlu0 %6579
    %6581 = vrot.lane.b32.xlu0 %v6527, 4
    %v6582 = vpop.permute.xlu0 %6581
    %6583 = vrot.lane.b32.xlu0 %v6528, 4
    %v6584 = vpop.permute.xlu0 %6583
    %6585 = vrot.lane.b32.xlu0 %v6529, 4
    %v6586 = vpop.permute.xlu0 %6585
    %6587 = vrot.lane.b32.xlu0 %v6530, 4
    %v6588 = vpop.permute.xlu0 %6587
    %6589 = vrot.lane.b32.xlu0 %v6531, 4
    %v6590 = vpop.permute.xlu0 %6589
    %6591 = vrot.lane.b32.xlu0 %v6532, 4
    %v6592 = vpop.permute.xlu0 %6591
    %6593 = vrot.lane.b32.xlu0 %v6533, 4
    %v6594 = vpop.permute.xlu0 %6593
    %6595 = vrot.lane.b32.xlu0 %v6534, 4
    %v6596 = vpop.permute.xlu0 %6595
    %6597 = vrot.lane.b32.xlu0 %v6535, 4
    %v6598 = vpop.permute.xlu0 %6597
    %6599 = vrot.lane.b32.xlu0 %v6536, 4
    %v6600 = vpop.permute.xlu0 %6599
    %6601 = vrot.lane.b32.xlu0 %v6537, 4
    %v6602 = vpop.permute.xlu0 %6601
    %6603 = vrot.lane.b32.xlu0 %v6538, 4
    %v6604 = vpop.permute.xlu0 %6603
    %v6605 = vsel %vm1970, %v6562, %v6564
    %v6606 = vsel %vm1970, %v6566, %v6568
    %v6607 = vsel %vm1970, %v6570, %v6572
    %v6608 = vsel %vm1970, %v6574, %v6576
    %v6609 = vsel %vm1970, %v6578, %v6580
    %v6610 = vsel %vm1970, %v6582, %v6584
    %v6611 = vsel %vm1970, %v6586, %v6588
    %v6612 = vsel %vm1970, %v6590, %v6592
    %v6613 = vsel %vm1970, %v6594, %v6596
    %v6614 = vsel %vm1970, %v6598, %v6600
    %v6615 = vsel %vm1970, %v6602, %v6604
    %v6638 = vadd.f32 %v6396, %v6562
    %v6639 = vadd.f32 %v6397, %v6605
    %v6640 = vadd.f32 %v6398, %v6566
    %v6641 = vadd.f32 %v6399, %v6606
    %v6642 = vadd.f32 %v6400, %v6570
    %v6643 = vadd.f32 %v6401, %v6607
    %v6644 = vadd.f32 %v6402, %v6574
    %v6645 = vadd.f32 %v6403, %v6608
    %v6646 = vadd.f32 %v6404, %v6578
    %v6647 = vadd.f32 %v6405, %v6609
    %v6648 = vadd.f32 %v6406, %v6582
    %v6649 = vadd.f32 %v6407, %v6610
    %v6650 = vadd.f32 %v6408, %v6586
    %v6651 = vadd.f32 %v6409, %v6611
    %v6652 = vadd.f32 %v6410, %v6590
    %v6653 = vadd.f32 %v6411, %v6612
    %v6654 = vadd.f32 %v6412, %v6594
    %v6655 = vadd.f32 %v6413, %v6613
    %v6656 = vadd.f32 %v6414, %v6598
    %v6657 = vadd.f32 %v6415, %v6614
    %v6658 = vadd.f32 %v6416, %v6602
    %v6659 = vadd.f32 %v6417, %v6615
    %6660 = vrot.lane.b32.xlu0 %v6198, 122
    %v6661 = vpop.permute.xlu0 %6660
    %6662 = vrot.lane.b32.xlu0 %v6199, 122
    %v6663 = vpop.permute.xlu0 %6662
    %6664 = vrot.lane.b32.xlu0 %v6200, 122
    %v6665 = vpop.permute.xlu0 %6664
    %6666 = vrot.lane.b32.xlu0 %v6201, 122
    %v6667 = vpop.permute.xlu0 %6666
    %6668 = vrot.lane.b32.xlu0 %v6202, 122
    %v6669 = vpop.permute.xlu0 %6668
    %6670 = vrot.lane.b32.xlu0 %v6203, 122
    %v6671 = vpop.permute.xlu0 %6670
    %6672 = vrot.lane.b32.xlu0 %v6204, 122
    %v6673 = vpop.permute.xlu0 %6672
    %6674 = vrot.lane.b32.xlu0 %v6205, 122
    %v6675 = vpop.permute.xlu0 %6674
    %6676 = vrot.lane.b32.xlu0 %v6206, 122
    %v6677 = vpop.permute.xlu0 %6676
    %6678 = vrot.lane.b32.xlu0 %v6207, 122
    %v6679 = vpop.permute.xlu0 %6678
    %6680 = vrot.lane.b32.xlu0 %v6208, 122
    %v6681 = vpop.permute.xlu0 %6680
    %6682 = vrot.lane.b32.xlu0 %v6209, 122
    %v6683 = vpop.permute.xlu0 %6682
    %6684 = vrot.lane.b32.xlu0 %v6210, 122
    %v6685 = vpop.permute.xlu0 %6684
    %6686 = vrot.lane.b32.xlu0 %v6211, 122
    %v6687 = vpop.permute.xlu0 %6686
    %6688 = vrot.lane.b32.xlu0 %v6212, 122
    %v6689 = vpop.permute.xlu0 %6688
    %6690 = vrot.lane.b32.xlu0 %v6213, 122
    %v6691 = vpop.permute.xlu0 %6690
    %6692 = vrot.lane.b32.xlu0 %v6214, 122
    %v6693 = vpop.permute.xlu0 %6692
    %6694 = vrot.lane.b32.xlu0 %v6215, 122
    %v6695 = vpop.permute.xlu0 %6694
    %6696 = vrot.lane.b32.xlu0 %v6216, 122
    %v6697 = vpop.permute.xlu0 %6696
    %6698 = vrot.lane.b32.xlu0 %v6217, 122
    %v6699 = vpop.permute.xlu0 %6698
    %6700 = vrot.lane.b32.xlu0 %v6218, 122
    %v6701 = vpop.permute.xlu0 %6700
    %6702 = vrot.lane.b32.xlu0 %v6219, 122
    %v6703 = vpop.permute.xlu0 %6702
    %v6704 = vsel %vm2070, %v6661, %v6663
    %v6705 = vsel %vm2070, %v6665, %v6667
    %v6706 = vsel %vm2070, %v6669, %v6671
    %v6707 = vsel %vm2070, %v6673, %v6675
    %v6708 = vsel %vm2070, %v6677, %v6679
    %v6709 = vsel %vm2070, %v6681, %v6683
    %v6710 = vsel %vm2070, %v6685, %v6687
    %v6711 = vsel %vm2070, %v6689, %v6691
    %v6712 = vsel %vm2070, %v6693, %v6695
    %v6713 = vsel %vm2070, %v6697, %v6699
    %v6714 = vsel %vm2070, %v6701, %v6703
    %v6737 = vadd.f32 %v6198, %v6704
    %v6738 = vadd.f32 %v6199, %v6663
    %v6739 = vadd.f32 %v6200, %v6705
    %v6740 = vadd.f32 %v6201, %v6667
    %v6741 = vadd.f32 %v6202, %v6706
    %v6742 = vadd.f32 %v6203, %v6671
    %v6743 = vadd.f32 %v6204, %v6707
    %v6744 = vadd.f32 %v6205, %v6675
    %v6745 = vadd.f32 %v6206, %v6708
    %v6746 = vadd.f32 %v6207, %v6679
    %v6747 = vadd.f32 %v6208, %v6709
    %v6748 = vadd.f32 %v6209, %v6683
    %v6749 = vadd.f32 %v6210, %v6710
    %v6750 = vadd.f32 %v6211, %v6687
    %v6751 = vadd.f32 %v6212, %v6711
    %v6752 = vadd.f32 %v6213, %v6691
    %v6753 = vadd.f32 %v6214, %v6712
    %v6754 = vadd.f32 %v6215, %v6695
    %v6755 = vadd.f32 %v6216, %v6713
    %v6756 = vadd.f32 %v6217, %v6699
    %v6757 = vadd.f32 %v6218, %v6714
    %v6758 = vadd.f32 %v6219, %v6703
    %v6759 = vmul.f32 %v6737, 0.036000773
    %v6760 = vmul.f32 %v6738, 0.036000773
    %v6761 = vmul.f32 %v6739, 0.036000773
    %v6762 = vmul.f32 %v6740, 0.036000773
    %v6763 = vmul.f32 %v6741, 0.036000773
    %v6764 = vmul.f32 %v6742, 0.036000773
    %v6765 = vmul.f32 %v6743, 0.036000773
    %v6766 = vmul.f32 %v6744, 0.036000773
    %v6767 = vmul.f32 %v6745, 0.036000773
    %v6768 = vmul.f32 %v6746, 0.036000773
    %v6769 = vmul.f32 %v6747, 0.036000773
    %v6770 = vmul.f32 %v6748, 0.036000773
    %v6771 = vmul.f32 %v6749, 0.036000773
    %v6772 = vmul.f32 %v6750, 0.036000773
    %v6773 = vmul.f32 %v6751, 0.036000773
    %v6774 = vmul.f32 %v6752, 0.036000773
    %v6775 = vmul.f32 %v6753, 0.036000773
    %v6776 = vmul.f32 %v6754, 0.036000773
    %v6777 = vmul.f32 %v6755, 0.036000773
    %v6778 = vmul.f32 %v6756, 0.036000773
    %v6779 = vmul.f32 %v6757, 0.036000773
    %v6780 = vmul.f32 %v6758, 0.036000773
    %6803 = vrot.lane.b32.xlu0 %v6759, 3
    %v6804 = vpop.permute.xlu0 %6803
    %6805 = vrot.lane.b32.xlu0 %v6760, 3
    %v6806 = vpop.permute.xlu0 %6805
    %6807 = vrot.lane.b32.xlu0 %v6761, 3
    %v6808 = vpop.permute.xlu0 %6807
    %6809 = vrot.lane.b32.xlu0 %v6762, 3
    %v6810 = vpop.permute.xlu0 %6809
    %6811 = vrot.lane.b32.xlu0 %v6763, 3
    %v6812 = vpop.permute.xlu0 %6811
    %6813 = vrot.lane.b32.xlu0 %v6764, 3
    %v6814 = vpop.permute.xlu0 %6813
    %6815 = vrot.lane.b32.xlu0 %v6765, 3
    %v6816 = vpop.permute.xlu0 %6815
    %6817 = vrot.lane.b32.xlu0 %v6766, 3
    %v6818 = vpop.permute.xlu0 %6817
    %6819 = vrot.lane.b32.xlu0 %v6767, 3
    %v6820 = vpop.permute.xlu0 %6819
    %6821 = vrot.lane.b32.xlu0 %v6768, 3
    %v6822 = vpop.permute.xlu0 %6821
    %6823 = vrot.lane.b32.xlu0 %v6769, 3
    %v6824 = vpop.permute.xlu0 %6823
    %6825 = vrot.lane.b32.xlu0 %v6770, 3
    %v6826 = vpop.permute.xlu0 %6825
    %6827 = vrot.lane.b32.xlu0 %v6771, 3
    %v6828 = vpop.permute.xlu0 %6827
    %6829 = vrot.lane.b32.xlu0 %v6772, 3
    %v6830 = vpop.permute.xlu0 %6829
    %6831 = vrot.lane.b32.xlu0 %v6773, 3
    %v6832 = vpop.permute.xlu0 %6831
    %6833 = vrot.lane.b32.xlu0 %v6774, 3
    %v6834 = vpop.permute.xlu0 %6833
    %6835 = vrot.lane.b32.xlu0 %v6775, 3
    %v6836 = vpop.permute.xlu0 %6835
    %6837 = vrot.lane.b32.xlu0 %v6776, 3
    %v6838 = vpop.permute.xlu0 %6837
    %6839 = vrot.lane.b32.xlu0 %v6777, 3
    %v6840 = vpop.permute.xlu0 %6839
    %6841 = vrot.lane.b32.xlu0 %v6778, 3
    %v6842 = vpop.permute.xlu0 %6841
    %6843 = vrot.lane.b32.xlu0 %v6779, 3
    %v6844 = vpop.permute.xlu0 %6843
    %6845 = vrot.lane.b32.xlu0 %v6780, 3
    %v6846 = vpop.permute.xlu0 %6845
    %v6847 = vsel %vm2214, %v6804, %v6806
    %v6848 = vsel %vm2214, %v6808, %v6810
    %v6849 = vsel %vm2214, %v6812, %v6814
    %v6850 = vsel %vm2214, %v6816, %v6818
    %v6851 = vsel %vm2214, %v6820, %v6822
    %v6852 = vsel %vm2214, %v6824, %v6826
    %v6853 = vsel %vm2214, %v6828, %v6830
    %v6854 = vsel %vm2214, %v6832, %v6834
    %v6855 = vsel %vm2214, %v6836, %v6838
    %v6856 = vsel %vm2214, %v6840, %v6842
    %v6857 = vsel %vm2214, %v6844, %v6846
    %v6880 = vadd.f32 %v6638, %v6804
    %v6881 = vadd.f32 %v6639, %v6847
    %v6882 = vadd.f32 %v6640, %v6808
    %v6883 = vadd.f32 %v6641, %v6848
    %v6884 = vadd.f32 %v6642, %v6812
    %v6885 = vadd.f32 %v6643, %v6849
    %v6886 = vadd.f32 %v6644, %v6816
    %v6887 = vadd.f32 %v6645, %v6850
    %v6888 = vadd.f32 %v6646, %v6820
    %v6889 = vadd.f32 %v6647, %v6851
    %v6890 = vadd.f32 %v6648, %v6824
    %v6891 = vadd.f32 %v6649, %v6852
    %v6892 = vadd.f32 %v6650, %v6828
    %v6893 = vadd.f32 %v6651, %v6853
    %v6894 = vadd.f32 %v6652, %v6832
    %v6895 = vadd.f32 %v6653, %v6854
    %v6896 = vadd.f32 %v6654, %v6836
    %v6897 = vadd.f32 %v6655, %v6855
    %v6898 = vadd.f32 %v6656, %v6840
    %v6899 = vadd.f32 %v6657, %v6856
    %v6900 = vadd.f32 %v6658, %v6844
    %v6901 = vadd.f32 %v6659, %v6857
    %6902 = vrot.lane.b32.xlu0 %v6198, 124
    %v6903 = vpop.permute.xlu0 %6902
    %6904 = vrot.lane.b32.xlu0 %v6199, 124
    %v6905 = vpop.permute.xlu0 %6904
    %6906 = vrot.lane.b32.xlu0 %v6200, 124
    %v6907 = vpop.permute.xlu0 %6906
    %6908 = vrot.lane.b32.xlu0 %v6201, 124
    %v6909 = vpop.permute.xlu0 %6908
    %6910 = vrot.lane.b32.xlu0 %v6202, 124
    %v6911 = vpop.permute.xlu0 %6910
    %6912 = vrot.lane.b32.xlu0 %v6203, 124
    %v6913 = vpop.permute.xlu0 %6912
    %6914 = vrot.lane.b32.xlu0 %v6204, 124
    %v6915 = vpop.permute.xlu0 %6914
    %6916 = vrot.lane.b32.xlu0 %v6205, 124
    %v6917 = vpop.permute.xlu0 %6916
    %6918 = vrot.lane.b32.xlu0 %v6206, 124
    %v6919 = vpop.permute.xlu0 %6918
    %6920 = vrot.lane.b32.xlu0 %v6207, 124
    %v6921 = vpop.permute.xlu0 %6920
    %6922 = vrot.lane.b32.xlu0 %v6208, 124
    %v6923 = vpop.permute.xlu0 %6922
    %6924 = vrot.lane.b32.xlu0 %v6209, 124
    %v6925 = vpop.permute.xlu0 %6924
    %6926 = vrot.lane.b32.xlu0 %v6210, 124
    %v6927 = vpop.permute.xlu0 %6926
    %6928 = vrot.lane.b32.xlu0 %v6211, 124
    %v6929 = vpop.permute.xlu0 %6928
    %6930 = vrot.lane.b32.xlu0 %v6212, 124
    %v6931 = vpop.permute.xlu0 %6930
    %6932 = vrot.lane.b32.xlu0 %v6213, 124
    %v6933 = vpop.permute.xlu0 %6932
    %6934 = vrot.lane.b32.xlu0 %v6214, 124
    %v6935 = vpop.permute.xlu0 %6934
    %6936 = vrot.lane.b32.xlu0 %v6215, 124
    %v6937 = vpop.permute.xlu0 %6936
    %6938 = vrot.lane.b32.xlu0 %v6216, 124
    %v6939 = vpop.permute.xlu0 %6938
    %6940 = vrot.lane.b32.xlu0 %v6217, 124
    %v6941 = vpop.permute.xlu0 %6940
    %6942 = vrot.lane.b32.xlu0 %v6218, 124
    %v6943 = vpop.permute.xlu0 %6942
    %6944 = vrot.lane.b32.xlu0 %v6219, 124
    %v6945 = vpop.permute.xlu0 %6944
    %v6946 = vsel %vm2314, %v6903, %v6905
    %v6947 = vsel %vm2314, %v6907, %v6909
    %v6948 = vsel %vm2314, %v6911, %v6913
    %v6949 = vsel %vm2314, %v6915, %v6917
    %v6950 = vsel %vm2314, %v6919, %v6921
    %v6951 = vsel %vm2314, %v6923, %v6925
    %v6952 = vsel %vm2314, %v6927, %v6929
    %v6953 = vsel %vm2314, %v6931, %v6933
    %v6954 = vsel %vm2314, %v6935, %v6937
    %v6955 = vsel %vm2314, %v6939, %v6941
    %v6956 = vsel %vm2314, %v6943, %v6945
    %v6979 = vadd.f32 %v6198, %v6946
    %v6980 = vadd.f32 %v6199, %v6905
    %v6981 = vadd.f32 %v6200, %v6947
    %v6982 = vadd.f32 %v6201, %v6909
    %v6983 = vadd.f32 %v6202, %v6948
    %v6984 = vadd.f32 %v6203, %v6913
    %v6985 = vadd.f32 %v6204, %v6949
    %v6986 = vadd.f32 %v6205, %v6917
    %v6987 = vadd.f32 %v6206, %v6950
    %v6988 = vadd.f32 %v6207, %v6921
    %v6989 = vadd.f32 %v6208, %v6951
    %v6990 = vadd.f32 %v6209, %v6925
    %v6991 = vadd.f32 %v6210, %v6952
    %v6992 = vadd.f32 %v6211, %v6929
    %v6993 = vadd.f32 %v6212, %v6953
    %v6994 = vadd.f32 %v6213, %v6933
    %v6995 = vadd.f32 %v6214, %v6954
    %v6996 = vadd.f32 %v6215, %v6937
    %v6997 = vadd.f32 %v6216, %v6955
    %v6998 = vadd.f32 %v6217, %v6941
    %v6999 = vadd.f32 %v6218, %v6956
    %v7000 = vadd.f32 %v6219, %v6945
    %v7001 = vmul.f32 %v6979, 0.10936069
    %v7002 = vmul.f32 %v6980, 0.10936069
    %v7003 = vmul.f32 %v6981, 0.10936069
    %v7004 = vmul.f32 %v6982, 0.10936069
    %v7005 = vmul.f32 %v6983, 0.10936069
    %v7006 = vmul.f32 %v6984, 0.10936069
    %v7007 = vmul.f32 %v6985, 0.10936069
    %v7008 = vmul.f32 %v6986, 0.10936069
    %v7009 = vmul.f32 %v6987, 0.10936069
    %v7010 = vmul.f32 %v6988, 0.10936069
    %v7011 = vmul.f32 %v6989, 0.10936069
    %v7012 = vmul.f32 %v6990, 0.10936069
    %v7013 = vmul.f32 %v6991, 0.10936069
    %v7014 = vmul.f32 %v6992, 0.10936069
    %v7015 = vmul.f32 %v6993, 0.10936069
    %v7016 = vmul.f32 %v6994, 0.10936069
    %v7017 = vmul.f32 %v6995, 0.10936069
    %v7018 = vmul.f32 %v6996, 0.10936069
    %v7019 = vmul.f32 %v6997, 0.10936069
    %v7020 = vmul.f32 %v6998, 0.10936069
    %v7021 = vmul.f32 %v6999, 0.10936069
    %v7022 = vmul.f32 %v7000, 0.10936069
    %7045 = vrot.lane.b32.xlu0 %v7001, 2
    %v7046 = vpop.permute.xlu0 %7045
    %7047 = vrot.lane.b32.xlu0 %v7002, 2
    %v7048 = vpop.permute.xlu0 %7047
    %7049 = vrot.lane.b32.xlu0 %v7003, 2
    %v7050 = vpop.permute.xlu0 %7049
    %7051 = vrot.lane.b32.xlu0 %v7004, 2
    %v7052 = vpop.permute.xlu0 %7051
    %7053 = vrot.lane.b32.xlu0 %v7005, 2
    %v7054 = vpop.permute.xlu0 %7053
    %7055 = vrot.lane.b32.xlu0 %v7006, 2
    %v7056 = vpop.permute.xlu0 %7055
    %7057 = vrot.lane.b32.xlu0 %v7007, 2
    %v7058 = vpop.permute.xlu0 %7057
    %7059 = vrot.lane.b32.xlu0 %v7008, 2
    %v7060 = vpop.permute.xlu0 %7059
    %7061 = vrot.lane.b32.xlu0 %v7009, 2
    %v7062 = vpop.permute.xlu0 %7061
    %7063 = vrot.lane.b32.xlu0 %v7010, 2
    %v7064 = vpop.permute.xlu0 %7063
    %7065 = vrot.lane.b32.xlu0 %v7011, 2
    %v7066 = vpop.permute.xlu0 %7065
    %7067 = vrot.lane.b32.xlu0 %v7012, 2
    %v7068 = vpop.permute.xlu0 %7067
    %7069 = vrot.lane.b32.xlu0 %v7013, 2
    %v7070 = vpop.permute.xlu0 %7069
    %7071 = vrot.lane.b32.xlu0 %v7014, 2
    %v7072 = vpop.permute.xlu0 %7071
    %7073 = vrot.lane.b32.xlu0 %v7015, 2
    %v7074 = vpop.permute.xlu0 %7073
    %7075 = vrot.lane.b32.xlu0 %v7016, 2
    %v7076 = vpop.permute.xlu0 %7075
    %7077 = vrot.lane.b32.xlu0 %v7017, 2
    %v7078 = vpop.permute.xlu0 %7077
    %7079 = vrot.lane.b32.xlu0 %v7018, 2
    %v7080 = vpop.permute.xlu0 %7079
    %7081 = vrot.lane.b32.xlu0 %v7019, 2
    %v7082 = vpop.permute.xlu0 %7081
    %7083 = vrot.lane.b32.xlu0 %v7020, 2
    %v7084 = vpop.permute.xlu0 %7083
    %7085 = vrot.lane.b32.xlu0 %v7021, 2
    %v7086 = vpop.permute.xlu0 %7085
    %7087 = vrot.lane.b32.xlu0 %v7022, 2
    %v7088 = vpop.permute.xlu0 %7087
    %v7089 = vsel %vm2458, %v7046, %v7048
    %v7090 = vsel %vm2458, %v7050, %v7052
    %v7091 = vsel %vm2458, %v7054, %v7056
    %v7092 = vsel %vm2458, %v7058, %v7060
    %v7093 = vsel %vm2458, %v7062, %v7064
    %v7094 = vsel %vm2458, %v7066, %v7068
    %v7095 = vsel %vm2458, %v7070, %v7072
    %v7096 = vsel %vm2458, %v7074, %v7076
    %v7097 = vsel %vm2458, %v7078, %v7080
    %v7098 = vsel %vm2458, %v7082, %v7084
    %v7099 = vsel %vm2458, %v7086, %v7088
    %v7122 = vadd.f32 %v6880, %v7046
    %v7123 = vadd.f32 %v6881, %v7089
    %v7124 = vadd.f32 %v6882, %v7050
    %v7125 = vadd.f32 %v6883, %v7090
    %v7126 = vadd.f32 %v6884, %v7054
    %v7127 = vadd.f32 %v6885, %v7091
    %v7128 = vadd.f32 %v6886, %v7058
    %v7129 = vadd.f32 %v6887, %v7092
    %v7130 = vadd.f32 %v6888, %v7062
    %v7131 = vadd.f32 %v6889, %v7093
    %v7132 = vadd.f32 %v6890, %v7066
    %v7133 = vadd.f32 %v6891, %v7094
    %v7134 = vadd.f32 %v6892, %v7070
    %v7135 = vadd.f32 %v6893, %v7095
    %v7136 = vadd.f32 %v6894, %v7074
    %v7137 = vadd.f32 %v6895, %v7096
    %v7138 = vadd.f32 %v6896, %v7078
    %v7139 = vadd.f32 %v6897, %v7097
    %v7140 = vadd.f32 %v6898, %v7082
    %v7141 = vadd.f32 %v6899, %v7098
    %v7142 = vadd.f32 %v6900, %v7086
    %v7143 = vadd.f32 %v6901, %v7099
    %7144 = vrot.lane.b32.xlu0 %v6198, 126
    %v7145 = vpop.permute.xlu0 %7144
    %7146 = vrot.lane.b32.xlu0 %v6199, 126
    %v7147 = vpop.permute.xlu0 %7146
    %7148 = vrot.lane.b32.xlu0 %v6200, 126
    %v7149 = vpop.permute.xlu0 %7148
    %7150 = vrot.lane.b32.xlu0 %v6201, 126
    %v7151 = vpop.permute.xlu0 %7150
    %7152 = vrot.lane.b32.xlu0 %v6202, 126
    %v7153 = vpop.permute.xlu0 %7152
    %7154 = vrot.lane.b32.xlu0 %v6203, 126
    %v7155 = vpop.permute.xlu0 %7154
    %7156 = vrot.lane.b32.xlu0 %v6204, 126
    %v7157 = vpop.permute.xlu0 %7156
    %7158 = vrot.lane.b32.xlu0 %v6205, 126
    %v7159 = vpop.permute.xlu0 %7158
    %7160 = vrot.lane.b32.xlu0 %v6206, 126
    %v7161 = vpop.permute.xlu0 %7160
    %7162 = vrot.lane.b32.xlu0 %v6207, 126
    %v7163 = vpop.permute.xlu0 %7162
    %7164 = vrot.lane.b32.xlu0 %v6208, 126
    %v7165 = vpop.permute.xlu0 %7164
    %7166 = vrot.lane.b32.xlu0 %v6209, 126
    %v7167 = vpop.permute.xlu0 %7166
    %7168 = vrot.lane.b32.xlu0 %v6210, 126
    %v7169 = vpop.permute.xlu0 %7168
    %7170 = vrot.lane.b32.xlu0 %v6211, 126
    %v7171 = vpop.permute.xlu0 %7170
    %7172 = vrot.lane.b32.xlu0 %v6212, 126
    %v7173 = vpop.permute.xlu0 %7172
    %7174 = vrot.lane.b32.xlu0 %v6213, 126
    %v7175 = vpop.permute.xlu0 %7174
    %7176 = vrot.lane.b32.xlu0 %v6214, 126
    %v7177 = vpop.permute.xlu0 %7176
    %7178 = vrot.lane.b32.xlu0 %v6215, 126
    %v7179 = vpop.permute.xlu0 %7178
    %7180 = vrot.lane.b32.xlu0 %v6216, 126
    %v7181 = vpop.permute.xlu0 %7180
    %7182 = vrot.lane.b32.xlu0 %v6217, 126
    %v7183 = vpop.permute.xlu0 %7182
    %7184 = vrot.lane.b32.xlu0 %v6218, 126
    %v7185 = vpop.permute.xlu0 %7184
    %7186 = vrot.lane.b32.xlu0 %v6219, 126
    %v7187 = vpop.permute.xlu0 %7186
    %v7188 = vsel %vm2558, %v7145, %v7147
    %v7189 = vsel %vm2558, %v7149, %v7151
    %v7190 = vsel %vm2558, %v7153, %v7155
    %v7191 = vsel %vm2558, %v7157, %v7159
    %v7192 = vsel %vm2558, %v7161, %v7163
    %v7193 = vsel %vm2558, %v7165, %v7167
    %v7194 = vsel %vm2558, %v7169, %v7171
    %v7195 = vsel %vm2558, %v7173, %v7175
    %v7196 = vsel %vm2558, %v7177, %v7179
    %v7197 = vsel %vm2558, %v7181, %v7183
    %v7198 = vsel %vm2558, %v7185, %v7187
    %v7221 = vadd.f32 %v6198, %v7188
    %v7222 = vadd.f32 %v6199, %v7147
    %v7223 = vadd.f32 %v6200, %v7189
    %v7224 = vadd.f32 %v6201, %v7151
    %v7225 = vadd.f32 %v6202, %v7190
    %v7226 = vadd.f32 %v6203, %v7155
    %v7227 = vadd.f32 %v6204, %v7191
    %v7228 = vadd.f32 %v6205, %v7159
    %v7229 = vadd.f32 %v6206, %v7192
    %v7230 = vadd.f32 %v6207, %v7163
    %v7231 = vadd.f32 %v6208, %v7193
    %v7232 = vadd.f32 %v6209, %v7167
    %v7233 = vadd.f32 %v6210, %v7194
    %v7234 = vadd.f32 %v6211, %v7171
    %v7235 = vadd.f32 %v6212, %v7195
    %v7236 = vadd.f32 %v6213, %v7175
    %v7237 = vadd.f32 %v6214, %v7196
    %v7238 = vadd.f32 %v6215, %v7179
    %v7239 = vadd.f32 %v6216, %v7197
    %v7240 = vadd.f32 %v6217, %v7183
    %v7241 = vadd.f32 %v6218, %v7198
    %v7242 = vadd.f32 %v6219, %v7187
    %v7243 = vmul.f32 %v7221, 0.21300554
    %v7244 = vmul.f32 %v7222, 0.21300554
    %v7245 = vmul.f32 %v7223, 0.21300554
    %v7246 = vmul.f32 %v7224, 0.21300554
    %v7247 = vmul.f32 %v7225, 0.21300554
    %v7248 = vmul.f32 %v7226, 0.21300554
    %v7249 = vmul.f32 %v7227, 0.21300554
    %v7250 = vmul.f32 %v7228, 0.21300554
    %v7251 = vmul.f32 %v7229, 0.21300554
    %v7252 = vmul.f32 %v7230, 0.21300554
    %v7253 = vmul.f32 %v7231, 0.21300554
    %v7254 = vmul.f32 %v7232, 0.21300554
    %v7255 = vmul.f32 %v7233, 0.21300554
    %v7256 = vmul.f32 %v7234, 0.21300554
    %v7257 = vmul.f32 %v7235, 0.21300554
    %v7258 = vmul.f32 %v7236, 0.21300554
    %v7259 = vmul.f32 %v7237, 0.21300554
    %v7260 = vmul.f32 %v7238, 0.21300554
    %v7261 = vmul.f32 %v7239, 0.21300554
    %v7262 = vmul.f32 %v7240, 0.21300554
    %v7263 = vmul.f32 %v7241, 0.21300554
    %v7264 = vmul.f32 %v7242, 0.21300554
    %7287 = vrot.lane.b32.xlu0 %v7243, 1
    %v7288 = vpop.permute.xlu0 %7287
    %7289 = vrot.lane.b32.xlu0 %v7244, 1
    %v7290 = vpop.permute.xlu0 %7289
    %7291 = vrot.lane.b32.xlu0 %v7245, 1
    %v7292 = vpop.permute.xlu0 %7291
    %7293 = vrot.lane.b32.xlu0 %v7246, 1
    %v7294 = vpop.permute.xlu0 %7293
    %7295 = vrot.lane.b32.xlu0 %v7247, 1
    %v7296 = vpop.permute.xlu0 %7295
    %7297 = vrot.lane.b32.xlu0 %v7248, 1
    %v7298 = vpop.permute.xlu0 %7297
    %7299 = vrot.lane.b32.xlu0 %v7249, 1
    %v7300 = vpop.permute.xlu0 %7299
    %7301 = vrot.lane.b32.xlu0 %v7250, 1
    %v7302 = vpop.permute.xlu0 %7301
    %7303 = vrot.lane.b32.xlu0 %v7251, 1
    %v7304 = vpop.permute.xlu0 %7303
    %7305 = vrot.lane.b32.xlu0 %v7252, 1
    %v7306 = vpop.permute.xlu0 %7305
    %7307 = vrot.lane.b32.xlu0 %v7253, 1
    %v7308 = vpop.permute.xlu0 %7307
    %7309 = vrot.lane.b32.xlu0 %v7254, 1
    %v7310 = vpop.permute.xlu0 %7309
    %7311 = vrot.lane.b32.xlu0 %v7255, 1
    %v7312 = vpop.permute.xlu0 %7311
    %7313 = vrot.lane.b32.xlu0 %v7256, 1
    %v7314 = vpop.permute.xlu0 %7313
    %7315 = vrot.lane.b32.xlu0 %v7257, 1
    %v7316 = vpop.permute.xlu0 %7315
    %7317 = vrot.lane.b32.xlu0 %v7258, 1
    %v7318 = vpop.permute.xlu0 %7317
    %7319 = vrot.lane.b32.xlu0 %v7259, 1
    %v7320 = vpop.permute.xlu0 %7319
    %7321 = vrot.lane.b32.xlu0 %v7260, 1
    %v7322 = vpop.permute.xlu0 %7321
    %7323 = vrot.lane.b32.xlu0 %v7261, 1
    %v7324 = vpop.permute.xlu0 %7323
    %7325 = vrot.lane.b32.xlu0 %v7262, 1
    %v7326 = vpop.permute.xlu0 %7325
    %7327 = vrot.lane.b32.xlu0 %v7263, 1
    %v7328 = vpop.permute.xlu0 %7327
    %7329 = vrot.lane.b32.xlu0 %v7264, 1
    %v7330 = vpop.permute.xlu0 %7329
    %v7331 = vsel %vm2702, %v7288, %v7290
    %v7332 = vsel %vm2702, %v7292, %v7294
    %v7333 = vsel %vm2702, %v7296, %v7298
    %v7334 = vsel %vm2702, %v7300, %v7302
    %v7335 = vsel %vm2702, %v7304, %v7306
    %v7336 = vsel %vm2702, %v7308, %v7310
    %v7337 = vsel %vm2702, %v7312, %v7314
    %v7338 = vsel %vm2702, %v7316, %v7318
    %v7339 = vsel %vm2702, %v7320, %v7322
    %v7340 = vsel %vm2702, %v7324, %v7326
    %v7341 = vsel %vm2702, %v7328, %v7330
    %v7364 = vadd.f32 %v7122, %v7288
    %v7365 = vadd.f32 %v7123, %v7331
    %v7366 = vadd.f32 %v7124, %v7292
    %v7367 = vadd.f32 %v7125, %v7332
    %v7368 = vadd.f32 %v7126, %v7296
    %v7369 = vadd.f32 %v7127, %v7333
    %v7370 = vadd.f32 %v7128, %v7300
    %v7371 = vadd.f32 %v7129, %v7334
    %v7372 = vadd.f32 %v7130, %v7304
    %v7373 = vadd.f32 %v7131, %v7335
    %v7374 = vadd.f32 %v7132, %v7308
    %v7375 = vadd.f32 %v7133, %v7336
    %v7376 = vadd.f32 %v7134, %v7312
    %v7377 = vadd.f32 %v7135, %v7337
    %v7378 = vadd.f32 %v7136, %v7316
    %v7379 = vadd.f32 %v7137, %v7338
    %v7380 = vadd.f32 %v7138, %v7320
    %v7381 = vadd.f32 %v7139, %v7339
    %v7382 = vadd.f32 %v7140, %v7324
    %v7383 = vadd.f32 %v7141, %v7340
    %v7384 = vadd.f32 %v7142, %v7328
    %v7385 = vadd.f32 %v7143, %v7341
    %v7386 = vld [vmem:[#allocation5] sm:$0xe0]
    %v7387 = vld [vmem:[#allocation5 + $0x8] sm:$0xe0]
    %v7388 = vld [vmem:[#allocation5 + $0x10] sm:$0xff]
    %v7389 = vld [vmem:[#allocation5 + $0x18] sm:$0xff]
    %v7390 = vld [vmem:[#allocation5 + $0x20] sm:$0xff]
    %v7391 = vld [vmem:[#allocation5 + $0x28] sm:$0xff]
    %v7392 = vld [vmem:[#allocation5 + $0x30] sm:$0xff]
    %v7393 = vld [vmem:[#allocation5 + $0x38] sm:$0xff]
    %v7394 = vld [vmem:[#allocation5 + $0x40] sm:$0xff]
    %v7395 = vld [vmem:[#allocation5 + $0x48] sm:$0xff]
    %v7396 = vld [vmem:[#allocation5 + $0x50] sm:$0xff]
    %v7397 = vld [vmem:[#allocation5 + $0x58] sm:$0xff]
    %v7398 = vld [vmem:[#allocation5 + $0x60] sm:$0xff]
    %v7399 = vld [vmem:[#allocation5 + $0x68] sm:$0xff]
    %v7400 = vld [vmem:[#allocation5 + $0x70] sm:$0xff]
    %v7401 = vld [vmem:[#allocation5 + $0x78] sm:$0xff]
    %v7402 = vld [vmem:[#allocation5 + $0x80] sm:$0xff]
    %v7403 = vld [vmem:[#allocation5 + $0x88] sm:$0xff]
    %v7404 = vld [vmem:[#allocation5 + $0x90] sm:$0xff]
    %v7405 = vld [vmem:[#allocation5 + $0x98] sm:$0xff]
    %v7406 = vld [vmem:[#allocation5 + $0xa0] sm:$0x1f]
    %v7407 = vld [vmem:[#allocation5 + $0xa8] sm:$0x1f]
    %v7408 = vmul.f32 %v7386, 0.26601171
    %v7409 = vmul.f32 %v7387, 0.26601171
    %v7410 = vmul.f32 %v7388, 0.26601171
    %v7411 = vmul.f32 %v7389, 0.26601171
    %v7412 = vmul.f32 %v7390, 0.26601171
    %v7413 = vmul.f32 %v7391, 0.26601171
    %v7414 = vmul.f32 %v7392, 0.26601171
    %v7415 = vmul.f32 %v7393, 0.26601171
    %v7416 = vmul.f32 %v7394, 0.26601171
    %v7417 = vmul.f32 %v7395, 0.26601171
    %v7418 = vmul.f32 %v7396, 0.26601171
    %v7419 = vmul.f32 %v7397, 0.26601171
    %v7420 = vmul.f32 %v7398, 0.26601171
    %v7421 = vmul.f32 %v7399, 0.26601171
    %v7422 = vmul.f32 %v7400, 0.26601171
    %v7423 = vmul.f32 %v7401, 0.26601171
    %v7424 = vmul.f32 %v7402, 0.26601171
    %v7425 = vmul.f32 %v7403, 0.26601171
    %v7426 = vmul.f32 %v7404, 0.26601171
    %v7427 = vmul.f32 %v7405, 0.26601171
    %v7428 = vmul.f32 %v7406, 0.26601171
    %v7429 = vmul.f32 %v7407, 0.26601171
    %v7430 = vld [vmem:[#allocation5] sm:$0xff]
    %v7431 = vld [vmem:[#allocation5 + $0x8] sm:$0xff]
    %v7432 = vld [vmem:[#allocation5 + $0x10] sm:$0xfc]
    %v7433 = vld [vmem:[#allocation5 + $0x18] sm:$0xfc]
    %v7434 = vld [vmem:[#allocation5 + $0x20] sm:$0xff]
    %v7435 = vld [vmem:[#allocation5 + $0x28] sm:$0xff]
    %v7436 = vld [vmem:[#allocation5 + $0x30] sm:$0xff]
    %v7437 = vld [vmem:[#allocation5 + $0x38] sm:$0xff]
    %v7438 = vld [vmem:[#allocation5 + $0x40] sm:$0xff]
    %v7439 = vld [vmem:[#allocation5 + $0x48] sm:$0xff]
    %v7440 = vld [vmem:[#allocation5 + $0x50] sm:$0xff]
    %v7441 = vld [vmem:[#allocation5 + $0x58] sm:$0xff]
    %v7442 = vld [vmem:[#allocation5 + $0x60] sm:$0xff]
    %v7443 = vld [vmem:[#allocation5 + $0x68] sm:$0xff]
    %v7444 = vld [vmem:[#allocation5 + $0x70] sm:$0xff]
    %v7445 = vld [vmem:[#allocation5 + $0x78] sm:$0xff]
    %v7446 = vld [vmem:[#allocation5 + $0x80] sm:$0xff]
    %v7447 = vld [vmem:[#allocation5 + $0x88] sm:$0xff]
    %v7448 = vld [vmem:[#allocation5 + $0x90] sm:$0xff]
    %v7449 = vld [vmem:[#allocation5 + $0x98] sm:$0xff]
    %v7450 = vld [vmem:[#allocation5 + $0xa0] sm:$0xff]
    %v7451 = vld [vmem:[#allocation5 + $0xa8] sm:$0xff]
    %v7452 = vld [vmem:[#allocation5 + $0xb0] sm:$0x3]
    %v7453 = vld [vmem:[#allocation5 + $0xb8] sm:$0x3]
    %v7476 = vrot.slane %v7432, 2
    %v7477 = vrot.slane %v7434, 2
    %v7478 = vsel %vm519, %v7476, %v7477
    %v7479 = vrot.slane %v7433, 2
    %v7480 = vrot.slane %v7435, 2
    %v7481 = vsel %vm519, %v7479, %v7480
    %v7482 = vrot.slane %v7436, 2
    %v7483 = vsel %vm519, %v7477, %v7482
    %v7484 = vrot.slane %v7437, 2
    %v7485 = vsel %vm519, %v7480, %v7484
    %v7486 = vrot.slane %v7438, 2
    %v7487 = vsel %vm519, %v7482, %v7486
    %v7488 = vrot.slane %v7439, 2
    %v7489 = vsel %vm519, %v7484, %v7488
    %v7490 = vrot.slane %v7440, 2
    %v7491 = vsel %vm519, %v7486, %v7490
    %v7492 = vrot.slane %v7441, 2
    %v7493 = vsel %vm519, %v7488, %v7492
    %v7494 = vrot.slane %v7442, 2
    %v7495 = vsel %vm519, %v7490, %v7494
    %v7496 = vrot.slane %v7443, 2
    %v7497 = vsel %vm519, %v7492, %v7496
    %v7498 = vrot.slane %v7444, 2
    %v7499 = vsel %vm519, %v7494, %v7498
    %v7500 = vrot.slane %v7445, 2
    %v7501 = vsel %vm519, %v7496, %v7500
    %v7502 = vrot.slane %v7446, 2
    %v7503 = vsel %vm519, %v7498, %v7502
    %v7504 = vrot.slane %v7447, 2
    %v7505 = vsel %vm519, %v7500, %v7504
    %v7506 = vrot.slane %v7448, 2
    %v7507 = vsel %vm519, %v7502, %v7506
    %v7508 = vrot.slane %v7449, 2
    %v7509 = vsel %vm519, %v7504, %v7508
    %v7510 = vrot.slane %v7450, 2
    %v7511 = vsel %vm519, %v7506, %v7510
    %v7512 = vrot.slane %v7451, 2
    %v7513 = vsel %vm519, %v7508, %v7512
    %v7514 = vrot.slane %v7452, 2
    %v7515 = vsel %vm519, %v7510, %v7514
    %v7516 = vrot.slane %v7453, 2
    %v7517 = vsel %vm519, %v7512, %v7516
    %v7538 = vadd.f32 %v7430, %v7478
    %v7539 = vadd.f32 %v7431, %v7481
    %v7540 = vadd.f32 %v7388, %v7483
    %v7541 = vadd.f32 %v7389, %v7485
    %v7542 = vadd.f32 %v7390, %v7487
    %v7543 = vadd.f32 %v7391, %v7489
    %v7544 = vadd.f32 %v7392, %v7491
    %v7545 = vadd.f32 %v7393, %v7493
    %v7546 = vadd.f32 %v7394, %v7495
    %v7547 = vadd.f32 %v7395, %v7497
    %v7548 = vadd.f32 %v7396, %v7499
    %v7549 = vadd.f32 %v7397, %v7501
    %v7550 = vadd.f32 %v7398, %v7503
    %v7551 = vadd.f32 %v7399, %v7505
    %v7552 = vadd.f32 %v7400, %v7507
    %v7553 = vadd.f32 %v7401, %v7509
    %v7554 = vadd.f32 %v7402, %v7511
    %v7555 = vadd.f32 %v7403, %v7513
    %v7556 = vadd.f32 %v7404, %v7515
    %v7557 = vadd.f32 %v7405, %v7517
    %v7558 = vmul.f32 %v7538, 0.0010283801
    %v7559 = vmul.f32 %v7539, 0.0010283801
    %v7560 = vmul.f32 %v7540, 0.0010283801
    %v7561 = vmul.f32 %v7541, 0.0010283801
    %v7562 = vmul.f32 %v7542, 0.0010283801
    %v7563 = vmul.f32 %v7543, 0.0010283801
    %v7564 = vmul.f32 %v7544, 0.0010283801
    %v7565 = vmul.f32 %v7545, 0.0010283801
    %v7566 = vmul.f32 %v7546, 0.0010283801
    %v7567 = vmul.f32 %v7547, 0.0010283801
    %v7568 = vmul.f32 %v7548, 0.0010283801
    %v7569 = vmul.f32 %v7549, 0.0010283801
    %v7570 = vmul.f32 %v7550, 0.0010283801
    %v7571 = vmul.f32 %v7551, 0.0010283801
    %v7572 = vmul.f32 %v7552, 0.0010283801
    %v7573 = vmul.f32 %v7553, 0.0010283801
    %v7574 = vmul.f32 %v7554, 0.0010283801
    %v7575 = vmul.f32 %v7555, 0.0010283801
    %v7576 = vmul.f32 %v7556, 0.0010283801
    %v7577 = vmul.f32 %v7557, 0.0010283801
    %v7598 = vrot.slane %v7558, 3
    %v7599 = vrot.slane %v7559, 3
    %v7600 = vrot.slane %v7560, 3
    %v7601 = vsel %vm642, %v7598, %v7600
    %v7602 = vrot.slane %v7561, 3
    %v7603 = vsel %vm642, %v7599, %v7602
    %v7604 = vrot.slane %v7562, 3
    %v7605 = vsel %vm642, %v7600, %v7604
    %v7606 = vrot.slane %v7563, 3
    %v7607 = vsel %vm642, %v7602, %v7606
    %v7608 = vrot.slane %v7564, 3
    %v7609 = vsel %vm642, %v7604, %v7608
    %v7610 = vrot.slane %v7565, 3
    %v7611 = vsel %vm642, %v7606, %v7610
    %v7612 = vrot.slane %v7566, 3
    %v7613 = vsel %vm642, %v7608, %v7612
    %v7614 = vrot.slane %v7567, 3
    %v7615 = vsel %vm642, %v7610, %v7614
    %v7616 = vrot.slane %v7568, 3
    %v7617 = vsel %vm642, %v7612, %v7616
    %v7618 = vrot.slane %v7569, 3
    %v7619 = vsel %vm642, %v7614, %v7618
    %v7620 = vrot.slane %v7570, 3
    %v7621 = vsel %vm642, %v7616, %v7620
    %v7622 = vrot.slane %v7571, 3
    %v7623 = vsel %vm642, %v7618, %v7622
    %v7624 = vrot.slane %v7572, 3
    %v7625 = vsel %vm642, %v7620, %v7624
    %v7626 = vrot.slane %v7573, 3
    %v7627 = vsel %vm642, %v7622, %v7626
    %v7628 = vrot.slane %v7574, 3
    %v7629 = vsel %vm642, %v7624, %v7628
    %v7630 = vrot.slane %v7575, 3
    %v7631 = vsel %vm642, %v7626, %v7630
    %v7632 = vrot.slane %v7576, 3
    %v7633 = vsel %vm642, %v7628, %v7632
    %v7634 = vrot.slane %v7577, 3
    %v7635 = vsel %vm642, %v7630, %v7634
    %v7658 = vadd.f32 %v7408, %v7598
    %v7659 = vadd.f32 %v7409, %v7599
    %v7660 = vadd.f32 %v7410, %v7601
    %v7661 = vadd.f32 %v7411, %v7603
    %v7662 = vadd.f32 %v7412, %v7605
    %v7663 = vadd.f32 %v7413, %v7607
    %v7664 = vadd.f32 %v7414, %v7609
    %v7665 = vadd.f32 %v7415, %v7611
    %v7666 = vadd.f32 %v7416, %v7613
    %v7667 = vadd.f32 %v7417, %v7615
    %v7668 = vadd.f32 %v7418, %v7617
    %v7669 = vadd.f32 %v7419, %v7619
    %v7670 = vadd.f32 %v7420, %v7621
    %v7671 = vadd.f32 %v7421, %v7623
    %v7672 = vadd.f32 %v7422, %v7625
    %v7673 = vadd.f32 %v7423, %v7627
    %v7674 = vadd.f32 %v7424, %v7629
    %v7675 = vadd.f32 %v7425, %v7631
    %v7676 = vadd.f32 %v7426, %v7633
    %v7677 = vadd.f32 %v7427, %v7635
    %v7678 = vadd.f32 %v7428, %v7632
    %v7679 = vadd.f32 %v7429, %v7634
    %v7680 = vld [vmem:[#allocation5] sm:$0xfe]
    %v7681 = vld [vmem:[#allocation5 + $0x8] sm:$0xfe]
    %v7682 = vld [vmem:[#allocation5 + $0xa0] sm:$0x1]
    %v7683 = vld [vmem:[#allocation5 + $0xa8] sm:$0x1]
    %v7684 = vld [vmem:[#allocation5 + $0x10] sm:$0xfe]
    %v7685 = vld [vmem:[#allocation5 + $0x18] sm:$0xfe]
    %v7686 = vld [vmem:[#allocation5 + $0xb0] sm:$0x1]
    %v7687 = vld [vmem:[#allocation5 + $0xb8] sm:$0x1]
    %v7688 = vadd.f32 %v7680, %v7684
    %v7689 = vadd.f32 %v7681, %v7685
    %v7690 = vadd.f32 %v7388, %v7434
    %v7691 = vadd.f32 %v7389, %v7435
    %v7692 = vadd.f32 %v7390, %v7436
    %v7693 = vadd.f32 %v7391, %v7437
    %v7694 = vadd.f32 %v7392, %v7438
    %v7695 = vadd.f32 %v7393, %v7439
    %v7696 = vadd.f32 %v7394, %v7440
    %v7697 = vadd.f32 %v7395, %v7441
    %v7698 = vadd.f32 %v7396, %v7442
    %v7699 = vadd.f32 %v7397, %v7443
    %v7700 = vadd.f32 %v7398, %v7444
    %v7701 = vadd.f32 %v7399, %v7445
    %v7702 = vadd.f32 %v7400, %v7446
    %v7703 = vadd.f32 %v7401, %v7447
    %v7704 = vadd.f32 %v7402, %v7448
    %v7705 = vadd.f32 %v7403, %v7449
    %v7706 = vadd.f32 %v7404, %v7450
    %v7707 = vadd.f32 %v7405, %v7451
    %v7708 = vadd.f32 %v7682, %v7686
    %v7709 = vadd.f32 %v7683, %v7687
    %v7710 = vmul.f32 %v7688, 0.007598758
    %v7711 = vmul.f32 %v7689, 0.007598758
    %v7712 = vmul.f32 %v7690, 0.007598758
    %v7713 = vmul.f32 %v7691, 0.007598758
    %v7714 = vmul.f32 %v7692, 0.007598758
    %v7715 = vmul.f32 %v7693, 0.007598758
    %v7716 = vmul.f32 %v7694, 0.007598758
    %v7717 = vmul.f32 %v7695, 0.007598758
    %v7718 = vmul.f32 %v7696, 0.007598758
    %v7719 = vmul.f32 %v7697, 0.007598758
    %v7720 = vmul.f32 %v7698, 0.007598758
    %v7721 = vmul.f32 %v7699, 0.007598758
    %v7722 = vmul.f32 %v7700, 0.007598758
    %v7723 = vmul.f32 %v7701, 0.007598758
    %v7724 = vmul.f32 %v7702, 0.007598758
    %v7725 = vmul.f32 %v7703, 0.007598758
    %v7726 = vmul.f32 %v7704, 0.007598758
    %v7727 = vmul.f32 %v7705, 0.007598758
    %v7728 = vmul.f32 %v7706, 0.007598758
    %v7729 = vmul.f32 %v7707, 0.007598758
    %v7730 = vmul.f32 %v7708, 0.007598758
    %v7731 = vmul.f32 %v7709, 0.007598758
    %v7754 = vrot.slane %v7710, 4
    %v7755 = vrot.slane %v7711, 4
    %v7756 = vrot.slane %v7712, 4
    %v7757 = vsel %vm799, %v7754, %v7756
    %v7758 = vrot.slane %v7713, 4
    %v7759 = vsel %vm799, %v7755, %v7758
    %v7760 = vrot.slane %v7714, 4
    %v7761 = vsel %vm799, %v7756, %v7760
    %v7762 = vrot.slane %v7715, 4
    %v7763 = vsel %vm799, %v7758, %v7762
    %v7764 = vrot.slane %v7716, 4
    %v7765 = vsel %vm799, %v7760, %v7764
    %v7766 = vrot.slane %v7717, 4
    %v7767 = vsel %vm799, %v7762, %v7766
    %v7768 = vrot.slane %v7718, 4
    %v7769 = vsel %vm799, %v7764, %v7768
    %v7770 = vrot.slane %v7719, 4
    %v7771 = vsel %vm799, %v7766, %v7770
    %v7772 = vrot.slane %v7720, 4
    %v7773 = vsel %vm799, %v7768, %v7772
    %v7774 = vrot.slane %v7721, 4
    %v7775 = vsel %vm799, %v7770, %v7774
    %v7776 = vrot.slane %v7722, 4
    %v7777 = vsel %vm799, %v7772, %v7776
    %v7778 = vrot.slane %v7723, 4
    %v7779 = vsel %vm799, %v7774, %v7778
    %v7780 = vrot.slane %v7724, 4
    %v7781 = vsel %vm799, %v7776, %v7780
    %v7782 = vrot.slane %v7725, 4
    %v7783 = vsel %vm799, %v7778, %v7782
    %v7784 = vrot.slane %v7726, 4
    %v7785 = vsel %vm799, %v7780, %v7784
    %v7786 = vrot.slane %v7727, 4
    %v7787 = vsel %vm799, %v7782, %v7786
    %v7788 = vrot.slane %v7728, 4
    %v7789 = vsel %vm799, %v7784, %v7788
    %v7790 = vrot.slane %v7729, 4
    %v7791 = vsel %vm799, %v7786, %v7790
    %v7792 = vrot.slane %v7730, 4
    %v7793 = vsel %vm799, %v7788, %v7792
    %v7794 = vrot.slane %v7731, 4
    %v7795 = vsel %vm799, %v7790, %v7794
    %v7818 = vadd.f32 %v7658, %v7754
    %v7819 = vadd.f32 %v7659, %v7755
    %v7820 = vadd.f32 %v7660, %v7757
    %v7821 = vadd.f32 %v7661, %v7759
    %v7822 = vadd.f32 %v7662, %v7761
    %v7823 = vadd.f32 %v7663, %v7763
    %v7824 = vadd.f32 %v7664, %v7765
    %v7825 = vadd.f32 %v7665, %v7767
    %v7826 = vadd.f32 %v7666, %v7769
    %v7827 = vadd.f32 %v7667, %v7771
    %v7828 = vadd.f32 %v7668, %v7773
    %v7829 = vadd.f32 %v7669, %v7775
    %v7830 = vadd.f32 %v7670, %v7777
    %v7831 = vadd.f32 %v7671, %v7779
    %v7832 = vadd.f32 %v7672, %v7781
    %v7833 = vadd.f32 %v7673, %v7783
    %v7834 = vadd.f32 %v7674, %v7785
    %v7835 = vadd.f32 %v7675, %v7787
    %v7836 = vadd.f32 %v7676, %v7789
    %v7837 = vadd.f32 %v7677, %v7791
    %v7838 = vadd.f32 %v7678, %v7793
    %v7839 = vadd.f32 %v7679, %v7795
    %v7840 = vld [vmem:[#allocation5] sm:$0xfc]
    %v7841 = vld [vmem:[#allocation5 + $0x8] sm:$0xfc]
    %v7842 = vld [vmem:[#allocation5 + $0xa0] sm:$0x3]
    %v7843 = vld [vmem:[#allocation5 + $0xa8] sm:$0x3]
    %v7844 = vld [vmem:[#allocation5 + $0xa0] sm:$0xff]
    %v7845 = vld [vmem:[#allocation5 + $0xa8] sm:$0xff]
    %v7866 = vrot.slane %v7388, 6
    %v7867 = vrot.slane %v7389, 6
    %v7868 = vrot.slane %v7390, 6
    %v7869 = vsel %vm912, %v7866, %v7868
    %v7870 = vrot.slane %v7391, 6
    %v7871 = vsel %vm912, %v7867, %v7870
    %v7872 = vrot.slane %v7392, 6
    %v7873 = vsel %vm912, %v7868, %v7872
    %v7874 = vrot.slane %v7393, 6
    %v7875 = vsel %vm912, %v7870, %v7874
    %v7876 = vrot.slane %v7394, 6
    %v7877 = vsel %vm912, %v7872, %v7876
    %v7878 = vrot.slane %v7395, 6
    %v7879 = vsel %vm912, %v7874, %v7878
    %v7880 = vrot.slane %v7396, 6
    %v7881 = vsel %vm912, %v7876, %v7880
    %v7882 = vrot.slane %v7397, 6
    %v7883 = vsel %vm912, %v7878, %v7882
    %v7884 = vrot.slane %v7398, 6
    %v7885 = vsel %vm912, %v7880, %v7884
    %v7886 = vrot.slane %v7399, 6
    %v7887 = vsel %vm912, %v7882, %v7886
    %v7888 = vrot.slane %v7400, 6
    %v7889 = vsel %vm912, %v7884, %v7888
    %v7890 = vrot.slane %v7401, 6
    %v7891 = vsel %vm912, %v7886, %v7890
    %v7892 = vrot.slane %v7402, 6
    %v7893 = vsel %vm912, %v7888, %v7892
    %v7894 = vrot.slane %v7403, 6
    %v7895 = vsel %vm912, %v7890, %v7894
    %v7896 = vrot.slane %v7404, 6
    %v7897 = vsel %vm912, %v7892, %v7896
    %v7898 = vrot.slane %v7405, 6
    %v7899 = vsel %vm912, %v7894, %v7898
    %v7900 = vrot.slane %v7844, 6
    %v7901 = vsel %vm912, %v7896, %v7900
    %v7902 = vrot.slane %v7845, 6
    %v7903 = vsel %vm912, %v7898, %v7902
    %v7926 = vadd.f32 %v7840, %v7866
    %v7927 = vadd.f32 %v7841, %v7867
    %v7928 = vadd.f32 %v7388, %v7869
    %v7929 = vadd.f32 %v7389, %v7871
    %v7930 = vadd.f32 %v7390, %v7873
    %v7931 = vadd.f32 %v7391, %v7875
    %v7932 = vadd.f32 %v7392, %v7877
    %v7933 = vadd.f32 %v7393, %v7879
    %v7934 = vadd.f32 %v7394, %v7881
    %v7935 = vadd.f32 %v7395, %v7883
    %v7936 = vadd.f32 %v7396, %v7885
    %v7937 = vadd.f32 %v7397, %v7887
    %v7938 = vadd.f32 %v7398, %v7889
    %v7939 = vadd.f32 %v7399, %v7891
    %v7940 = vadd.f32 %v7400, %v7893
    %v7941 = vadd.f32 %v7401, %v7895
    %v7942 = vadd.f32 %v7402, %v7897
    %v7943 = vadd.f32 %v7403, %v7899
    %v7944 = vadd.f32 %v7404, %v7901
    %v7945 = vadd.f32 %v7405, %v7903
    %v7946 = vadd.f32 %v7842, %v7900
    %v7947 = vadd.f32 %v7843, %v7902
    %v7948 = vmul.f32 %v7926, 0.036000773
    %v7949 = vmul.f32 %v7927, 0.036000773
    %v7950 = vmul.f32 %v7928, 0.036000773
    %v7951 = vmul.f32 %v7929, 0.036000773
    %v7952 = vmul.f32 %v7930, 0.036000773
    %v7953 = vmul.f32 %v7931, 0.036000773
    %v7954 = vmul.f32 %v7932, 0.036000773
    %v7955 = vmul.f32 %v7933, 0.036000773
    %v7956 = vmul.f32 %v7934, 0.036000773
    %v7957 = vmul.f32 %v7935, 0.036000773
    %v7958 = vmul.f32 %v7936, 0.036000773
    %v7959 = vmul.f32 %v7937, 0.036000773
    %v7960 = vmul.f32 %v7938, 0.036000773
    %v7961 = vmul.f32 %v7939, 0.036000773
    %v7962 = vmul.f32 %v7940, 0.036000773
    %v7963 = vmul.f32 %v7941, 0.036000773
    %v7964 = vmul.f32 %v7942, 0.036000773
    %v7965 = vmul.f32 %v7943, 0.036000773
    %v7966 = vmul.f32 %v7944, 0.036000773
    %v7967 = vmul.f32 %v7945, 0.036000773
    %v7968 = vmul.f32 %v7946, 0.036000773
    %v7969 = vmul.f32 %v7947, 0.036000773
    %v7992 = vrot.slane %v7948, 5
    %v7993 = vrot.slane %v7949, 5
    %v7994 = vrot.slane %v7950, 5
    %v7995 = vsel %vm1039, %v7992, %v7994
    %v7996 = vrot.slane %v7951, 5
    %v7997 = vsel %vm1039, %v7993, %v7996
    %v7998 = vrot.slane %v7952, 5
    %v7999 = vsel %vm1039, %v7994, %v7998
    %v8000 = vrot.slane %v7953, 5
    %v8001 = vsel %vm1039, %v7996, %v8000
    %v8002 = vrot.slane %v7954, 5
    %v8003 = vsel %vm1039, %v7998, %v8002
    %v8004 = vrot.slane %v7955, 5
    %v8005 = vsel %vm1039, %v8000, %v8004
    %v8006 = vrot.slane %v7956, 5
    %v8007 = vsel %vm1039, %v8002, %v8006
    %v8008 = vrot.slane %v7957, 5
    %v8009 = vsel %vm1039, %v8004, %v8008
    %v8010 = vrot.slane %v7958, 5
    %v8011 = vsel %vm1039, %v8006, %v8010
    %v8012 = vrot.slane %v7959, 5
    %v8013 = vsel %vm1039, %v8008, %v8012
    %v8014 = vrot.slane %v7960, 5
    %v8015 = vsel %vm1039, %v8010, %v8014
    %v8016 = vrot.slane %v7961, 5
    %v8017 = vsel %vm1039, %v8012, %v8016
    %v8018 = vrot.slane %v7962, 5
    %v8019 = vsel %vm1039, %v8014, %v8018
    %v8020 = vrot.slane %v7963, 5
    %v8021 = vsel %vm1039, %v8016, %v8020
    %v8022 = vrot.slane %v7964, 5
    %v8023 = vsel %vm1039, %v8018, %v8022
    %v8024 = vrot.slane %v7965, 5
    %v8025 = vsel %vm1039, %v8020, %v8024
    %v8026 = vrot.slane %v7966, 5
    %v8027 = vsel %vm1039, %v8022, %v8026
    %v8028 = vrot.slane %v7967, 5
    %v8029 = vsel %vm1039, %v8024, %v8028
    %v8030 = vrot.slane %v7968, 5
    %v8031 = vsel %vm1039, %v8026, %v8030
    %v8032 = vrot.slane %v7969, 5
    %v8033 = vsel %vm1039, %v8028, %v8032
    %v8056 = vadd.f32 %v7818, %v7992
    %v8057 = vadd.f32 %v7819, %v7993
    %v8058 = vadd.f32 %v7820, %v7995
    %v8059 = vadd.f32 %v7821, %v7997
    %v8060 = vadd.f32 %v7822, %v7999
    %v8061 = vadd.f32 %v7823, %v8001
    %v8062 = vadd.f32 %v7824, %v8003
    %v8063 = vadd.f32 %v7825, %v8005
    %v8064 = vadd.f32 %v7826, %v8007
    %v8065 = vadd.f32 %v7827, %v8009
    %v8066 = vadd.f32 %v7828, %v8011
    %v8067 = vadd.f32 %v7829, %v8013
    %v8068 = vadd.f32 %v7830, %v8015
    %v8069 = vadd.f32 %v7831, %v8017
    %v8070 = vadd.f32 %v7832, %v8019
    %v8071 = vadd.f32 %v7833, %v8021
    %v8072 = vadd.f32 %v7834, %v8023
    %v8073 = vadd.f32 %v7835, %v8025
    %v8074 = vadd.f32 %v7836, %v8027
    %v8075 = vadd.f32 %v7837, %v8029
    %v8076 = vadd.f32 %v7838, %v8031
    %v8077 = vadd.f32 %v7839, %v8033
    %v8078 = vld [vmem:[#allocation5] sm:$0xf8]
    %v8079 = vld [vmem:[#allocation5 + $0x8] sm:$0xf8]
    %v8080 = vld [vmem:[#allocation5 + $0xa0] sm:$0x7]
    %v8081 = vld [vmem:[#allocation5 + $0xa8] sm:$0x7]
    %v8082 = vld [vmem:[#allocation5] sm:$0x80]
    %v8083 = vld [vmem:[#allocation5 + $0x8] sm:$0x80]
    %v8084 = vld [vmem:[#allocation5 + $0xa0] sm:$0x7f]
    %v8085 = vld [vmem:[#allocation5 + $0xa8] sm:$0x7f]
    %v8090 = vrot.slane %v8082, 4
    %v8091 = vrot.slane %v7388, 4
    %v8092 = vsel %vm799, %v8090, %v8091
    %v8093 = vrot.slane %v8083, 4
    %v8094 = vrot.slane %v7389, 4
    %v8095 = vsel %vm799, %v8093, %v8094
    %v8096 = vrot.slane %v7390, 4
    %v8097 = vsel %vm799, %v8091, %v8096
    %v8098 = vrot.slane %v7391, 4
    %v8099 = vsel %vm799, %v8094, %v8098
    %v8100 = vrot.slane %v7392, 4
    %v8101 = vsel %vm799, %v8096, %v8100
    %v8102 = vrot.slane %v7393, 4
    %v8103 = vsel %vm799, %v8098, %v8102
    %v8104 = vrot.slane %v7394, 4
    %v8105 = vsel %vm799, %v8100, %v8104
    %v8106 = vrot.slane %v7395, 4
    %v8107 = vsel %vm799, %v8102, %v8106
    %v8108 = vrot.slane %v7396, 4
    %v8109 = vsel %vm799, %v8104, %v8108
    %v8110 = vrot.slane %v7397, 4
    %v8111 = vsel %vm799, %v8106, %v8110
    %v8112 = vrot.slane %v7398, 4
    %v8113 = vsel %vm799, %v8108, %v8112
    %v8114 = vrot.slane %v7399, 4
    %v8115 = vsel %vm799, %v8110, %v8114
    %v8116 = vrot.slane %v7400, 4
    %v8117 = vsel %vm799, %v8112, %v8116
    %v8118 = vrot.slane %v7401, 4
    %v8119 = vsel %vm799, %v8114, %v8118
    %v8120 = vrot.slane %v7402, 4
    %v8121 = vsel %vm799, %v8116, %v8120
    %v8122 = vrot.slane %v7403, 4
    %v8123 = vsel %vm799, %v8118, %v8122
    %v8124 = vrot.slane %v7404, 4
    %v8125 = vsel %vm799, %v8120, %v8124
    %v8126 = vrot.slane %v7405, 4
    %v8127 = vsel %vm799, %v8122, %v8126
    %v8128 = vrot.slane %v8084, 4
    %v8129 = vsel %vm799, %v8124, %v8128
    %v8130 = vrot.slane %v8085, 4
    %v8131 = vsel %vm799, %v8126, %v8130
    %v8154 = vadd.f32 %v8078, %v8092
    %v8155 = vadd.f32 %v8079, %v8095
    %v8156 = vadd.f32 %v7388, %v8097
    %v8157 = vadd.f32 %v7389, %v8099
    %v8158 = vadd.f32 %v7390, %v8101
    %v8159 = vadd.f32 %v7391, %v8103
    %v8160 = vadd.f32 %v7392, %v8105
    %v8161 = vadd.f32 %v7393, %v8107
    %v8162 = vadd.f32 %v7394, %v8109
    %v8163 = vadd.f32 %v7395, %v8111
    %v8164 = vadd.f32 %v7396, %v8113
    %v8165 = vadd.f32 %v7397, %v8115
    %v8166 = vadd.f32 %v7398, %v8117
    %v8167 = vadd.f32 %v7399, %v8119
    %v8168 = vadd.f32 %v7400, %v8121
    %v8169 = vadd.f32 %v7401, %v8123
    %v8170 = vadd.f32 %v7402, %v8125
    %v8171 = vadd.f32 %v7403, %v8127
    %v8172 = vadd.f32 %v7404, %v8129
    %v8173 = vadd.f32 %v7405, %v8131
    %v8174 = vadd.f32 %v8080, %v8128
    %v8175 = vadd.f32 %v8081, %v8130
    %v8176 = vmul.f32 %v8154, 0.10936069
    %v8177 = vmul.f32 %v8155, 0.10936069
    %v8178 = vmul.f32 %v8156, 0.10936069
    %v8179 = vmul.f32 %v8157, 0.10936069
    %v8180 = vmul.f32 %v8158, 0.10936069
    %v8181 = vmul.f32 %v8159, 0.10936069
    %v8182 = vmul.f32 %v8160, 0.10936069
    %v8183 = vmul.f32 %v8161, 0.10936069
    %v8184 = vmul.f32 %v8162, 0.10936069
    %v8185 = vmul.f32 %v8163, 0.10936069
    %v8186 = vmul.f32 %v8164, 0.10936069
    %v8187 = vmul.f32 %v8165, 0.10936069
    %v8188 = vmul.f32 %v8166, 0.10936069
    %v8189 = vmul.f32 %v8167, 0.10936069
    %v8190 = vmul.f32 %v8168, 0.10936069
    %v8191 = vmul.f32 %v8169, 0.10936069
    %v8192 = vmul.f32 %v8170, 0.10936069
    %v8193 = vmul.f32 %v8171, 0.10936069
    %v8194 = vmul.f32 %v8172, 0.10936069
    %v8195 = vmul.f32 %v8173, 0.10936069
    %v8196 = vmul.f32 %v8174, 0.10936069
    %v8197 = vmul.f32 %v8175, 0.10936069
    %v8220 = vrot.slane %v8176, 6
    %v8221 = vrot.slane %v8177, 6
    %v8222 = vrot.slane %v8178, 6
    %v8223 = vsel %vm912, %v8220, %v8222
    %v8224 = vrot.slane %v8179, 6
    %v8225 = vsel %vm912, %v8221, %v8224
    %v8226 = vrot.slane %v8180, 6
    %v8227 = vsel %vm912, %v8222, %v8226
    %v8228 = vrot.slane %v8181, 6
    %v8229 = vsel %vm912, %v8224, %v8228
    %v8230 = vrot.slane %v8182, 6
    %v8231 = vsel %vm912, %v8226, %v8230
    %v8232 = vrot.slane %v8183, 6
    %v8233 = vsel %vm912, %v8228, %v8232
    %v8234 = vrot.slane %v8184, 6
    %v8235 = vsel %vm912, %v8230, %v8234
    %v8236 = vrot.slane %v8185, 6
    %v8237 = vsel %vm912, %v8232, %v8236
    %v8238 = vrot.slane %v8186, 6
    %v8239 = vsel %vm912, %v8234, %v8238
    %v8240 = vrot.slane %v8187, 6
    %v8241 = vsel %vm912, %v8236, %v8240
    %v8242 = vrot.slane %v8188, 6
    %v8243 = vsel %vm912, %v8238, %v8242
    %v8244 = vrot.slane %v8189, 6
    %v8245 = vsel %vm912, %v8240, %v8244
    %v8246 = vrot.slane %v8190, 6
    %v8247 = vsel %vm912, %v8242, %v8246
    %v8248 = vrot.slane %v8191, 6
    %v8249 = vsel %vm912, %v8244, %v8248
    %v8250 = vrot.slane %v8192, 6
    %v8251 = vsel %vm912, %v8246, %v8250
    %v8252 = vrot.slane %v8193, 6
    %v8253 = vsel %vm912, %v8248, %v8252
    %v8254 = vrot.slane %v8194, 6
    %v8255 = vsel %vm912, %v8250, %v8254
    %v8256 = vrot.slane %v8195, 6
    %v8257 = vsel %vm912, %v8252, %v8256
    %v8258 = vrot.slane %v8196, 6
    %v8259 = vsel %vm912, %v8254, %v8258
    %v8260 = vrot.slane %v8197, 6
    %v8261 = vsel %vm912, %v8256, %v8260
    %v8284 = vadd.f32 %v8056, %v8220
    %v8285 = vadd.f32 %v8057, %v8221
    %v8286 = vadd.f32 %v8058, %v8223
    %v8287 = vadd.f32 %v8059, %v8225
    %v8288 = vadd.f32 %v8060, %v8227
    %v8289 = vadd.f32 %v8061, %v8229
    %v8290 = vadd.f32 %v8062, %v8231
    %v8291 = vadd.f32 %v8063, %v8233
    %v8292 = vadd.f32 %v8064, %v8235
    %v8293 = vadd.f32 %v8065, %v8237
    %v8294 = vadd.f32 %v8066, %v8239
    %v8295 = vadd.f32 %v8067, %v8241
    %v8296 = vadd.f32 %v8068, %v8243
    %v8297 = vadd.f32 %v8069, %v8245
    %v8298 = vadd.f32 %v8070, %v8247
    %v8299 = vadd.f32 %v8071, %v8249
    %v8300 = vadd.f32 %v8072, %v8251
    %v8301 = vadd.f32 %v8073, %v8253
    %v8302 = vadd.f32 %v8074, %v8255
    %v8303 = vadd.f32 %v8075, %v8257
    %v8304 = vadd.f32 %v8076, %v8259
    %v8305 = vadd.f32 %v8077, %v8261
    %v8306 = vld [vmem:[#allocation5] sm:$0xf0]
    %v8307 = vld [vmem:[#allocation5 + $0x8] sm:$0xf0]
    %v8308 = vld [vmem:[#allocation5 + $0xa0] sm:$0xf]
    %v8309 = vld [vmem:[#allocation5 + $0xa8] sm:$0xf]
    %v8310 = vld [vmem:[#allocation5] sm:$0xc0]
    %v8311 = vld [vmem:[#allocation5 + $0x8] sm:$0xc0]
    %v8312 = vld [vmem:[#allocation5 + $0xa0] sm:$0x3f]
    %v8313 = vld [vmem:[#allocation5 + $0xa8] sm:$0x3f]
    %v8318 = vrot.slane %v8310, 2
    %v8319 = vrot.slane %v7388, 2
    %v8320 = vsel %vm519, %v8318, %v8319
    %v8321 = vrot.slane %v8311, 2
    %v8322 = vrot.slane %v7389, 2
    %v8323 = vsel %vm519, %v8321, %v8322
    %v8324 = vrot.slane %v7390, 2
    %v8325 = vsel %vm519, %v8319, %v8324
    %v8326 = vrot.slane %v7391, 2
    %v8327 = vsel %vm519, %v8322, %v8326
    %v8328 = vrot.slane %v7392, 2
    %v8329 = vsel %vm519, %v8324, %v8328
    %v8330 = vrot.slane %v7393, 2
    %v8331 = vsel %vm519, %v8326, %v8330
    %v8332 = vrot.slane %v7394, 2
    %v8333 = vsel %vm519, %v8328, %v8332
    %v8334 = vrot.slane %v7395, 2
    %v8335 = vsel %vm519, %v8330, %v8334
    %v8336 = vrot.slane %v7396, 2
    %v8337 = vsel %vm519, %v8332, %v8336
    %v8338 = vrot.slane %v7397, 2
    %v8339 = vsel %vm519, %v8334, %v8338
    %v8340 = vrot.slane %v7398, 2
    %v8341 = vsel %vm519, %v8336, %v8340
    %v8342 = vrot.slane %v7399, 2
    %v8343 = vsel %vm519, %v8338, %v8342
    %v8344 = vrot.slane %v7400, 2
    %v8345 = vsel %vm519, %v8340, %v8344
    %v8346 = vrot.slane %v7401, 2
    %v8347 = vsel %vm519, %v8342, %v8346
    %v8348 = vrot.slane %v7402, 2
    %v8349 = vsel %vm519, %v8344, %v8348
    %v8350 = vrot.slane %v7403, 2
    %v8351 = vsel %vm519, %v8346, %v8350
    %v8352 = vrot.slane %v7404, 2
    %v8353 = vsel %vm519, %v8348, %v8352
    %v8354 = vrot.slane %v7405, 2
    %v8355 = vsel %vm519, %v8350, %v8354
    %v8356 = vrot.slane %v8312, 2
    %v8357 = vsel %vm519, %v8352, %v8356
    %v8358 = vrot.slane %v8313, 2
    %v8359 = vsel %vm519, %v8354, %v8358
    %v8382 = vadd.f32 %v8306, %v8320
    %v8383 = vadd.f32 %v8307, %v8323
    %v8384 = vadd.f32 %v7388, %v8325
    %v8385 = vadd.f32 %v7389, %v8327
    %v8386 = vadd.f32 %v7390, %v8329
    %v8387 = vadd.f32 %v7391, %v8331
    %v8388 = vadd.f32 %v7392, %v8333
    %v8389 = vadd.f32 %v7393, %v8335
    %v8390 = vadd.f32 %v7394, %v8337
    %v8391 = vadd.f32 %v7395, %v8339
    %v8392 = vadd.f32 %v7396, %v8341
    %v8393 = vadd.f32 %v7397, %v8343
    %v8394 = vadd.f32 %v7398, %v8345
    %v8395 = vadd.f32 %v7399, %v8347
    %v8396 = vadd.f32 %v7400, %v8349
    %v8397 = vadd.f32 %v7401, %v8351
    %v8398 = vadd.f32 %v7402, %v8353
    %v8399 = vadd.f32 %v7403, %v8355
    %v8400 = vadd.f32 %v7404, %v8357
    %v8401 = vadd.f32 %v7405, %v8359
    %v8402 = vadd.f32 %v8308, %v8356
    %v8403 = vadd.f32 %v8309, %v8358
    %v8404 = vmul.f32 %v8382, 0.21300554
    %v8405 = vmul.f32 %v8383, 0.21300554
    %v8406 = vmul.f32 %v8384, 0.21300554
    %v8407 = vmul.f32 %v8385, 0.21300554
    %v8408 = vmul.f32 %v8386, 0.21300554
    %v8409 = vmul.f32 %v8387, 0.21300554
    %v8410 = vmul.f32 %v8388, 0.21300554
    %v8411 = vmul.f32 %v8389, 0.21300554
    %v8412 = vmul.f32 %v8390, 0.21300554
    %v8413 = vmul.f32 %v8391, 0.21300554
    %v8414 = vmul.f32 %v8392, 0.21300554
    %v8415 = vmul.f32 %v8393, 0.21300554
    %v8416 = vmul.f32 %v8394, 0.21300554
    %v8417 = vmul.f32 %v8395, 0.21300554
    %v8418 = vmul.f32 %v8396, 0.21300554
    %v8419 = vmul.f32 %v8397, 0.21300554
    %v8420 = vmul.f32 %v8398, 0.21300554
    %v8421 = vmul.f32 %v8399, 0.21300554
    %v8422 = vmul.f32 %v8400, 0.21300554
    %v8423 = vmul.f32 %v8401, 0.21300554
    %v8424 = vmul.f32 %v8402, 0.21300554
    %v8425 = vmul.f32 %v8403, 0.21300554
    %v8448 = vrot.slane %v8404, 7
    %v8449 = vrot.slane %v8405, 7
    %v8450 = vrot.slane %v8406, 7
    %v8451 = vsel %vm1496, %v8448, %v8450
    %v8452 = vrot.slane %v8407, 7
    %v8453 = vsel %vm1496, %v8449, %v8452
    %v8454 = vrot.slane %v8408, 7
    %v8455 = vsel %vm1496, %v8450, %v8454
    %v8456 = vrot.slane %v8409, 7
    %v8457 = vsel %vm1496, %v8452, %v8456
    %v8458 = vrot.slane %v8410, 7
    %v8459 = vsel %vm1496, %v8454, %v8458
    %v8460 = vrot.slane %v8411, 7
    %v8461 = vsel %vm1496, %v8456, %v8460
    %v8462 = vrot.slane %v8412, 7
    %v8463 = vsel %vm1496, %v8458, %v8462
    %v8464 = vrot.slane %v8413, 7
    %v8465 = vsel %vm1496, %v8460, %v8464
    %v8466 = vrot.slane %v8414, 7
    %v8467 = vsel %vm1496, %v8462, %v8466
    %v8468 = vrot.slane %v8415, 7
    %v8469 = vsel %vm1496, %v8464, %v8468
    %v8470 = vrot.slane %v8416, 7
    %v8471 = vsel %vm1496, %v8466, %v8470
    %v8472 = vrot.slane %v8417, 7
    %v8473 = vsel %vm1496, %v8468, %v8472
    %v8474 = vrot.slane %v8418, 7
    %v8475 = vsel %vm1496, %v8470, %v8474
    %v8476 = vrot.slane %v8419, 7
    %v8477 = vsel %vm1496, %v8472, %v8476
    %v8478 = vrot.slane %v8420, 7
    %v8479 = vsel %vm1496, %v8474, %v8478
    %v8480 = vrot.slane %v8421, 7
    %v8481 = vsel %vm1496, %v8476, %v8480
    %v8482 = vrot.slane %v8422, 7
    %v8483 = vsel %vm1496, %v8478, %v8482
    %v8484 = vrot.slane %v8423, 7
    %v8485 = vsel %vm1496, %v8480, %v8484
    %v8486 = vrot.slane %v8424, 7
    %v8487 = vsel %vm1496, %v8482, %v8486
    %v8488 = vrot.slane %v8425, 7
    %v8489 = vsel %vm1496, %v8484, %v8488
    %v8512 = vadd.f32 %v8284, %v8448
    %v8513 = vadd.f32 %v8285, %v8449
    %v8514 = vadd.f32 %v8286, %v8451
    %v8515 = vadd.f32 %v8287, %v8453
    %v8516 = vadd.f32 %v8288, %v8455
    %v8517 = vadd.f32 %v8289, %v8457
    %v8518 = vadd.f32 %v8290, %v8459
    %v8519 = vadd.f32 %v8291, %v8461
    %v8520 = vadd.f32 %v8292, %v8463
    %v8521 = vadd.f32 %v8293, %v8465
    %v8522 = vadd.f32 %v8294, %v8467
    %v8523 = vadd.f32 %v8295, %v8469
    %v8524 = vadd.f32 %v8296, %v8471
    %v8525 = vadd.f32 %v8297, %v8473
    %v8526 = vadd.f32 %v8298, %v8475
    %v8527 = vadd.f32 %v8299, %v8477
    %v8528 = vadd.f32 %v8300, %v8479
    %v8529 = vadd.f32 %v8301, %v8481
    %v8530 = vadd.f32 %v8302, %v8483
    %v8531 = vadd.f32 %v8303, %v8485
    %v8532 = vadd.f32 %v8304, %v8487
    %v8533 = vadd.f32 %v8305, %v8489
    %v8534 = vmul.f32 %v8512, 0.26601171
    %v8535 = vmul.f32 %v8513, 0.26601171
    %v8536 = vmul.f32 %v8514, 0.26601171
    %v8537 = vmul.f32 %v8515, 0.26601171
    %v8538 = vmul.f32 %v8516, 0.26601171
    %v8539 = vmul.f32 %v8517, 0.26601171
    %v8540 = vmul.f32 %v8518, 0.26601171
    %v8541 = vmul.f32 %v8519, 0.26601171
    %v8542 = vmul.f32 %v8520, 0.26601171
    %v8543 = vmul.f32 %v8521, 0.26601171
    %v8544 = vmul.f32 %v8522, 0.26601171
    %v8545 = vmul.f32 %v8523, 0.26601171
    %v8546 = vmul.f32 %v8524, 0.26601171
    %v8547 = vmul.f32 %v8525, 0.26601171
    %v8548 = vmul.f32 %v8526, 0.26601171
    %v8549 = vmul.f32 %v8527, 0.26601171
    %v8550 = vmul.f32 %v8528, 0.26601171
    %v8551 = vmul.f32 %v8529, 0.26601171
    %v8552 = vmul.f32 %v8530, 0.26601171
    %v8553 = vmul.f32 %v8531, 0.26601171
    %v8554 = vmul.f32 %v8532, 0.26601171
    %v8555 = vmul.f32 %v8533, 0.26601171
    %8578 = vrot.lane.b32.xlu0 %v8512, 118
    %v8579 = vpop.permute.xlu0 %8578
    %8580 = vrot.lane.b32.xlu0 %v8513, 118
    %v8581 = vpop.permute.xlu0 %8580
    %8582 = vrot.lane.b32.xlu0 %v8514, 118
    %v8583 = vpop.permute.xlu0 %8582
    %8584 = vrot.lane.b32.xlu0 %v8515, 118
    %v8585 = vpop.permute.xlu0 %8584
    %8586 = vrot.lane.b32.xlu0 %v8516, 118
    %v8587 = vpop.permute.xlu0 %8586
    %8588 = vrot.lane.b32.xlu0 %v8517, 118
    %v8589 = vpop.permute.xlu0 %8588
    %8590 = vrot.lane.b32.xlu0 %v8518, 118
    %v8591 = vpop.permute.xlu0 %8590
    %8592 = vrot.lane.b32.xlu0 %v8519, 118
    %v8593 = vpop.permute.xlu0 %8592
    %8594 = vrot.lane.b32.xlu0 %v8520, 118
    %v8595 = vpop.permute.xlu0 %8594
    %8596 = vrot.lane.b32.xlu0 %v8521, 118
    %v8597 = vpop.permute.xlu0 %8596
    %8598 = vrot.lane.b32.xlu0 %v8522, 118
    %v8599 = vpop.permute.xlu0 %8598
    %8600 = vrot.lane.b32.xlu0 %v8523, 118
    %v8601 = vpop.permute.xlu0 %8600
    %8602 = vrot.lane.b32.xlu0 %v8524, 118
    %v8603 = vpop.permute.xlu0 %8602
    %8604 = vrot.lane.b32.xlu0 %v8525, 118
    %v8605 = vpop.permute.xlu0 %8604
    %8606 = vrot.lane.b32.xlu0 %v8526, 118
    %v8607 = vpop.permute.xlu0 %8606
    %8608 = vrot.lane.b32.xlu0 %v8527, 118
    %v8609 = vpop.permute.xlu0 %8608
    %8610 = vrot.lane.b32.xlu0 %v8528, 118
    %v8611 = vpop.permute.xlu0 %8610
    %8612 = vrot.lane.b32.xlu0 %v8529, 118
    %v8613 = vpop.permute.xlu0 %8612
    %8614 = vrot.lane.b32.xlu0 %v8530, 118
    %v8615 = vpop.permute.xlu0 %8614
    %8616 = vrot.lane.b32.xlu0 %v8531, 118
    %v8617 = vpop.permute.xlu0 %8616
    %8618 = vrot.lane.b32.xlu0 %v8532, 118
    %v8619 = vpop.permute.xlu0 %8618
    %8620 = vrot.lane.b32.xlu0 %v8533, 118
    %v8621 = vpop.permute.xlu0 %8620
    %v8622 = vsel %vm1671, %v8579, %v8581
    %v8623 = vsel %vm1671, %v8583, %v8585
    %v8624 = vsel %vm1671, %v8587, %v8589
    %v8625 = vsel %vm1671, %v8591, %v8593
    %v8626 = vsel %vm1671, %v8595, %v8597
    %v8627 = vsel %vm1671, %v8599, %v8601
    %v8628 = vsel %vm1671, %v8603, %v8605
    %v8629 = vsel %vm1671, %v8607, %v8609
    %v8630 = vsel %vm1671, %v8611, %v8613
    %v8631 = vsel %vm1671, %v8615, %v8617
    %v8632 = vsel %vm1671, %v8619, %v8621
    %v8644 = vadd.f32 %v8512, %v8622
    %v8645 = vadd.f32 %v8514, %v8623
    %v8646 = vadd.f32 %v8516, %v8624
    %v8647 = vadd.f32 %v8518, %v8625
    %v8648 = vadd.f32 %v8520, %v8626
    %v8649 = vadd.f32 %v8522, %v8627
    %v8650 = vadd.f32 %v8524, %v8628
    %v8651 = vadd.f32 %v8526, %v8629
    %v8652 = vadd.f32 %v8528, %v8630
    %v8653 = vadd.f32 %v8530, %v8631
    %v8654 = vadd.f32 %v8532, %v8632
    %v8655 = vmul.f32 %v8644, 0.0010283801
    %v8656 = vmul.f32 %v8645, 0.0010283801
    %v8657 = vmul.f32 %v8646, 0.0010283801
    %v8658 = vmul.f32 %v8647, 0.0010283801
    %v8659 = vmul.f32 %v8648, 0.0010283801
    %v8660 = vmul.f32 %v8649, 0.0010283801
    %v8661 = vmul.f32 %v8650, 0.0010283801
    %v8662 = vmul.f32 %v8651, 0.0010283801
    %v8663 = vmul.f32 %v8652, 0.0010283801
    %v8664 = vmul.f32 %v8653, 0.0010283801
    %v8665 = vmul.f32 %v8654, 0.0010283801
    %8677 = vrot.lane.b32.xlu0 %v8655, 5
    %v8678 = vpop.permute.xlu0 %8677
    %8679 = vrot.lane.b32.xlu0 %v8656, 5
    %v8680 = vpop.permute.xlu0 %8679
    %8681 = vrot.lane.b32.xlu0 %v8657, 5
    %v8682 = vpop.permute.xlu0 %8681
    %8683 = vrot.lane.b32.xlu0 %v8658, 5
    %v8684 = vpop.permute.xlu0 %8683
    %8685 = vrot.lane.b32.xlu0 %v8659, 5
    %v8686 = vpop.permute.xlu0 %8685
    %8687 = vrot.lane.b32.xlu0 %v8660, 5
    %v8688 = vpop.permute.xlu0 %8687
    %8689 = vrot.lane.b32.xlu0 %v8661, 5
    %v8690 = vpop.permute.xlu0 %8689
    %8691 = vrot.lane.b32.xlu0 %v8662, 5
    %v8692 = vpop.permute.xlu0 %8691
    %8693 = vrot.lane.b32.xlu0 %v8663, 5
    %v8694 = vpop.permute.xlu0 %8693
    %8695 = vrot.lane.b32.xlu0 %v8664, 5
    %v8696 = vpop.permute.xlu0 %8695
    %8697 = vrot.lane.b32.xlu0 %v8665, 5
    %v8698 = vpop.permute.xlu0 %8697
    %v8710 = vadd.f32 %v8534, %v8678
    %v8711 = vadd.f32 %v8535, %v8678
    %v8712 = vadd.f32 %v8536, %v8680
    %v8713 = vadd.f32 %v8537, %v8680
    %v8714 = vadd.f32 %v8538, %v8682
    %v8715 = vadd.f32 %v8539, %v8682
    %v8716 = vadd.f32 %v8540, %v8684
    %v8717 = vadd.f32 %v8541, %v8684
    %v8718 = vadd.f32 %v8542, %v8686
    %v8719 = vadd.f32 %v8543, %v8686
    %v8720 = vadd.f32 %v8544, %v8688
    %v8721 = vadd.f32 %v8545, %v8688
    %v8722 = vadd.f32 %v8546, %v8690
    %v8723 = vadd.f32 %v8547, %v8690
    %v8724 = vadd.f32 %v8548, %v8692
    %v8725 = vadd.f32 %v8549, %v8692
    %v8726 = vadd.f32 %v8550, %v8694
    %v8727 = vadd.f32 %v8551, %v8694
    %v8728 = vadd.f32 %v8552, %v8696
    %v8729 = vadd.f32 %v8553, %v8696
    %v8730 = vadd.f32 %v8554, %v8698
    %v8731 = vadd.f32 %v8555, %v8698
    %8732 = vrot.lane.b32.xlu0 %v8512, 120
    %v8733 = vpop.permute.xlu0 %8732
    %8734 = vrot.lane.b32.xlu0 %v8513, 120
    %v8735 = vpop.permute.xlu0 %8734
    %8736 = vrot.lane.b32.xlu0 %v8514, 120
    %v8737 = vpop.permute.xlu0 %8736
    %8738 = vrot.lane.b32.xlu0 %v8515, 120
    %v8739 = vpop.permute.xlu0 %8738
    %8740 = vrot.lane.b32.xlu0 %v8516, 120
    %v8741 = vpop.permute.xlu0 %8740
    %8742 = vrot.lane.b32.xlu0 %v8517, 120
    %v8743 = vpop.permute.xlu0 %8742
    %8744 = vrot.lane.b32.xlu0 %v8518, 120
    %v8745 = vpop.permute.xlu0 %8744
    %8746 = vrot.lane.b32.xlu0 %v8519, 120
    %v8747 = vpop.permute.xlu0 %8746
    %8748 = vrot.lane.b32.xlu0 %v8520, 120
    %v8749 = vpop.permute.xlu0 %8748
    %8750 = vrot.lane.b32.xlu0 %v8521, 120
    %v8751 = vpop.permute.xlu0 %8750
    %8752 = vrot.lane.b32.xlu0 %v8522, 120
    %v8753 = vpop.permute.xlu0 %8752
    %8754 = vrot.lane.b32.xlu0 %v8523, 120
    %v8755 = vpop.permute.xlu0 %8754
    %8756 = vrot.lane.b32.xlu0 %v8524, 120
    %v8757 = vpop.permute.xlu0 %8756
    %8758 = vrot.lane.b32.xlu0 %v8525, 120
    %v8759 = vpop.permute.xlu0 %8758
    %8760 = vrot.lane.b32.xlu0 %v8526, 120
    %v8761 = vpop.permute.xlu0 %8760
    %8762 = vrot.lane.b32.xlu0 %v8527, 120
    %v8763 = vpop.permute.xlu0 %8762
    %8764 = vrot.lane.b32.xlu0 %v8528, 120
    %v8765 = vpop.permute.xlu0 %8764
    %8766 = vrot.lane.b32.xlu0 %v8529, 120
    %v8767 = vpop.permute.xlu0 %8766
    %8768 = vrot.lane.b32.xlu0 %v8530, 120
    %v8769 = vpop.permute.xlu0 %8768
    %8770 = vrot.lane.b32.xlu0 %v8531, 120
    %v8771 = vpop.permute.xlu0 %8770
    %8772 = vrot.lane.b32.xlu0 %v8532, 120
    %v8773 = vpop.permute.xlu0 %8772
    %8774 = vrot.lane.b32.xlu0 %v8533, 120
    %v8775 = vpop.permute.xlu0 %8774
    %v8776 = vsel %vm1826, %v8733, %v8735
    %v8777 = vsel %vm1826, %v8737, %v8739
    %v8778 = vsel %vm1826, %v8741, %v8743
    %v8779 = vsel %vm1826, %v8745, %v8747
    %v8780 = vsel %vm1826, %v8749, %v8751
    %v8781 = vsel %vm1826, %v8753, %v8755
    %v8782 = vsel %vm1826, %v8757, %v8759
    %v8783 = vsel %vm1826, %v8761, %v8763
    %v8784 = vsel %vm1826, %v8765, %v8767
    %v8785 = vsel %vm1826, %v8769, %v8771
    %v8786 = vsel %vm1826, %v8773, %v8775
    %v8809 = vadd.f32 %v8512, %v8776
    %v8810 = vadd.f32 %v8513, %v8735
    %v8811 = vadd.f32 %v8514, %v8777
    %v8812 = vadd.f32 %v8515, %v8739
    %v8813 = vadd.f32 %v8516, %v8778
    %v8814 = vadd.f32 %v8517, %v8743
    %v8815 = vadd.f32 %v8518, %v8779
    %v8816 = vadd.f32 %v8519, %v8747
    %v8817 = vadd.f32 %v8520, %v8780
    %v8818 = vadd.f32 %v8521, %v8751
    %v8819 = vadd.f32 %v8522, %v8781
    %v8820 = vadd.f32 %v8523, %v8755
    %v8821 = vadd.f32 %v8524, %v8782
    %v8822 = vadd.f32 %v8525, %v8759
    %v8823 = vadd.f32 %v8526, %v8783
    %v8824 = vadd.f32 %v8527, %v8763
    %v8825 = vadd.f32 %v8528, %v8784
    %v8826 = vadd.f32 %v8529, %v8767
    %v8827 = vadd.f32 %v8530, %v8785
    %v8828 = vadd.f32 %v8531, %v8771
    %v8829 = vadd.f32 %v8532, %v8786
    %v8830 = vadd.f32 %v8533, %v8775
    %v8831 = vmul.f32 %v8809, 0.007598758
    %v8832 = vmul.f32 %v8810, 0.007598758
    %v8833 = vmul.f32 %v8811, 0.007598758
    %v8834 = vmul.f32 %v8812, 0.007598758
    %v8835 = vmul.f32 %v8813, 0.007598758
    %v8836 = vmul.f32 %v8814, 0.007598758
    %v8837 = vmul.f32 %v8815, 0.007598758
    %v8838 = vmul.f32 %v8816, 0.007598758
    %v8839 = vmul.f32 %v8817, 0.007598758
    %v8840 = vmul.f32 %v8818, 0.007598758
    %v8841 = vmul.f32 %v8819, 0.007598758
    %v8842 = vmul.f32 %v8820, 0.007598758
    %v8843 = vmul.f32 %v8821, 0.007598758
    %v8844 = vmul.f32 %v8822, 0.007598758
    %v8845 = vmul.f32 %v8823, 0.007598758
    %v8846 = vmul.f32 %v8824, 0.007598758
    %v8847 = vmul.f32 %v8825, 0.007598758
    %v8848 = vmul.f32 %v8826, 0.007598758
    %v8849 = vmul.f32 %v8827, 0.007598758
    %v8850 = vmul.f32 %v8828, 0.007598758
    %v8851 = vmul.f32 %v8829, 0.007598758
    %v8852 = vmul.f32 %v8830, 0.007598758
    %8875 = vrot.lane.b32.xlu0 %v8831, 4
    %v8876 = vpop.permute.xlu0 %8875
    %8877 = vrot.lane.b32.xlu0 %v8832, 4
    %v8878 = vpop.permute.xlu0 %8877
    %8879 = vrot.lane.b32.xlu0 %v8833, 4
    %v8880 = vpop.permute.xlu0 %8879
    %8881 = vrot.lane.b32.xlu0 %v8834, 4
    %v8882 = vpop.permute.xlu0 %8881
    %8883 = vrot.lane.b32.xlu0 %v8835, 4
    %v8884 = vpop.permute.xlu0 %8883
    %8885 = vrot.lane.b32.xlu0 %v8836, 4
    %v8886 = vpop.permute.xlu0 %8885
    %8887 = vrot.lane.b32.xlu0 %v8837, 4
    %v8888 = vpop.permute.xlu0 %8887
    %8889 = vrot.lane.b32.xlu0 %v8838, 4
    %v8890 = vpop.permute.xlu0 %8889
    %8891 = vrot.lane.b32.xlu0 %v8839, 4
    %v8892 = vpop.permute.xlu0 %8891
    %8893 = vrot.lane.b32.xlu0 %v8840, 4
    %v8894 = vpop.permute.xlu0 %8893
    %8895 = vrot.lane.b32.xlu0 %v8841, 4
    %v8896 = vpop.permute.xlu0 %8895
    %8897 = vrot.lane.b32.xlu0 %v8842, 4
    %v8898 = vpop.permute.xlu0 %8897
    %8899 = vrot.lane.b32.xlu0 %v8843, 4
    %v8900 = vpop.permute.xlu0 %8899
    %8901 = vrot.lane.b32.xlu0 %v8844, 4
    %v8902 = vpop.permute.xlu0 %8901
    %8903 = vrot.lane.b32.xlu0 %v8845, 4
    %v8904 = vpop.permute.xlu0 %8903
    %8905 = vrot.lane.b32.xlu0 %v8846, 4
    %v8906 = vpop.permute.xlu0 %8905
    %8907 = vrot.lane.b32.xlu0 %v8847, 4
    %v8908 = vpop.permute.xlu0 %8907
    %8909 = vrot.lane.b32.xlu0 %v8848, 4
    %v8910 = vpop.permute.xlu0 %8909
    %8911 = vrot.lane.b32.xlu0 %v8849, 4
    %v8912 = vpop.permute.xlu0 %8911
    %8913 = vrot.lane.b32.xlu0 %v8850, 4
    %v8914 = vpop.permute.xlu0 %8913
    %8915 = vrot.lane.b32.xlu0 %v8851, 4
    %v8916 = vpop.permute.xlu0 %8915
    %8917 = vrot.lane.b32.xlu0 %v8852, 4
    %v8918 = vpop.permute.xlu0 %8917
    %v8919 = vsel %vm1970, %v8876, %v8878
    %v8920 = vsel %vm1970, %v8880, %v8882
    %v8921 = vsel %vm1970, %v8884, %v8886
    %v8922 = vsel %vm1970, %v8888, %v8890
    %v8923 = vsel %vm1970, %v8892, %v8894
    %v8924 = vsel %vm1970, %v8896, %v8898
    %v8925 = vsel %vm1970, %v8900, %v8902
    %v8926 = vsel %vm1970, %v8904, %v8906
    %v8927 = vsel %vm1970, %v8908, %v8910
    %v8928 = vsel %vm1970, %v8912, %v8914
    %v8929 = vsel %vm1970, %v8916, %v8918
    %v8952 = vadd.f32 %v8710, %v8876
    %v8953 = vadd.f32 %v8711, %v8919
    %v8954 = vadd.f32 %v8712, %v8880
    %v8955 = vadd.f32 %v8713, %v8920
    %v8956 = vadd.f32 %v8714, %v8884
    %v8957 = vadd.f32 %v8715, %v8921
    %v8958 = vadd.f32 %v8716, %v8888
    %v8959 = vadd.f32 %v8717, %v8922
    %v8960 = vadd.f32 %v8718, %v8892
    %v8961 = vadd.f32 %v8719, %v8923
    %v8962 = vadd.f32 %v8720, %v8896
    %v8963 = vadd.f32 %v8721, %v8924
    %v8964 = vadd.f32 %v8722, %v8900
    %v8965 = vadd.f32 %v8723, %v8925
    %v8966 = vadd.f32 %v8724, %v8904
    %v8967 = vadd.f32 %v8725, %v8926
    %v8968 = vadd.f32 %v8726, %v8908
    %v8969 = vadd.f32 %v8727, %v8927
    %v8970 = vadd.f32 %v8728, %v8912
    %v8971 = vadd.f32 %v8729, %v8928
    %v8972 = vadd.f32 %v8730, %v8916
    %v8973 = vadd.f32 %v8731, %v8929
    %8974 = vrot.lane.b32.xlu0 %v8512, 122
    %v8975 = vpop.permute.xlu0 %8974
    %8976 = vrot.lane.b32.xlu0 %v8513, 122
    %v8977 = vpop.permute.xlu0 %8976
    %8978 = vrot.lane.b32.xlu0 %v8514, 122
    %v8979 = vpop.permute.xlu0 %8978
    %8980 = vrot.lane.b32.xlu0 %v8515, 122
    %v8981 = vpop.permute.xlu0 %8980
    %8982 = vrot.lane.b32.xlu0 %v8516, 122
    %v8983 = vpop.permute.xlu0 %8982
    %8984 = vrot.lane.b32.xlu0 %v8517, 122
    %v8985 = vpop.permute.xlu0 %8984
    %8986 = vrot.lane.b32.xlu0 %v8518, 122
    %v8987 = vpop.permute.xlu0 %8986
    %8988 = vrot.lane.b32.xlu0 %v8519, 122
    %v8989 = vpop.permute.xlu0 %8988
    %8990 = vrot.lane.b32.xlu0 %v8520, 122
    %v8991 = vpop.permute.xlu0 %8990
    %8992 = vrot.lane.b32.xlu0 %v8521, 122
    %v8993 = vpop.permute.xlu0 %8992
    %8994 = vrot.lane.b32.xlu0 %v8522, 122
    %v8995 = vpop.permute.xlu0 %8994
    %8996 = vrot.lane.b32.xlu0 %v8523, 122
    %v8997 = vpop.permute.xlu0 %8996
    %8998 = vrot.lane.b32.xlu0 %v8524, 122
    %v8999 = vpop.permute.xlu0 %8998
    %9000 = vrot.lane.b32.xlu0 %v8525, 122
    %v9001 = vpop.permute.xlu0 %9000
    %9002 = vrot.lane.b32.xlu0 %v8526, 122
    %v9003 = vpop.permute.xlu0 %9002
    %9004 = vrot.lane.b32.xlu0 %v8527, 122
    %v9005 = vpop.permute.xlu0 %9004
    %9006 = vrot.lane.b32.xlu0 %v8528, 122
    %v9007 = vpop.permute.xlu0 %9006
    %9008 = vrot.lane.b32.xlu0 %v8529, 122
    %v9009 = vpop.permute.xlu0 %9008
    %9010 = vrot.lane.b32.xlu0 %v8530, 122
    %v9011 = vpop.permute.xlu0 %9010
    %9012 = vrot.lane.b32.xlu0 %v8531, 122
    %v9013 = vpop.permute.xlu0 %9012
    %9014 = vrot.lane.b32.xlu0 %v8532, 122
    %v9015 = vpop.permute.xlu0 %9014
    %9016 = vrot.lane.b32.xlu0 %v8533, 122
    %v9017 = vpop.permute.xlu0 %9016
    %v9018 = vsel %vm2070, %v8975, %v8977
    %v9019 = vsel %vm2070, %v8979, %v8981
    %v9020 = vsel %vm2070, %v8983, %v8985
    %v9021 = vsel %vm2070, %v8987, %v8989
    %v9022 = vsel %vm2070, %v8991, %v8993
    %v9023 = vsel %vm2070, %v8995, %v8997
    %v9024 = vsel %vm2070, %v8999, %v9001
    %v9025 = vsel %vm2070, %v9003, %v9005
    %v9026 = vsel %vm2070, %v9007, %v9009
    %v9027 = vsel %vm2070, %v9011, %v9013
    %v9028 = vsel %vm2070, %v9015, %v9017
    %v9051 = vadd.f32 %v8512, %v9018
    %v9052 = vadd.f32 %v8513, %v8977
    %v9053 = vadd.f32 %v8514, %v9019
    %v9054 = vadd.f32 %v8515, %v8981
    %v9055 = vadd.f32 %v8516, %v9020
    %v9056 = vadd.f32 %v8517, %v8985
    %v9057 = vadd.f32 %v8518, %v9021
    %v9058 = vadd.f32 %v8519, %v8989
    %v9059 = vadd.f32 %v8520, %v9022
    %v9060 = vadd.f32 %v8521, %v8993
    %v9061 = vadd.f32 %v8522, %v9023
    %v9062 = vadd.f32 %v8523, %v8997
    %v9063 = vadd.f32 %v8524, %v9024
    %v9064 = vadd.f32 %v8525, %v9001
    %v9065 = vadd.f32 %v8526, %v9025
    %v9066 = vadd.f32 %v8527, %v9005
    %v9067 = vadd.f32 %v8528, %v9026
    %v9068 = vadd.f32 %v8529, %v9009
    %v9069 = vadd.f32 %v8530, %v9027
    %v9070 = vadd.f32 %v8531, %v9013
    %v9071 = vadd.f32 %v8532, %v9028
    %v9072 = vadd.f32 %v8533, %v9017
    %v9073 = vmul.f32 %v9051, 0.036000773
    %v9074 = vmul.f32 %v9052, 0.036000773
    %v9075 = vmul.f32 %v9053, 0.036000773
    %v9076 = vmul.f32 %v9054, 0.036000773
    %v9077 = vmul.f32 %v9055, 0.036000773
    %v9078 = vmul.f32 %v9056, 0.036000773
    %v9079 = vmul.f32 %v9057, 0.036000773
    %v9080 = vmul.f32 %v9058, 0.036000773
    %v9081 = vmul.f32 %v9059, 0.036000773
    %v9082 = vmul.f32 %v9060, 0.036000773
    %v9083 = vmul.f32 %v9061, 0.036000773
    %v9084 = vmul.f32 %v9062, 0.036000773
    %v9085 = vmul.f32 %v9063, 0.036000773
    %v9086 = vmul.f32 %v9064, 0.036000773
    %v9087 = vmul.f32 %v9065, 0.036000773
    %v9088 = vmul.f32 %v9066, 0.036000773
    %v9089 = vmul.f32 %v9067, 0.036000773
    %v9090 = vmul.f32 %v9068, 0.036000773
    %v9091 = vmul.f32 %v9069, 0.036000773
    %v9092 = vmul.f32 %v9070, 0.036000773
    %v9093 = vmul.f32 %v9071, 0.036000773
    %v9094 = vmul.f32 %v9072, 0.036000773
    %9117 = vrot.lane.b32.xlu0 %v9073, 3
    %v9118 = vpop.permute.xlu0 %9117
    %9119 = vrot.lane.b32.xlu0 %v9074, 3
    %v9120 = vpop.permute.xlu0 %9119
    %9121 = vrot.lane.b32.xlu0 %v9075, 3
    %v9122 = vpop.permute.xlu0 %9121
    %9123 = vrot.lane.b32.xlu0 %v9076, 3
    %v9124 = vpop.permute.xlu0 %9123
    %9125 = vrot.lane.b32.xlu0 %v9077, 3
    %v9126 = vpop.permute.xlu0 %9125
    %9127 = vrot.lane.b32.xlu0 %v9078, 3
    %v9128 = vpop.permute.xlu0 %9127
    %9129 = vrot.lane.b32.xlu0 %v9079, 3
    %v9130 = vpop.permute.xlu0 %9129
    %9131 = vrot.lane.b32.xlu0 %v9080, 3
    %v9132 = vpop.permute.xlu0 %9131
    %9133 = vrot.lane.b32.xlu0 %v9081, 3
    %v9134 = vpop.permute.xlu0 %9133
    %9135 = vrot.lane.b32.xlu0 %v9082, 3
    %v9136 = vpop.permute.xlu0 %9135
    %9137 = vrot.lane.b32.xlu0 %v9083, 3
    %v9138 = vpop.permute.xlu0 %9137
    %9139 = vrot.lane.b32.xlu0 %v9084, 3
    %v9140 = vpop.permute.xlu0 %9139
    %9141 = vrot.lane.b32.xlu0 %v9085, 3
    %v9142 = vpop.permute.xlu0 %9141
    %9143 = vrot.lane.b32.xlu0 %v9086, 3
    %v9144 = vpop.permute.xlu0 %9143
    %9145 = vrot.lane.b32.xlu0 %v9087, 3
    %v9146 = vpop.permute.xlu0 %9145
    %9147 = vrot.lane.b32.xlu0 %v9088, 3
    %v9148 = vpop.permute.xlu0 %9147
    %9149 = vrot.lane.b32.xlu0 %v9089, 3
    %v9150 = vpop.permute.xlu0 %9149
    %9151 = vrot.lane.b32.xlu0 %v9090, 3
    %v9152 = vpop.permute.xlu0 %9151
    %9153 = vrot.lane.b32.xlu0 %v9091, 3
    %v9154 = vpop.permute.xlu0 %9153
    %9155 = vrot.lane.b32.xlu0 %v9092, 3
    %v9156 = vpop.permute.xlu0 %9155
    %9157 = vrot.lane.b32.xlu0 %v9093, 3
    %v9158 = vpop.permute.xlu0 %9157
    %9159 = vrot.lane.b32.xlu0 %v9094, 3
    %v9160 = vpop.permute.xlu0 %9159
    %v9161 = vsel %vm2214, %v9118, %v9120
    %v9162 = vsel %vm2214, %v9122, %v9124
    %v9163 = vsel %vm2214, %v9126, %v9128
    %v9164 = vsel %vm2214, %v9130, %v9132
    %v9165 = vsel %vm2214, %v9134, %v9136
    %v9166 = vsel %vm2214, %v9138, %v9140
    %v9167 = vsel %vm2214, %v9142, %v9144
    %v9168 = vsel %vm2214, %v9146, %v9148
    %v9169 = vsel %vm2214, %v9150, %v9152
    %v9170 = vsel %vm2214, %v9154, %v9156
    %v9171 = vsel %vm2214, %v9158, %v9160
    %v9194 = vadd.f32 %v8952, %v9118
    %v9195 = vadd.f32 %v8953, %v9161
    %v9196 = vadd.f32 %v8954, %v9122
    %v9197 = vadd.f32 %v8955, %v9162
    %v9198 = vadd.f32 %v8956, %v9126
    %v9199 = vadd.f32 %v8957, %v9163
    %v9200 = vadd.f32 %v8958, %v9130
    %v9201 = vadd.f32 %v8959, %v9164
    %v9202 = vadd.f32 %v8960, %v9134
    %v9203 = vadd.f32 %v8961, %v9165
    %v9204 = vadd.f32 %v8962, %v9138
    %v9205 = vadd.f32 %v8963, %v9166
    %v9206 = vadd.f32 %v8964, %v9142
    %v9207 = vadd.f32 %v8965, %v9167
    %v9208 = vadd.f32 %v8966, %v9146
    %v9209 = vadd.f32 %v8967, %v9168
    %v9210 = vadd.f32 %v8968, %v9150
    %v9211 = vadd.f32 %v8969, %v9169
    %v9212 = vadd.f32 %v8970, %v9154
    %v9213 = vadd.f32 %v8971, %v9170
    %v9214 = vadd.f32 %v8972, %v9158
    %v9215 = vadd.f32 %v8973, %v9171
    %9216 = vrot.lane.b32.xlu0 %v8512, 124
    %v9217 = vpop.permute.xlu0 %9216
    %9218 = vrot.lane.b32.xlu0 %v8513, 124
    %v9219 = vpop.permute.xlu0 %9218
    %9220 = vrot.lane.b32.xlu0 %v8514, 124
    %v9221 = vpop.permute.xlu0 %9220
    %9222 = vrot.lane.b32.xlu0 %v8515, 124
    %v9223 = vpop.permute.xlu0 %9222
    %9224 = vrot.lane.b32.xlu0 %v8516, 124
    %v9225 = vpop.permute.xlu0 %9224
    %9226 = vrot.lane.b32.xlu0 %v8517, 124
    %v9227 = vpop.permute.xlu0 %9226
    %9228 = vrot.lane.b32.xlu0 %v8518, 124
    %v9229 = vpop.permute.xlu0 %9228
    %9230 = vrot.lane.b32.xlu0 %v8519, 124
    %v9231 = vpop.permute.xlu0 %9230
    %9232 = vrot.lane.b32.xlu0 %v8520, 124
    %v9233 = vpop.permute.xlu0 %9232
    %9234 = vrot.lane.b32.xlu0 %v8521, 124
    %v9235 = vpop.permute.xlu0 %9234
    %9236 = vrot.lane.b32.xlu0 %v8522, 124
    %v9237 = vpop.permute.xlu0 %9236
    %9238 = vrot.lane.b32.xlu0 %v8523, 124
    %v9239 = vpop.permute.xlu0 %9238
    %9240 = vrot.lane.b32.xlu0 %v8524, 124
    %v9241 = vpop.permute.xlu0 %9240
    %9242 = vrot.lane.b32.xlu0 %v8525, 124
    %v9243 = vpop.permute.xlu0 %9242
    %9244 = vrot.lane.b32.xlu0 %v8526, 124
    %v9245 = vpop.permute.xlu0 %9244
    %9246 = vrot.lane.b32.xlu0 %v8527, 124
    %v9247 = vpop.permute.xlu0 %9246
    %9248 = vrot.lane.b32.xlu0 %v8528, 124
    %v9249 = vpop.permute.xlu0 %9248
    %9250 = vrot.lane.b32.xlu0 %v8529, 124
    %v9251 = vpop.permute.xlu0 %9250
    %9252 = vrot.lane.b32.xlu0 %v8530, 124
    %v9253 = vpop.permute.xlu0 %9252
    %9254 = vrot.lane.b32.xlu0 %v8531, 124
    %v9255 = vpop.permute.xlu0 %9254
    %9256 = vrot.lane.b32.xlu0 %v8532, 124
    %v9257 = vpop.permute.xlu0 %9256
    %9258 = vrot.lane.b32.xlu0 %v8533, 124
    %v9259 = vpop.permute.xlu0 %9258
    %v9260 = vsel %vm2314, %v9217, %v9219
    %v9261 = vsel %vm2314, %v9221, %v9223
    %v9262 = vsel %vm2314, %v9225, %v9227
    %v9263 = vsel %vm2314, %v9229, %v9231
    %v9264 = vsel %vm2314, %v9233, %v9235
    %v9265 = vsel %vm2314, %v9237, %v9239
    %v9266 = vsel %vm2314, %v9241, %v9243
    %v9267 = vsel %vm2314, %v9245, %v9247
    %v9268 = vsel %vm2314, %v9249, %v9251
    %v9269 = vsel %vm2314, %v9253, %v9255
    %v9270 = vsel %vm2314, %v9257, %v9259
    %v9293 = vadd.f32 %v8512, %v9260
    %v9294 = vadd.f32 %v8513, %v9219
    %v9295 = vadd.f32 %v8514, %v9261
    %v9296 = vadd.f32 %v8515, %v9223
    %v9297 = vadd.f32 %v8516, %v9262
    %v9298 = vadd.f32 %v8517, %v9227
    %v9299 = vadd.f32 %v8518, %v9263
    %v9300 = vadd.f32 %v8519, %v9231
    %v9301 = vadd.f32 %v8520, %v9264
    %v9302 = vadd.f32 %v8521, %v9235
    %v9303 = vadd.f32 %v8522, %v9265
    %v9304 = vadd.f32 %v8523, %v9239
    %v9305 = vadd.f32 %v8524, %v9266
    %v9306 = vadd.f32 %v8525, %v9243
    %v9307 = vadd.f32 %v8526, %v9267
    %v9308 = vadd.f32 %v8527, %v9247
    %v9309 = vadd.f32 %v8528, %v9268
    %v9310 = vadd.f32 %v8529, %v9251
    %v9311 = vadd.f32 %v8530, %v9269
    %v9312 = vadd.f32 %v8531, %v9255
    %v9313 = vadd.f32 %v8532, %v9270
    %v9314 = vadd.f32 %v8533, %v9259
    %v9315 = vmul.f32 %v9293, 0.10936069
    %v9316 = vmul.f32 %v9294, 0.10936069
    %v9317 = vmul.f32 %v9295, 0.10936069
    %v9318 = vmul.f32 %v9296, 0.10936069
    %v9319 = vmul.f32 %v9297, 0.10936069
    %v9320 = vmul.f32 %v9298, 0.10936069
    %v9321 = vmul.f32 %v9299, 0.10936069
    %v9322 = vmul.f32 %v9300, 0.10936069
    %v9323 = vmul.f32 %v9301, 0.10936069
    %v9324 = vmul.f32 %v9302, 0.10936069
    %v9325 = vmul.f32 %v9303, 0.10936069
    %v9326 = vmul.f32 %v9304, 0.10936069
    %v9327 = vmul.f32 %v9305, 0.10936069
    %v9328 = vmul.f32 %v9306, 0.10936069
    %v9329 = vmul.f32 %v9307, 0.10936069
    %v9330 = vmul.f32 %v9308, 0.10936069
    %v9331 = vmul.f32 %v9309, 0.10936069
    %v9332 = vmul.f32 %v9310, 0.10936069
    %v9333 = vmul.f32 %v9311, 0.10936069
    %v9334 = vmul.f32 %v9312, 0.10936069
    %v9335 = vmul.f32 %v9313, 0.10936069
    %v9336 = vmul.f32 %v9314, 0.10936069
    %9359 = vrot.lane.b32.xlu0 %v9315, 2
    %v9360 = vpop.permute.xlu0 %9359
    %9361 = vrot.lane.b32.xlu0 %v9316, 2
    %v9362 = vpop.permute.xlu0 %9361
    %9363 = vrot.lane.b32.xlu0 %v9317, 2
    %v9364 = vpop.permute.xlu0 %9363
    %9365 = vrot.lane.b32.xlu0 %v9318, 2
    %v9366 = vpop.permute.xlu0 %9365
    %9367 = vrot.lane.b32.xlu0 %v9319, 2
    %v9368 = vpop.permute.xlu0 %9367
    %9369 = vrot.lane.b32.xlu0 %v9320, 2
    %v9370 = vpop.permute.xlu0 %9369
    %9371 = vrot.lane.b32.xlu0 %v9321, 2
    %v9372 = vpop.permute.xlu0 %9371
    %9373 = vrot.lane.b32.xlu0 %v9322, 2
    %v9374 = vpop.permute.xlu0 %9373
    %9375 = vrot.lane.b32.xlu0 %v9323, 2
    %v9376 = vpop.permute.xlu0 %9375
    %9377 = vrot.lane.b32.xlu0 %v9324, 2
    %v9378 = vpop.permute.xlu0 %9377
    %9379 = vrot.lane.b32.xlu0 %v9325, 2
    %v9380 = vpop.permute.xlu0 %9379
    %9381 = vrot.lane.b32.xlu0 %v9326, 2
    %v9382 = vpop.permute.xlu0 %9381
    %9383 = vrot.lane.b32.xlu0 %v9327, 2
    %v9384 = vpop.permute.xlu0 %9383
    %9385 = vrot.lane.b32.xlu0 %v9328, 2
    %v9386 = vpop.permute.xlu0 %9385
    %9387 = vrot.lane.b32.xlu0 %v9329, 2
    %v9388 = vpop.permute.xlu0 %9387
    %9389 = vrot.lane.b32.xlu0 %v9330, 2
    %v9390 = vpop.permute.xlu0 %9389
    %9391 = vrot.lane.b32.xlu0 %v9331, 2
    %v9392 = vpop.permute.xlu0 %9391
    %9393 = vrot.lane.b32.xlu0 %v9332, 2
    %v9394 = vpop.permute.xlu0 %9393
    %9395 = vrot.lane.b32.xlu0 %v9333, 2
    %v9396 = vpop.permute.xlu0 %9395
    %9397 = vrot.lane.b32.xlu0 %v9334, 2
    %v9398 = vpop.permute.xlu0 %9397
    %9399 = vrot.lane.b32.xlu0 %v9335, 2
    %v9400 = vpop.permute.xlu0 %9399
    %9401 = vrot.lane.b32.xlu0 %v9336, 2
    %v9402 = vpop.permute.xlu0 %9401
    %v9403 = vsel %vm2458, %v9360, %v9362
    %v9404 = vsel %vm2458, %v9364, %v9366
    %v9405 = vsel %vm2458, %v9368, %v9370
    %v9406 = vsel %vm2458, %v9372, %v9374
    %v9407 = vsel %vm2458, %v9376, %v9378
    %v9408 = vsel %vm2458, %v9380, %v9382
    %v9409 = vsel %vm2458, %v9384, %v9386
    %v9410 = vsel %vm2458, %v9388, %v9390
    %v9411 = vsel %vm2458, %v9392, %v9394
    %v9412 = vsel %vm2458, %v9396, %v9398
    %v9413 = vsel %vm2458, %v9400, %v9402
    %v9436 = vadd.f32 %v9194, %v9360
    %v9437 = vadd.f32 %v9195, %v9403
    %v9438 = vadd.f32 %v9196, %v9364
    %v9439 = vadd.f32 %v9197, %v9404
    %v9440 = vadd.f32 %v9198, %v9368
    %v9441 = vadd.f32 %v9199, %v9405
    %v9442 = vadd.f32 %v9200, %v9372
    %v9443 = vadd.f32 %v9201, %v9406
    %v9444 = vadd.f32 %v9202, %v9376
    %v9445 = vadd.f32 %v9203, %v9407
    %v9446 = vadd.f32 %v9204, %v9380
    %v9447 = vadd.f32 %v9205, %v9408
    %v9448 = vadd.f32 %v9206, %v9384
    %v9449 = vadd.f32 %v9207, %v9409
    %v9450 = vadd.f32 %v9208, %v9388
    %v9451 = vadd.f32 %v9209, %v9410
    %v9452 = vadd.f32 %v9210, %v9392
    %v9453 = vadd.f32 %v9211, %v9411
    %v9454 = vadd.f32 %v9212, %v9396
    %v9455 = vadd.f32 %v9213, %v9412
    %v9456 = vadd.f32 %v9214, %v9400
    %v9457 = vadd.f32 %v9215, %v9413
    %9458 = vrot.lane.b32.xlu0 %v8512, 126
    %v9459 = vpop.permute.xlu0 %9458
    %9460 = vrot.lane.b32.xlu0 %v8513, 126
    %v9461 = vpop.permute.xlu0 %9460
    %9462 = vrot.lane.b32.xlu0 %v8514, 126
    %v9463 = vpop.permute.xlu0 %9462
    %9464 = vrot.lane.b32.xlu0 %v8515, 126
    %v9465 = vpop.permute.xlu0 %9464
    %9466 = vrot.lane.b32.xlu0 %v8516, 126
    %v9467 = vpop.permute.xlu0 %9466
    %9468 = vrot.lane.b32.xlu0 %v8517, 126
    %v9469 = vpop.permute.xlu0 %9468
    %9470 = vrot.lane.b32.xlu0 %v8518, 126
    %v9471 = vpop.permute.xlu0 %9470
    %9472 = vrot.lane.b32.xlu0 %v8519, 126
    %v9473 = vpop.permute.xlu0 %9472
    %9474 = vrot.lane.b32.xlu0 %v8520, 126
    %v9475 = vpop.permute.xlu0 %9474
    %9476 = vrot.lane.b32.xlu0 %v8521, 126
    %v9477 = vpop.permute.xlu0 %9476
    %9478 = vrot.lane.b32.xlu0 %v8522, 126
    %v9479 = vpop.permute.xlu0 %9478
    %9480 = vrot.lane.b32.xlu0 %v8523, 126
    %v9481 = vpop.permute.xlu0 %9480
    %9482 = vrot.lane.b32.xlu0 %v8524, 126
    %v9483 = vpop.permute.xlu0 %9482
    %9484 = vrot.lane.b32.xlu0 %v8525, 126
    %v9485 = vpop.permute.xlu0 %9484
    %9486 = vrot.lane.b32.xlu0 %v8526, 126
    %v9487 = vpop.permute.xlu0 %9486
    %9488 = vrot.lane.b32.xlu0 %v8527, 126
    %v9489 = vpop.permute.xlu0 %9488
    %9490 = vrot.lane.b32.xlu0 %v8528, 126
    %v9491 = vpop.permute.xlu0 %9490
    %9492 = vrot.lane.b32.xlu0 %v8529, 126
    %v9493 = vpop.permute.xlu0 %9492
    %9494 = vrot.lane.b32.xlu0 %v8530, 126
    %v9495 = vpop.permute.xlu0 %9494
    %9496 = vrot.lane.b32.xlu0 %v8531, 126
    %v9497 = vpop.permute.xlu0 %9496
    %9498 = vrot.lane.b32.xlu0 %v8532, 126
    %v9499 = vpop.permute.xlu0 %9498
    %9500 = vrot.lane.b32.xlu0 %v8533, 126
    %v9501 = vpop.permute.xlu0 %9500
    %v9502 = vsel %vm2558, %v9459, %v9461
    %v9503 = vsel %vm2558, %v9463, %v9465
    %v9504 = vsel %vm2558, %v9467, %v9469
    %v9505 = vsel %vm2558, %v9471, %v9473
    %v9506 = vsel %vm2558, %v9475, %v9477
    %v9507 = vsel %vm2558, %v9479, %v9481
    %v9508 = vsel %vm2558, %v9483, %v9485
    %v9509 = vsel %vm2558, %v9487, %v9489
    %v9510 = vsel %vm2558, %v9491, %v9493
    %v9511 = vsel %vm2558, %v9495, %v9497
    %v9512 = vsel %vm2558, %v9499, %v9501
    %v9535 = vadd.f32 %v8512, %v9502
    %v9536 = vadd.f32 %v8513, %v9461
    %v9537 = vadd.f32 %v8514, %v9503
    %v9538 = vadd.f32 %v8515, %v9465
    %v9539 = vadd.f32 %v8516, %v9504
    %v9540 = vadd.f32 %v8517, %v9469
    %v9541 = vadd.f32 %v8518, %v9505
    %v9542 = vadd.f32 %v8519, %v9473
    %v9543 = vadd.f32 %v8520, %v9506
    %v9544 = vadd.f32 %v8521, %v9477
    %v9545 = vadd.f32 %v8522, %v9507
    %v9546 = vadd.f32 %v8523, %v9481
    %v9547 = vadd.f32 %v8524, %v9508
    %v9548 = vadd.f32 %v8525, %v9485
    %v9549 = vadd.f32 %v8526, %v9509
    %v9550 = vadd.f32 %v8527, %v9489
    %v9551 = vadd.f32 %v8528, %v9510
    %v9552 = vadd.f32 %v8529, %v9493
    %v9553 = vadd.f32 %v8530, %v9511
    %v9554 = vadd.f32 %v8531, %v9497
    %v9555 = vadd.f32 %v8532, %v9512
    %v9556 = vadd.f32 %v8533, %v9501
    %v9557 = vmul.f32 %v9535, 0.21300554
    %v9558 = vmul.f32 %v9536, 0.21300554
    %v9559 = vmul.f32 %v9537, 0.21300554
    %v9560 = vmul.f32 %v9538, 0.21300554
    %v9561 = vmul.f32 %v9539, 0.21300554
    %v9562 = vmul.f32 %v9540, 0.21300554
    %v9563 = vmul.f32 %v9541, 0.21300554
    %v9564 = vmul.f32 %v9542, 0.21300554
    %v9565 = vmul.f32 %v9543, 0.21300554
    %v9566 = vmul.f32 %v9544, 0.21300554
    %v9567 = vmul.f32 %v9545, 0.21300554
    %v9568 = vmul.f32 %v9546, 0.21300554
    %v9569 = vmul.f32 %v9547, 0.21300554
    %v9570 = vmul.f32 %v9548, 0.21300554
    %v9571 = vmul.f32 %v9549, 0.21300554
    %v9572 = vmul.f32 %v9550, 0.21300554
    %v9573 = vmul.f32 %v9551, 0.21300554
    %v9574 = vmul.f32 %v9552, 0.21300554
    %v9575 = vmul.f32 %v9553, 0.21300554
    %v9576 = vmul.f32 %v9554, 0.21300554
    %v9577 = vmul.f32 %v9555, 0.21300554
    %v9578 = vmul.f32 %v9556, 0.21300554
    %9601 = vrot.lane.b32.xlu0 %v9557, 1
    %v9602 = vpop.permute.xlu0 %9601
    %9603 = vrot.lane.b32.xlu0 %v9558, 1
    %v9604 = vpop.permute.xlu0 %9603
    %9605 = vrot.lane.b32.xlu0 %v9559, 1
    %v9606 = vpop.permute.xlu0 %9605
    %9607 = vrot.lane.b32.xlu0 %v9560, 1
    %v9608 = vpop.permute.xlu0 %9607
    %9609 = vrot.lane.b32.xlu0 %v9561, 1
    %v9610 = vpop.permute.xlu0 %9609
    %9611 = vrot.lane.b32.xlu0 %v9562, 1
    %v9612 = vpop.permute.xlu0 %9611
    %9613 = vrot.lane.b32.xlu0 %v9563, 1
    %v9614 = vpop.permute.xlu0 %9613
    %9615 = vrot.lane.b32.xlu0 %v9564, 1
    %v9616 = vpop.permute.xlu0 %9615
    %9617 = vrot.lane.b32.xlu0 %v9565, 1
    %v9618 = vpop.permute.xlu0 %9617
    %9619 = vrot.lane.b32.xlu0 %v9566, 1
    %v9620 = vpop.permute.xlu0 %9619
    %9621 = vrot.lane.b32.xlu0 %v9567, 1
    %v9622 = vpop.permute.xlu0 %9621
    %9623 = vrot.lane.b32.xlu0 %v9568, 1
    %v9624 = vpop.permute.xlu0 %9623
    %9625 = vrot.lane.b32.xlu0 %v9569, 1
    %v9626 = vpop.permute.xlu0 %9625
    %9627 = vrot.lane.b32.xlu0 %v9570, 1
    %v9628 = vpop.permute.xlu0 %9627
    %9629 = vrot.lane.b32.xlu0 %v9571, 1
    %v9630 = vpop.permute.xlu0 %9629
    %9631 = vrot.lane.b32.xlu0 %v9572, 1
    %v9632 = vpop.permute.xlu0 %9631
    %9633 = vrot.lane.b32.xlu0 %v9573, 1
    %v9634 = vpop.permute.xlu0 %9633
    %9635 = vrot.lane.b32.xlu0 %v9574, 1
    %v9636 = vpop.permute.xlu0 %9635
    %9637 = vrot.lane.b32.xlu0 %v9575, 1
    %v9638 = vpop.permute.xlu0 %9637
    %9639 = vrot.lane.b32.xlu0 %v9576, 1
    %v9640 = vpop.permute.xlu0 %9639
    %9641 = vrot.lane.b32.xlu0 %v9577, 1
    %v9642 = vpop.permute.xlu0 %9641
    %9643 = vrot.lane.b32.xlu0 %v9578, 1
    %v9644 = vpop.permute.xlu0 %9643
    %v9645 = vsel %vm2702, %v9602, %v9604
    %v9646 = vsel %vm2702, %v9606, %v9608
    %v9647 = vsel %vm2702, %v9610, %v9612
    %v9648 = vsel %vm2702, %v9614, %v9616
    %v9649 = vsel %vm2702, %v9618, %v9620
    %v9650 = vsel %vm2702, %v9622, %v9624
    %v9651 = vsel %vm2702, %v9626, %v9628
    %v9652 = vsel %vm2702, %v9630, %v9632
    %v9653 = vsel %vm2702, %v9634, %v9636
    %v9654 = vsel %vm2702, %v9638, %v9640
    %v9655 = vsel %vm2702, %v9642, %v9644
    %v9678 = vadd.f32 %v9436, %v9602
    %v9679 = vadd.f32 %v9437, %v9645
    %v9680 = vadd.f32 %v9438, %v9606
    %v9681 = vadd.f32 %v9439, %v9646
    %v9682 = vadd.f32 %v9440, %v9610
    %v9683 = vadd.f32 %v9441, %v9647
    %v9684 = vadd.f32 %v9442, %v9614
    %v9685 = vadd.f32 %v9443, %v9648
    %v9686 = vadd.f32 %v9444, %v9618
    %v9687 = vadd.f32 %v9445, %v9649
    %v9688 = vadd.f32 %v9446, %v9622
    %v9689 = vadd.f32 %v9447, %v9650
    %v9690 = vadd.f32 %v9448, %v9626
    %v9691 = vadd.f32 %v9449, %v9651
    %v9692 = vadd.f32 %v9450, %v9630
    %v9693 = vadd.f32 %v9451, %v9652
    %v9694 = vadd.f32 %v9452, %v9634
    %v9695 = vadd.f32 %v9453, %v9653
    %v9696 = vadd.f32 %v9454, %v9638
    %v9697 = vadd.f32 %v9455, %v9654
    %v9698 = vadd.f32 %v9456, %v9642
    %v9699 = vadd.f32 %v9457, %v9655
    %v9700 = vld [vmem:[#allocation6] sm:$0xe0]
    %v9701 = vld [vmem:[#allocation6 + $0x8] sm:$0xe0]
    %v9702 = vld [vmem:[#allocation6 + $0x10] sm:$0xff]
    %v9703 = vld [vmem:[#allocation6 + $0x18] sm:$0xff]
    %v9704 = vld [vmem:[#allocation6 + $0x20] sm:$0xff]
    %v9705 = vld [vmem:[#allocation6 + $0x28] sm:$0xff]
    %v9706 = vld [vmem:[#allocation6 + $0x30] sm:$0xff]
    %v9707 = vld [vmem:[#allocation6 + $0x38] sm:$0xff]
    %v9708 = vld [vmem:[#allocation6 + $0x40] sm:$0xff]
    %v9709 = vld [vmem:[#allocation6 + $0x48] sm:$0xff]
    %v9710 = vld [vmem:[#allocation6 + $0x50] sm:$0xff]
    %v9711 = vld [vmem:[#allocation6 + $0x58] sm:$0xff]
    %v9712 = vld [vmem:[#allocation6 + $0x60] sm:$0xff]
    %v9713 = vld [vmem:[#allocation6 + $0x68] sm:$0xff]
    %v9714 = vld [vmem:[#allocation6 + $0x70] sm:$0xff]
    %v9715 = vld [vmem:[#allocation6 + $0x78] sm:$0xff]
    %v9716 = vld [vmem:[#allocation6 + $0x80] sm:$0xff]
    %v9717 = vld [vmem:[#allocation6 + $0x88] sm:$0xff]
    %v9718 = vld [vmem:[#allocation6 + $0x90] sm:$0xff]
    %v9719 = vld [vmem:[#allocation6 + $0x98] sm:$0xff]
    %v9720 = vld [vmem:[#allocation6 + $0xa0] sm:$0x1f]
    %v9721 = vld [vmem:[#allocation6 + $0xa8] sm:$0x1f]
    %v9722 = vmul.f32 %v9700, 0.26601171
    %v9723 = vmul.f32 %v9701, 0.26601171
    %v9724 = vmul.f32 %v9702, 0.26601171
    %v9725 = vmul.f32 %v9703, 0.26601171
    %v9726 = vmul.f32 %v9704, 0.26601171
    %v9727 = vmul.f32 %v9705, 0.26601171
    %v9728 = vmul.f32 %v9706, 0.26601171
    %v9729 = vmul.f32 %v9707, 0.26601171
    %v9730 = vmul.f32 %v9708, 0.26601171
    %v9731 = vmul.f32 %v9709, 0.26601171
    %v9732 = vmul.f32 %v9710, 0.26601171
    %v9733 = vmul.f32 %v9711, 0.26601171
    %v9734 = vmul.f32 %v9712, 0.26601171
    %v9735 = vmul.f32 %v9713, 0.26601171
    %v9736 = vmul.f32 %v9714, 0.26601171
    %v9737 = vmul.f32 %v9715, 0.26601171
    %v9738 = vmul.f32 %v9716, 0.26601171
    %v9739 = vmul.f32 %v9717, 0.26601171
    %v9740 = vmul.f32 %v9718, 0.26601171
    %v9741 = vmul.f32 %v9719, 0.26601171
    %v9742 = vmul.f32 %v9720, 0.26601171
    %v9743 = vmul.f32 %v9721, 0.26601171
    %v9744 = vld [vmem:[#allocation6] sm:$0xff]
    %v9745 = vld [vmem:[#allocation6 + $0x8] sm:$0xff]
    %v9746 = vld [vmem:[#allocation6 + $0x10] sm:$0xfc]
    %v9747 = vld [vmem:[#allocation6 + $0x18] sm:$0xfc]
    %v9748 = vld [vmem:[#allocation6 + $0x20] sm:$0xff]
    %v9749 = vld [vmem:[#allocation6 + $0x28] sm:$0xff]
    %v9750 = vld [vmem:[#allocation6 + $0x30] sm:$0xff]
    %v9751 = vld [vmem:[#allocation6 + $0x38] sm:$0xff]
    %v9752 = vld [vmem:[#allocation6 + $0x40] sm:$0xff]
    %v9753 = vld [vmem:[#allocation6 + $0x48] sm:$0xff]
    %v9754 = vld [vmem:[#allocation6 + $0x50] sm:$0xff]
    %v9755 = vld [vmem:[#allocation6 + $0x58] sm:$0xff]
    %v9756 = vld [vmem:[#allocation6 + $0x60] sm:$0xff]
    %v9757 = vld [vmem:[#allocation6 + $0x68] sm:$0xff]
    %v9758 = vld [vmem:[#allocation6 + $0x70] sm:$0xff]
    %v9759 = vld [vmem:[#allocation6 + $0x78] sm:$0xff]
    %v9760 = vld [vmem:[#allocation6 + $0x80] sm:$0xff]
    %v9761 = vld [vmem:[#allocation6 + $0x88] sm:$0xff]
    %v9762 = vld [vmem:[#allocation6 + $0x90] sm:$0xff]
    %v9763 = vld [vmem:[#allocation6 + $0x98] sm:$0xff]
    %v9764 = vld [vmem:[#allocation6 + $0xa0] sm:$0xff]
    %v9765 = vld [vmem:[#allocation6 + $0xa8] sm:$0xff]
    %v9766 = vld [vmem:[#allocation6 + $0xb0] sm:$0x3]
    %v9767 = vld [vmem:[#allocation6 + $0xb8] sm:$0x3]
    %v9790 = vrot.slane %v9746, 2
    %v9791 = vrot.slane %v9748, 2
    %v9792 = vsel %vm519, %v9790, %v9791
    %v9793 = vrot.slane %v9747, 2
    %v9794 = vrot.slane %v9749, 2
    %v9795 = vsel %vm519, %v9793, %v9794
    %v9796 = vrot.slane %v9750, 2
    %v9797 = vsel %vm519, %v9791, %v9796
    %v9798 = vrot.slane %v9751, 2
    %v9799 = vsel %vm519, %v9794, %v9798
    %v9800 = vrot.slane %v9752, 2
    %v9801 = vsel %vm519, %v9796, %v9800
    %v9802 = vrot.slane %v9753, 2
    %v9803 = vsel %vm519, %v9798, %v9802
    %v9804 = vrot.slane %v9754, 2
    %v9805 = vsel %vm519, %v9800, %v9804
    %v9806 = vrot.slane %v9755, 2
    %v9807 = vsel %vm519, %v9802, %v9806
    %v9808 = vrot.slane %v9756, 2
    %v9809 = vsel %vm519, %v9804, %v9808
    %v9810 = vrot.slane %v9757, 2
    %v9811 = vsel %vm519, %v9806, %v9810
    %v9812 = vrot.slane %v9758, 2
    %v9813 = vsel %vm519, %v9808, %v9812
    %v9814 = vrot.slane %v9759, 2
    %v9815 = vsel %vm519, %v9810, %v9814
    %v9816 = vrot.slane %v9760, 2
    %v9817 = vsel %vm519, %v9812, %v9816
    %v9818 = vrot.slane %v9761, 2
    %v9819 = vsel %vm519, %v9814, %v9818
    %v9820 = vrot.slane %v9762, 2
    %v9821 = vsel %vm519, %v9816, %v9820
    %v9822 = vrot.slane %v9763, 2
    %v9823 = vsel %vm519, %v9818, %v9822
    %v9824 = vrot.slane %v9764, 2
    %v9825 = vsel %vm519, %v9820, %v9824
    %v9826 = vrot.slane %v9765, 2
    %v9827 = vsel %vm519, %v9822, %v9826
    %v9828 = vrot.slane %v9766, 2
    %v9829 = vsel %vm519, %v9824, %v9828
    %v9830 = vrot.slane %v9767, 2
    %v9831 = vsel %vm519, %v9826, %v9830
    %v9852 = vadd.f32 %v9744, %v9792
    %v9853 = vadd.f32 %v9745, %v9795
    %v9854 = vadd.f32 %v9702, %v9797
    %v9855 = vadd.f32 %v9703, %v9799
    %v9856 = vadd.f32 %v9704, %v9801
    %v9857 = vadd.f32 %v9705, %v9803
    %v9858 = vadd.f32 %v9706, %v9805
    %v9859 = vadd.f32 %v9707, %v9807
    %v9860 = vadd.f32 %v9708, %v9809
    %v9861 = vadd.f32 %v9709, %v9811
    %v9862 = vadd.f32 %v9710, %v9813
    %v9863 = vadd.f32 %v9711, %v9815
    %v9864 = vadd.f32 %v9712, %v9817
    %v9865 = vadd.f32 %v9713, %v9819
    %v9866 = vadd.f32 %v9714, %v9821
    %v9867 = vadd.f32 %v9715, %v9823
    %v9868 = vadd.f32 %v9716, %v9825
    %v9869 = vadd.f32 %v9717, %v9827
    %v9870 = vadd.f32 %v9718, %v9829
    %v9871 = vadd.f32 %v9719, %v9831
    %v9872 = vmul.f32 %v9852, 0.0010283801
    %v9873 = vmul.f32 %v9853, 0.0010283801
    %v9874 = vmul.f32 %v9854, 0.0010283801
    %v9875 = vmul.f32 %v9855, 0.0010283801
    %v9876 = vmul.f32 %v9856, 0.0010283801
    %v9877 = vmul.f32 %v9857, 0.0010283801
    %v9878 = vmul.f32 %v9858, 0.0010283801
    %v9879 = vmul.f32 %v9859, 0.0010283801
    %v9880 = vmul.f32 %v9860, 0.0010283801
    %v9881 = vmul.f32 %v9861, 0.0010283801
    %v9882 = vmul.f32 %v9862, 0.0010283801
    %v9883 = vmul.f32 %v9863, 0.0010283801
    %v9884 = vmul.f32 %v9864, 0.0010283801
    %v9885 = vmul.f32 %v9865, 0.0010283801
    %v9886 = vmul.f32 %v9866, 0.0010283801
    %v9887 = vmul.f32 %v9867, 0.0010283801
    %v9888 = vmul.f32 %v9868, 0.0010283801
    %v9889 = vmul.f32 %v9869, 0.0010283801
    %v9890 = vmul.f32 %v9870, 0.0010283801
    %v9891 = vmul.f32 %v9871, 0.0010283801
    %v9912 = vrot.slane %v9872, 3
    %v9913 = vrot.slane %v9873, 3
    %v9914 = vrot.slane %v9874, 3
    %v9915 = vsel %vm642, %v9912, %v9914
    %v9916 = vrot.slane %v9875, 3
    %v9917 = vsel %vm642, %v9913, %v9916
    %v9918 = vrot.slane %v9876, 3
    %v9919 = vsel %vm642, %v9914, %v9918
    %v9920 = vrot.slane %v9877, 3
    %v9921 = vsel %vm642, %v9916, %v9920
    %v9922 = vrot.slane %v9878, 3
    %v9923 = vsel %vm642, %v9918, %v9922
    %v9924 = vrot.slane %v9879, 3
    %v9925 = vsel %vm642, %v9920, %v9924
    %v9926 = vrot.slane %v9880, 3
    %v9927 = vsel %vm642, %v9922, %v9926
    %v9928 = vrot.slane %v9881, 3
    %v9929 = vsel %vm642, %v9924, %v9928
    %v9930 = vrot.slane %v9882, 3
    %v9931 = vsel %vm642, %v9926, %v9930
    %v9932 = vrot.slane %v9883, 3
    %v9933 = vsel %vm642, %v9928, %v9932
    %v9934 = vrot.slane %v9884, 3
    %v9935 = vsel %vm642, %v9930, %v9934
    %v9936 = vrot.slane %v9885, 3
    %v9937 = vsel %vm642, %v9932, %v9936
    %v9938 = vrot.slane %v9886, 3
    %v9939 = vsel %vm642, %v9934, %v9938
    %v9940 = vrot.slane %v9887, 3
    %v9941 = vsel %vm642, %v9936, %v9940
    %v9942 = vrot.slane %v9888, 3
    %v9943 = vsel %vm642, %v9938, %v9942
    %v9944 = vrot.slane %v9889, 3
    %v9945 = vsel %vm642, %v9940, %v9944
    %v9946 = vrot.slane %v9890, 3
    %v9947 = vsel %vm642, %v9942, %v9946
    %v9948 = vrot.slane %v9891, 3
    %v9949 = vsel %vm642, %v9944, %v9948
    %v9972 = vadd.f32 %v9722, %v9912
    %v9973 = vadd.f32 %v9723, %v9913
    %v9974 = vadd.f32 %v9724, %v9915
    %v9975 = vadd.f32 %v9725, %v9917
    %v9976 = vadd.f32 %v9726, %v9919
    %v9977 = vadd.f32 %v9727, %v9921
    %v9978 = vadd.f32 %v9728, %v9923
    %v9979 = vadd.f32 %v9729, %v9925
    %v9980 = vadd.f32 %v9730, %v9927
    %v9981 = vadd.f32 %v9731, %v9929
    %v9982 = vadd.f32 %v9732, %v9931
    %v9983 = vadd.f32 %v9733, %v9933
    %v9984 = vadd.f32 %v9734, %v9935
    %v9985 = vadd.f32 %v9735, %v9937
    %v9986 = vadd.f32 %v9736, %v9939
    %v9987 = vadd.f32 %v9737, %v9941
    %v9988 = vadd.f32 %v9738, %v9943
    %v9989 = vadd.f32 %v9739, %v9945
    %v9990 = vadd.f32 %v9740, %v9947
    %v9991 = vadd.f32 %v9741, %v9949
    %v9992 = vadd.f32 %v9742, %v9946
    %v9993 = vadd.f32 %v9743, %v9948
    %v9994 = vld [vmem:[#allocation6] sm:$0xfe]
    %v9995 = vld [vmem:[#allocation6 + $0x8] sm:$0xfe]
    %v9996 = vld [vmem:[#allocation6 + $0xa0] sm:$0x1]
    %v9997 = vld [vmem:[#allocation6 + $0xa8] sm:$0x1]
    %v9998 = vld [vmem:[#allocation6 + $0x10] sm:$0xfe]
    %v9999 = vld [vmem:[#allocation6 + $0x18] sm:$0xfe]
    %v10000 = vld [vmem:[#allocation6 + $0xb0] sm:$0x1]
    %v10001 = vld [vmem:[#allocation6 + $0xb8] sm:$0x1]
    %v10002 = vadd.f32 %v9994, %v9998
    %v10003 = vadd.f32 %v9995, %v9999
    %v10004 = vadd.f32 %v9702, %v9748
    %v10005 = vadd.f32 %v9703, %v9749
    %v10006 = vadd.f32 %v9704, %v9750
    %v10007 = vadd.f32 %v9705, %v9751
    %v10008 = vadd.f32 %v9706, %v9752
    %v10009 = vadd.f32 %v9707, %v9753
    %v10010 = vadd.f32 %v9708, %v9754
    %v10011 = vadd.f32 %v9709, %v9755
    %v10012 = vadd.f32 %v9710, %v9756
    %v10013 = vadd.f32 %v9711, %v9757
    %v10014 = vadd.f32 %v9712, %v9758
    %v10015 = vadd.f32 %v9713, %v9759
    %v10016 = vadd.f32 %v9714, %v9760
    %v10017 = vadd.f32 %v9715, %v9761
    %v10018 = vadd.f32 %v9716, %v9762
    %v10019 = vadd.f32 %v9717, %v9763
    %v10020 = vadd.f32 %v9718, %v9764
    %v10021 = vadd.f32 %v9719, %v9765
    %v10022 = vadd.f32 %v9996, %v10000
    %v10023 = vadd.f32 %v9997, %v10001
    %v10024 = vmul.f32 %v10002, 0.007598758
    %v10025 = vmul.f32 %v10003, 0.007598758
    %v10026 = vmul.f32 %v10004, 0.007598758
    %v10027 = vmul.f32 %v10005, 0.007598758
    %v10028 = vmul.f32 %v10006, 0.007598758
    %v10029 = vmul.f32 %v10007, 0.007598758
    %v10030 = vmul.f32 %v10008, 0.007598758
    %v10031 = vmul.f32 %v10009, 0.007598758
    %v10032 = vmul.f32 %v10010, 0.007598758
    %v10033 = vmul.f32 %v10011, 0.007598758
    %v10034 = vmul.f32 %v10012, 0.007598758
    %v10035 = vmul.f32 %v10013, 0.007598758
    %v10036 = vmul.f32 %v10014, 0.007598758
    %v10037 = vmul.f32 %v10015, 0.007598758
    %v10038 = vmul.f32 %v10016, 0.007598758
    %v10039 = vmul.f32 %v10017, 0.007598758
    %v10040 = vmul.f32 %v10018, 0.007598758
    %v10041 = vmul.f32 %v10019, 0.007598758
    %v10042 = vmul.f32 %v10020, 0.007598758
    %v10043 = vmul.f32 %v10021, 0.007598758
    %v10044 = vmul.f32 %v10022, 0.007598758
    %v10045 = vmul.f32 %v10023, 0.007598758
    %v10068 = vrot.slane %v10024, 4
    %v10069 = vrot.slane %v10025, 4
    %v10070 = vrot.slane %v10026, 4
    %v10071 = vsel %vm799, %v10068, %v10070
    %v10072 = vrot.slane %v10027, 4
    %v10073 = vsel %vm799, %v10069, %v10072
    %v10074 = vrot.slane %v10028, 4
    %v10075 = vsel %vm799, %v10070, %v10074
    %v10076 = vrot.slane %v10029, 4
    %v10077 = vsel %vm799, %v10072, %v10076
    %v10078 = vrot.slane %v10030, 4
    %v10079 = vsel %vm799, %v10074, %v10078
    %v10080 = vrot.slane %v10031, 4
    %v10081 = vsel %vm799, %v10076, %v10080
    %v10082 = vrot.slane %v10032, 4
    %v10083 = vsel %vm799, %v10078, %v10082
    %v10084 = vrot.slane %v10033, 4
    %v10085 = vsel %vm799, %v10080, %v10084
    %v10086 = vrot.slane %v10034, 4
    %v10087 = vsel %vm799, %v10082, %v10086
    %v10088 = vrot.slane %v10035, 4
    %v10089 = vsel %vm799, %v10084, %v10088
    %v10090 = vrot.slane %v10036, 4
    %v10091 = vsel %vm799, %v10086, %v10090
    %v10092 = vrot.slane %v10037, 4
    %v10093 = vsel %vm799, %v10088, %v10092
    %v10094 = vrot.slane %v10038, 4
    %v10095 = vsel %vm799, %v10090, %v10094
    %v10096 = vrot.slane %v10039, 4
    %v10097 = vsel %vm799, %v10092, %v10096
    %v10098 = vrot.slane %v10040, 4
    %v10099 = vsel %vm799, %v10094, %v10098
    %v10100 = vrot.slane %v10041, 4
    %v10101 = vsel %vm799, %v10096, %v10100
    %v10102 = vrot.slane %v10042, 4
    %v10103 = vsel %vm799, %v10098, %v10102
    %v10104 = vrot.slane %v10043, 4
    %v10105 = vsel %vm799, %v10100, %v10104
    %v10106 = vrot.slane %v10044, 4
    %v10107 = vsel %vm799, %v10102, %v10106
    %v10108 = vrot.slane %v10045, 4
    %v10109 = vsel %vm799, %v10104, %v10108
    %v10132 = vadd.f32 %v9972, %v10068
    %v10133 = vadd.f32 %v9973, %v10069
    %v10134 = vadd.f32 %v9974, %v10071
    %v10135 = vadd.f32 %v9975, %v10073
    %v10136 = vadd.f32 %v9976, %v10075
    %v10137 = vadd.f32 %v9977, %v10077
    %v10138 = vadd.f32 %v9978, %v10079
    %v10139 = vadd.f32 %v9979, %v10081
    %v10140 = vadd.f32 %v9980, %v10083
    %v10141 = vadd.f32 %v9981, %v10085
    %v10142 = vadd.f32 %v9982, %v10087
    %v10143 = vadd.f32 %v9983, %v10089
    %v10144 = vadd.f32 %v9984, %v10091
    %v10145 = vadd.f32 %v9985, %v10093
    %v10146 = vadd.f32 %v9986, %v10095
    %v10147 = vadd.f32 %v9987, %v10097
    %v10148 = vadd.f32 %v9988, %v10099
    %v10149 = vadd.f32 %v9989, %v10101
    %v10150 = vadd.f32 %v9990, %v10103
    %v10151 = vadd.f32 %v9991, %v10105
    %v10152 = vadd.f32 %v9992, %v10107
    %v10153 = vadd.f32 %v9993, %v10109
    %v10154 = vld [vmem:[#allocation6] sm:$0xfc]
    %v10155 = vld [vmem:[#allocation6 + $0x8] sm:$0xfc]
    %v10156 = vld [vmem:[#allocation6 + $0xa0] sm:$0x3]
    %v10157 = vld [vmem:[#allocation6 + $0xa8] sm:$0x3]
    %v10158 = vld [vmem:[#allocation6 + $0xa0] sm:$0xff]
    %v10159 = vld [vmem:[#allocation6 + $0xa8] sm:$0xff]
    %v10180 = vrot.slane %v9702, 6
    %v10181 = vrot.slane %v9703, 6
    %v10182 = vrot.slane %v9704, 6
    %v10183 = vsel %vm912, %v10180, %v10182
    %v10184 = vrot.slane %v9705, 6
    %v10185 = vsel %vm912, %v10181, %v10184
    %v10186 = vrot.slane %v9706, 6
    %v10187 = vsel %vm912, %v10182, %v10186
    %v10188 = vrot.slane %v9707, 6
    %v10189 = vsel %vm912, %v10184, %v10188
    %v10190 = vrot.slane %v9708, 6
    %v10191 = vsel %vm912, %v10186, %v10190
    %v10192 = vrot.slane %v9709, 6
    %v10193 = vsel %vm912, %v10188, %v10192
    %v10194 = vrot.slane %v9710, 6
    %v10195 = vsel %vm912, %v10190, %v10194
    %v10196 = vrot.slane %v9711, 6
    %v10197 = vsel %vm912, %v10192, %v10196
    %v10198 = vrot.slane %v9712, 6
    %v10199 = vsel %vm912, %v10194, %v10198
    %v10200 = vrot.slane %v9713, 6
    %v10201 = vsel %vm912, %v10196, %v10200
    %v10202 = vrot.slane %v9714, 6
    %v10203 = vsel %vm912, %v10198, %v10202
    %v10204 = vrot.slane %v9715, 6
    %v10205 = vsel %vm912, %v10200, %v10204
    %v10206 = vrot.slane %v9716, 6
    %v10207 = vsel %vm912, %v10202, %v10206
    %v10208 = vrot.slane %v9717, 6
    %v10209 = vsel %vm912, %v10204, %v10208
    %v10210 = vrot.slane %v9718, 6
    %v10211 = vsel %vm912, %v10206, %v10210
    %v10212 = vrot.slane %v9719, 6
    %v10213 = vsel %vm912, %v10208, %v10212
    %v10214 = vrot.slane %v10158, 6
    %v10215 = vsel %vm912, %v10210, %v10214
    %v10216 = vrot.slane %v10159, 6
    %v10217 = vsel %vm912, %v10212, %v10216
    %v10240 = vadd.f32 %v10154, %v10180
    %v10241 = vadd.f32 %v10155, %v10181
    %v10242 = vadd.f32 %v9702, %v10183
    %v10243 = vadd.f32 %v9703, %v10185
    %v10244 = vadd.f32 %v9704, %v10187
    %v10245 = vadd.f32 %v9705, %v10189
    %v10246 = vadd.f32 %v9706, %v10191
    %v10247 = vadd.f32 %v9707, %v10193
    %v10248 = vadd.f32 %v9708, %v10195
    %v10249 = vadd.f32 %v9709, %v10197
    %v10250 = vadd.f32 %v9710, %v10199
    %v10251 = vadd.f32 %v9711, %v10201
    %v10252 = vadd.f32 %v9712, %v10203
    %v10253 = vadd.f32 %v9713, %v10205
    %v10254 = vadd.f32 %v9714, %v10207
    %v10255 = vadd.f32 %v9715, %v10209
    %v10256 = vadd.f32 %v9716, %v10211
    %v10257 = vadd.f32 %v9717, %v10213
    %v10258 = vadd.f32 %v9718, %v10215
    %v10259 = vadd.f32 %v9719, %v10217
    %v10260 = vadd.f32 %v10156, %v10214
    %v10261 = vadd.f32 %v10157, %v10216
    %v10262 = vmul.f32 %v10240, 0.036000773
    %v10263 = vmul.f32 %v10241, 0.036000773
    %v10264 = vmul.f32 %v10242, 0.036000773
    %v10265 = vmul.f32 %v10243, 0.036000773
    %v10266 = vmul.f32 %v10244, 0.036000773
    %v10267 = vmul.f32 %v10245, 0.036000773
    %v10268 = vmul.f32 %v10246, 0.036000773
    %v10269 = vmul.f32 %v10247, 0.036000773
    %v10270 = vmul.f32 %v10248, 0.036000773
    %v10271 = vmul.f32 %v10249, 0.036000773
    %v10272 = vmul.f32 %v10250, 0.036000773
    %v10273 = vmul.f32 %v10251, 0.036000773
    %v10274 = vmul.f32 %v10252, 0.036000773
    %v10275 = vmul.f32 %v10253, 0.036000773
    %v10276 = vmul.f32 %v10254, 0.036000773
    %v10277 = vmul.f32 %v10255, 0.036000773
    %v10278 = vmul.f32 %v10256, 0.036000773
    %v10279 = vmul.f32 %v10257, 0.036000773
    %v10280 = vmul.f32 %v10258, 0.036000773
    %v10281 = vmul.f32 %v10259, 0.036000773
    %v10282 = vmul.f32 %v10260, 0.036000773
    %v10283 = vmul.f32 %v10261, 0.036000773
    %v10306 = vrot.slane %v10262, 5
    %v10307 = vrot.slane %v10263, 5
    %v10308 = vrot.slane %v10264, 5
    %v10309 = vsel %vm1039, %v10306, %v10308
    %v10310 = vrot.slane %v10265, 5
    %v10311 = vsel %vm1039, %v10307, %v10310
    %v10312 = vrot.slane %v10266, 5
    %v10313 = vsel %vm1039, %v10308, %v10312
    %v10314 = vrot.slane %v10267, 5
    %v10315 = vsel %vm1039, %v10310, %v10314
    %v10316 = vrot.slane %v10268, 5
    %v10317 = vsel %vm1039, %v10312, %v10316
    %v10318 = vrot.slane %v10269, 5
    %v10319 = vsel %vm1039, %v10314, %v10318
    %v10320 = vrot.slane %v10270, 5
    %v10321 = vsel %vm1039, %v10316, %v10320
    %v10322 = vrot.slane %v10271, 5
    %v10323 = vsel %vm1039, %v10318, %v10322
    %v10324 = vrot.slane %v10272, 5
    %v10325 = vsel %vm1039, %v10320, %v10324
    %v10326 = vrot.slane %v10273, 5
    %v10327 = vsel %vm1039, %v10322, %v10326
    %v10328 = vrot.slane %v10274, 5
    %v10329 = vsel %vm1039, %v10324, %v10328
    %v10330 = vrot.slane %v10275, 5
    %v10331 = vsel %vm1039, %v10326, %v10330
    %v10332 = vrot.slane %v10276, 5
    %v10333 = vsel %vm1039, %v10328, %v10332
    %v10334 = vrot.slane %v10277, 5
    %v10335 = vsel %vm1039, %v10330, %v10334
    %v10336 = vrot.slane %v10278, 5
    %v10337 = vsel %vm1039, %v10332, %v10336
    %v10338 = vrot.slane %v10279, 5
    %v10339 = vsel %vm1039, %v10334, %v10338
    %v10340 = vrot.slane %v10280, 5
    %v10341 = vsel %vm1039, %v10336, %v10340
    %v10342 = vrot.slane %v10281, 5
    %v10343 = vsel %vm1039, %v10338, %v10342
    %v10344 = vrot.slane %v10282, 5
    %v10345 = vsel %vm1039, %v10340, %v10344
    %v10346 = vrot.slane %v10283, 5
    %v10347 = vsel %vm1039, %v10342, %v10346
    %v10370 = vadd.f32 %v10132, %v10306
    %v10371 = vadd.f32 %v10133, %v10307
    %v10372 = vadd.f32 %v10134, %v10309
    %v10373 = vadd.f32 %v10135, %v10311
    %v10374 = vadd.f32 %v10136, %v10313
    %v10375 = vadd.f32 %v10137, %v10315
    %v10376 = vadd.f32 %v10138, %v10317
    %v10377 = vadd.f32 %v10139, %v10319
    %v10378 = vadd.f32 %v10140, %v10321
    %v10379 = vadd.f32 %v10141, %v10323
    %v10380 = vadd.f32 %v10142, %v10325
    %v10381 = vadd.f32 %v10143, %v10327
    %v10382 = vadd.f32 %v10144, %v10329
    %v10383 = vadd.f32 %v10145, %v10331
    %v10384 = vadd.f32 %v10146, %v10333
    %v10385 = vadd.f32 %v10147, %v10335
    %v10386 = vadd.f32 %v10148, %v10337
    %v10387 = vadd.f32 %v10149, %v10339
    %v10388 = vadd.f32 %v10150, %v10341
    %v10389 = vadd.f32 %v10151, %v10343
    %v10390 = vadd.f32 %v10152, %v10345
    %v10391 = vadd.f32 %v10153, %v10347
    %v10392 = vld [vmem:[#allocation6] sm:$0xf8]
    %v10393 = vld [vmem:[#allocation6 + $0x8] sm:$0xf8]
    %v10394 = vld [vmem:[#allocation6 + $0xa0] sm:$0x7]
    %v10395 = vld [vmem:[#allocation6 + $0xa8] sm:$0x7]
    %v10396 = vld [vmem:[#allocation6] sm:$0x80]
    %v10397 = vld [vmem:[#allocation6 + $0x8] sm:$0x80]
    %v10398 = vld [vmem:[#allocation6 + $0xa0] sm:$0x7f]
    %v10399 = vld [vmem:[#allocation6 + $0xa8] sm:$0x7f]
    %v10404 = vrot.slane %v10396, 4
    %v10405 = vrot.slane %v9702, 4
    %v10406 = vsel %vm799, %v10404, %v10405
    %v10407 = vrot.slane %v10397, 4
    %v10408 = vrot.slane %v9703, 4
    %v10409 = vsel %vm799, %v10407, %v10408
    %v10410 = vrot.slane %v9704, 4
    %v10411 = vsel %vm799, %v10405, %v10410
    %v10412 = vrot.slane %v9705, 4
    %v10413 = vsel %vm799, %v10408, %v10412
    %v10414 = vrot.slane %v9706, 4
    %v10415 = vsel %vm799, %v10410, %v10414
    %v10416 = vrot.slane %v9707, 4
    %v10417 = vsel %vm799, %v10412, %v10416
    %v10418 = vrot.slane %v9708, 4
    %v10419 = vsel %vm799, %v10414, %v10418
    %v10420 = vrot.slane %v9709, 4
    %v10421 = vsel %vm799, %v10416, %v10420
    %v10422 = vrot.slane %v9710, 4
    %v10423 = vsel %vm799, %v10418, %v10422
    %v10424 = vrot.slane %v9711, 4
    %v10425 = vsel %vm799, %v10420, %v10424
    %v10426 = vrot.slane %v9712, 4
    %v10427 = vsel %vm799, %v10422, %v10426
    %v10428 = vrot.slane %v9713, 4
    %v10429 = vsel %vm799, %v10424, %v10428
    %v10430 = vrot.slane %v9714, 4
    %v10431 = vsel %vm799, %v10426, %v10430
    %v10432 = vrot.slane %v9715, 4
    %v10433 = vsel %vm799, %v10428, %v10432
    %v10434 = vrot.slane %v9716, 4
    %v10435 = vsel %vm799, %v10430, %v10434
    %v10436 = vrot.slane %v9717, 4
    %v10437 = vsel %vm799, %v10432, %v10436
    %v10438 = vrot.slane %v9718, 4
    %v10439 = vsel %vm799, %v10434, %v10438
    %v10440 = vrot.slane %v9719, 4
    %v10441 = vsel %vm799, %v10436, %v10440
    %v10442 = vrot.slane %v10398, 4
    %v10443 = vsel %vm799, %v10438, %v10442
    %v10444 = vrot.slane %v10399, 4
    %v10445 = vsel %vm799, %v10440, %v10444
    %v10468 = vadd.f32 %v10392, %v10406
    %v10469 = vadd.f32 %v10393, %v10409
    %v10470 = vadd.f32 %v9702, %v10411
    %v10471 = vadd.f32 %v9703, %v10413
    %v10472 = vadd.f32 %v9704, %v10415
    %v10473 = vadd.f32 %v9705, %v10417
    %v10474 = vadd.f32 %v9706, %v10419
    %v10475 = vadd.f32 %v9707, %v10421
    %v10476 = vadd.f32 %v9708, %v10423
    %v10477 = vadd.f32 %v9709, %v10425
    %v10478 = vadd.f32 %v9710, %v10427
    %v10479 = vadd.f32 %v9711, %v10429
    %v10480 = vadd.f32 %v9712, %v10431
    %v10481 = vadd.f32 %v9713, %v10433
    %v10482 = vadd.f32 %v9714, %v10435
    %v10483 = vadd.f32 %v9715, %v10437
    %v10484 = vadd.f32 %v9716, %v10439
    %v10485 = vadd.f32 %v9717, %v10441
    %v10486 = vadd.f32 %v9718, %v10443
    %v10487 = vadd.f32 %v9719, %v10445
    %v10488 = vadd.f32 %v10394, %v10442
    %v10489 = vadd.f32 %v10395, %v10444
    %v10490 = vmul.f32 %v10468, 0.10936069
    %v10491 = vmul.f32 %v10469, 0.10936069
    %v10492 = vmul.f32 %v10470, 0.10936069
    %v10493 = vmul.f32 %v10471, 0.10936069
    %v10494 = vmul.f32 %v10472, 0.10936069
    %v10495 = vmul.f32 %v10473, 0.10936069
    %v10496 = vmul.f32 %v10474, 0.10936069
    %v10497 = vmul.f32 %v10475, 0.10936069
    %v10498 = vmul.f32 %v10476, 0.10936069
    %v10499 = vmul.f32 %v10477, 0.10936069
    %v10500 = vmul.f32 %v10478, 0.10936069
    %v10501 = vmul.f32 %v10479, 0.10936069
    %v10502 = vmul.f32 %v10480, 0.10936069
    %v10503 = vmul.f32 %v10481, 0.10936069
    %v10504 = vmul.f32 %v10482, 0.10936069
    %v10505 = vmul.f32 %v10483, 0.10936069
    %v10506 = vmul.f32 %v10484, 0.10936069
    %v10507 = vmul.f32 %v10485, 0.10936069
    %v10508 = vmul.f32 %v10486, 0.10936069
    %v10509 = vmul.f32 %v10487, 0.10936069
    %v10510 = vmul.f32 %v10488, 0.10936069
    %v10511 = vmul.f32 %v10489, 0.10936069
    %v10534 = vrot.slane %v10490, 6
    %v10535 = vrot.slane %v10491, 6
    %v10536 = vrot.slane %v10492, 6
    %v10537 = vsel %vm912, %v10534, %v10536
    %v10538 = vrot.slane %v10493, 6
    %v10539 = vsel %vm912, %v10535, %v10538
    %v10540 = vrot.slane %v10494, 6
    %v10541 = vsel %vm912, %v10536, %v10540
    %v10542 = vrot.slane %v10495, 6
    %v10543 = vsel %vm912, %v10538, %v10542
    %v10544 = vrot.slane %v10496, 6
    %v10545 = vsel %vm912, %v10540, %v10544
    %v10546 = vrot.slane %v10497, 6
    %v10547 = vsel %vm912, %v10542, %v10546
    %v10548 = vrot.slane %v10498, 6
    %v10549 = vsel %vm912, %v10544, %v10548
    %v10550 = vrot.slane %v10499, 6
    %v10551 = vsel %vm912, %v10546, %v10550
    %v10552 = vrot.slane %v10500, 6
    %v10553 = vsel %vm912, %v10548, %v10552
    %v10554 = vrot.slane %v10501, 6
    %v10555 = vsel %vm912, %v10550, %v10554
    %v10556 = vrot.slane %v10502, 6
    %v10557 = vsel %vm912, %v10552, %v10556
    %v10558 = vrot.slane %v10503, 6
    %v10559 = vsel %vm912, %v10554, %v10558
    %v10560 = vrot.slane %v10504, 6
    %v10561 = vsel %vm912, %v10556, %v10560
    %v10562 = vrot.slane %v10505, 6
    %v10563 = vsel %vm912, %v10558, %v10562
    %v10564 = vrot.slane %v10506, 6
    %v10565 = vsel %vm912, %v10560, %v10564
    %v10566 = vrot.slane %v10507, 6
    %v10567 = vsel %vm912, %v10562, %v10566
    %v10568 = vrot.slane %v10508, 6
    %v10569 = vsel %vm912, %v10564, %v10568
    %v10570 = vrot.slane %v10509, 6
    %v10571 = vsel %vm912, %v10566, %v10570
    %v10572 = vrot.slane %v10510, 6
    %v10573 = vsel %vm912, %v10568, %v10572
    %v10574 = vrot.slane %v10511, 6
    %v10575 = vsel %vm912, %v10570, %v10574
    %v10598 = vadd.f32 %v10370, %v10534
    %v10599 = vadd.f32 %v10371, %v10535
    %v10600 = vadd.f32 %v10372, %v10537
    %v10601 = vadd.f32 %v10373, %v10539
    %v10602 = vadd.f32 %v10374, %v10541
    %v10603 = vadd.f32 %v10375, %v10543
    %v10604 = vadd.f32 %v10376, %v10545
    %v10605 = vadd.f32 %v10377, %v10547
    %v10606 = vadd.f32 %v10378, %v10549
    %v10607 = vadd.f32 %v10379, %v10551
    %v10608 = vadd.f32 %v10380, %v10553
    %v10609 = vadd.f32 %v10381, %v10555
    %v10610 = vadd.f32 %v10382, %v10557
    %v10611 = vadd.f32 %v10383, %v10559
    %v10612 = vadd.f32 %v10384, %v10561
    %v10613 = vadd.f32 %v10385, %v10563
    %v10614 = vadd.f32 %v10386, %v10565
    %v10615 = vadd.f32 %v10387, %v10567
    %v10616 = vadd.f32 %v10388, %v10569
    %v10617 = vadd.f32 %v10389, %v10571
    %v10618 = vadd.f32 %v10390, %v10573
    %v10619 = vadd.f32 %v10391, %v10575
    %v10620 = vld [vmem:[#allocation6] sm:$0xf0]
    %v10621 = vld [vmem:[#allocation6 + $0x8] sm:$0xf0]
    %v10622 = vld [vmem:[#allocation6 + $0xa0] sm:$0xf]
    %v10623 = vld [vmem:[#allocation6 + $0xa8] sm:$0xf]
    %v10624 = vld [vmem:[#allocation6] sm:$0xc0]
    %v10625 = vld [vmem:[#allocation6 + $0x8] sm:$0xc0]
    %v10626 = vld [vmem:[#allocation6 + $0xa0] sm:$0x3f]
    %v10627 = vld [vmem:[#allocation6 + $0xa8] sm:$0x3f]
    %v10632 = vrot.slane %v10624, 2
    %v10633 = vrot.slane %v9702, 2
    %v10634 = vsel %vm519, %v10632, %v10633
    %v10635 = vrot.slane %v10625, 2
    %v10636 = vrot.slane %v9703, 2
    %v10637 = vsel %vm519, %v10635, %v10636
    %v10638 = vrot.slane %v9704, 2
    %v10639 = vsel %vm519, %v10633, %v10638
    %v10640 = vrot.slane %v9705, 2
    %v10641 = vsel %vm519, %v10636, %v10640
    %v10642 = vrot.slane %v9706, 2
    %v10643 = vsel %vm519, %v10638, %v10642
    %v10644 = vrot.slane %v9707, 2
    %v10645 = vsel %vm519, %v10640, %v10644
    %v10646 = vrot.slane %v9708, 2
    %v10647 = vsel %vm519, %v10642, %v10646
    %v10648 = vrot.slane %v9709, 2
    %v10649 = vsel %vm519, %v10644, %v10648
    %v10650 = vrot.slane %v9710, 2
    %v10651 = vsel %vm519, %v10646, %v10650
    %v10652 = vrot.slane %v9711, 2
    %v10653 = vsel %vm519, %v10648, %v10652
    %v10654 = vrot.slane %v9712, 2
    %v10655 = vsel %vm519, %v10650, %v10654
    %v10656 = vrot.slane %v9713, 2
    %v10657 = vsel %vm519, %v10652, %v10656
    %v10658 = vrot.slane %v9714, 2
    %v10659 = vsel %vm519, %v10654, %v10658
    %v10660 = vrot.slane %v9715, 2
    %v10661 = vsel %vm519, %v10656, %v10660
    %v10662 = vrot.slane %v9716, 2
    %v10663 = vsel %vm519, %v10658, %v10662
    %v10664 = vrot.slane %v9717, 2
    %v10665 = vsel %vm519, %v10660, %v10664
    %v10666 = vrot.slane %v9718, 2
    %v10667 = vsel %vm519, %v10662, %v10666
    %v10668 = vrot.slane %v9719, 2
    %v10669 = vsel %vm519, %v10664, %v10668
    %v10670 = vrot.slane %v10626, 2
    %v10671 = vsel %vm519, %v10666, %v10670
    %v10672 = vrot.slane %v10627, 2
    %v10673 = vsel %vm519, %v10668, %v10672
    %v10696 = vadd.f32 %v10620, %v10634
    %v10697 = vadd.f32 %v10621, %v10637
    %v10698 = vadd.f32 %v9702, %v10639
    %v10699 = vadd.f32 %v9703, %v10641
    %v10700 = vadd.f32 %v9704, %v10643
    %v10701 = vadd.f32 %v9705, %v10645
    %v10702 = vadd.f32 %v9706, %v10647
    %v10703 = vadd.f32 %v9707, %v10649
    %v10704 = vadd.f32 %v9708, %v10651
    %v10705 = vadd.f32 %v9709, %v10653
    %v10706 = vadd.f32 %v9710, %v10655
    %v10707 = vadd.f32 %v9711, %v10657
    %v10708 = vadd.f32 %v9712, %v10659
    %v10709 = vadd.f32 %v9713, %v10661
    %v10710 = vadd.f32 %v9714, %v10663
    %v10711 = vadd.f32 %v9715, %v10665
    %v10712 = vadd.f32 %v9716, %v10667
    %v10713 = vadd.f32 %v9717, %v10669
    %v10714 = vadd.f32 %v9718, %v10671
    %v10715 = vadd.f32 %v9719, %v10673
    %v10716 = vadd.f32 %v10622, %v10670
    %v10717 = vadd.f32 %v10623, %v10672
    %v10718 = vmul.f32 %v10696, 0.21300554
    %v10719 = vmul.f32 %v10697, 0.21300554
    %v10720 = vmul.f32 %v10698, 0.21300554
    %v10721 = vmul.f32 %v10699, 0.21300554
    %v10722 = vmul.f32 %v10700, 0.21300554
    %v10723 = vmul.f32 %v10701, 0.21300554
    %v10724 = vmul.f32 %v10702, 0.21300554
    %v10725 = vmul.f32 %v10703, 0.21300554
    %v10726 = vmul.f32 %v10704, 0.21300554
    %v10727 = vmul.f32 %v10705, 0.21300554
    %v10728 = vmul.f32 %v10706, 0.21300554
    %v10729 = vmul.f32 %v10707, 0.21300554
    %v10730 = vmul.f32 %v10708, 0.21300554
    %v10731 = vmul.f32 %v10709, 0.21300554
    %v10732 = vmul.f32 %v10710, 0.21300554
    %v10733 = vmul.f32 %v10711, 0.21300554
    %v10734 = vmul.f32 %v10712, 0.21300554
    %v10735 = vmul.f32 %v10713, 0.21300554
    %v10736 = vmul.f32 %v10714, 0.21300554
    %v10737 = vmul.f32 %v10715, 0.21300554
    %v10738 = vmul.f32 %v10716, 0.21300554
    %v10739 = vmul.f32 %v10717, 0.21300554
    %v10762 = vrot.slane %v10718, 7
    %v10763 = vrot.slane %v10719, 7
    %v10764 = vrot.slane %v10720, 7
    %v10765 = vsel %vm1496, %v10762, %v10764
    %v10766 = vrot.slane %v10721, 7
    %v10767 = vsel %vm1496, %v10763, %v10766
    %v10768 = vrot.slane %v10722, 7
    %v10769 = vsel %vm1496, %v10764, %v10768
    %v10770 = vrot.slane %v10723, 7
    %v10771 = vsel %vm1496, %v10766, %v10770
    %v10772 = vrot.slane %v10724, 7
    %v10773 = vsel %vm1496, %v10768, %v10772
    %v10774 = vrot.slane %v10725, 7
    %v10775 = vsel %vm1496, %v10770, %v10774
    %v10776 = vrot.slane %v10726, 7
    %v10777 = vsel %vm1496, %v10772, %v10776
    %v10778 = vrot.slane %v10727, 7
    %v10779 = vsel %vm1496, %v10774, %v10778
    %v10780 = vrot.slane %v10728, 7
    %v10781 = vsel %vm1496, %v10776, %v10780
    %v10782 = vrot.slane %v10729, 7
    %v10783 = vsel %vm1496, %v10778, %v10782
    %v10784 = vrot.slane %v10730, 7
    %v10785 = vsel %vm1496, %v10780, %v10784
    %v10786 = vrot.slane %v10731, 7
    %v10787 = vsel %vm1496, %v10782, %v10786
    %v10788 = vrot.slane %v10732, 7
    %v10789 = vsel %vm1496, %v10784, %v10788
    %v10790 = vrot.slane %v10733, 7
    %v10791 = vsel %vm1496, %v10786, %v10790
    %v10792 = vrot.slane %v10734, 7
    %v10793 = vsel %vm1496, %v10788, %v10792
    %v10794 = vrot.slane %v10735, 7
    %v10795 = vsel %vm1496, %v10790, %v10794
    %v10796 = vrot.slane %v10736, 7
    %v10797 = vsel %vm1496, %v10792, %v10796
    %v10798 = vrot.slane %v10737, 7
    %v10799 = vsel %vm1496, %v10794, %v10798
    %v10800 = vrot.slane %v10738, 7
    %v10801 = vsel %vm1496, %v10796, %v10800
    %v10802 = vrot.slane %v10739, 7
    %v10803 = vsel %vm1496, %v10798, %v10802
    %v10826 = vadd.f32 %v10598, %v10762
    %v10827 = vadd.f32 %v10599, %v10763
    %v10828 = vadd.f32 %v10600, %v10765
    %v10829 = vadd.f32 %v10601, %v10767
    %v10830 = vadd.f32 %v10602, %v10769
    %v10831 = vadd.f32 %v10603, %v10771
    %v10832 = vadd.f32 %v10604, %v10773
    %v10833 = vadd.f32 %v10605, %v10775
    %v10834 = vadd.f32 %v10606, %v10777
    %v10835 = vadd.f32 %v10607, %v10779
    %v10836 = vadd.f32 %v10608, %v10781
    %v10837 = vadd.f32 %v10609, %v10783
    %v10838 = vadd.f32 %v10610, %v10785
    %v10839 = vadd.f32 %v10611, %v10787
    %v10840 = vadd.f32 %v10612, %v10789
    %v10841 = vadd.f32 %v10613, %v10791
    %v10842 = vadd.f32 %v10614, %v10793
    %v10843 = vadd.f32 %v10615, %v10795
    %v10844 = vadd.f32 %v10616, %v10797
    %v10845 = vadd.f32 %v10617, %v10799
    %v10846 = vadd.f32 %v10618, %v10801
    %v10847 = vadd.f32 %v10619, %v10803
    %v10848 = vmul.f32 %v10826, 0.26601171
    %v10849 = vmul.f32 %v10827, 0.26601171
    %v10850 = vmul.f32 %v10828, 0.26601171
    %v10851 = vmul.f32 %v10829, 0.26601171
    %v10852 = vmul.f32 %v10830, 0.26601171
    %v10853 = vmul.f32 %v10831, 0.26601171
    %v10854 = vmul.f32 %v10832, 0.26601171
    %v10855 = vmul.f32 %v10833, 0.26601171
    %v10856 = vmul.f32 %v10834, 0.26601171
    %v10857 = vmul.f32 %v10835, 0.26601171
    %v10858 = vmul.f32 %v10836, 0.26601171
    %v10859 = vmul.f32 %v10837, 0.26601171
    %v10860 = vmul.f32 %v10838, 0.26601171
    %v10861 = vmul.f32 %v10839, 0.26601171
    %v10862 = vmul.f32 %v10840, 0.26601171
    %v10863 = vmul.f32 %v10841, 0.26601171
    %v10864 = vmul.f32 %v10842, 0.26601171
    %v10865 = vmul.f32 %v10843, 0.26601171
    %v10866 = vmul.f32 %v10844, 0.26601171
    %v10867 = vmul.f32 %v10845, 0.26601171
    %v10868 = vmul.f32 %v10846, 0.26601171
    %v10869 = vmul.f32 %v10847, 0.26601171
    %10892 = vrot.lane.b32.xlu0 %v10826, 118
    %v10893 = vpop.permute.xlu0 %10892
    %10894 = vrot.lane.b32.xlu0 %v10827, 118
    %v10895 = vpop.permute.xlu0 %10894
    %10896 = vrot.lane.b32.xlu0 %v10828, 118
    %v10897 = vpop.permute.xlu0 %10896
    %10898 = vrot.lane.b32.xlu0 %v10829, 118
    %v10899 = vpop.permute.xlu0 %10898
    %10900 = vrot.lane.b32.xlu0 %v10830, 118
    %v10901 = vpop.permute.xlu0 %10900
    %10902 = vrot.lane.b32.xlu0 %v10831, 118
    %v10903 = vpop.permute.xlu0 %10902
    %10904 = vrot.lane.b32.xlu0 %v10832, 118
    %v10905 = vpop.permute.xlu0 %10904
    %10906 = vrot.lane.b32.xlu0 %v10833, 118
    %v10907 = vpop.permute.xlu0 %10906
    %10908 = vrot.lane.b32.xlu0 %v10834, 118
    %v10909 = vpop.permute.xlu0 %10908
    %10910 = vrot.lane.b32.xlu0 %v10835, 118
    %v10911 = vpop.permute.xlu0 %10910
    %10912 = vrot.lane.b32.xlu0 %v10836, 118
    %v10913 = vpop.permute.xlu0 %10912
    %10914 = vrot.lane.b32.xlu0 %v10837, 118
    %v10915 = vpop.permute.xlu0 %10914
    %10916 = vrot.lane.b32.xlu0 %v10838, 118
    %v10917 = vpop.permute.xlu0 %10916
    %10918 = vrot.lane.b32.xlu0 %v10839, 118
    %v10919 = vpop.permute.xlu0 %10918
    %10920 = vrot.lane.b32.xlu0 %v10840, 118
    %v10921 = vpop.permute.xlu0 %10920
    %10922 = vrot.lane.b32.xlu0 %v10841, 118
    %v10923 = vpop.permute.xlu0 %10922
    %10924 = vrot.lane.b32.xlu0 %v10842, 118
    %v10925 = vpop.permute.xlu0 %10924
    %10926 = vrot.lane.b32.xlu0 %v10843, 118
    %v10927 = vpop.permute.xlu0 %10926
    %10928 = vrot.lane.b32.xlu0 %v10844, 118
    %v10929 = vpop.permute.xlu0 %10928
    %10930 = vrot.lane.b32.xlu0 %v10845, 118
    %v10931 = vpop.permute.xlu0 %10930
    %10932 = vrot.lane.b32.xlu0 %v10846, 118
    %v10933 = vpop.permute.xlu0 %10932
    %10934 = vrot.lane.b32.xlu0 %v10847, 118
    %v10935 = vpop.permute.xlu0 %10934
    %v10936 = vsel %vm1671, %v10893, %v10895
    %v10937 = vsel %vm1671, %v10897, %v10899
    %v10938 = vsel %vm1671, %v10901, %v10903
    %v10939 = vsel %vm1671, %v10905, %v10907
    %v10940 = vsel %vm1671, %v10909, %v10911
    %v10941 = vsel %vm1671, %v10913, %v10915
    %v10942 = vsel %vm1671, %v10917, %v10919
    %v10943 = vsel %vm1671, %v10921, %v10923
    %v10944 = vsel %vm1671, %v10925, %v10927
    %v10945 = vsel %vm1671, %v10929, %v10931
    %v10946 = vsel %vm1671, %v10933, %v10935
    %v10958 = vadd.f32 %v10826, %v10936
    %v10959 = vadd.f32 %v10828, %v10937
    %v10960 = vadd.f32 %v10830, %v10938
    %v10961 = vadd.f32 %v10832, %v10939
    %v10962 = vadd.f32 %v10834, %v10940
    %v10963 = vadd.f32 %v10836, %v10941
    %v10964 = vadd.f32 %v10838, %v10942
    %v10965 = vadd.f32 %v10840, %v10943
    %v10966 = vadd.f32 %v10842, %v10944
    %v10967 = vadd.f32 %v10844, %v10945
    %v10968 = vadd.f32 %v10846, %v10946
    %v10969 = vmul.f32 %v10958, 0.0010283801
    %v10970 = vmul.f32 %v10959, 0.0010283801
    %v10971 = vmul.f32 %v10960, 0.0010283801
    %v10972 = vmul.f32 %v10961, 0.0010283801
    %v10973 = vmul.f32 %v10962, 0.0010283801
    %v10974 = vmul.f32 %v10963, 0.0010283801
    %v10975 = vmul.f32 %v10964, 0.0010283801
    %v10976 = vmul.f32 %v10965, 0.0010283801
    %v10977 = vmul.f32 %v10966, 0.0010283801
    %v10978 = vmul.f32 %v10967, 0.0010283801
    %v10979 = vmul.f32 %v10968, 0.0010283801
    %10991 = vrot.lane.b32.xlu0 %v10969, 5
    %v10992 = vpop.permute.xlu0 %10991
    %10993 = vrot.lane.b32.xlu0 %v10970, 5
    %v10994 = vpop.permute.xlu0 %10993
    %10995 = vrot.lane.b32.xlu0 %v10971, 5
    %v10996 = vpop.permute.xlu0 %10995
    %10997 = vrot.lane.b32.xlu0 %v10972, 5
    %v10998 = vpop.permute.xlu0 %10997
    %10999 = vrot.lane.b32.xlu0 %v10973, 5
    %v11000 = vpop.permute.xlu0 %10999
    %11001 = vrot.lane.b32.xlu0 %v10974, 5
    %v11002 = vpop.permute.xlu0 %11001
    %11003 = vrot.lane.b32.xlu0 %v10975, 5
    %v11004 = vpop.permute.xlu0 %11003
    %11005 = vrot.lane.b32.xlu0 %v10976, 5
    %v11006 = vpop.permute.xlu0 %11005
    %11007 = vrot.lane.b32.xlu0 %v10977, 5
    %v11008 = vpop.permute.xlu0 %11007
    %11009 = vrot.lane.b32.xlu0 %v10978, 5
    %v11010 = vpop.permute.xlu0 %11009
    %11011 = vrot.lane.b32.xlu0 %v10979, 5
    %v11012 = vpop.permute.xlu0 %11011
    %v11024 = vadd.f32 %v10848, %v10992
    %v11025 = vadd.f32 %v10849, %v10992
    %v11026 = vadd.f32 %v10850, %v10994
    %v11027 = vadd.f32 %v10851, %v10994
    %v11028 = vadd.f32 %v10852, %v10996
    %v11029 = vadd.f32 %v10853, %v10996
    %v11030 = vadd.f32 %v10854, %v10998
    %v11031 = vadd.f32 %v10855, %v10998
    %v11032 = vadd.f32 %v10856, %v11000
    %v11033 = vadd.f32 %v10857, %v11000
    %v11034 = vadd.f32 %v10858, %v11002
    %v11035 = vadd.f32 %v10859, %v11002
    %v11036 = vadd.f32 %v10860, %v11004
    %v11037 = vadd.f32 %v10861, %v11004
    %v11038 = vadd.f32 %v10862, %v11006
    %v11039 = vadd.f32 %v10863, %v11006
    %v11040 = vadd.f32 %v10864, %v11008
    %v11041 = vadd.f32 %v10865, %v11008
    %v11042 = vadd.f32 %v10866, %v11010
    %v11043 = vadd.f32 %v10867, %v11010
    %v11044 = vadd.f32 %v10868, %v11012
    %v11045 = vadd.f32 %v10869, %v11012
    %11046 = vrot.lane.b32.xlu0 %v10826, 120
    %v11047 = vpop.permute.xlu0 %11046
    %11048 = vrot.lane.b32.xlu0 %v10827, 120
    %v11049 = vpop.permute.xlu0 %11048
    %11050 = vrot.lane.b32.xlu0 %v10828, 120
    %v11051 = vpop.permute.xlu0 %11050
    %11052 = vrot.lane.b32.xlu0 %v10829, 120
    %v11053 = vpop.permute.xlu0 %11052
    %11054 = vrot.lane.b32.xlu0 %v10830, 120
    %v11055 = vpop.permute.xlu0 %11054
    %11056 = vrot.lane.b32.xlu0 %v10831, 120
    %v11057 = vpop.permute.xlu0 %11056
    %11058 = vrot.lane.b32.xlu0 %v10832, 120
    %v11059 = vpop.permute.xlu0 %11058
    %11060 = vrot.lane.b32.xlu0 %v10833, 120
    %v11061 = vpop.permute.xlu0 %11060
    %11062 = vrot.lane.b32.xlu0 %v10834, 120
    %v11063 = vpop.permute.xlu0 %11062
    %11064 = vrot.lane.b32.xlu0 %v10835, 120
    %v11065 = vpop.permute.xlu0 %11064
    %11066 = vrot.lane.b32.xlu0 %v10836, 120
    %v11067 = vpop.permute.xlu0 %11066
    %11068 = vrot.lane.b32.xlu0 %v10837, 120
    %v11069 = vpop.permute.xlu0 %11068
    %11070 = vrot.lane.b32.xlu0 %v10838, 120
    %v11071 = vpop.permute.xlu0 %11070
    %11072 = vrot.lane.b32.xlu0 %v10839, 120
    %v11073 = vpop.permute.xlu0 %11072
    %11074 = vrot.lane.b32.xlu0 %v10840, 120
    %v11075 = vpop.permute.xlu0 %11074
    %11076 = vrot.lane.b32.xlu0 %v10841, 120
    %v11077 = vpop.permute.xlu0 %11076
    %11078 = vrot.lane.b32.xlu0 %v10842, 120
    %v11079 = vpop.permute.xlu0 %11078
    %11080 = vrot.lane.b32.xlu0 %v10843, 120
    %v11081 = vpop.permute.xlu0 %11080
    %11082 = vrot.lane.b32.xlu0 %v10844, 120
    %v11083 = vpop.permute.xlu0 %11082
    %11084 = vrot.lane.b32.xlu0 %v10845, 120
    %v11085 = vpop.permute.xlu0 %11084
    %11086 = vrot.lane.b32.xlu0 %v10846, 120
    %v11087 = vpop.permute.xlu0 %11086
    %11088 = vrot.lane.b32.xlu0 %v10847, 120
    %v11089 = vpop.permute.xlu0 %11088
    %v11090 = vsel %vm1826, %v11047, %v11049
    %v11091 = vsel %vm1826, %v11051, %v11053
    %v11092 = vsel %vm1826, %v11055, %v11057
    %v11093 = vsel %vm1826, %v11059, %v11061
    %v11094 = vsel %vm1826, %v11063, %v11065
    %v11095 = vsel %vm1826, %v11067, %v11069
    %v11096 = vsel %vm1826, %v11071, %v11073
    %v11097 = vsel %vm1826, %v11075, %v11077
    %v11098 = vsel %vm1826, %v11079, %v11081
    %v11099 = vsel %vm1826, %v11083, %v11085
    %v11100 = vsel %vm1826, %v11087, %v11089
    %v11123 = vadd.f32 %v10826, %v11090
    %v11124 = vadd.f32 %v10827, %v11049
    %v11125 = vadd.f32 %v10828, %v11091
    %v11126 = vadd.f32 %v10829, %v11053
    %v11127 = vadd.f32 %v10830, %v11092
    %v11128 = vadd.f32 %v10831, %v11057
    %v11129 = vadd.f32 %v10832, %v11093
    %v11130 = vadd.f32 %v10833, %v11061
    %v11131 = vadd.f32 %v10834, %v11094
    %v11132 = vadd.f32 %v10835, %v11065
    %v11133 = vadd.f32 %v10836, %v11095
    %v11134 = vadd.f32 %v10837, %v11069
    %v11135 = vadd.f32 %v10838, %v11096
    %v11136 = vadd.f32 %v10839, %v11073
    %v11137 = vadd.f32 %v10840, %v11097
    %v11138 = vadd.f32 %v10841, %v11077
    %v11139 = vadd.f32 %v10842, %v11098
    %v11140 = vadd.f32 %v10843, %v11081
    %v11141 = vadd.f32 %v10844, %v11099
    %v11142 = vadd.f32 %v10845, %v11085
    %v11143 = vadd.f32 %v10846, %v11100
    %v11144 = vadd.f32 %v10847, %v11089
    %v11145 = vmul.f32 %v11123, 0.007598758
    %v11146 = vmul.f32 %v11124, 0.007598758
    %v11147 = vmul.f32 %v11125, 0.007598758
    %v11148 = vmul.f32 %v11126, 0.007598758
    %v11149 = vmul.f32 %v11127, 0.007598758
    %v11150 = vmul.f32 %v11128, 0.007598758
    %v11151 = vmul.f32 %v11129, 0.007598758
    %v11152 = vmul.f32 %v11130, 0.007598758
    %v11153 = vmul.f32 %v11131, 0.007598758
    %v11154 = vmul.f32 %v11132, 0.007598758
    %v11155 = vmul.f32 %v11133, 0.007598758
    %v11156 = vmul.f32 %v11134, 0.007598758
    %v11157 = vmul.f32 %v11135, 0.007598758
    %v11158 = vmul.f32 %v11136, 0.007598758
    %v11159 = vmul.f32 %v11137, 0.007598758
    %v11160 = vmul.f32 %v11138, 0.007598758
    %v11161 = vmul.f32 %v11139, 0.007598758
    %v11162 = vmul.f32 %v11140, 0.007598758
    %v11163 = vmul.f32 %v11141, 0.007598758
    %v11164 = vmul.f32 %v11142, 0.007598758
    %v11165 = vmul.f32 %v11143, 0.007598758
    %v11166 = vmul.f32 %v11144, 0.007598758
    %11189 = vrot.lane.b32.xlu0 %v11145, 4
    %v11190 = vpop.permute.xlu0 %11189
    %11191 = vrot.lane.b32.xlu0 %v11146, 4
    %v11192 = vpop.permute.xlu0 %11191
    %11193 = vrot.lane.b32.xlu0 %v11147, 4
    %v11194 = vpop.permute.xlu0 %11193
    %11195 = vrot.lane.b32.xlu0 %v11148, 4
    %v11196 = vpop.permute.xlu0 %11195
    %11197 = vrot.lane.b32.xlu0 %v11149, 4
    %v11198 = vpop.permute.xlu0 %11197
    %11199 = vrot.lane.b32.xlu0 %v11150, 4
    %v11200 = vpop.permute.xlu0 %11199
    %11201 = vrot.lane.b32.xlu0 %v11151, 4
    %v11202 = vpop.permute.xlu0 %11201
    %11203 = vrot.lane.b32.xlu0 %v11152, 4
    %v11204 = vpop.permute.xlu0 %11203
    %11205 = vrot.lane.b32.xlu0 %v11153, 4
    %v11206 = vpop.permute.xlu0 %11205
    %11207 = vrot.lane.b32.xlu0 %v11154, 4
    %v11208 = vpop.permute.xlu0 %11207
    %11209 = vrot.lane.b32.xlu0 %v11155, 4
    %v11210 = vpop.permute.xlu0 %11209
    %11211 = vrot.lane.b32.xlu0 %v11156, 4
    %v11212 = vpop.permute.xlu0 %11211
    %11213 = vrot.lane.b32.xlu0 %v11157, 4
    %v11214 = vpop.permute.xlu0 %11213
    %11215 = vrot.lane.b32.xlu0 %v11158, 4
    %v11216 = vpop.permute.xlu0 %11215
    %11217 = vrot.lane.b32.xlu0 %v11159, 4
    %v11218 = vpop.permute.xlu0 %11217
    %11219 = vrot.lane.b32.xlu0 %v11160, 4
    %v11220 = vpop.permute.xlu0 %11219
    %11221 = vrot.lane.b32.xlu0 %v11161, 4
    %v11222 = vpop.permute.xlu0 %11221
    %11223 = vrot.lane.b32.xlu0 %v11162, 4
    %v11224 = vpop.permute.xlu0 %11223
    %11225 = vrot.lane.b32.xlu0 %v11163, 4
    %v11226 = vpop.permute.xlu0 %11225
    %11227 = vrot.lane.b32.xlu0 %v11164, 4
    %v11228 = vpop.permute.xlu0 %11227
    %11229 = vrot.lane.b32.xlu0 %v11165, 4
    %v11230 = vpop.permute.xlu0 %11229
    %11231 = vrot.lane.b32.xlu0 %v11166, 4
    %v11232 = vpop.permute.xlu0 %11231
    %v11233 = vsel %vm1970, %v11190, %v11192
    %v11234 = vsel %vm1970, %v11194, %v11196
    %v11235 = vsel %vm1970, %v11198, %v11200
    %v11236 = vsel %vm1970, %v11202, %v11204
    %v11237 = vsel %vm1970, %v11206, %v11208
    %v11238 = vsel %vm1970, %v11210, %v11212
    %v11239 = vsel %vm1970, %v11214, %v11216
    %v11240 = vsel %vm1970, %v11218, %v11220
    %v11241 = vsel %vm1970, %v11222, %v11224
    %v11242 = vsel %vm1970, %v11226, %v11228
    %v11243 = vsel %vm1970, %v11230, %v11232
    %v11266 = vadd.f32 %v11024, %v11190
    %v11267 = vadd.f32 %v11025, %v11233
    %v11268 = vadd.f32 %v11026, %v11194
    %v11269 = vadd.f32 %v11027, %v11234
    %v11270 = vadd.f32 %v11028, %v11198
    %v11271 = vadd.f32 %v11029, %v11235
    %v11272 = vadd.f32 %v11030, %v11202
    %v11273 = vadd.f32 %v11031, %v11236
    %v11274 = vadd.f32 %v11032, %v11206
    %v11275 = vadd.f32 %v11033, %v11237
    %v11276 = vadd.f32 %v11034, %v11210
    %v11277 = vadd.f32 %v11035, %v11238
    %v11278 = vadd.f32 %v11036, %v11214
    %v11279 = vadd.f32 %v11037, %v11239
    %v11280 = vadd.f32 %v11038, %v11218
    %v11281 = vadd.f32 %v11039, %v11240
    %v11282 = vadd.f32 %v11040, %v11222
    %v11283 = vadd.f32 %v11041, %v11241
    %v11284 = vadd.f32 %v11042, %v11226
    %v11285 = vadd.f32 %v11043, %v11242
    %v11286 = vadd.f32 %v11044, %v11230
    %v11287 = vadd.f32 %v11045, %v11243
    %11288 = vrot.lane.b32.xlu0 %v10826, 122
    %v11289 = vpop.permute.xlu0 %11288
    %11290 = vrot.lane.b32.xlu0 %v10827, 122
    %v11291 = vpop.permute.xlu0 %11290
    %11292 = vrot.lane.b32.xlu0 %v10828, 122
    %v11293 = vpop.permute.xlu0 %11292
    %11294 = vrot.lane.b32.xlu0 %v10829, 122
    %v11295 = vpop.permute.xlu0 %11294
    %11296 = vrot.lane.b32.xlu0 %v10830, 122
    %v11297 = vpop.permute.xlu0 %11296
    %11298 = vrot.lane.b32.xlu0 %v10831, 122
    %v11299 = vpop.permute.xlu0 %11298
    %11300 = vrot.lane.b32.xlu0 %v10832, 122
    %v11301 = vpop.permute.xlu0 %11300
    %11302 = vrot.lane.b32.xlu0 %v10833, 122
    %v11303 = vpop.permute.xlu0 %11302
    %11304 = vrot.lane.b32.xlu0 %v10834, 122
    %v11305 = vpop.permute.xlu0 %11304
    %11306 = vrot.lane.b32.xlu0 %v10835, 122
    %v11307 = vpop.permute.xlu0 %11306
    %11308 = vrot.lane.b32.xlu0 %v10836, 122
    %v11309 = vpop.permute.xlu0 %11308
    %11310 = vrot.lane.b32.xlu0 %v10837, 122
    %v11311 = vpop.permute.xlu0 %11310
    %11312 = vrot.lane.b32.xlu0 %v10838, 122
    %v11313 = vpop.permute.xlu0 %11312
    %11314 = vrot.lane.b32.xlu0 %v10839, 122
    %v11315 = vpop.permute.xlu0 %11314
    %11316 = vrot.lane.b32.xlu0 %v10840, 122
    %v11317 = vpop.permute.xlu0 %11316
    %11318 = vrot.lane.b32.xlu0 %v10841, 122
    %v11319 = vpop.permute.xlu0 %11318
    %11320 = vrot.lane.b32.xlu0 %v10842, 122
    %v11321 = vpop.permute.xlu0 %11320
    %11322 = vrot.lane.b32.xlu0 %v10843, 122
    %v11323 = vpop.permute.xlu0 %11322
    %11324 = vrot.lane.b32.xlu0 %v10844, 122
    %v11325 = vpop.permute.xlu0 %11324
    %11326 = vrot.lane.b32.xlu0 %v10845, 122
    %v11327 = vpop.permute.xlu0 %11326
    %11328 = vrot.lane.b32.xlu0 %v10846, 122
    %v11329 = vpop.permute.xlu0 %11328
    %11330 = vrot.lane.b32.xlu0 %v10847, 122
    %v11331 = vpop.permute.xlu0 %11330
    %v11332 = vsel %vm2070, %v11289, %v11291
    %v11333 = vsel %vm2070, %v11293, %v11295
    %v11334 = vsel %vm2070, %v11297, %v11299
    %v11335 = vsel %vm2070, %v11301, %v11303
    %v11336 = vsel %vm2070, %v11305, %v11307
    %v11337 = vsel %vm2070, %v11309, %v11311
    %v11338 = vsel %vm2070, %v11313, %v11315
    %v11339 = vsel %vm2070, %v11317, %v11319
    %v11340 = vsel %vm2070, %v11321, %v11323
    %v11341 = vsel %vm2070, %v11325, %v11327
    %v11342 = vsel %vm2070, %v11329, %v11331
    %v11365 = vadd.f32 %v10826, %v11332
    %v11366 = vadd.f32 %v10827, %v11291
    %v11367 = vadd.f32 %v10828, %v11333
    %v11368 = vadd.f32 %v10829, %v11295
    %v11369 = vadd.f32 %v10830, %v11334
    %v11370 = vadd.f32 %v10831, %v11299
    %v11371 = vadd.f32 %v10832, %v11335
    %v11372 = vadd.f32 %v10833, %v11303
    %v11373 = vadd.f32 %v10834, %v11336
    %v11374 = vadd.f32 %v10835, %v11307
    %v11375 = vadd.f32 %v10836, %v11337
    %v11376 = vadd.f32 %v10837, %v11311
    %v11377 = vadd.f32 %v10838, %v11338
    %v11378 = vadd.f32 %v10839, %v11315
    %v11379 = vadd.f32 %v10840, %v11339
    %v11380 = vadd.f32 %v10841, %v11319
    %v11381 = vadd.f32 %v10842, %v11340
    %v11382 = vadd.f32 %v10843, %v11323
    %v11383 = vadd.f32 %v10844, %v11341
    %v11384 = vadd.f32 %v10845, %v11327
    %v11385 = vadd.f32 %v10846, %v11342
    %v11386 = vadd.f32 %v10847, %v11331
    %v11387 = vmul.f32 %v11365, 0.036000773
    %v11388 = vmul.f32 %v11366, 0.036000773
    %v11389 = vmul.f32 %v11367, 0.036000773
    %v11390 = vmul.f32 %v11368, 0.036000773
    %v11391 = vmul.f32 %v11369, 0.036000773
    %v11392 = vmul.f32 %v11370, 0.036000773
    %v11393 = vmul.f32 %v11371, 0.036000773
    %v11394 = vmul.f32 %v11372, 0.036000773
    %v11395 = vmul.f32 %v11373, 0.036000773
    %v11396 = vmul.f32 %v11374, 0.036000773
    %v11397 = vmul.f32 %v11375, 0.036000773
    %v11398 = vmul.f32 %v11376, 0.036000773
    %v11399 = vmul.f32 %v11377, 0.036000773
    %v11400 = vmul.f32 %v11378, 0.036000773
    %v11401 = vmul.f32 %v11379, 0.036000773
    %v11402 = vmul.f32 %v11380, 0.036000773
    %v11403 = vmul.f32 %v11381, 0.036000773
    %v11404 = vmul.f32 %v11382, 0.036000773
    %v11405 = vmul.f32 %v11383, 0.036000773
    %v11406 = vmul.f32 %v11384, 0.036000773
    %v11407 = vmul.f32 %v11385, 0.036000773
    %v11408 = vmul.f32 %v11386, 0.036000773
    %11431 = vrot.lane.b32.xlu0 %v11387, 3
    %v11432 = vpop.permute.xlu0 %11431
    %11433 = vrot.lane.b32.xlu0 %v11388, 3
    %v11434 = vpop.permute.xlu0 %11433
    %11435 = vrot.lane.b32.xlu0 %v11389, 3
    %v11436 = vpop.permute.xlu0 %11435
    %11437 = vrot.lane.b32.xlu0 %v11390, 3
    %v11438 = vpop.permute.xlu0 %11437
    %11439 = vrot.lane.b32.xlu0 %v11391, 3
    %v11440 = vpop.permute.xlu0 %11439
    %11441 = vrot.lane.b32.xlu0 %v11392, 3
    %v11442 = vpop.permute.xlu0 %11441
    %11443 = vrot.lane.b32.xlu0 %v11393, 3
    %v11444 = vpop.permute.xlu0 %11443
    %11445 = vrot.lane.b32.xlu0 %v11394, 3
    %v11446 = vpop.permute.xlu0 %11445
    %11447 = vrot.lane.b32.xlu0 %v11395, 3
    %v11448 = vpop.permute.xlu0 %11447
    %11449 = vrot.lane.b32.xlu0 %v11396, 3
    %v11450 = vpop.permute.xlu0 %11449
    %11451 = vrot.lane.b32.xlu0 %v11397, 3
    %v11452 = vpop.permute.xlu0 %11451
    %11453 = vrot.lane.b32.xlu0 %v11398, 3
    %v11454 = vpop.permute.xlu0 %11453
    %11455 = vrot.lane.b32.xlu0 %v11399, 3
    %v11456 = vpop.permute.xlu0 %11455
    %11457 = vrot.lane.b32.xlu0 %v11400, 3
    %v11458 = vpop.permute.xlu0 %11457
    %11459 = vrot.lane.b32.xlu0 %v11401, 3
    %v11460 = vpop.permute.xlu0 %11459
    %11461 = vrot.lane.b32.xlu0 %v11402, 3
    %v11462 = vpop.permute.xlu0 %11461
    %11463 = vrot.lane.b32.xlu0 %v11403, 3
    %v11464 = vpop.permute.xlu0 %11463
    %11465 = vrot.lane.b32.xlu0 %v11404, 3
    %v11466 = vpop.permute.xlu0 %11465
    %11467 = vrot.lane.b32.xlu0 %v11405, 3
    %v11468 = vpop.permute.xlu0 %11467
    %11469 = vrot.lane.b32.xlu0 %v11406, 3
    %v11470 = vpop.permute.xlu0 %11469
    %11471 = vrot.lane.b32.xlu0 %v11407, 3
    %v11472 = vpop.permute.xlu0 %11471
    %11473 = vrot.lane.b32.xlu0 %v11408, 3
    %v11474 = vpop.permute.xlu0 %11473
    %v11475 = vsel %vm2214, %v11432, %v11434
    %v11476 = vsel %vm2214, %v11436, %v11438
    %v11477 = vsel %vm2214, %v11440, %v11442
    %v11478 = vsel %vm2214, %v11444, %v11446
    %v11479 = vsel %vm2214, %v11448, %v11450
    %v11480 = vsel %vm2214, %v11452, %v11454
    %v11481 = vsel %vm2214, %v11456, %v11458
    %v11482 = vsel %vm2214, %v11460, %v11462
    %v11483 = vsel %vm2214, %v11464, %v11466
    %v11484 = vsel %vm2214, %v11468, %v11470
    %v11485 = vsel %vm2214, %v11472, %v11474
    %v11508 = vadd.f32 %v11266, %v11432
    %v11509 = vadd.f32 %v11267, %v11475
    %v11510 = vadd.f32 %v11268, %v11436
    %v11511 = vadd.f32 %v11269, %v11476
    %v11512 = vadd.f32 %v11270, %v11440
    %v11513 = vadd.f32 %v11271, %v11477
    %v11514 = vadd.f32 %v11272, %v11444
    %v11515 = vadd.f32 %v11273, %v11478
    %v11516 = vadd.f32 %v11274, %v11448
    %v11517 = vadd.f32 %v11275, %v11479
    %v11518 = vadd.f32 %v11276, %v11452
    %v11519 = vadd.f32 %v11277, %v11480
    %v11520 = vadd.f32 %v11278, %v11456
    %v11521 = vadd.f32 %v11279, %v11481
    %v11522 = vadd.f32 %v11280, %v11460
    %v11523 = vadd.f32 %v11281, %v11482
    %v11524 = vadd.f32 %v11282, %v11464
    %v11525 = vadd.f32 %v11283, %v11483
    %v11526 = vadd.f32 %v11284, %v11468
    %v11527 = vadd.f32 %v11285, %v11484
    %v11528 = vadd.f32 %v11286, %v11472
    %v11529 = vadd.f32 %v11287, %v11485
    %11530 = vrot.lane.b32.xlu0 %v10826, 124
    %v11531 = vpop.permute.xlu0 %11530
    %11532 = vrot.lane.b32.xlu0 %v10827, 124
    %v11533 = vpop.permute.xlu0 %11532
    %11534 = vrot.lane.b32.xlu0 %v10828, 124
    %v11535 = vpop.permute.xlu0 %11534
    %11536 = vrot.lane.b32.xlu0 %v10829, 124
    %v11537 = vpop.permute.xlu0 %11536
    %11538 = vrot.lane.b32.xlu0 %v10830, 124
    %v11539 = vpop.permute.xlu0 %11538
    %11540 = vrot.lane.b32.xlu0 %v10831, 124
    %v11541 = vpop.permute.xlu0 %11540
    %11542 = vrot.lane.b32.xlu0 %v10832, 124
    %v11543 = vpop.permute.xlu0 %11542
    %11544 = vrot.lane.b32.xlu0 %v10833, 124
    %v11545 = vpop.permute.xlu0 %11544
    %11546 = vrot.lane.b32.xlu0 %v10834, 124
    %v11547 = vpop.permute.xlu0 %11546
    %11548 = vrot.lane.b32.xlu0 %v10835, 124
    %v11549 = vpop.permute.xlu0 %11548
    %11550 = vrot.lane.b32.xlu0 %v10836, 124
    %v11551 = vpop.permute.xlu0 %11550
    %11552 = vrot.lane.b32.xlu0 %v10837, 124
    %v11553 = vpop.permute.xlu0 %11552
    %11554 = vrot.lane.b32.xlu0 %v10838, 124
    %v11555 = vpop.permute.xlu0 %11554
    %11556 = vrot.lane.b32.xlu0 %v10839, 124
    %v11557 = vpop.permute.xlu0 %11556
    %11558 = vrot.lane.b32.xlu0 %v10840, 124
    %v11559 = vpop.permute.xlu0 %11558
    %11560 = vrot.lane.b32.xlu0 %v10841, 124
    %v11561 = vpop.permute.xlu0 %11560
    %11562 = vrot.lane.b32.xlu0 %v10842, 124
    %v11563 = vpop.permute.xlu0 %11562
    %11564 = vrot.lane.b32.xlu0 %v10843, 124
    %v11565 = vpop.permute.xlu0 %11564
    %11566 = vrot.lane.b32.xlu0 %v10844, 124
    %v11567 = vpop.permute.xlu0 %11566
    %11568 = vrot.lane.b32.xlu0 %v10845, 124
    %v11569 = vpop.permute.xlu0 %11568
    %11570 = vrot.lane.b32.xlu0 %v10846, 124
    %v11571 = vpop.permute.xlu0 %11570
    %11572 = vrot.lane.b32.xlu0 %v10847, 124
    %v11573 = vpop.permute.xlu0 %11572
    %v11574 = vsel %vm2314, %v11531, %v11533
    %v11575 = vsel %vm2314, %v11535, %v11537
    %v11576 = vsel %vm2314, %v11539, %v11541
    %v11577 = vsel %vm2314, %v11543, %v11545
    %v11578 = vsel %vm2314, %v11547, %v11549
    %v11579 = vsel %vm2314, %v11551, %v11553
    %v11580 = vsel %vm2314, %v11555, %v11557
    %v11581 = vsel %vm2314, %v11559, %v11561
    %v11582 = vsel %vm2314, %v11563, %v11565
    %v11583 = vsel %vm2314, %v11567, %v11569
    %v11584 = vsel %vm2314, %v11571, %v11573
    %v11607 = vadd.f32 %v10826, %v11574
    %v11608 = vadd.f32 %v10827, %v11533
    %v11609 = vadd.f32 %v10828, %v11575
    %v11610 = vadd.f32 %v10829, %v11537
    %v11611 = vadd.f32 %v10830, %v11576
    %v11612 = vadd.f32 %v10831, %v11541
    %v11613 = vadd.f32 %v10832, %v11577
    %v11614 = vadd.f32 %v10833, %v11545
    %v11615 = vadd.f32 %v10834, %v11578
    %v11616 = vadd.f32 %v10835, %v11549
    %v11617 = vadd.f32 %v10836, %v11579
    %v11618 = vadd.f32 %v10837, %v11553
    %v11619 = vadd.f32 %v10838, %v11580
    %v11620 = vadd.f32 %v10839, %v11557
    %v11621 = vadd.f32 %v10840, %v11581
    %v11622 = vadd.f32 %v10841, %v11561
    %v11623 = vadd.f32 %v10842, %v11582
    %v11624 = vadd.f32 %v10843, %v11565
    %v11625 = vadd.f32 %v10844, %v11583
    %v11626 = vadd.f32 %v10845, %v11569
    %v11627 = vadd.f32 %v10846, %v11584
    %v11628 = vadd.f32 %v10847, %v11573
    %v11629 = vmul.f32 %v11607, 0.10936069
    %v11630 = vmul.f32 %v11608, 0.10936069
    %v11631 = vmul.f32 %v11609, 0.10936069
    %v11632 = vmul.f32 %v11610, 0.10936069
    %v11633 = vmul.f32 %v11611, 0.10936069
    %v11634 = vmul.f32 %v11612, 0.10936069
    %v11635 = vmul.f32 %v11613, 0.10936069
    %v11636 = vmul.f32 %v11614, 0.10936069
    %v11637 = vmul.f32 %v11615, 0.10936069
    %v11638 = vmul.f32 %v11616, 0.10936069
    %v11639 = vmul.f32 %v11617, 0.10936069
    %v11640 = vmul.f32 %v11618, 0.10936069
    %v11641 = vmul.f32 %v11619, 0.10936069
    %v11642 = vmul.f32 %v11620, 0.10936069
    %v11643 = vmul.f32 %v11621, 0.10936069
    %v11644 = vmul.f32 %v11622, 0.10936069
    %v11645 = vmul.f32 %v11623, 0.10936069
    %v11646 = vmul.f32 %v11624, 0.10936069
    %v11647 = vmul.f32 %v11625, 0.10936069
    %v11648 = vmul.f32 %v11626, 0.10936069
    %v11649 = vmul.f32 %v11627, 0.10936069
    %v11650 = vmul.f32 %v11628, 0.10936069
    %11673 = vrot.lane.b32.xlu0 %v11629, 2
    %v11674 = vpop.permute.xlu0 %11673
    %11675 = vrot.lane.b32.xlu0 %v11630, 2
    %v11676 = vpop.permute.xlu0 %11675
    %11677 = vrot.lane.b32.xlu0 %v11631, 2
    %v11678 = vpop.permute.xlu0 %11677
    %11679 = vrot.lane.b32.xlu0 %v11632, 2
    %v11680 = vpop.permute.xlu0 %11679
    %11681 = vrot.lane.b32.xlu0 %v11633, 2
    %v11682 = vpop.permute.xlu0 %11681
    %11683 = vrot.lane.b32.xlu0 %v11634, 2
    %v11684 = vpop.permute.xlu0 %11683
    %11685 = vrot.lane.b32.xlu0 %v11635, 2
    %v11686 = vpop.permute.xlu0 %11685
    %11687 = vrot.lane.b32.xlu0 %v11636, 2
    %v11688 = vpop.permute.xlu0 %11687
    %11689 = vrot.lane.b32.xlu0 %v11637, 2
    %v11690 = vpop.permute.xlu0 %11689
    %11691 = vrot.lane.b32.xlu0 %v11638, 2
    %v11692 = vpop.permute.xlu0 %11691
    %11693 = vrot.lane.b32.xlu0 %v11639, 2
    %v11694 = vpop.permute.xlu0 %11693
    %11695 = vrot.lane.b32.xlu0 %v11640, 2
    %v11696 = vpop.permute.xlu0 %11695
    %11697 = vrot.lane.b32.xlu0 %v11641, 2
    %v11698 = vpop.permute.xlu0 %11697
    %11699 = vrot.lane.b32.xlu0 %v11642, 2
    %v11700 = vpop.permute.xlu0 %11699
    %11701 = vrot.lane.b32.xlu0 %v11643, 2
    %v11702 = vpop.permute.xlu0 %11701
    %11703 = vrot.lane.b32.xlu0 %v11644, 2
    %v11704 = vpop.permute.xlu0 %11703
    %11705 = vrot.lane.b32.xlu0 %v11645, 2
    %v11706 = vpop.permute.xlu0 %11705
    %11707 = vrot.lane.b32.xlu0 %v11646, 2
    %v11708 = vpop.permute.xlu0 %11707
    %11709 = vrot.lane.b32.xlu0 %v11647, 2
    %v11710 = vpop.permute.xlu0 %11709
    %11711 = vrot.lane.b32.xlu0 %v11648, 2
    %v11712 = vpop.permute.xlu0 %11711
    %11713 = vrot.lane.b32.xlu0 %v11649, 2
    %v11714 = vpop.permute.xlu0 %11713
    %11715 = vrot.lane.b32.xlu0 %v11650, 2
    %v11716 = vpop.permute.xlu0 %11715
    %v11717 = vsel %vm2458, %v11674, %v11676
    %v11718 = vsel %vm2458, %v11678, %v11680
    %v11719 = vsel %vm2458, %v11682, %v11684
    %v11720 = vsel %vm2458, %v11686, %v11688
    %v11721 = vsel %vm2458, %v11690, %v11692
    %v11722 = vsel %vm2458, %v11694, %v11696
    %v11723 = vsel %vm2458, %v11698, %v11700
    %v11724 = vsel %vm2458, %v11702, %v11704
    %v11725 = vsel %vm2458, %v11706, %v11708
    %v11726 = vsel %vm2458, %v11710, %v11712
    %v11727 = vsel %vm2458, %v11714, %v11716
    %v11750 = vadd.f32 %v11508, %v11674
    %v11751 = vadd.f32 %v11509, %v11717
    %v11752 = vadd.f32 %v11510, %v11678
    %v11753 = vadd.f32 %v11511, %v11718
    %v11754 = vadd.f32 %v11512, %v11682
    %v11755 = vadd.f32 %v11513, %v11719
    %v11756 = vadd.f32 %v11514, %v11686
    %v11757 = vadd.f32 %v11515, %v11720
    %v11758 = vadd.f32 %v11516, %v11690
    %v11759 = vadd.f32 %v11517, %v11721
    %v11760 = vadd.f32 %v11518, %v11694
    %v11761 = vadd.f32 %v11519, %v11722
    %v11762 = vadd.f32 %v11520, %v11698
    %v11763 = vadd.f32 %v11521, %v11723
    %v11764 = vadd.f32 %v11522, %v11702
    %v11765 = vadd.f32 %v11523, %v11724
    %v11766 = vadd.f32 %v11524, %v11706
    %v11767 = vadd.f32 %v11525, %v11725
    %v11768 = vadd.f32 %v11526, %v11710
    %v11769 = vadd.f32 %v11527, %v11726
    %v11770 = vadd.f32 %v11528, %v11714
    %v11771 = vadd.f32 %v11529, %v11727
    %11772 = vrot.lane.b32.xlu0 %v10826, 126
    %v11773 = vpop.permute.xlu0 %11772
    %11774 = vrot.lane.b32.xlu0 %v10827, 126
    %v11775 = vpop.permute.xlu0 %11774
    %11776 = vrot.lane.b32.xlu0 %v10828, 126
    %v11777 = vpop.permute.xlu0 %11776
    %11778 = vrot.lane.b32.xlu0 %v10829, 126
    %v11779 = vpop.permute.xlu0 %11778
    %11780 = vrot.lane.b32.xlu0 %v10830, 126
    %v11781 = vpop.permute.xlu0 %11780
    %11782 = vrot.lane.b32.xlu0 %v10831, 126
    %v11783 = vpop.permute.xlu0 %11782
    %11784 = vrot.lane.b32.xlu0 %v10832, 126
    %v11785 = vpop.permute.xlu0 %11784
    %11786 = vrot.lane.b32.xlu0 %v10833, 126
    %v11787 = vpop.permute.xlu0 %11786
    %11788 = vrot.lane.b32.xlu0 %v10834, 126
    %v11789 = vpop.permute.xlu0 %11788
    %11790 = vrot.lane.b32.xlu0 %v10835, 126
    %v11791 = vpop.permute.xlu0 %11790
    %11792 = vrot.lane.b32.xlu0 %v10836, 126
    %v11793 = vpop.permute.xlu0 %11792
    %11794 = vrot.lane.b32.xlu0 %v10837, 126
    %v11795 = vpop.permute.xlu0 %11794
    %11796 = vrot.lane.b32.xlu0 %v10838, 126
    %v11797 = vpop.permute.xlu0 %11796
    %11798 = vrot.lane.b32.xlu0 %v10839, 126
    %v11799 = vpop.permute.xlu0 %11798
    %11800 = vrot.lane.b32.xlu0 %v10840, 126
    %v11801 = vpop.permute.xlu0 %11800
    %11802 = vrot.lane.b32.xlu0 %v10841, 126
    %v11803 = vpop.permute.xlu0 %11802
    %11804 = vrot.lane.b32.xlu0 %v10842, 126
    %v11805 = vpop.permute.xlu0 %11804
    %11806 = vrot.lane.b32.xlu0 %v10843, 126
    %v11807 = vpop.permute.xlu0 %11806
    %11808 = vrot.lane.b32.xlu0 %v10844, 126
    %v11809 = vpop.permute.xlu0 %11808
    %11810 = vrot.lane.b32.xlu0 %v10845, 126
    %v11811 = vpop.permute.xlu0 %11810
    %11812 = vrot.lane.b32.xlu0 %v10846, 126
    %v11813 = vpop.permute.xlu0 %11812
    %11814 = vrot.lane.b32.xlu0 %v10847, 126
    %v11815 = vpop.permute.xlu0 %11814
    %v11816 = vsel %vm2558, %v11773, %v11775
    %v11817 = vsel %vm2558, %v11777, %v11779
    %v11818 = vsel %vm2558, %v11781, %v11783
    %v11819 = vsel %vm2558, %v11785, %v11787
    %v11820 = vsel %vm2558, %v11789, %v11791
    %v11821 = vsel %vm2558, %v11793, %v11795
    %v11822 = vsel %vm2558, %v11797, %v11799
    %v11823 = vsel %vm2558, %v11801, %v11803
    %v11824 = vsel %vm2558, %v11805, %v11807
    %v11825 = vsel %vm2558, %v11809, %v11811
    %v11826 = vsel %vm2558, %v11813, %v11815
    %v11849 = vadd.f32 %v10826, %v11816
    %v11850 = vadd.f32 %v10827, %v11775
    %v11851 = vadd.f32 %v10828, %v11817
    %v11852 = vadd.f32 %v10829, %v11779
    %v11853 = vadd.f32 %v10830, %v11818
    %v11854 = vadd.f32 %v10831, %v11783
    %v11855 = vadd.f32 %v10832, %v11819
    %v11856 = vadd.f32 %v10833, %v11787
    %v11857 = vadd.f32 %v10834, %v11820
    %v11858 = vadd.f32 %v10835, %v11791
    %v11859 = vadd.f32 %v10836, %v11821
    %v11860 = vadd.f32 %v10837, %v11795
    %v11861 = vadd.f32 %v10838, %v11822
    %v11862 = vadd.f32 %v10839, %v11799
    %v11863 = vadd.f32 %v10840, %v11823
    %v11864 = vadd.f32 %v10841, %v11803
    %v11865 = vadd.f32 %v10842, %v11824
    %v11866 = vadd.f32 %v10843, %v11807
    %v11867 = vadd.f32 %v10844, %v11825
    %v11868 = vadd.f32 %v10845, %v11811
    %v11869 = vadd.f32 %v10846, %v11826
    %v11870 = vadd.f32 %v10847, %v11815
    %v11871 = vmul.f32 %v11849, 0.21300554
    %v11872 = vmul.f32 %v11850, 0.21300554
    %v11873 = vmul.f32 %v11851, 0.21300554
    %v11874 = vmul.f32 %v11852, 0.21300554
    %v11875 = vmul.f32 %v11853, 0.21300554
    %v11876 = vmul.f32 %v11854, 0.21300554
    %v11877 = vmul.f32 %v11855, 0.21300554
    %v11878 = vmul.f32 %v11856, 0.21300554
    %v11879 = vmul.f32 %v11857, 0.21300554
    %v11880 = vmul.f32 %v11858, 0.21300554
    %v11881 = vmul.f32 %v11859, 0.21300554
    %v11882 = vmul.f32 %v11860, 0.21300554
    %v11883 = vmul.f32 %v11861, 0.21300554
    %v11884 = vmul.f32 %v11862, 0.21300554
    %v11885 = vmul.f32 %v11863, 0.21300554
    %v11886 = vmul.f32 %v11864, 0.21300554
    %v11887 = vmul.f32 %v11865, 0.21300554
    %v11888 = vmul.f32 %v11866, 0.21300554
    %v11889 = vmul.f32 %v11867, 0.21300554
    %v11890 = vmul.f32 %v11868, 0.21300554
    %v11891 = vmul.f32 %v11869, 0.21300554
    %v11892 = vmul.f32 %v11870, 0.21300554
    %11915 = vrot.lane.b32.xlu0 %v11871, 1
    %v11916 = vpop.permute.xlu0 %11915
    %11917 = vrot.lane.b32.xlu0 %v11872, 1
    %v11918 = vpop.permute.xlu0 %11917
    %11919 = vrot.lane.b32.xlu0 %v11873, 1
    %v11920 = vpop.permute.xlu0 %11919
    %11921 = vrot.lane.b32.xlu0 %v11874, 1
    %v11922 = vpop.permute.xlu0 %11921
    %11923 = vrot.lane.b32.xlu0 %v11875, 1
    %v11924 = vpop.permute.xlu0 %11923
    %11925 = vrot.lane.b32.xlu0 %v11876, 1
    %v11926 = vpop.permute.xlu0 %11925
    %11927 = vrot.lane.b32.xlu0 %v11877, 1
    %v11928 = vpop.permute.xlu0 %11927
    %11929 = vrot.lane.b32.xlu0 %v11878, 1
    %v11930 = vpop.permute.xlu0 %11929
    %11931 = vrot.lane.b32.xlu0 %v11879, 1
    %v11932 = vpop.permute.xlu0 %11931
    %11933 = vrot.lane.b32.xlu0 %v11880, 1
    %v11934 = vpop.permute.xlu0 %11933
    %11935 = vrot.lane.b32.xlu0 %v11881, 1
    %v11936 = vpop.permute.xlu0 %11935
    %11937 = vrot.lane.b32.xlu0 %v11882, 1
    %v11938 = vpop.permute.xlu0 %11937
    %11939 = vrot.lane.b32.xlu0 %v11883, 1
    %v11940 = vpop.permute.xlu0 %11939
    %11941 = vrot.lane.b32.xlu0 %v11884, 1
    %v11942 = vpop.permute.xlu0 %11941
    %11943 = vrot.lane.b32.xlu0 %v11885, 1
    %v11944 = vpop.permute.xlu0 %11943
    %11945 = vrot.lane.b32.xlu0 %v11886, 1
    %v11946 = vpop.permute.xlu0 %11945
    %11947 = vrot.lane.b32.xlu0 %v11887, 1
    %v11948 = vpop.permute.xlu0 %11947
    %11949 = vrot.lane.b32.xlu0 %v11888, 1
    %v11950 = vpop.permute.xlu0 %11949
    %11951 = vrot.lane.b32.xlu0 %v11889, 1
    %v11952 = vpop.permute.xlu0 %11951
    %11953 = vrot.lane.b32.xlu0 %v11890, 1
    %v11954 = vpop.permute.xlu0 %11953
    %11955 = vrot.lane.b32.xlu0 %v11891, 1
    %v11956 = vpop.permute.xlu0 %11955
    %11957 = vrot.lane.b32.xlu0 %v11892, 1
    %v11958 = vpop.permute.xlu0 %11957
    %v11959 = vsel %vm2702, %v11916, %v11918
    %v11960 = vsel %vm2702, %v11920, %v11922
    %v11961 = vsel %vm2702, %v11924, %v11926
    %v11962 = vsel %vm2702, %v11928, %v11930
    %v11963 = vsel %vm2702, %v11932, %v11934
    %v11964 = vsel %vm2702, %v11936, %v11938
    %v11965 = vsel %vm2702, %v11940, %v11942
    %v11966 = vsel %vm2702, %v11944, %v11946
    %v11967 = vsel %vm2702, %v11948, %v11950
    %v11968 = vsel %vm2702, %v11952, %v11954
    %v11969 = vsel %vm2702, %v11956, %v11958
    %v11992 = vadd.f32 %v11750, %v11916
    %v11993 = vadd.f32 %v11751, %v11959
    %v11994 = vadd.f32 %v11752, %v11920
    %v11995 = vadd.f32 %v11753, %v11960
    %v11996 = vadd.f32 %v11754, %v11924
    %v11997 = vadd.f32 %v11755, %v11961
    %v11998 = vadd.f32 %v11756, %v11928
    %v11999 = vadd.f32 %v11757, %v11962
    %v12000 = vadd.f32 %v11758, %v11932
    %v12001 = vadd.f32 %v11759, %v11963
    %v12002 = vadd.f32 %v11760, %v11936
    %v12003 = vadd.f32 %v11761, %v11964
    %v12004 = vadd.f32 %v11762, %v11940
    %v12005 = vadd.f32 %v11763, %v11965
    %v12006 = vadd.f32 %v11764, %v11944
    %v12007 = vadd.f32 %v11765, %v11966
    %v12008 = vadd.f32 %v11766, %v11948
    %v12009 = vadd.f32 %v11767, %v11967
    %v12010 = vadd.f32 %v11768, %v11952
    %v12011 = vadd.f32 %v11769, %v11968
    %v12012 = vadd.f32 %v11770, %v11956
    %v12013 = vadd.f32 %v11771, %v11969
    %v12014 = vmul.f32 %v2736, %v2736
    %v12015 = vmul.f32 %v2737, %v2737
    %v12016 = vmul.f32 %v2738, %v2738
    %v12017 = vmul.f32 %v2739, %v2739
    %v12018 = vmul.f32 %v2740, %v2740
    %v12019 = vmul.f32 %v2741, %v2741
    %v12020 = vmul.f32 %v2742, %v2742
    %v12021 = vmul.f32 %v2743, %v2743
    %v12022 = vmul.f32 %v2744, %v2744
    %v12023 = vmul.f32 %v2745, %v2745
    %v12024 = vmul.f32 %v2746, %v2746
    %v12025 = vmul.f32 %v2747, %v2747
    %v12026 = vmul.f32 %v2748, %v2748
    %v12027 = vmul.f32 %v2749, %v2749
    %v12028 = vmul.f32 %v2750, %v2750
    %v12029 = vmul.f32 %v2751, %v2751
    %v12030 = vmul.f32 %v2752, %v2752
    %v12031 = vmul.f32 %v2753, %v2753
    %v12032 = vmul.f32 %v2754, %v2754
    %v12033 = vmul.f32 %v2755, %v2755
    %v12034 = vmul.f32 %v2756, %v2756
    %v12035 = vmul.f32 %v2757, %v2757
    %v12036 = vmul.f32 %v5050, %v5050
    %v12037 = vmul.f32 %v5051, %v5051
    %v12038 = vmul.f32 %v5052, %v5052
    %v12039 = vmul.f32 %v5053, %v5053
    %v12040 = vmul.f32 %v5054, %v5054
    %v12041 = vmul.f32 %v5055, %v5055
    %v12042 = vmul.f32 %v5056, %v5056
    %v12043 = vmul.f32 %v5057, %v5057
    %v12044 = vmul.f32 %v5058, %v5058
    %v12045 = vmul.f32 %v5059, %v5059
    %v12046 = vmul.f32 %v5060, %v5060
    %v12047 = vmul.f32 %v5061, %v5061
    %v12048 = vmul.f32 %v5062, %v5062
    %v12049 = vmul.f32 %v5063, %v5063
    %v12050 = vmul.f32 %v5064, %v5064
    %v12051 = vmul.f32 %v5065, %v5065
    %v12052 = vmul.f32 %v5066, %v5066
    %v12053 = vmul.f32 %v5067, %v5067
    %v12054 = vmul.f32 %v5068, %v5068
    %v12055 = vmul.f32 %v5069, %v5069
    %v12056 = vmul.f32 %v5070, %v5070
    %v12057 = vmul.f32 %v5071, %v5071
    %v12058 = vmul.f32 %v2736, %v5050
    %v12059 = vmul.f32 %v2737, %v5051
    %v12060 = vmul.f32 %v2738, %v5052
    %v12061 = vmul.f32 %v2739, %v5053
    %v12062 = vmul.f32 %v2740, %v5054
    %v12063 = vmul.f32 %v2741, %v5055
    %v12064 = vmul.f32 %v2742, %v5056
    %v12065 = vmul.f32 %v2743, %v5057
    %v12066 = vmul.f32 %v2744, %v5058
    %v12067 = vmul.f32 %v2745, %v5059
    %v12068 = vmul.f32 %v2746, %v5060
    %v12069 = vmul.f32 %v2747, %v5061
    %v12070 = vmul.f32 %v2748, %v5062
    %v12071 = vmul.f32 %v2749, %v5063
    %v12072 = vmul.f32 %v2750, %v5064
    %v12073 = vmul.f32 %v2751, %v5065
    %v12074 = vmul.f32 %v2752, %v5066
    %v12075 = vmul.f32 %v2753, %v5067
    %v12076 = vmul.f32 %v2754, %v5068
    %v12077 = vmul.f32 %v2755, %v5069
    %v12078 = vmul.f32 %v2756, %v5070
    %v12079 = vmul.f32 %v2757, %v5071
    %v12080 = vsub.f32 %v7364, %v12014
    %v12081 = vsub.f32 %v7365, %v12015
    %v12082 = vsub.f32 %v7366, %v12016
    %v12083 = vsub.f32 %v7367, %v12017
    %v12084 = vsub.f32 %v7368, %v12018
    %v12085 = vsub.f32 %v7369, %v12019
    %v12086 = vsub.f32 %v7370, %v12020
    %v12087 = vsub.f32 %v7371, %v12021
    %v12088 = vsub.f32 %v7372, %v12022
    %v12089 = vsub.f32 %v7373, %v12023
    %v12090 = vsub.f32 %v7374, %v12024
    %v12091 = vsub.f32 %v7375, %v12025
    %v12092 = vsub.f32 %v7376, %v12026
    %v12093 = vsub.f32 %v7377, %v12027
    %v12094 = vsub.f32 %v7378, %v12028
    %v12095 = vsub.f32 %v7379, %v12029
    %v12096 = vsub.f32 %v7380, %v12030
    %v12097 = vsub.f32 %v7381, %v12031
    %v12098 = vsub.f32 %v7382, %v12032
    %v12099 = vsub.f32 %v7383, %v12033
    %v12100 = vsub.f32 %v7384, %v12034
    %v12101 = vsub.f32 %v7385, %v12035
    %v12102 = vsub.f32 %v9678, %v12036
    %v12103 = vsub.f32 %v9679, %v12037
    %v12104 = vsub.f32 %v9680, %v12038
    %v12105 = vsub.f32 %v9681, %v12039
    %v12106 = vsub.f32 %v9682, %v12040
    %v12107 = vsub.f32 %v9683, %v12041
    %v12108 = vsub.f32 %v9684, %v12042
    %v12109 = vsub.f32 %v9685, %v12043
    %v12110 = vsub.f32 %v9686, %v12044
    %v12111 = vsub.f32 %v9687, %v12045
    %v12112 = vsub.f32 %v9688, %v12046
    %v12113 = vsub.f32 %v9689, %v12047
    %v12114 = vsub.f32 %v9690, %v12048
    %v12115 = vsub.f32 %v9691, %v12049
    %v12116 = vsub.f32 %v9692, %v12050
    %v12117 = vsub.f32 %v9693, %v12051
    %v12118 = vsub.f32 %v9694, %v12052
    %v12119 = vsub.f32 %v9695, %v12053
    %v12120 = vsub.f32 %v9696, %v12054
    %v12121 = vsub.f32 %v9697, %v12055
    %v12122 = vsub.f32 %v9698, %v12056
    %v12123 = vsub.f32 %v9699, %v12057
    %v12124 = vsub.f32 %v11992, %v12058
    %v12125 = vsub.f32 %v11993, %v12059
    %v12126 = vsub.f32 %v11994, %v12060
    %v12127 = vsub.f32 %v11995, %v12061
    %v12128 = vsub.f32 %v11996, %v12062
    %v12129 = vsub.f32 %v11997, %v12063
    %v12130 = vsub.f32 %v11998, %v12064
    %v12131 = vsub.f32 %v11999, %v12065
    %v12132 = vsub.f32 %v12000, %v12066
    %v12133 = vsub.f32 %v12001, %v12067
    %v12134 = vsub.f32 %v12002, %v12068
    %v12135 = vsub.f32 %v12003, %v12069
    %v12136 = vsub.f32 %v12004, %v12070
    %v12137 = vsub.f32 %v12005, %v12071
    %v12138 = vsub.f32 %v12006, %v12072
    %v12139 = vsub.f32 %v12007, %v12073
    %v12140 = vsub.f32 %v12008, %v12074
    %v12141 = vsub.f32 %v12009, %v12075
    %v12142 = vsub.f32 %v12010, %v12076
    %v12143 = vsub.f32 %v12011, %v12077
    %v12144 = vsub.f32 %v12012, %v12078
    %v12145 = vsub.f32 %v12013, %v12079
    %v12146 = vmul.f32 %v12058, 2.0
    %v12147 = vmul.f32 %v12059, 2.0
    %v12148 = vmul.f32 %v12060, 2.0
    %v12149 = vmul.f32 %v12061, 2.0
    %v12150 = vmul.f32 %v12062, 2.0
    %v12151 = vmul.f32 %v12063, 2.0
    %v12152 = vmul.f32 %v12064, 2.0
    %v12153 = vmul.f32 %v12065, 2.0
    %v12154 = vmul.f32 %v12066, 2.0
    %v12155 = vmul.f32 %v12067, 2.0
    %v12156 = vmul.f32 %v12068, 2.0
    %v12157 = vmul.f32 %v12069, 2.0
    %v12158 = vmul.f32 %v12070, 2.0
    %v12159 = vmul.f32 %v12071, 2.0
    %v12160 = vmul.f32 %v12072, 2.0
    %v12161 = vmul.f32 %v12073, 2.0
    %v12162 = vmul.f32 %v12074, 2.0
    %v12163 = vmul.f32 %v12075, 2.0
    %v12164 = vmul.f32 %v12076, 2.0
    %v12165 = vmul.f32 %v12077, 2.0
    %v12166 = vmul.f32 %v12078, 2.0
    %v12167 = vmul.f32 %v12079, 2.0
    %v12168 = vadd.f32 %v12146, 0.0001
    %v12169 = vadd.f32 %v12147, 0.0001
    %v12170 = vadd.f32 %v12148, 0.0001
    %v12171 = vadd.f32 %v12149, 0.0001
    %v12172 = vadd.f32 %v12150, 0.0001
    %v12173 = vadd.f32 %v12151, 0.0001
    %v12174 = vadd.f32 %v12152, 0.0001
    %v12175 = vadd.f32 %v12153, 0.0001
    %v12176 = vadd.f32 %v12154, 0.0001
    %v12177 = vadd.f32 %v12155, 0.0001
    %v12178 = vadd.f32 %v12156, 0.0001
    %v12179 = vadd.f32 %v12157, 0.0001
    %v12180 = vadd.f32 %v12158, 0.0001
    %v12181 = vadd.f32 %v12159, 0.0001
    %v12182 = vadd.f32 %v12160, 0.0001
    %v12183 = vadd.f32 %v12161, 0.0001
    %v12184 = vadd.f32 %v12162, 0.0001
    %v12185 = vadd.f32 %v12163, 0.0001
    %v12186 = vadd.f32 %v12164, 0.0001
    %v12187 = vadd.f32 %v12165, 0.0001
    %v12188 = vadd.f32 %v12166, 0.0001
    %v12189 = vadd.f32 %v12167, 0.0001
    %v12190 = vmul.f32 %v12124, 2.0
    %v12191 = vmul.f32 %v12125, 2.0
    %v12192 = vmul.f32 %v12126, 2.0
    %v12193 = vmul.f32 %v12127, 2.0
    %v12194 = vmul.f32 %v12128, 2.0
    %v12195 = vmul.f32 %v12129, 2.0
    %v12196 = vmul.f32 %v12130, 2.0
    %v12197 = vmul.f32 %v12131, 2.0
    %v12198 = vmul.f32 %v12132, 2.0
    %v12199 = vmul.f32 %v12133, 2.0
    %v12200 = vmul.f32 %v12134, 2.0
    %v12201 = vmul.f32 %v12135, 2.0
    %v12202 = vmul.f32 %v12136, 2.0
    %v12203 = vmul.f32 %v12137, 2.0
    %v12204 = vmul.f32 %v12138, 2.0
    %v12205 = vmul.f32 %v12139, 2.0
    %v12206 = vmul.f32 %v12140, 2.0
    %v12207 = vmul.f32 %v12141, 2.0
    %v12208 = vmul.f32 %v12142, 2.0
    %v12209 = vmul.f32 %v12143, 2.0
    %v12210 = vmul.f32 %v12144, 2.0
    %v12211 = vmul.f32 %v12145, 2.0
    %v12212 = vadd.f32 %v12190, 0.0009
    %v12213 = vadd.f32 %v12191, 0.0009
    %v12214 = vadd.f32 %v12192, 0.0009
    %v12215 = vadd.f32 %v12193, 0.0009
    %v12216 = vadd.f32 %v12194, 0.0009
    %v12217 = vadd.f32 %v12195, 0.0009
    %v12218 = vadd.f32 %v12196, 0.0009
    %v12219 = vadd.f32 %v12197, 0.0009
    %v12220 = vadd.f32 %v12198, 0.0009
    %v12221 = vadd.f32 %v12199, 0.0009
    %v12222 = vadd.f32 %v12200, 0.0009
    %v12223 = vadd.f32 %v12201, 0.0009
    %v12224 = vadd.f32 %v12202, 0.0009
    %v12225 = vadd.f32 %v12203, 0.0009
    %v12226 = vadd.f32 %v12204, 0.0009
    %v12227 = vadd.f32 %v12205, 0.0009
    %v12228 = vadd.f32 %v12206, 0.0009
    %v12229 = vadd.f32 %v12207, 0.0009
    %v12230 = vadd.f32 %v12208, 0.0009
    %v12231 = vadd.f32 %v12209, 0.0009
    %v12232 = vadd.f32 %v12210, 0.0009
    %v12233 = vadd.f32 %v12211, 0.0009
    %v12234 = vmul.f32 %v12168, %v12212
    %v12235 = vmul.f32 %v12169, %v12213
    %v12236 = vmul.f32 %v12170, %v12214
    %v12237 = vmul.f32 %v12171, %v12215
    %v12238 = vmul.f32 %v12172, %v12216
    %v12239 = vmul.f32 %v12173, %v12217
    %v12240 = vmul.f32 %v12174, %v12218
    %v12241 = vmul.f32 %v12175, %v12219
    %v12242 = vmul.f32 %v12176, %v12220
    %v12243 = vmul.f32 %v12177, %v12221
    %v12244 = vmul.f32 %v12178, %v12222
    %v12245 = vmul.f32 %v12179, %v12223
    %v12246 = vmul.f32 %v12180, %v12224
    %v12247 = vmul.f32 %v12181, %v12225
    %v12248 = vmul.f32 %v12182, %v12226
    %v12249 = vmul.f32 %v12183, %v12227
    %v12250 = vmul.f32 %v12184, %v12228
    %v12251 = vmul.f32 %v12185, %v12229
    %v12252 = vmul.f32 %v12186, %v12230
    %v12253 = vmul.f32 %v12187, %v12231
    %v12254 = vmul.f32 %v12188, %v12232
    %v12255 = vmul.f32 %v12189, %v12233
    %v12256 = vadd.f32 %v12014, %v12036
    %v12257 = vadd.f32 %v12015, %v12037
    %v12258 = vadd.f32 %v12016, %v12038
    %v12259 = vadd.f32 %v12017, %v12039
    %v12260 = vadd.f32 %v12018, %v12040
    %v12261 = vadd.f32 %v12019, %v12041
    %v12262 = vadd.f32 %v12020, %v12042
    %v12263 = vadd.f32 %v12021, %v12043
    %v12264 = vadd.f32 %v12022, %v12044
    %v12265 = vadd.f32 %v12023, %v12045
    %v12266 = vadd.f32 %v12024, %v12046
    %v12267 = vadd.f32 %v12025, %v12047
    %v12268 = vadd.f32 %v12026, %v12048
    %v12269 = vadd.f32 %v12027, %v12049
    %v12270 = vadd.f32 %v12028, %v12050
    %v12271 = vadd.f32 %v12029, %v12051
    %v12272 = vadd.f32 %v12030, %v12052
    %v12273 = vadd.f32 %v12031, %v12053
    %v12274 = vadd.f32 %v12032, %v12054
    %v12275 = vadd.f32 %v12033, %v12055
    %v12276 = vadd.f32 %v12034, %v12056
    %v12277 = vadd.f32 %v12035, %v12057
    %v12278 = vadd.f32 %v12256, 0.0001
    %v12279 = vadd.f32 %v12257, 0.0001
    %v12280 = vadd.f32 %v12258, 0.0001
    %v12281 = vadd.f32 %v12259, 0.0001
    %v12282 = vadd.f32 %v12260, 0.0001
    %v12283 = vadd.f32 %v12261, 0.0001
    %v12284 = vadd.f32 %v12262, 0.0001
    %v12285 = vadd.f32 %v12263, 0.0001
    %v12286 = vadd.f32 %v12264, 0.0001
    %v12287 = vadd.f32 %v12265, 0.0001
    %v12288 = vadd.f32 %v12266, 0.0001
    %v12289 = vadd.f32 %v12267, 0.0001
    %v12290 = vadd.f32 %v12268, 0.0001
    %v12291 = vadd.f32 %v12269, 0.0001
    %v12292 = vadd.f32 %v12270, 0.0001
    %v12293 = vadd.f32 %v12271, 0.0001
    %v12294 = vadd.f32 %v12272, 0.0001
    %v12295 = vadd.f32 %v12273, 0.0001
    %v12296 = vadd.f32 %v12274, 0.0001
    %v12297 = vadd.f32 %v12275, 0.0001
    %v12298 = vadd.f32 %v12276, 0.0001
    %v12299 = vadd.f32 %v12277, 0.0001
    %v12300 = vadd.f32 %v12080, %v12102
    %v12301 = vadd.f32 %v12081, %v12103
    %v12302 = vadd.f32 %v12082, %v12104
    %v12303 = vadd.f32 %v12083, %v12105
    %v12304 = vadd.f32 %v12084, %v12106
    %v12305 = vadd.f32 %v12085, %v12107
    %v12306 = vadd.f32 %v12086, %v12108
    %v12307 = vadd.f32 %v12087, %v12109
    %v12308 = vadd.f32 %v12088, %v12110
    %v12309 = vadd.f32 %v12089, %v12111
    %v12310 = vadd.f32 %v12090, %v12112
    %v12311 = vadd.f32 %v12091, %v12113
    %v12312 = vadd.f32 %v12092, %v12114
    %v12313 = vadd.f32 %v12093, %v12115
    %v12314 = vadd.f32 %v12094, %v12116
    %v12315 = vadd.f32 %v12095, %v12117
    %v12316 = vadd.f32 %v12096, %v12118
    %v12317 = vadd.f32 %v12097, %v12119
    %v12318 = vadd.f32 %v12098, %v12120
    %v12319 = vadd.f32 %v12099, %v12121
    %v12320 = vadd.f32 %v12100, %v12122
    %v12321 = vadd.f32 %v12101, %v12123
    %v12322 = vadd.f32 %v12300, 0.0009
    %v12323 = vadd.f32 %v12301, 0.0009
    %v12324 = vadd.f32 %v12302, 0.0009
    %v12325 = vadd.f32 %v12303, 0.0009
    %v12326 = vadd.f32 %v12304, 0.0009
    %v12327 = vadd.f32 %v12305, 0.0009
    %v12328 = vadd.f32 %v12306, 0.0009
    %v12329 = vadd.f32 %v12307, 0.0009
    %v12330 = vadd.f32 %v12308, 0.0009
    %v12331 = vadd.f32 %v12309, 0.0009
    %v12332 = vadd.f32 %v12310, 0.0009
    %v12333 = vadd.f32 %v12311, 0.0009
    %v12334 = vadd.f32 %v12312, 0.0009
    %v12335 = vadd.f32 %v12313, 0.0009
    %v12336 = vadd.f32 %v12314, 0.0009
    %v12337 = vadd.f32 %v12315, 0.0009
    %v12338 = vadd.f32 %v12316, 0.0009
    %v12339 = vadd.f32 %v12317, 0.0009
    %v12340 = vadd.f32 %v12318, 0.0009
    %v12341 = vadd.f32 %v12319, 0.0009
    %v12342 = vadd.f32 %v12320, 0.0009
    %v12343 = vadd.f32 %v12321, 0.0009
    %v12344 = vmul.f32 %v12278, %v12322
    %v12345 = vmul.f32 %v12279, %v12323
    %v12346 = vmul.f32 %v12280, %v12324
    %v12347 = vmul.f32 %v12281, %v12325
    %v12348 = vmul.f32 %v12282, %v12326
    %v12349 = vmul.f32 %v12283, %v12327
    %v12350 = vmul.f32 %v12284, %v12328
    %v12351 = vmul.f32 %v12285, %v12329
    %v12352 = vmul.f32 %v12286, %v12330
    %v12353 = vmul.f32 %v12287, %v12331
    %v12354 = vmul.f32 %v12288, %v12332
    %v12355 = vmul.f32 %v12289, %v12333
    %v12356 = vmul.f32 %v12290, %v12334
    %v12357 = vmul.f32 %v12291, %v12335
    %v12358 = vmul.f32 %v12292, %v12336
    %v12359 = vmul.f32 %v12293, %v12337
    %v12360 = vmul.f32 %v12294, %v12338
    %v12361 = vmul.f32 %v12295, %v12339
    %v12362 = vmul.f32 %v12296, %v12340
    %v12363 = vmul.f32 %v12297, %v12341
    %v12364 = vmul.f32 %v12298, %v12342
    %v12365 = vmul.f32 %v12299, %v12343
    %v12366 = vrcp.pop %v12344
    %v12367 = vrcp.pop %v12345
    %v12368 = vrcp.pop %v12346
    %v12369 = vrcp.pop %v12347
    %v12370 = vrcp.pop %v12348
    %v12371 = vrcp.pop %v12349
    %v12372 = vrcp.pop %v12350
    %v12373 = vrcp.pop %v12351
    %v12374 = vrcp.pop %v12352
    %v12375 = vrcp.pop %v12353
    %v12376 = vrcp.pop %v12354
    %v12377 = vrcp.pop %v12355
    %v12378 = vrcp.pop %v12356
    %v12379 = vrcp.pop %v12357
    %v12380 = vrcp.pop %v12358
    %v12381 = vrcp.pop %v12359
    %v12382 = vrcp.pop %v12360
    %v12383 = vrcp.pop %v12361
    %v12384 = vrcp.pop %v12362
    %v12385 = vrcp.pop %v12363
    %v12386 = vrcp.pop %v12364
    %v12387 = vrcp.pop %v12365
    %v12388 = vmul.f32 %v12234, %v12366
    %v12389 = vmul.f32 %v12235, %v12367
    %v12390 = vmul.f32 %v12236, %v12368
    %v12391 = vmul.f32 %v12237, %v12369
    %v12392 = vmul.f32 %v12238, %v12370
    %v12393 = vmul.f32 %v12239, %v12371
    %v12394 = vmul.f32 %v12240, %v12372
    %v12395 = vmul.f32 %v12241, %v12373
    %v12396 = vmul.f32 %v12242, %v12374
    %v12397 = vmul.f32 %v12243, %v12375
    %v12398 = vmul.f32 %v12244, %v12376
    %v12399 = vmul.f32 %v12245, %v12377
    %v12400 = vmul.f32 %v12246, %v12378
    %v12401 = vmul.f32 %v12247, %v12379
    %v12402 = vmul.f32 %v12248, %v12380
    %v12403 = vmul.f32 %v12249, %v12381
    %v12404 = vmul.f32 %v12250, %v12382
    %v12405 = vmul.f32 %v12251, %v12383
    %v12406 = vmul.f32 %v12252, %v12384
    %v12407 = vmul.f32 %v12253, %v12385
    %v12408 = vmul.f32 %v12254, %v12386
    %v12409 = vmul.f32 %v12255, %v12387
    %v12410 = vlaneseq
    %v12411 = vshrl.u32 %v12410, 7
    %v12412 = vadd.s32 %v12411, 8
    %v12413 = vadd.s32 %v12411, 16
    %v12414 = vadd.s32 %v12411, 24
    %v12415 = vadd.s32 %v12411, 32
    %v12416 = vadd.s32 %v12411, 40
    %v12417 = vadd.s32 %v12411, 48
    %v12418 = vadd.s32 %v12411, 56
    %v12419 = vadd.s32 %v12411, 64
    %v12420 = vadd.s32 %v12411, 72
    %v12421 = vlaneseq
    %v12422 = vand.u32 %v12421, 127
    %v12423 = vstv %s428
    %vm12424 = vcmp.lt.s32.totalorder %v12411, %v12423
    %vm12425 = vcmp.lt.s32.totalorder %v12412, %v12423
    %vm12426 = vcmp.lt.s32.totalorder %v12413, %v12423
    %vm12427 = vcmp.lt.s32.totalorder %v12414, %v12423
    %vm12428 = vcmp.lt.s32.totalorder %v12415, %v12423
    %vm12429 = vcmp.lt.s32.totalorder %v12416, %v12423
    %vm12430 = vcmp.lt.s32.totalorder %v12417, %v12423
    %vm12431 = vcmp.lt.s32.totalorder %v12418, %v12423
    %vm12432 = vcmp.lt.s32.totalorder %v12419, %v12423
    %vm12433 = vcmp.lt.s32.totalorder %v12420, %v12423
    %vm12434 = vcmp.lt.s32.totalorder %v12422, 62
    %vm12435 = vmand %vm12424, %vm12434
    %vm12436 = vmand %vm12425, %vm12434
    %vm12437 = vmand %vm12426, %vm12434
    %vm12438 = vmand %vm12427, %vm12434
    %vm12439 = vmand %vm12428, %vm12434
    %vm12440 = vmand %vm12429, %vm12434
    %vm12441 = vmand %vm12430, %vm12434
    %vm12442 = vmand %vm12431, %vm12434
    %vm12443 = vmand %vm12432, %vm12434
    %vm12444 = vmand %vm12433, %vm12434
    %v12467 = vrot.slane %v12388, 5
    %v12468 = vrot.slane %v12390, 5
    %v12469 = vsel %vm1039, %v12467, %v12468
    %v12470 = vrot.slane %v12389, 5
    %v12471 = vrot.slane %v12391, 5
    %v12472 = vsel %vm1039, %v12470, %v12471
    %v12473 = vrot.slane %v12392, 5
    %v12474 = vsel %vm1039, %v12468, %v12473
    %v12475 = vrot.slane %v12393, 5
    %v12476 = vsel %vm1039, %v12471, %v12475
    %v12477 = vrot.slane %v12394, 5
    %v12478 = vsel %vm1039, %v12473, %v12477
    %v12479 = vrot.slane %v12395, 5
    %v12480 = vsel %vm1039, %v12475, %v12479
    %v12481 = vrot.slane %v12396, 5
    %v12482 = vsel %vm1039, %v12477, %v12481
    %v12483 = vrot.slane %v12397, 5
    %v12484 = vsel %vm1039, %v12479, %v12483
    %v12485 = vrot.slane %v12398, 5
    %v12486 = vsel %vm1039, %v12481, %v12485
    %v12487 = vrot.slane %v12399, 5
    %v12488 = vsel %vm1039, %v12483, %v12487
    %v12489 = vrot.slane %v12400, 5
    %v12490 = vsel %vm1039, %v12485, %v12489
    %v12491 = vrot.slane %v12401, 5
    %v12492 = vsel %vm1039, %v12487, %v12491
    %v12493 = vrot.slane %v12402, 5
    %v12494 = vsel %vm1039, %v12489, %v12493
    %v12495 = vrot.slane %v12403, 5
    %v12496 = vsel %vm1039, %v12491, %v12495
    %v12497 = vrot.slane %v12404, 5
    %v12498 = vsel %vm1039, %v12493, %v12497
    %v12499 = vrot.slane %v12405, 5
    %v12500 = vsel %vm1039, %v12495, %v12499
    %v12501 = vrot.slane %v12406, 5
    %v12502 = vsel %vm1039, %v12497, %v12501
    %v12503 = vrot.slane %v12407, 5
    %v12504 = vsel %vm1039, %v12499, %v12503
    %v12505 = vrot.slane %v12408, 5
    %v12506 = vsel %vm1039, %v12501, %v12505
    %v12507 = vrot.slane %v12409, 5
    %v12508 = vsel %vm1039, %v12503, %v12507
    %12509 = vrot.lane.b32.xlu0 %v12469, 123
    %v12510 = vpop.permute.xlu0 %12509
    %12511 = vrot.lane.b32.xlu0 %v12472, 123
    %v12512 = vpop.permute.xlu0 %12511
    %12513 = vrot.lane.b32.xlu0 %v12474, 123
    %v12514 = vpop.permute.xlu0 %12513
    %12515 = vrot.lane.b32.xlu0 %v12476, 123
    %v12516 = vpop.permute.xlu0 %12515
    %12517 = vrot.lane.b32.xlu0 %v12478, 123
    %v12518 = vpop.permute.xlu0 %12517
    %12519 = vrot.lane.b32.xlu0 %v12480, 123
    %v12520 = vpop.permute.xlu0 %12519
    %12521 = vrot.lane.b32.xlu0 %v12482, 123
    %v12522 = vpop.permute.xlu0 %12521
    %12523 = vrot.lane.b32.xlu0 %v12484, 123
    %v12524 = vpop.permute.xlu0 %12523
    %12525 = vrot.lane.b32.xlu0 %v12486, 123
    %v12526 = vpop.permute.xlu0 %12525
    %12527 = vrot.lane.b32.xlu0 %v12488, 123
    %v12528 = vpop.permute.xlu0 %12527
    %12529 = vrot.lane.b32.xlu0 %v12490, 123
    %v12530 = vpop.permute.xlu0 %12529
    %12531 = vrot.lane.b32.xlu0 %v12492, 123
    %v12532 = vpop.permute.xlu0 %12531
    %12533 = vrot.lane.b32.xlu0 %v12494, 123
    %v12534 = vpop.permute.xlu0 %12533
    %12535 = vrot.lane.b32.xlu0 %v12496, 123
    %v12536 = vpop.permute.xlu0 %12535
    %12537 = vrot.lane.b32.xlu0 %v12498, 123
    %v12538 = vpop.permute.xlu0 %12537
    %12539 = vrot.lane.b32.xlu0 %v12500, 123
    %v12540 = vpop.permute.xlu0 %12539
    %12541 = vrot.lane.b32.xlu0 %v12502, 123
    %v12542 = vpop.permute.xlu0 %12541
    %12543 = vrot.lane.b32.xlu0 %v12504, 123
    %v12544 = vpop.permute.xlu0 %12543
    %12545 = vrot.lane.b32.xlu0 %v12506, 123
    %v12546 = vpop.permute.xlu0 %12545
    %12547 = vrot.lane.b32.xlu0 %v12508, 123
    %v12548 = vpop.permute.xlu0 %12547
    %vm12549 = vcmask 1006592
    %v12550 = vsel %vm12549, %v12510, %v12512
    %v12551 = vsel %vm12549, %v12514, %v12516
    %v12552 = vsel %vm12549, %v12518, %v12520
    %v12553 = vsel %vm12549, %v12522, %v12524
    %v12554 = vsel %vm12549, %v12526, %v12528
    %v12555 = vsel %vm12549, %v12530, %v12532
    %v12556 = vsel %vm12549, %v12534, %v12536
    %v12557 = vsel %vm12549, %v12538, %v12540
    %v12558 = vsel %vm12549, %v12542, %v12544
    %v12559 = vsel %vm12549, %v12546, %v12548
    %v12570 = vsel %vm12435, %v12550, 0.0
    %v12571 = vsel %vm12436, %v12551, 0.0
    %v12572 = vsel %vm12437, %v12552, 0.0
    %v12573 = vsel %vm12438, %v12553, 0.0
    %v12574 = vsel %vm12439, %v12554, 0.0
    %v12575 = vsel %vm12440, %v12555, 0.0
    %v12576 = vsel %vm12441, %v12556, 0.0
    %v12577 = vsel %vm12442, %v12557, 0.0
    %v12578 = vsel %vm12443, %v12558, 0.0
    %v12579 = vsel %vm12444, %v12559, 0.0
    %v12580 = vadd.f32 %v12570, %v12571
    %v12581 = vadd.f32 %v12580, %v12572
    %v12582 = vadd.f32 %v12581, %v12573
    %v12583 = vadd.f32 %v12582, %v12574
    %v12584 = vadd.f32 %v12583, %v12575
    %v12585 = vadd.f32 %v12584, %v12576
    %v12586 = vadd.f32 %v12585, %v12577
    %v12587 = vadd.f32 %v12586, %v12578
    %v12588 = vadd.f32 %v12587, %v12579
    %12589 = vadd.xlane.f32.xlu0 %v12588
    %v12590 = vpop.xlane.xlu0 %12589
    %v12591 = vrot.slane %v12590, 4
    %v12592 = vadd.f32 %v12590, %v12591
    %v12593 = vrot.slane %v12592, 2
    %v12594 = vadd.f32 %v12592, %v12593
    %v12595 = vrot.slane %v12594, 1
    %v12596 = vadd.f32 %v12594, %v12595
    %s12597 = vtos %v12596
    %s12598 = sadd.f32 %s12597, 0.0
    %vm12599 = vcmp.eq.s32.totalorder %v12422, 0
    %v12600 = vstv %s12598
    %v12601 = vsel %vm12599, %v12600, 0.0
    %vm12602 = vcmp.eq.s32.totalorder %v12422, 1
    %v12603 = vstv %s378
    %v12604 = vsel %vm12602, %v12603, 0.0
    %v12605 = vadd.f32 %v12601, %v12604
    %vm12606 = vcmp.eq.s32.totalorder %v12422, 2
    %v12607 = vstv %s426
    %v12608 = vsel %vm12606, %v12607, 0.0
    %v12609 = vadd.f32 %v12605, %v12608
    %12610 = vst [vmem:[#allocation15] sm:$0xff] %v12609
    %p12611 = scmp.eq.s32.totalorder 0, 0
    // Predicated region
    $region34: #{tpu_custom_call.1} parent=1 // pred_check
      %p12612 = pneg %p12611
    $region35: #{tpu_custom_call.1} parent=1 // pred_check_branch
      %12614 = sbr.rel (%p12612) target = $region37
    $region36: #{tpu_custom_call.1} parent=1 // pred_region
      %v12615 = vsub.f32 %v295, %v291
      %v12616 = vsub.f32 %v296, %v292
      %v12617 = vsub.f32 %v297, %v293
      %v12618 = vsub.f32 %v298, %v294
      %v12619 = vadd.f32 %v299, %v300
      %v12620 = vadd.f32 %v12619, %v301
      %v12621 = vadd.f32 %v12620, %v302
      %12622 = vadd.xlane.f32.xlu0 %v12621
      %v12623 = vpop.xlane.xlu0 %12622
      %v12624 = vrot.slane %v12623, 4
      %v12625 = vadd.f32 %v12623, %v12624
      %v12626 = vrot.slane %v12625, 2
      %v12627 = vadd.f32 %v12625, %v12626
      %v12628 = vrot.slane %v12627, 1
      %v12629 = vadd.f32 %v12627, %v12628
      %s12630 = vtos %v12629
      %v12631 = vmul.f32 %v12615, %v12615
      %v12632 = vmul.f32 %v12616, %v12616
      %v12633 = vmul.f32 %v12617, %v12617
      %v12634 = vmul.f32 %v12618, %v12618
      %v12635 = vadd.f32 %v12631, %v12632
      %v12636 = vadd.f32 %v12635, %v12633
      %v12637 = vadd.f32 %v12636, %v12634
      %12638 = vadd.xlane.f32.xlu0 %v12637
      %v12639 = vpop.xlane.xlu0 %12638
      %v12640 = vrot.slane %v12639, 4
      %v12641 = vadd.f32 %v12639, %v12640
      %v12642 = vrot.slane %v12641, 2
      %v12643 = vadd.f32 %v12641, %v12642
      %v12644 = vrot.slane %v12643, 1
      %v12645 = vadd.f32 %v12643, %v12644
      %s12646 = vtos %v12645
      %v12647 = vld [vmem:[#allocation15] sm:$0xff]
      %v12648 = vstv %s12630
      %v12649 = vsel %vm12602, %v12648, 0.0
      %v12650 = vstv %s12646
      %v12651 = vsel %vm12606, %v12650, 0.0
      %v12652 = vadd.f32 %v12649, %v12651
      %v12653 = vadd.f32 %v12647, %v12652
      %12654 = vst [vmem:[#allocation15] sm:$0xff] %v12653
    $region37: #{tpu_custom_call.1} parent=1 // pred_fallthru
      _
    // Predicated region
    $region38: #{tpu_custom_call.1} parent=1 // pred_check
      _
    $region39: #{tpu_custom_call.1} parent=1 // pred_check_branch
      %12656 = sbr.rel (0) target = $region41
    $region40: #{tpu_custom_call.1} parent=1 // pred_region
      %s12658 = ssub.s32 128, 128
      %12659 = vsyncadd [#allocation9], %s12658
      %s12661 = sshll.u32 [#allocation15], 4
      %s12662 = int_to_ptr.vmem [resolvable:$true] %s12661
      %12664 = dma.vmem_to_hbm [thread:$0]  %s12662, 128, %s4, [#allocation9]
    $region41: #{tpu_custom_call.1} parent=1 // pred_fallthru
      _
    // Predicated region
    $region42: #{tpu_custom_call.1} parent=1 // pred_check
      _
    $region43: #{tpu_custom_call.1} parent=1 // pred_check_branch
      %12666 = sbr.rel (0) target = $region45
    $region44: #{tpu_custom_call.1} parent=1 // pred_region
      %12667 = dma.done [#allocation9], 128
    $region45: #{tpu_custom_call.1} parent=1 // pred_fallthru
      _
    %12668 = vsyncpa [#allocation8], 1
    %12669 = vsyncpa [#allocation11], 1
    %12670 = vsyncpa [#allocation14], 1
    %12671 = vsyncpa [#allocation9], 1

</llo_original>
